<compile_context>
chip_gen: v6e
topology: v6e:2x2x1
jax: 0.10.0
libtpu: 0.0.40
codegen_flags: <defaults>
</compile_context>

<pallas_src>
import functools

import jax
import jax.numpy as jnp
from jax import lax
from jax.experimental import pallas as pl
from jax.experimental.pallas import tpu as pltpu


# ----------------------------------------------------------------------------
# Pallas kernel: one full decoder stage (all `depth` s2b_attention layers) for
# one batch element.  grid = (B, depth); the depth axis is serial ("arbitrary")
# and carries the activation in a VMEM scratch.
# ----------------------------------------------------------------------------
def _s2b_stage_kernel(x_ref, km_ref, g_ref, b_ref, wqkv_ref, bqkv_ref,
                      wp_ref, bp_ref, out_ref, x_scr, *, num_heads):
    l = pl.program_id(1)
    n_layers = pl.num_programs(1)

    # Load the activation into the persistent VMEM scratch at the first layer.
    @pl.when(l == 0)
    def _():
        x_scr[...] = x_ref[...].astype(jnp.float32)

    x = x_scr[...]                                   # (N, C) f32
    n, c = x.shape
    dh = c // num_heads

    # --- LayerNorm (eps=1e-5, biased variance) == nn.LayerNorm(dim) ---
    mu = jnp.mean(x, axis=-1, keepdims=True)
    var = jnp.mean(jnp.square(x - mu), axis=-1, keepdims=True)
    xn = (x - mu) * lax.rsqrt(var + 1e-5)
    xn = xn * g_ref[...] + b_ref[...]                # (1, C) broadcast

    # --- fused q/k/v projection: one (N, C) @ (C, 3C) bf16 MXU matmul ---
    qkv = jnp.dot(xn.astype(jnp.bfloat16), wqkv_ref[...],
                  preferred_element_type=jnp.float32) + bqkv_ref[...]  # (N,3C) f32

    m_col = km_ref[...]                              # (N, 1) key mask in {0, 1}

    # Rank-1 mask folded into K once: (q @ k.T) * m[j] == q @ (m * k).T
    q_all = qkv[:, :c].astype(jnp.bfloat16)                      # (N, C) bf16
    k_all = (qkv[:, c:2 * c] * m_col).astype(jnp.bfloat16)       # (N, C) bf16
    v_all = qkv[:, 2 * c:].astype(jnp.bfloat16)                  # (N, C) bf16

    # --- per-head attention; accumulate the output projection per head ---
    acc = jnp.zeros((n, c), jnp.float32)
    for h in range(num_heads):                       # static unroll (8 heads)
        q_h = q_all[:, h * dh:(h + 1) * dh]          # (N, dh)
        k_h = k_all[:, h * dh:(h + 1) * dh]          # (N, dh)
        v_h = v_all[:, h * dh:(h + 1) * dh]          # (N, dh)

        # scores: contract head dims (reference applies NO 1/sqrt(dh) scaling)
        s = lax.dot_general(q_h, k_h,
                            dimension_numbers=(((1,), (1,)), ((), ())),
                            preferred_element_type=jnp.float32)  # (N, N) f32

        # softmax in f32 (masked scores are exactly 0, as in the reference)
        s = s - jnp.max(s, axis=-1, keepdims=True)
        p = jnp.exp(s)
        p = p * pl.reciprocal(jnp.sum(p, axis=-1, keepdims=True), approx=True)

        o_h = jnp.dot(p.astype(jnp.bfloat16), v_h,
                      preferred_element_type=jnp.float32)         # (N, dh)
        acc = acc + jnp.dot(o_h.astype(jnp.bfloat16), wp_ref[h],
                            preferred_element_type=jnp.float32)   # (N, C)

    y = acc + bp_ref[...]                            # dropout rate 0.0 -> identity

    # Keep the activation resident in VMEM for the next layer of this stage.
    x_scr[...] = y

    @pl.when(l == n_layers - 1)
    def _():
        out_ref[...] = y.astype(out_ref.dtype)


@functools.partial(jax.jit, static_argnames=("num_heads",))
def s2b_stage_pallas(x, key_mask, params, num_heads=8):
    """x: (B, N, C) f32; key_mask: (B, N, 1) in {0,1}; params stacked over depth."""
    B, N, C = x.shape
    depth = params["wqkv"].shape[0]
    dh = C // num_heads
    kernel = functools.partial(_s2b_stage_kernel, num_heads=num_heads)

    act_spec = pl.BlockSpec((None, N, C), lambda b, l: (b, 0, 0))

    def per_layer_vec(width):
        return pl.BlockSpec((None, 1, width), lambda b, l: (l, 0, 0))

    # TODO(synk): for large N the per-head (N, N) score tile should be split
    # over query-row tiles (extra grid axis) to bound VMEM; omitted here since
    # the serial depth-carry keeps the full (N, C) activation resident.
    return pl.pallas_call(
        kernel,
        out_shape=jax.ShapeDtypeStruct((B, N, C), x.dtype),
        grid=(B, depth),
        in_specs=[
            act_spec,                                                # x (B, N, C)
            pl.BlockSpec((None, N, 1), lambda b, l: (b, 0, 0)),      # key mask
            per_layer_vec(C),                                        # ln gamma
            per_layer_vec(C),                                        # ln beta
            pl.BlockSpec((None, C, 3 * C), lambda b, l: (l, 0, 0)),  # Wqkv (bf16)
            per_layer_vec(3 * C),                                    # bqkv
            pl.BlockSpec((None, num_heads, dh, C),
                         lambda b, l: (l, 0, 0, 0)),                 # Wp head-major (bf16)
            per_layer_vec(C),                                        # bp
        ],
        out_specs=act_spec,
        scratch_shapes=[pltpu.VMEM((N, C), jnp.float32)],
        compiler_params=pltpu.CompilerParams(
            dimension_semantics=("parallel", "arbitrary"),
            vmem_limit_bytes=64 * 1024 * 1024),
    )(x, key_mask,
      params["gamma"], params["beta"],
      params["wqkv"], params["bqkv"],
      params["wp"], params["bp"])


# ----------------------------------------------------------------------------
# Glue (plain JAX): flatten / reflatten, nearest interpolation, rank-1 Mask()
# ----------------------------------------------------------------------------
def flat(e):
    B, C, H, W = e.shape
    return jnp.transpose(e, (0, 2, 3, 1)).reshape(B, H * W, C)


def reflat(d, H, W):
    B = d.shape[0]
    return jnp.transpose(d, (0, 2, 1)).reshape(B, -1, H, W)


def nearest_interpolate(m, out_h, out_w):
    # Matches torch F.interpolate(mode='nearest'): src_idx = floor(dst_idx * in / out)
    B, C, H, W = m.shape
    rows = (jnp.arange(out_h) * H) // out_h
    cols = (jnp.arange(out_w) * W) // out_w
    return m[:, :, rows, :][:, :, :, cols]


def build_key_mask(mask, size):
    # Reference Mask(): binarize, then mask[i, j] = ~((f_j==0 & f_i==1) | (f_j==0 & f_i==0)).
    # Since f_i is binary, this simplifies to mask[i, j] = (f_j != 0): key-only, rank-1.
    m = nearest_interpolate(mask, size, size)
    m = jnp.where(m < 1.0, 0.0, m)                   # binary_mask[binary_mask < 1] = 0
    m = jnp.where(m > 0.0, 1.0, m)                   # binary_mask[binary_mask > 0] = 1
    B = m.shape[0]
    flat_m = m[:, 0, :, :].reshape(B, size * size)   # (B, N) row-major, matches flat()
    return (flat_m != 0.0).astype(jnp.float32)[:, :, None]   # (B, N, 1)


# ----------------------------------------------------------------------------
# Parameter init (deterministic, synthetic), stacked per stage over depth.
# Weights are stored in bf16 (MXU inputs); biases / LN params in f32.
# ----------------------------------------------------------------------------
def init_stage_params(key, dim, depth, num_heads=8, scale=0.02):
    dh = dim // num_heads
    gammas, betas, wqkvs, bqkvs, wps, bps = [], [], [], [], [], []
    for layer_key in jax.random.split(key, depth):
        ks = jax.random.split(layer_key, 8)
        wq = scale * jax.random.normal(ks[0], (dim, dim), jnp.float32)
        bq = scale * jax.random.normal(ks[1], (1, dim), jnp.float32)
        wk = scale * jax.random.normal(ks[2], (dim, dim), jnp.float32)
        bk = scale * jax.random.normal(ks[3], (1, dim), jnp.float32)
        wv = scale * jax.random.normal(ks[4], (dim, dim), jnp.float32)
        bv = scale * jax.random.normal(ks[5], (1, dim), jnp.float32)
        wp = scale * jax.random.normal(ks[6], (dim, dim), jnp.float32)
        bp = scale * jax.random.normal(ks[7], (1, dim), jnp.float32)
        gammas.append(jnp.ones((1, dim), jnp.float32))
        betas.append(jnp.zeros((1, dim), jnp.float32))
        wqkvs.append(jnp.concatenate([wq, wk, wv], axis=1).astype(jnp.bfloat16))
        bqkvs.append(jnp.concatenate([bq, bk, bv], axis=1))
        wps.append(wp.reshape(num_heads, dh, dim).astype(jnp.bfloat16))
        bps.append(bp)
    return {
        "gamma": jnp.stack(gammas),   # (depth, 1, C)
        "beta": jnp.stack(betas),     # (depth, 1, C)
        "wqkv": jnp.stack(wqkvs),     # (depth, C, 3C)  bf16
        "bqkv": jnp.stack(bqkvs),     # (depth, 1, 3C)
        "wp": jnp.stack(wps),         # (depth, H, dh, C) bf16
        "bp": jnp.stack(bps),         # (depth, 1, C)
    }


class S2BDecoder:
    def __init__(self, key, embed_dims=(64, 128, 320, 512), depths=(2, 2, 3, 2),
                 num_heads=8):
        self.embed_dims = embed_dims
        self.depths = depths
        self.num_heads = num_heads
        self.params = []
        for dim, depth in zip(embed_dims, depths):
            key, sub = jax.random.split(key)
            self.params.append(init_stage_params(sub, dim, depth, num_heads))

    def __call__(self, feats, mask):
        outs = []
        for stage, e in enumerate(feats):
            B, C, H, W = e.shape
            d = flat(e)
            # F.interpolate(mask, to_2tuple(e.shape[2])) -> square (H, H), built once
            key_mask = build_key_mask(mask, H)                       # (B, N, 1)
            d = s2b_stage_pallas(d, key_mask, self.params[stage],
                                 num_heads=self.num_heads)
            outs.append(reflat(d, H, W))
        return tuple(outs)


# ----------------------------------------------------------------------------
if __name__ == "__main__":
    key = jax.random.PRNGKey(0)
    kf, km, kp = jax.random.split(key, 3)

    B = 2
    embed_dims = [32, 64, 128, 256]      # small, divisible by num_heads=8
    depths = [2, 2, 3, 2]
    spatial = [16, 8, 4, 4]

    feat_keys = jax.random.split(kf, 4)
    feats = [
        jax.random.normal(feat_keys[i], (B, embed_dims[i], spatial[i], spatial[i]),
                          jnp.float32)
        for i in range(4)
    ]

    # smoke / background mask with values in {0.0, 0.3, 1.0, 2.0};
    # Mask() thresholds: <1 -> 0, then >0 -> 1.
    raw = jax.random.uniform(km, (B, 1, 16, 16))
    mask = jnp.where(raw > 0.5,
                     jnp.where(raw > 0.75, 2.0, 1.0),
                     jnp.where(raw > 0.25, 0.3, 0.0)).astype(jnp.float32)

    decoder = S2BDecoder(kp, embed_dims, depths)
    outs = decoder(feats, mask)
    outs = jax.block_until_ready(outs)

    assert all(o.shape == f.shape for o, f in zip(outs, feats))
    assert all(bool(jnp.all(jnp.isfinite(o))) for o in outs)
    print("KERNEL_OK")
</pallas_src>

<mosaic_0001>
module attributes {stable_mosaic.version = 11 : i64} {
  func.func @_s2b_stage_kernel(%arg0: i32, %arg1: i32, %arg2: memref<1x256x32xf32, #tpu.memory_space<vmem>>, %arg3: memref<1x256x1xf32, #tpu.memory_space<vmem>>, %arg4: memref<1x1x32xf32, #tpu.memory_space<vmem>>, %arg5: memref<1x1x32xf32, #tpu.memory_space<vmem>>, %arg6: memref<1x32x96xbf16, #tpu.memory_space<vmem>>, %arg7: memref<1x1x96xf32, #tpu.memory_space<vmem>>, %arg8: memref<1x8x4x32xbf16, #tpu.memory_space<vmem>>, %arg9: memref<1x1x32xf32, #tpu.memory_space<vmem>>, %arg10: memref<1x256x32xf32, #tpu.memory_space<vmem>>, %arg11: memref<256x32xf32, #tpu.memory_space<vmem>>) attributes {dimension_semantics = [#tpu.dimension_semantics<parallel>, #tpu.dimension_semantics<arbitrary>], iteration_bounds = array<i64: 2, 2>, scalar_prefetch = 0 : i64, scratch_operands = 1 : i64, tpu.core_type = #tpu.core_type<tc>, window_params = [{transform_indices = @transform_0, window_bounds = array<i64: 1, 256, 32>}, {transform_indices = @transform_1, window_bounds = array<i64: 1, 256, 1>}, {transform_indices = @transform_2, window_bounds = array<i64: 1, 1, 32>}, {transform_indices = @transform_3, window_bounds = array<i64: 1, 1, 32>}, {transform_indices = @transform_4, window_bounds = array<i64: 1, 32, 96>}, {transform_indices = @transform_5, window_bounds = array<i64: 1, 1, 96>}, {transform_indices = @transform_6, window_bounds = array<i64: 1, 8, 4, 32>}, {transform_indices = @transform_7, window_bounds = array<i64: 1, 1, 32>}, {transform_indices = @transform_8, window_bounds = array<i64: 1, 256, 32>}]} {
    %c0_i32 = arith.constant 0 : i32
    %0 = arith.cmpi eq, %arg1, %c0_i32 : i32
    %1 = arith.extui %0 : i1 to i32
    %c0_i32_0 = arith.constant 0 : i32
    %2 = arith.cmpi ne, %1, %c0_i32_0 : i32
    scf.if %2 {
      %c0_94 = arith.constant 0 : index
      %c0_95 = arith.constant 0 : index
      %c0_96 = arith.constant 0 : index
      %225 = vector.load %arg2[%c0_94, %c0_95, %c0_96] : memref<1x256x32xf32, #tpu.memory_space<vmem>>, vector<1x256x32xf32>
      %226 = vector.shape_cast %225 : vector<1x256x32xf32> to vector<256x32xf32>
      %c0_97 = arith.constant 0 : index
      %c0_98 = arith.constant 0 : index
      %227 = vector.load %arg11[%c0_97, %c0_98] : memref<256x32xf32, #tpu.memory_space<vmem>>, vector<256x32xf32>
      tpu.vector_store %arg11[%c0_97, %c0_98], %226 {strides = array<i32>} : memref<256x32xf32, #tpu.memory_space<vmem>>, vector<256x32xf32>,
    } else {
    }
    %c0 = arith.constant 0 : index
    %c0_1 = arith.constant 0 : index
    %3 = vector.load %arg11[%c0, %c0_1] : memref<256x32xf32, #tpu.memory_space<vmem>>, vector<256x32xf32>
    %cst = arith.constant dense<0.000000e+00> : vector<256xf32>
    %4 = vector.multi_reduction <add>, %3, %cst [1] : vector<256x32xf32> to vector<256xf32>
    %5 = vector.shape_cast %4 : vector<256xf32> to vector<256x1xf32>
    %cst_2 = arith.constant 3.200000e+01 : f32
    %6 = vector.broadcast %cst_2 : f32 to vector<256x1xf32>
    %7 = arith.divf %5, %6 : vector<256x1xf32>
    %8 = vector.broadcast %7 : vector<256x1xf32> to vector<256x32xf32>
    %9 = arith.subf %3, %8 : vector<256x32xf32>
    %10 = arith.mulf %9, %9 : vector<256x32xf32>
    %cst_3 = arith.constant dense<0.000000e+00> : vector<256xf32>
    %11 = vector.multi_reduction <add>, %10, %cst_3 [1] : vector<256x32xf32> to vector<256xf32>
    %12 = vector.shape_cast %11 : vector<256xf32> to vector<256x1xf32>
    %cst_4 = arith.constant 3.200000e+01 : f32
    %13 = vector.broadcast %cst_4 : f32 to vector<256x1xf32>
    %14 = arith.divf %12, %13 : vector<256x1xf32>
    %15 = vector.broadcast %7 : vector<256x1xf32> to vector<256x32xf32>
    %16 = arith.subf %3, %15 : vector<256x32xf32>
    %cst_5 = arith.constant 9.99999974E-6 : f32
    %17 = vector.broadcast %cst_5 : f32 to vector<256x1xf32>
    %18 = arith.addf %14, %17 : vector<256x1xf32>
    %19 = math.rsqrt %18 : vector<256x1xf32>
    %20 = vector.broadcast %19 : vector<256x1xf32> to vector<256x32xf32>
    %21 = arith.mulf %16, %20 : vector<256x32xf32>
    %c0_6 = arith.constant 0 : index
    %c0_7 = arith.constant 0 : index
    %c0_8 = arith.constant 0 : index
    %22 = vector.load %arg4[%c0_6, %c0_7, %c0_8] : memref<1x1x32xf32, #tpu.memory_space<vmem>>, vector<1x1x32xf32>
    %23 = vector.shape_cast %22 : vector<1x1x32xf32> to vector<1x32xf32>
    %24 = vector.broadcast %23 : vector<1x32xf32> to vector<256x32xf32>
    %25 = arith.mulf %21, %24 : vector<256x32xf32>
    %c0_9 = arith.constant 0 : index
    %c0_10 = arith.constant 0 : index
    %c0_11 = arith.constant 0 : index
    %26 = vector.load %arg5[%c0_9, %c0_10, %c0_11] : memref<1x1x32xf32, #tpu.memory_space<vmem>>, vector<1x1x32xf32>
    %27 = vector.shape_cast %26 : vector<1x1x32xf32> to vector<1x32xf32>
    %28 = vector.broadcast %27 : vector<1x32xf32> to vector<256x32xf32>
    %29 = arith.addf %25, %28 : vector<256x32xf32>
    %30 = arith.truncf %29 : vector<256x32xf32> to vector<256x32xbf16>
    %c0_12 = arith.constant 0 : index
    %c0_13 = arith.constant 0 : index
    %c0_14 = arith.constant 0 : index
    %31 = vector.load %arg6[%c0_12, %c0_13, %c0_14] : memref<1x32x96xbf16, #tpu.memory_space<vmem>>, vector<1x32x96xbf16>
    %32 = vector.shape_cast %31 : vector<1x32x96xbf16> to vector<32x96xbf16>
    %cst_15 = arith.constant dense<0.000000e+00> : vector<256x96xf32>
    %33 = tpu.matmul %30, %32, %cst_15 {dimension_numbers = #tpu.dot_dimension_numbers<[1], [0], [0], [1], [0, 0, 1, 1], [], []>} : vector<256x32xbf16>, vector<32x96xbf16>, vector<256x96xf32> -> vector<256x96xf32>
    %c0_16 = arith.constant 0 : index
    %c0_17 = arith.constant 0 : index
    %c0_18 = arith.constant 0 : index
    %34 = vector.load %arg7[%c0_16, %c0_17, %c0_18] : memref<1x1x96xf32, #tpu.memory_space<vmem>>, vector<1x1x96xf32>
    %35 = vector.shape_cast %34 : vector<1x1x96xf32> to vector<1x96xf32>
    %36 = vector.broadcast %35 : vector<1x96xf32> to vector<256x96xf32>
    %37 = arith.addf %33, %36 : vector<256x96xf32>
    %c0_19 = arith.constant 0 : index
    %c0_20 = arith.constant 0 : index
    %c0_21 = arith.constant 0 : index
    %38 = vector.load %arg3[%c0_19, %c0_20, %c0_21] : memref<1x256x1xf32, #tpu.memory_space<vmem>>, vector<1x256x1xf32>
    %39 = vector.shape_cast %38 : vector<1x256x1xf32> to vector<256x1xf32>
    %40 = vector.extract_strided_slice %37 {offsets = [0, 0], sizes = [256, 32], strides = [1, 1]} : vector<256x96xf32> to vector<256x32xf32>
    %41 = arith.truncf %40 : vector<256x32xf32> to vector<256x32xbf16>
    %42 = vector.extract_strided_slice %37 {offsets = [0, 32], sizes = [256, 32], strides = [1, 1]} : vector<256x96xf32> to vector<256x32xf32>
    %43 = vector.broadcast %39 : vector<256x1xf32> to vector<256x32xf32>
    %44 = arith.mulf %42, %43 : vector<256x32xf32>
    %45 = arith.truncf %44 : vector<256x32xf32> to vector<256x32xbf16>
    %46 = vector.extract_strided_slice %37 {offsets = [0, 64], sizes = [256, 32], strides = [1, 1]} : vector<256x96xf32> to vector<256x32xf32>
    %47 = arith.truncf %46 : vector<256x32xf32> to vector<256x32xbf16>
    %cst_22 = arith.constant 0.000000e+00 : f32
    %48 = vector.broadcast %cst_22 : f32 to vector<256x32xf32>
    %49 = vector.extract_strided_slice %41 {offsets = [0, 0], sizes = [256, 4], strides = [1, 1]} : vector<256x32xbf16> to vector<256x4xbf16>
    %50 = vector.extract_strided_slice %45 {offsets = [0, 0], sizes = [256, 4], strides = [1, 1]} : vector<256x32xbf16> to vector<256x4xbf16>
    %51 = vector.extract_strided_slice %47 {offsets = [0, 0], sizes = [256, 4], strides = [1, 1]} : vector<256x32xbf16> to vector<256x4xbf16>
    %cst_23 = arith.constant dense<0.000000e+00> : vector<256x256xf32>
    %52 = tpu.matmul %49, %50, %cst_23 {dimension_numbers = #tpu.dot_dimension_numbers<[1], [1], [0], [0], [0, 0, 1, 0], [], []>} : vector<256x4xbf16>, vector<256x4xbf16>, vector<256x256xf32> -> vector<256x256xf32>
    %cst_24 = arith.constant dense<0xFF800000> : vector<256xf32>
    %53 = vector.multi_reduction <maximumf>, %52, %cst_24 [1] : vector<256x256xf32> to vector<256xf32>
    %54 = vector.shape_cast %53 : vector<256xf32> to vector<256x1xf32>
    %55 = vector.broadcast %54 : vector<256x1xf32> to vector<256x256xf32>
    %56 = arith.subf %52, %55 : vector<256x256xf32>
    %57 = math.exp %56 : vector<256x256xf32>
    %cst_25 = arith.constant dense<0.000000e+00> : vector<256xf32>
    %58 = vector.multi_reduction <add>, %57, %cst_25 [1] : vector<256x256xf32> to vector<256xf32>
    %59 = vector.shape_cast %58 : vector<256xf32> to vector<256x1xf32>
    %60 = tpu.reciprocal %59 {approx = true} : vector<256x1xf32> -> vector<256x1xf32>
    %61 = vector.broadcast %60 : vector<256x1xf32> to vector<256x256xf32>
    %62 = arith.mulf %57, %61 : vector<256x256xf32>
    %63 = arith.truncf %62 : vector<256x256xf32> to vector<256x256xbf16>
    %cst_26 = arith.constant dense<0.000000e+00> : vector<256x4xf32>
    %64 = tpu.matmul %63, %51, %cst_26 {dimension_numbers = #tpu.dot_dimension_numbers<[1], [0], [0], [1], [0, 0, 1, 1], [], []>} : vector<256x256xbf16>, vector<256x4xbf16>, vector<256x4xf32> -> vector<256x4xf32>
    %65 = arith.truncf %64 : vector<256x4xf32> to vector<256x4xbf16>
    %c0_27 = arith.constant 0 : index
    %c0_28 = arith.constant 0 : index
    %c0_29 = arith.constant 0 : index
    %c0_30 = arith.constant 0 : index
    %66 = vector.load %arg8[%c0_27, %c0_28, %c0_29, %c0_30] : memref<1x8x4x32xbf16, #tpu.memory_space<vmem>>, vector<1x1x4x32xbf16>
    %67 = vector.shape_cast %66 : vector<1x1x4x32xbf16> to vector<4x32xbf16>
    %cst_31 = arith.constant dense<0.000000e+00> : vector<256x32xf32>
    %68 = tpu.matmul %65, %67, %cst_31 {dimension_numbers = #tpu.dot_dimension_numbers<[1], [0], [0], [1], [0, 0, 1, 1], [], []>} : vector<256x4xbf16>, vector<4x32xbf16>, vector<256x32xf32> -> vector<256x32xf32>
    %69 = arith.addf %48, %68 : vector<256x32xf32>
    %70 = vector.extract_strided_slice %41 {offsets = [0, 4], sizes = [256, 4], strides = [1, 1]} : vector<256x32xbf16> to vector<256x4xbf16>
    %71 = vector.extract_strided_slice %45 {offsets = [0, 4], sizes = [256, 4], strides = [1, 1]} : vector<256x32xbf16> to vector<256x4xbf16>
    %72 = vector.extract_strided_slice %47 {offsets = [0, 4], sizes = [256, 4], strides = [1, 1]} : vector<256x32xbf16> to vector<256x4xbf16>
    %cst_32 = arith.constant dense<0.000000e+00> : vector<256x256xf32>
    %73 = tpu.matmul %70, %71, %cst_32 {dimension_numbers = #tpu.dot_dimension_numbers<[1], [1], [0], [0], [0, 0, 1, 0], [], []>} : vector<256x4xbf16>, vector<256x4xbf16>, vector<256x256xf32> -> vector<256x256xf32>
    %cst_33 = arith.constant dense<0xFF800000> : vector<256xf32>
    %74 = vector.multi_reduction <maximumf>, %73, %cst_33 [1] : vector<256x256xf32> to vector<256xf32>
    %75 = vector.shape_cast %74 : vector<256xf32> to vector<256x1xf32>
    %76 = vector.broadcast %75 : vector<256x1xf32> to vector<256x256xf32>
    %77 = arith.subf %73, %76 : vector<256x256xf32>
    %78 = math.exp %77 : vector<256x256xf32>
    %cst_34 = arith.constant dense<0.000000e+00> : vector<256xf32>
    %79 = vector.multi_reduction <add>, %78, %cst_34 [1] : vector<256x256xf32> to vector<256xf32>
    %80 = vector.shape_cast %79 : vector<256xf32> to vector<256x1xf32>
    %81 = tpu.reciprocal %80 {approx = true} : vector<256x1xf32> -> vector<256x1xf32>
    %82 = vector.broadcast %81 : vector<256x1xf32> to vector<256x256xf32>
    %83 = arith.mulf %78, %82 : vector<256x256xf32>
    %84 = arith.truncf %83 : vector<256x256xf32> to vector<256x256xbf16>
    %cst_35 = arith.constant dense<0.000000e+00> : vector<256x4xf32>
    %85 = tpu.matmul %84, %72, %cst_35 {dimension_numbers = #tpu.dot_dimension_numbers<[1], [0], [0], [1], [0, 0, 1, 1], [], []>} : vector<256x256xbf16>, vector<256x4xbf16>, vector<256x4xf32> -> vector<256x4xf32>
    %86 = arith.truncf %85 : vector<256x4xf32> to vector<256x4xbf16>
    %c0_36 = arith.constant 0 : index
    %c1 = arith.constant 1 : index
    %c0_37 = arith.constant 0 : index
    %c0_38 = arith.constant 0 : index
    %87 = vector.load %arg8[%c0_36, %c1, %c0_37, %c0_38] : memref<1x8x4x32xbf16, #tpu.memory_space<vmem>>, vector<1x1x4x32xbf16>
    %88 = vector.shape_cast %87 : vector<1x1x4x32xbf16> to vector<4x32xbf16>
    %cst_39 = arith.constant dense<0.000000e+00> : vector<256x32xf32>
    %89 = tpu.matmul %86, %88, %cst_39 {dimension_numbers = #tpu.dot_dimension_numbers<[1], [0], [0], [1], [0, 0, 1, 1], [], []>} : vector<256x4xbf16>, vector<4x32xbf16>, vector<256x32xf32> -> vector<256x32xf32>
    %90 = arith.addf %69, %89 : vector<256x32xf32>
    %91 = vector.extract_strided_slice %41 {offsets = [0, 8], sizes = [256, 4], strides = [1, 1]} : vector<256x32xbf16> to vector<256x4xbf16>
    %92 = vector.extract_strided_slice %45 {offsets = [0, 8], sizes = [256, 4], strides = [1, 1]} : vector<256x32xbf16> to vector<256x4xbf16>
    %93 = vector.extract_strided_slice %47 {offsets = [0, 8], sizes = [256, 4], strides = [1, 1]} : vector<256x32xbf16> to vector<256x4xbf16>
    %cst_40 = arith.constant dense<0.000000e+00> : vector<256x256xf32>
    %94 = tpu.matmul %91, %92, %cst_40 {dimension_numbers = #tpu.dot_dimension_numbers<[1], [1], [0], [0], [0, 0, 1, 0], [], []>} : vector<256x4xbf16>, vector<256x4xbf16>, vector<256x256xf32> -> vector<256x256xf32>
    %cst_41 = arith.constant dense<0xFF800000> : vector<256xf32>
    %95 = vector.multi_reduction <maximumf>, %94, %cst_41 [1] : vector<256x256xf32> to vector<256xf32>
    %96 = vector.shape_cast %95 : vector<256xf32> to vector<256x1xf32>
    %97 = vector.broadcast %96 : vector<256x1xf32> to vector<256x256xf32>
    %98 = arith.subf %94, %97 : vector<256x256xf32>
    %99 = math.exp %98 : vector<256x256xf32>
    %cst_42 = arith.constant dense<0.000000e+00> : vector<256xf32>
    %100 = vector.multi_reduction <add>, %99, %cst_42 [1] : vector<256x256xf32> to vector<256xf32>
    %101 = vector.shape_cast %100 : vector<256xf32> to vector<256x1xf32>
    %102 = tpu.reciprocal %101 {approx = true} : vector<256x1xf32> -> vector<256x1xf32>
    %103 = vector.broadcast %102 : vector<256x1xf32> to vector<256x256xf32>
    %104 = arith.mulf %99, %103 : vector<256x256xf32>
    %105 = arith.truncf %104 : vector<256x256xf32> to vector<256x256xbf16>
    %cst_43 = arith.constant dense<0.000000e+00> : vector<256x4xf32>
    %106 = tpu.matmul %105, %93, %cst_43 {dimension_numbers = #tpu.dot_dimension_numbers<[1], [0], [0], [1], [0, 0, 1, 1], [], []>} : vector<256x256xbf16>, vector<256x4xbf16>, vector<256x4xf32> -> vector<256x4xf32>
    %107 = arith.truncf %106 : vector<256x4xf32> to vector<256x4xbf16>
    %c0_44 = arith.constant 0 : index
    %c2 = arith.constant 2 : index
    %c0_45 = arith.constant 0 : index
    %c0_46 = arith.constant 0 : index
    %108 = vector.load %arg8[%c0_44, %c2, %c0_45, %c0_46] : memref<1x8x4x32xbf16, #tpu.memory_space<vmem>>, vector<1x1x4x32xbf16>
    %109 = vector.shape_cast %108 : vector<1x1x4x32xbf16> to vector<4x32xbf16>
    %cst_47 = arith.constant dense<0.000000e+00> : vector<256x32xf32>
    %110 = tpu.matmul %107, %109, %cst_47 {dimension_numbers = #tpu.dot_dimension_numbers<[1], [0], [0], [1], [0, 0, 1, 1], [], []>} : vector<256x4xbf16>, vector<4x32xbf16>, vector<256x32xf32> -> vector<256x32xf32>
    %111 = arith.addf %90, %110 : vector<256x32xf32>
    %112 = vector.extract_strided_slice %41 {offsets = [0, 12], sizes = [256, 4], strides = [1, 1]} : vector<256x32xbf16> to vector<256x4xbf16>
    %113 = vector.extract_strided_slice %45 {offsets = [0, 12], sizes = [256, 4], strides = [1, 1]} : vector<256x32xbf16> to vector<256x4xbf16>
    %114 = vector.extract_strided_slice %47 {offsets = [0, 12], sizes = [256, 4], strides = [1, 1]} : vector<256x32xbf16> to vector<256x4xbf16>
    %cst_48 = arith.constant dense<0.000000e+00> : vector<256x256xf32>
    %115 = tpu.matmul %112, %113, %cst_48 {dimension_numbers = #tpu.dot_dimension_numbers<[1], [1], [0], [0], [0, 0, 1, 0], [], []>} : vector<256x4xbf16>, vector<256x4xbf16>, vector<256x256xf32> -> vector<256x256xf32>
    %cst_49 = arith.constant dense<0xFF800000> : vector<256xf32>
    %116 = vector.multi_reduction <maximumf>, %115, %cst_49 [1] : vector<256x256xf32> to vector<256xf32>
    %117 = vector.shape_cast %116 : vector<256xf32> to vector<256x1xf32>
    %118 = vector.broadcast %117 : vector<256x1xf32> to vector<256x256xf32>
    %119 = arith.subf %115, %118 : vector<256x256xf32>
    %120 = math.exp %119 : vector<256x256xf32>
    %cst_50 = arith.constant dense<0.000000e+00> : vector<256xf32>
    %121 = vector.multi_reduction <add>, %120, %cst_50 [1] : vector<256x256xf32> to vector<256xf32>
    %122 = vector.shape_cast %121 : vector<256xf32> to vector<256x1xf32>
    %123 = tpu.reciprocal %122 {approx = true} : vector<256x1xf32> -> vector<256x1xf32>
    %124 = vector.broadcast %123 : vector<256x1xf32> to vector<256x256xf32>
    %125 = arith.mulf %120, %124 : vector<256x256xf32>
    %126 = arith.truncf %125 : vector<256x256xf32> to vector<256x256xbf16>
    %cst_51 = arith.constant dense<0.000000e+00> : vector<256x4xf32>
    %127 = tpu.matmul %126, %114, %cst_51 {dimension_numbers = #tpu.dot_dimension_numbers<[1], [0], [0], [1], [0, 0, 1, 1], [], []>} : vector<256x256xbf16>, vector<256x4xbf16>, vector<256x4xf32> -> vector<256x4xf32>
    %128 = arith.truncf %127 : vector<256x4xf32> to vector<256x4xbf16>
    %c0_52 = arith.constant 0 : index
    %c3 = arith.constant 3 : index
    %c0_53 = arith.constant 0 : index
    %c0_54 = arith.constant 0 : index
    %129 = vector.load %arg8[%c0_52, %c3, %c0_53, %c0_54] : memref<1x8x4x32xbf16, #tpu.memory_space<vmem>>, vector<1x1x4x32xbf16>
    %130 = vector.shape_cast %129 : vector<1x1x4x32xbf16> to vector<4x32xbf16>
    %cst_55 = arith.constant dense<0.000000e+00> : vector<256x32xf32>
    %131 = tpu.matmul %128, %130, %cst_55 {dimension_numbers = #tpu.dot_dimension_numbers<[1], [0], [0], [1], [0, 0, 1, 1], [], []>} : vector<256x4xbf16>, vector<4x32xbf16>, vector<256x32xf32> -> vector<256x32xf32>
    %132 = arith.addf %111, %131 : vector<256x32xf32>
    %133 = vector.extract_strided_slice %41 {offsets = [0, 16], sizes = [256, 4], strides = [1, 1]} : vector<256x32xbf16> to vector<256x4xbf16>
    %134 = vector.extract_strided_slice %45 {offsets = [0, 16], sizes = [256, 4], strides = [1, 1]} : vector<256x32xbf16> to vector<256x4xbf16>
    %135 = vector.extract_strided_slice %47 {offsets = [0, 16], sizes = [256, 4], strides = [1, 1]} : vector<256x32xbf16> to vector<256x4xbf16>
    %cst_56 = arith.constant dense<0.000000e+00> : vector<256x256xf32>
    %136 = tpu.matmul %133, %134, %cst_56 {dimension_numbers = #tpu.dot_dimension_numbers<[1], [1], [0], [0], [0, 0, 1, 0], [], []>} : vector<256x4xbf16>, vector<256x4xbf16>, vector<256x256xf32> -> vector<256x256xf32>
    %cst_57 = arith.constant dense<0xFF800000> : vector<256xf32>
    %137 = vector.multi_reduction <maximumf>, %136, %cst_57 [1] : vector<256x256xf32> to vector<256xf32>
    %138 = vector.shape_cast %137 : vector<256xf32> to vector<256x1xf32>
    %139 = vector.broadcast %138 : vector<256x1xf32> to vector<256x256xf32>
    %140 = arith.subf %136, %139 : vector<256x256xf32>
    %141 = math.exp %140 : vector<256x256xf32>
    %cst_58 = arith.constant dense<0.000000e+00> : vector<256xf32>
    %142 = vector.multi_reduction <add>, %141, %cst_58 [1] : vector<256x256xf32> to vector<256xf32>
    %143 = vector.shape_cast %142 : vector<256xf32> to vector<256x1xf32>
    %144 = tpu.reciprocal %143 {approx = true} : vector<256x1xf32> -> vector<256x1xf32>
    %145 = vector.broadcast %144 : vector<256x1xf32> to vector<256x256xf32>
    %146 = arith.mulf %141, %145 : vector<256x256xf32>
    %147 = arith.truncf %146 : vector<256x256xf32> to vector<256x256xbf16>
    %cst_59 = arith.constant dense<0.000000e+00> : vector<256x4xf32>
    %148 = tpu.matmul %147, %135, %cst_59 {dimension_numbers = #tpu.dot_dimension_numbers<[1], [0], [0], [1], [0, 0, 1, 1], [], []>} : vector<256x256xbf16>, vector<256x4xbf16>, vector<256x4xf32> -> vector<256x4xf32>
    %149 = arith.truncf %148 : vector<256x4xf32> to vector<256x4xbf16>
    %c0_60 = arith.constant 0 : index
    %c4 = arith.constant 4 : index
    %c0_61 = arith.constant 0 : index
    %c0_62 = arith.constant 0 : index
    %150 = vector.load %arg8[%c0_60, %c4, %c0_61, %c0_62] : memref<1x8x4x32xbf16, #tpu.memory_space<vmem>>, vector<1x1x4x32xbf16>
    %151 = vector.shape_cast %150 : vector<1x1x4x32xbf16> to vector<4x32xbf16>
    %cst_63 = arith.constant dense<0.000000e+00> : vector<256x32xf32>
    %152 = tpu.matmul %149, %151, %cst_63 {dimension_numbers = #tpu.dot_dimension_numbers<[1], [0], [0], [1], [0, 0, 1, 1], [], []>} : vector<256x4xbf16>, vector<4x32xbf16>, vector<256x32xf32> -> vector<256x32xf32>
    %153 = arith.addf %132, %152 : vector<256x32xf32>
    %154 = vector.extract_strided_slice %41 {offsets = [0, 20], sizes = [256, 4], strides = [1, 1]} : vector<256x32xbf16> to vector<256x4xbf16>
    %155 = vector.extract_strided_slice %45 {offsets = [0, 20], sizes = [256, 4], strides = [1, 1]} : vector<256x32xbf16> to vector<256x4xbf16>
    %156 = vector.extract_strided_slice %47 {offsets = [0, 20], sizes = [256, 4], strides = [1, 1]} : vector<256x32xbf16> to vector<256x4xbf16>
    %cst_64 = arith.constant dense<0.000000e+00> : vector<256x256xf32>
    %157 = tpu.matmul %154, %155, %cst_64 {dimension_numbers = #tpu.dot_dimension_numbers<[1], [1], [0], [0], [0, 0, 1, 0], [], []>} : vector<256x4xbf16>, vector<256x4xbf16>, vector<256x256xf32> -> vector<256x256xf32>
    %cst_65 = arith.constant dense<0xFF800000> : vector<256xf32>
    %158 = vector.multi_reduction <maximumf>, %157, %cst_65 [1] : vector<256x256xf32> to vector<256xf32>
    %159 = vector.shape_cast %158 : vector<256xf32> to vector<256x1xf32>
    %160 = vector.broadcast %159 : vector<256x1xf32> to vector<256x256xf32>
    %161 = arith.subf %157, %160 : vector<256x256xf32>
    %162 = math.exp %161 : vector<256x256xf32>
    %cst_66 = arith.constant dense<0.000000e+00> : vector<256xf32>
    %163 = vector.multi_reduction <add>, %162, %cst_66 [1] : vector<256x256xf32> to vector<256xf32>
    %164 = vector.shape_cast %163 : vector<256xf32> to vector<256x1xf32>
    %165 = tpu.reciprocal %164 {approx = true} : vector<256x1xf32> -> vector<256x1xf32>
    %166 = vector.broadcast %165 : vector<256x1xf32> to vector<256x256xf32>
    %167 = arith.mulf %162, %166 : vector<256x256xf32>
    %168 = arith.truncf %167 : vector<256x256xf32> to vector<256x256xbf16>
    %cst_67 = arith.constant dense<0.000000e+00> : vector<256x4xf32>
    %169 = tpu.matmul %168, %156, %cst_67 {dimension_numbers = #tpu.dot_dimension_numbers<[1], [0], [0], [1], [0, 0, 1, 1], [], []>} : vector<256x256xbf16>, vector<256x4xbf16>, vector<256x4xf32> -> vector<256x4xf32>
    %170 = arith.truncf %169 : vector<256x4xf32> to vector<256x4xbf16>
    %c0_68 = arith.constant 0 : index
    %c5 = arith.constant 5 : index
    %c0_69 = arith.constant 0 : index
    %c0_70 = arith.constant 0 : index
    %171 = vector.load %arg8[%c0_68, %c5, %c0_69, %c0_70] : memref<1x8x4x32xbf16, #tpu.memory_space<vmem>>, vector<1x1x4x32xbf16>
    %172 = vector.shape_cast %171 : vector<1x1x4x32xbf16> to vector<4x32xbf16>
    %cst_71 = arith.constant dense<0.000000e+00> : vector<256x32xf32>
    %173 = tpu.matmul %170, %172, %cst_71 {dimension_numbers = #tpu.dot_dimension_numbers<[1], [0], [0], [1], [0, 0, 1, 1], [], []>} : vector<256x4xbf16>, vector<4x32xbf16>, vector<256x32xf32> -> vector<256x32xf32>
    %174 = arith.addf %153, %173 : vector<256x32xf32>
    %175 = vector.extract_strided_slice %41 {offsets = [0, 24], sizes = [256, 4], strides = [1, 1]} : vector<256x32xbf16> to vector<256x4xbf16>
    %176 = vector.extract_strided_slice %45 {offsets = [0, 24], sizes = [256, 4], strides = [1, 1]} : vector<256x32xbf16> to vector<256x4xbf16>
    %177 = vector.extract_strided_slice %47 {offsets = [0, 24], sizes = [256, 4], strides = [1, 1]} : vector<256x32xbf16> to vector<256x4xbf16>
    %cst_72 = arith.constant dense<0.000000e+00> : vector<256x256xf32>
    %178 = tpu.matmul %175, %176, %cst_72 {dimension_numbers = #tpu.dot_dimension_numbers<[1], [1], [0], [0], [0, 0, 1, 0], [], []>} : vector<256x4xbf16>, vector<256x4xbf16>, vector<256x256xf32> -> vector<256x256xf32>
    %cst_73 = arith.constant dense<0xFF800000> : vector<256xf32>
    %179 = vector.multi_reduction <maximumf>, %178, %cst_73 [1] : vector<256x256xf32> to vector<256xf32>
    %180 = vector.shape_cast %179 : vector<256xf32> to vector<256x1xf32>
    %181 = vector.broadcast %180 : vector<256x1xf32> to vector<256x256xf32>
    %182 = arith.subf %178, %181 : vector<256x256xf32>
    %183 = math.exp %182 : vector<256x256xf32>
    %cst_74 = arith.constant dense<0.000000e+00> : vector<256xf32>
    %184 = vector.multi_reduction <add>, %183, %cst_74 [1] : vector<256x256xf32> to vector<256xf32>
    %185 = vector.shape_cast %184 : vector<256xf32> to vector<256x1xf32>
    %186 = tpu.reciprocal %185 {approx = true} : vector<256x1xf32> -> vector<256x1xf32>
    %187 = vector.broadcast %186 : vector<256x1xf32> to vector<256x256xf32>
    %188 = arith.mulf %183, %187 : vector<256x256xf32>
    %189 = arith.truncf %188 : vector<256x256xf32> to vector<256x256xbf16>
    %cst_75 = arith.constant dense<0.000000e+00> : vector<256x4xf32>
    %190 = tpu.matmul %189, %177, %cst_75 {dimension_numbers = #tpu.dot_dimension_numbers<[1], [0], [0], [1], [0, 0, 1, 1], [], []>} : vector<256x256xbf16>, vector<256x4xbf16>, vector<256x4xf32> -> vector<256x4xf32>
    %191 = arith.truncf %190 : vector<256x4xf32> to vector<256x4xbf16>
    %c0_76 = arith.constant 0 : index
    %c6 = arith.constant 6 : index
    %c0_77 = arith.constant 0 : index
    %c0_78 = arith.constant 0 : index
    %192 = vector.load %arg8[%c0_76, %c6, %c0_77, %c0_78] : memref<1x8x4x32xbf16, #tpu.memory_space<vmem>>, vector<1x1x4x32xbf16>
    %193 = vector.shape_cast %192 : vector<1x1x4x32xbf16> to vector<4x32xbf16>
    %cst_79 = arith.constant dense<0.000000e+00> : vector<256x32xf32>
    %194 = tpu.matmul %191, %193, %cst_79 {dimension_numbers = #tpu.dot_dimension_numbers<[1], [0], [0], [1], [0, 0, 1, 1], [], []>} : vector<256x4xbf16>, vector<4x32xbf16>, vector<256x32xf32> -> vector<256x32xf32>
    %195 = arith.addf %174, %194 : vector<256x32xf32>
    %196 = vector.extract_strided_slice %41 {offsets = [0, 28], sizes = [256, 4], strides = [1, 1]} : vector<256x32xbf16> to vector<256x4xbf16>
    %197 = vector.extract_strided_slice %45 {offsets = [0, 28], sizes = [256, 4], strides = [1, 1]} : vector<256x32xbf16> to vector<256x4xbf16>
    %198 = vector.extract_strided_slice %47 {offsets = [0, 28], sizes = [256, 4], strides = [1, 1]} : vector<256x32xbf16> to vector<256x4xbf16>
    %cst_80 = arith.constant dense<0.000000e+00> : vector<256x256xf32>
    %199 = tpu.matmul %196, %197, %cst_80 {dimension_numbers = #tpu.dot_dimension_numbers<[1], [1], [0], [0], [0, 0, 1, 0], [], []>} : vector<256x4xbf16>, vector<256x4xbf16>, vector<256x256xf32> -> vector<256x256xf32>
    %cst_81 = arith.constant dense<0xFF800000> : vector<256xf32>
    %200 = vector.multi_reduction <maximumf>, %199, %cst_81 [1] : vector<256x256xf32> to vector<256xf32>
    %201 = vector.shape_cast %200 : vector<256xf32> to vector<256x1xf32>
    %202 = vector.broadcast %201 : vector<256x1xf32> to vector<256x256xf32>
    %203 = arith.subf %199, %202 : vector<256x256xf32>
    %204 = math.exp %203 : vector<256x256xf32>
    %cst_82 = arith.constant dense<0.000000e+00> : vector<256xf32>
    %205 = vector.multi_reduction <add>, %204, %cst_82 [1] : vector<256x256xf32> to vector<256xf32>
    %206 = vector.shape_cast %205 : vector<256xf32> to vector<256x1xf32>
    %207 = tpu.reciprocal %206 {approx = true} : vector<256x1xf32> -> vector<256x1xf32>
    %208 = vector.broadcast %207 : vector<256x1xf32> to vector<256x256xf32>
    %209 = arith.mulf %204, %208 : vector<256x256xf32>
    %210 = arith.truncf %209 : vector<256x256xf32> to vector<256x256xbf16>
    %cst_83 = arith.constant dense<0.000000e+00> : vector<256x4xf32>
    %211 = tpu.matmul %210, %198, %cst_83 {dimension_numbers = #tpu.dot_dimension_numbers<[1], [0], [0], [1], [0, 0, 1, 1], [], []>} : vector<256x256xbf16>, vector<256x4xbf16>, vector<256x4xf32> -> vector<256x4xf32>
    %212 = arith.truncf %211 : vector<256x4xf32> to vector<256x4xbf16>
    %c0_84 = arith.constant 0 : index
    %c7 = arith.constant 7 : index
    %c0_85 = arith.constant 0 : index
    %c0_86 = arith.constant 0 : index
    %213 = vector.load %arg8[%c0_84, %c7, %c0_85, %c0_86] : memref<1x8x4x32xbf16, #tpu.memory_space<vmem>>, vector<1x1x4x32xbf16>
    %214 = vector.shape_cast %213 : vector<1x1x4x32xbf16> to vector<4x32xbf16>
    %cst_87 = arith.constant dense<0.000000e+00> : vector<256x32xf32>
    %215 = tpu.matmul %212, %214, %cst_87 {dimension_numbers = #tpu.dot_dimension_numbers<[1], [0], [0], [1], [0, 0, 1, 1], [], []>} : vector<256x4xbf16>, vector<4x32xbf16>, vector<256x32xf32> -> vector<256x32xf32>
    %216 = arith.addf %195, %215 : vector<256x32xf32>
    %c0_88 = arith.constant 0 : index
    %c0_89 = arith.constant 0 : index
    %c0_90 = arith.constant 0 : index
    %217 = vector.load %arg9[%c0_88, %c0_89, %c0_90] : memref<1x1x32xf32, #tpu.memory_space<vmem>>, vector<1x1x32xf32>
    %218 = vector.shape_cast %217 : vector<1x1x32xf32> to vector<1x32xf32>
    %219 = vector.broadcast %218 : vector<1x32xf32> to vector<256x32xf32>
    %220 = arith.addf %216, %219 : vector<256x32xf32>
    %c0_91 = arith.constant 0 : index
    %c0_92 = arith.constant 0 : index
    %221 = vector.load %arg11[%c0_91, %c0_92] : memref<256x32xf32, #tpu.memory_space<vmem>>, vector<256x32xf32>
    tpu.vector_store %arg11[%c0_91, %c0_92], %220 {strides = array<i32>} : memref<256x32xf32, #tpu.memory_space<vmem>>, vector<256x32xf32>,
    %c1_i32 = arith.constant 1 : i32
    %222 = arith.cmpi eq, %arg1, %c1_i32 : i32
    %223 = arith.extui %222 : i1 to i32
    %c0_i32_93 = arith.constant 0 : i32
    %224 = arith.cmpi ne, %223, %c0_i32_93 : i32
    scf.if %224 {
      %c0_94 = arith.constant 0 : index
      %c0_95 = arith.constant 0 : index
      %c0_96 = arith.constant 0 : index
      %225 = vector.load %arg10[%c0_94, %c0_95, %c0_96] : memref<1x256x32xf32, #tpu.memory_space<vmem>>, vector<1x256x32xf32>
      %226 = vector.shape_cast %225 : vector<1x256x32xf32> to vector<256x32xf32>
      %227 = vector.shape_cast %220 : vector<256x32xf32> to vector<1x256x32xf32>
      tpu.vector_store %arg10[%c0_94, %c0_95, %c0_96], %227 {strides = array<i32>} : memref<1x256x32xf32, #tpu.memory_space<vmem>>, vector<1x256x32xf32>,
    } else {
    }
    return
  }
  func.func @transform_0(%arg0: i32, %arg1: i32) -> (i32, i32, i32) {
    %c0_i32 = arith.constant 0 : i32
    %c0_i32_0 = arith.constant 0 : i32
    %c0_i32_1 = arith.constant 0 : i32
    return %arg0, %c0_i32, %c0_i32_0 : i32, i32, i32
  }
  func.func @transform_1(%arg0: i32, %arg1: i32) -> (i32, i32, i32) {
    %c0_i32 = arith.constant 0 : i32
    %c0_i32_0 = arith.constant 0 : i32
    %c0_i32_1 = arith.constant 0 : i32
    return %arg0, %c0_i32, %c0_i32_0 : i32, i32, i32
  }
  func.func @transform_2(%arg0: i32, %arg1: i32) -> (i32, i32, i32) {
    %c0_i32 = arith.constant 0 : i32
    %c0_i32_0 = arith.constant 0 : i32
    %c0_i32_1 = arith.constant 0 : i32
    return %arg1, %c0_i32, %c0_i32_0 : i32, i32, i32
  }
  func.func @transform_3(%arg0: i32, %arg1: i32) -> (i32, i32, i32) {
    %c0_i32 = arith.constant 0 : i32
    %c0_i32_0 = arith.constant 0 : i32
    %c0_i32_1 = arith.constant 0 : i32
    return %arg1, %c0_i32, %c0_i32_0 : i32, i32, i32
  }
  func.func @transform_4(%arg0: i32, %arg1: i32) -> (i32, i32, i32) {
    %c0_i32 = arith.constant 0 : i32
    %c0_i32_0 = arith.constant 0 : i32
    %c0_i32_1 = arith.constant 0 : i32
    return %arg1, %c0_i32, %c0_i32_0 : i32, i32, i32
  }
  func.func @transform_5(%arg0: i32, %arg1: i32) -> (i32, i32, i32) {
    %c0_i32 = arith.constant 0 : i32
    %c0_i32_0 = arith.constant 0 : i32
    %c0_i32_1 = arith.constant 0 : i32
    return %arg1, %c0_i32, %c0_i32_0 : i32, i32, i32
  }
  func.func @transform_6(%arg0: i32, %arg1: i32) -> (i32, i32, i32, i32) {
    %c0_i32 = arith.constant 0 : i32
    %c0_i32_0 = arith.constant 0 : i32
    %c0_i32_1 = arith.constant 0 : i32
    %c0_i32_2 = arith.constant 0 : i32
    return %arg1, %c0_i32, %c0_i32_0, %c0_i32_1 : i32, i32, i32, i32
  }
  func.func @transform_7(%arg0: i32, %arg1: i32) -> (i32, i32, i32) {
    %c0_i32 = arith.constant 0 : i32
    %c0_i32_0 = arith.constant 0 : i32
    %c0_i32_1 = arith.constant 0 : i32
    return %arg1, %c0_i32, %c0_i32_0 : i32, i32, i32
  }
  func.func @transform_8(%arg0: i32, %arg1: i32) -> (i32, i32, i32) {
    %c0_i32 = arith.constant 0 : i32
    %c0_i32_0 = arith.constant 0 : i32
    %c0_i32_1 = arith.constant 0 : i32
    return %arg0, %c0_i32, %c0_i32_0 : i32, i32, i32
  }
}

</mosaic_0001>

<llo_original>
// kernel: s2b_stage_pallas.1
$region0: #{s2b_stage_pallas.1}
  #allocation0 [shape = 'u32[]', space=smem, size = 0x4, offset = 0x4, fixed_abs, tag = 'smem constant byte address 0x4 - core index']
  #allocation1 [shape = 'u32[144,128]{1,0:T(1,128)}', space=vmem, size = 0x12000, scoped, tag = 'internal scratch']
  #allocation2 [shape = 'f32[256,32]{1,0:T(8,128)}', space=vmem, size = 0x20000, scoped, tag = 'scratch operand']
  %s0 = inlined_call_operand.vmem [shape: f32[2,256,32], index: 0, kind: input, shape index: {}]
  %s1 = inlined_call_operand.vmem [shape: f32[2,256,1], index: 1, kind: input, shape index: {}]
  %s2 = inlined_call_operand.vmem [shape: f32[2,1,32], index: 2, kind: input, shape index: {}]
  %s3 = inlined_call_operand.vmem [shape: f32[2,1,32], index: 3, kind: input, shape index: {}]
  %s4 = inlined_call_operand.vmem [shape: bf16[2,32,96], index: 4, kind: input, shape index: {}]
  %s5 = inlined_call_operand.vmem [shape: f32[2,1,96], index: 5, kind: input, shape index: {}]
  %s6 = inlined_call_operand.vmem [shape: bf16[2,8,4,32], index: 6, kind: input, shape index: {}]
  %s7 = inlined_call_operand.vmem [shape: f32[2,1,32], index: 7, kind: input, shape index: {}]
  %s8 = inlined_call_operand.vmem [shape: f32[2,256,32], index: 8, kind: output, shape index: {}]
  %s9 = sld [smem:[#allocation0]]
  $region73: #{s2b_stage_pallas.1} parent=0
    _
  %s11 = ssub.s32 1, %s9
  %s12 = scalar_select 0, %s11, %s9
  loop: start=0, step=1, limit=6
  $region2: #{s2b_stage_pallas.1} parent=0 // loop_pre_header
    _
  $region3: #{s2b_stage_pallas.1} parent=0 // loop_header
    %s14 = sphi 0, %s18
    %p15 = scmp.ge.s32.totalorder %s14, 6
    %s21 = sphi 0, %s33
    %s22 = sphi 0, %s29
    %s23 = sphi 0, %s21
    %s24 = sphi 0, %s22
    %s25 = sphi 0, %s23
    %s26 = sphi 0, %s24
    %s36 = sphi 0, %s38
    %s39 = sphi 0, %s36
    %s40 = sphi 0, %s39
    %s56 = sphi 0, %s40
    %s62 = sphi 0, %s64
    %s65 = sphi 0, %s62
    %s66 = sphi 0, %s65
    %s82 = sphi 0, %s66
    %s88 = sphi 0, %s90
    %s91 = sphi 0, %s88
    %s92 = sphi 0, %s91
    %s108 = sphi 0, %s92
    %s114 = sphi 0, %s116
    %s117 = sphi 0, %s114
    %s118 = sphi 0, %s117
    %s134 = sphi 0, %s118
    %s140 = sphi 0, %s142
    %s143 = sphi 0, %s140
    %s144 = sphi 0, %s143
    %s160 = sphi 0, %s144
    %s166 = sphi 0, %s168
    %s169 = sphi 0, %s166
    %s170 = sphi 0, %s169
    %s186 = sphi 0, %s170
    %s192 = sphi 0, %s194
    %s195 = sphi 0, %s192
    %s196 = sphi 0, %s195
    %s212 = sphi 0, %s196
    %s218 = sphi 0, %s220
    %s221 = sphi 0, %s218
    %s222 = sphi 0, %s221
    %s238 = sphi 0, %s222
    %s244 = sphi 0, %s246
    %s247 = sphi 0, %s244
    %s248 = sphi 0, %s247
    %s264 = sphi 0, %s248
  $region4: #{s2b_stage_pallas.1} parent=0 // loop_header_branch
    %17 = sbr.rel (%p15) target = $region8
  $region5: #{s2b_stage_pallas.1} parent=0 // loop_body
    %s19 = ssub.s32 %s14, 1
    %s20 = ssub.s32 %s14, 2
    %s27 = sadd.s32 1, %s22
    %p28 = scmp.ge.s32.totalorder %s27, 2
    %s29 = scalar_select %p28, 0, %s27
    %s30 = sadd.s32 1, %s21
    %s31 = scalar_select %p28, %s30, %s21
    %p32 = scmp.ge.s32.totalorder %s31, 2
    %s33 = scalar_select %p32, 0, %s31
    %s34 = ssub.s32 %s21, %s33
    %p35 = scmp.eq.s32.totalorder %s34, 0
    %s37 = sadd.s32 %s36, 1
    %s38 = scalar_select %p35, %s36, %s37
    %p41 = pneg %p35
    %p42 = scmp.eq.s32.totalorder %s14, 3
    %p43 = por %p41, %p42
    %p44 = scmp.ne.s32.totalorder %s36, %s39
    %p45 = scmp.eq.s32.totalorder %s14, 0
    %p46 = por %p44, %p45
    %p47 = scmp.ne.s32.totalorder %s36, %s39
    %p48 = scmp.eq.s32.totalorder %s19, 3
    %p49 = por %p47, %p48
    %p50 = scmp.ne.s32.totalorder %s39, %s40
    %p51 = scmp.eq.s32.totalorder %s19, 0
    %p52 = por %p50, %p51
    %p53 = scmp.ne.s32.totalorder %s39, %s40
    %p54 = scmp.eq.s32.totalorder %s20, 3
    %p55 = por %p53, %p54
    %p57 = scmp.ne.s32.totalorder %s40, %s56
    %p58 = scmp.eq.s32.totalorder %s20, 0
    %p59 = por %p57, %p58
    %s60 = ssub.s32 %s21, %s33
    %p61 = scmp.eq.s32.totalorder %s60, 0
    %s63 = sadd.s32 %s62, 1
    %s64 = scalar_select %p61, %s62, %s63
    %p67 = pneg %p61
    %p68 = scmp.eq.s32.totalorder %s14, 3
    %p69 = por %p67, %p68
    %p70 = scmp.ne.s32.totalorder %s62, %s65
    %p71 = scmp.eq.s32.totalorder %s14, 0
    %p72 = por %p70, %p71
    %p73 = scmp.ne.s32.totalorder %s62, %s65
    %p74 = scmp.eq.s32.totalorder %s19, 3
    %p75 = por %p73, %p74
    %p76 = scmp.ne.s32.totalorder %s65, %s66
    %p77 = scmp.eq.s32.totalorder %s19, 0
    %p78 = por %p76, %p77
    %p79 = scmp.ne.s32.totalorder %s65, %s66
    %p80 = scmp.eq.s32.totalorder %s20, 3
    %p81 = por %p79, %p80
    %p83 = scmp.ne.s32.totalorder %s66, %s82
    %p84 = scmp.eq.s32.totalorder %s20, 0
    %p85 = por %p83, %p84
    %s86 = ssub.s32 %s22, %s29
    %p87 = scmp.eq.s32.totalorder %s86, 0
    %s89 = sadd.s32 %s88, 1
    %s90 = scalar_select %p87, %s88, %s89
    %p93 = pneg %p87
    %p94 = scmp.eq.s32.totalorder %s14, 3
    %p95 = por %p93, %p94
    %p96 = scmp.ne.s32.totalorder %s88, %s91
    %p97 = scmp.eq.s32.totalorder %s14, 0
    %p98 = por %p96, %p97
    %p99 = scmp.ne.s32.totalorder %s88, %s91
    %p100 = scmp.eq.s32.totalorder %s19, 3
    %p101 = por %p99, %p100
    %p102 = scmp.ne.s32.totalorder %s91, %s92
    %p103 = scmp.eq.s32.totalorder %s19, 0
    %p104 = por %p102, %p103
    %p105 = scmp.ne.s32.totalorder %s91, %s92
    %p106 = scmp.eq.s32.totalorder %s20, 3
    %p107 = por %p105, %p106
    %p109 = scmp.ne.s32.totalorder %s92, %s108
    %p110 = scmp.eq.s32.totalorder %s20, 0
    %p111 = por %p109, %p110
    %s112 = ssub.s32 %s22, %s29
    %p113 = scmp.eq.s32.totalorder %s112, 0
    %s115 = sadd.s32 %s114, 1
    %s116 = scalar_select %p113, %s114, %s115
    %p119 = pneg %p113
    %p120 = scmp.eq.s32.totalorder %s14, 3
    %p121 = por %p119, %p120
    %p122 = scmp.ne.s32.totalorder %s114, %s117
    %p123 = scmp.eq.s32.totalorder %s14, 0
    %p124 = por %p122, %p123
    %p125 = scmp.ne.s32.totalorder %s114, %s117
    %p126 = scmp.eq.s32.totalorder %s19, 3
    %p127 = por %p125, %p126
    %p128 = scmp.ne.s32.totalorder %s117, %s118
    %p129 = scmp.eq.s32.totalorder %s19, 0
    %p130 = por %p128, %p129
    %p131 = scmp.ne.s32.totalorder %s117, %s118
    %p132 = scmp.eq.s32.totalorder %s20, 3
    %p133 = por %p131, %p132
    %p135 = scmp.ne.s32.totalorder %s118, %s134
    %p136 = scmp.eq.s32.totalorder %s20, 0
    %p137 = por %p135, %p136
    %s138 = ssub.s32 %s22, %s29
    %p139 = scmp.eq.s32.totalorder %s138, 0
    %s141 = sadd.s32 %s140, 1
    %s142 = scalar_select %p139, %s140, %s141
    %p145 = pneg %p139
    %p146 = scmp.eq.s32.totalorder %s14, 3
    %p147 = por %p145, %p146
    %p148 = scmp.ne.s32.totalorder %s140, %s143
    %p149 = scmp.eq.s32.totalorder %s14, 0
    %p150 = por %p148, %p149
    %p151 = scmp.ne.s32.totalorder %s140, %s143
    %p152 = scmp.eq.s32.totalorder %s19, 3
    %p153 = por %p151, %p152
    %p154 = scmp.ne.s32.totalorder %s143, %s144
    %p155 = scmp.eq.s32.totalorder %s19, 0
    %p156 = por %p154, %p155
    %p157 = scmp.ne.s32.totalorder %s143, %s144
    %p158 = scmp.eq.s32.totalorder %s20, 3
    %p159 = por %p157, %p158
    %p161 = scmp.ne.s32.totalorder %s144, %s160
    %p162 = scmp.eq.s32.totalorder %s20, 0
    %p163 = por %p161, %p162
    %s164 = ssub.s32 %s22, %s29
    %p165 = scmp.eq.s32.totalorder %s164, 0
    %s167 = sadd.s32 %s166, 1
    %s168 = scalar_select %p165, %s166, %s167
    %p171 = pneg %p165
    %p172 = scmp.eq.s32.totalorder %s14, 3
    %p173 = por %p171, %p172
    %p174 = scmp.ne.s32.totalorder %s166, %s169
    %p175 = scmp.eq.s32.totalorder %s14, 0
    %p176 = por %p174, %p175
    %p177 = scmp.ne.s32.totalorder %s166, %s169
    %p178 = scmp.eq.s32.totalorder %s19, 3
    %p179 = por %p177, %p178
    %p180 = scmp.ne.s32.totalorder %s169, %s170
    %p181 = scmp.eq.s32.totalorder %s19, 0
    %p182 = por %p180, %p181
    %p183 = scmp.ne.s32.totalorder %s169, %s170
    %p184 = scmp.eq.s32.totalorder %s20, 3
    %p185 = por %p183, %p184
    %p187 = scmp.ne.s32.totalorder %s170, %s186
    %p188 = scmp.eq.s32.totalorder %s20, 0
    %p189 = por %p187, %p188
    %s190 = ssub.s32 %s22, %s29
    %p191 = scmp.eq.s32.totalorder %s190, 0
    %s193 = sadd.s32 %s192, 1
    %s194 = scalar_select %p191, %s192, %s193
    %p197 = pneg %p191
    %p198 = scmp.eq.s32.totalorder %s14, 3
    %p199 = por %p197, %p198
    %p200 = scmp.ne.s32.totalorder %s192, %s195
    %p201 = scmp.eq.s32.totalorder %s14, 0
    %p202 = por %p200, %p201
    %p203 = scmp.ne.s32.totalorder %s192, %s195
    %p204 = scmp.eq.s32.totalorder %s19, 3
    %p205 = por %p203, %p204
    %p206 = scmp.ne.s32.totalorder %s195, %s196
    %p207 = scmp.eq.s32.totalorder %s19, 0
    %p208 = por %p206, %p207
    %p209 = scmp.ne.s32.totalorder %s195, %s196
    %p210 = scmp.eq.s32.totalorder %s20, 3
    %p211 = por %p209, %p210
    %p213 = scmp.ne.s32.totalorder %s196, %s212
    %p214 = scmp.eq.s32.totalorder %s20, 0
    %p215 = por %p213, %p214
    %s216 = ssub.s32 %s22, %s29
    %p217 = scmp.eq.s32.totalorder %s216, 0
    %s219 = sadd.s32 %s218, 1
    %s220 = scalar_select %p217, %s218, %s219
    %p223 = pneg %p217
    %p224 = scmp.eq.s32.totalorder %s14, 3
    %p225 = por %p223, %p224
    %p226 = scmp.ne.s32.totalorder %s218, %s221
    %p227 = scmp.eq.s32.totalorder %s14, 0
    %p228 = por %p226, %p227
    %p229 = scmp.ne.s32.totalorder %s218, %s221
    %p230 = scmp.eq.s32.totalorder %s19, 3
    %p231 = por %p229, %p230
    %p232 = scmp.ne.s32.totalorder %s221, %s222
    %p233 = scmp.eq.s32.totalorder %s19, 0
    %p234 = por %p232, %p233
    %p235 = scmp.ne.s32.totalorder %s221, %s222
    %p236 = scmp.eq.s32.totalorder %s20, 3
    %p237 = por %p235, %p236
    %p239 = scmp.ne.s32.totalorder %s222, %s238
    %p240 = scmp.eq.s32.totalorder %s20, 0
    %p241 = por %p239, %p240
    %s242 = ssub.s32 %s21, %s33
    %p243 = scmp.eq.s32.totalorder %s242, 0
    %s245 = sadd.s32 %s244, 1
    %s246 = scalar_select %p243, %s244, %s245
    %p249 = pneg %p243
    %p250 = scmp.eq.s32.totalorder %s14, 3
    %p251 = por %p249, %p250
    %p252 = scmp.ne.s32.totalorder %s244, %s247
    %p253 = scmp.eq.s32.totalorder %s14, 0
    %p254 = por %p252, %p253
    %p255 = scmp.ne.s32.totalorder %s244, %s247
    %p256 = scmp.eq.s32.totalorder %s19, 3
    %p257 = por %p255, %p256
    %p258 = scmp.ne.s32.totalorder %s247, %s248
    %p259 = scmp.eq.s32.totalorder %s19, 0
    %p260 = por %p258, %p259
    %p261 = scmp.ne.s32.totalorder %s247, %s248
    %p262 = scmp.eq.s32.totalorder %s20, 3
    %p263 = por %p261, %p262
    %p265 = scmp.ne.s32.totalorder %s248, %s264
    %p266 = scmp.eq.s32.totalorder %s20, 0
    %p267 = por %p265, %p266
    %p268 = scmp.le.s32.totalorder 1, %s14
    %p269 = scmp.lt.s32.totalorder %s14, 5
    %p270 = pnand %p268, %p269
    %p271 = pneg %p270
    // Predicated region
    $region9: #{s2b_stage_pallas.1} parent=5 // pred_check
      _
    $region10: #{s2b_stage_pallas.1} parent=5 // pred_check_branch
      %273 = sbr.rel (%p270) target = $region12
    $region11: #{s2b_stage_pallas.1} parent=5 // pred_region
      %s274 = ssub.s32 %s14, 1
    $region12: #{s2b_stage_pallas.1} parent=5 // pred_fallthru
      _
    %p275 = scmp.lt.s32.totalorder %s14, 4
    // Predicated region
    $region13: #{s2b_stage_pallas.1} parent=5 // pred_check
      %p276 = pneg %p275
    $region14: #{s2b_stage_pallas.1} parent=5 // pred_check_branch
      %278 = sbr.rel (%p276) target = $region16
    $region15: #{s2b_stage_pallas.1} parent=5 // pred_region
      // Predicated region
      $region17: #{s2b_stage_pallas.1} parent=15 // pred_check
        %p279 = pneg %p46
      $region18: #{s2b_stage_pallas.1} parent=15 // pred_check_branch
        %281 = sbr.rel (%p279) target = $region20
      $region19: #{s2b_stage_pallas.1} parent=15 // pred_region
        %p282 = scmp.lt.s32.totalorder %s21, 1
        %s283 = scalar_select %p282, %s21, 1
        %s284 = smul.addr %s283, 32
        %s285 = smul.addr %s284, 8
        %s286 = scalar_lea.vmem %s0, %s285
      $region20: #{s2b_stage_pallas.1} parent=15 // pred_fallthru
        _
      // Predicated region
      $region21: #{s2b_stage_pallas.1} parent=15 // pred_check
        %p287 = pneg %p72
      $region22: #{s2b_stage_pallas.1} parent=15 // pred_check_branch
        %289 = sbr.rel (%p287) target = $region24
      $region23: #{s2b_stage_pallas.1} parent=15 // pred_region
        %p290 = scmp.lt.s32.totalorder %s21, 1
        %s291 = scalar_select %p290, %s21, 1
        %s292 = smul.addr %s291, 32
        %s293 = smul.addr %s292, 8
        %s294 = scalar_lea.vmem %s1, %s293
      $region24: #{s2b_stage_pallas.1} parent=15 // pred_fallthru
        _
      // Predicated region
      $region25: #{s2b_stage_pallas.1} parent=15 // pred_check
        %p295 = pneg %p98
      $region26: #{s2b_stage_pallas.1} parent=15 // pred_check_branch
        %297 = sbr.rel (%p295) target = $region28
      $region27: #{s2b_stage_pallas.1} parent=15 // pred_region
        %p298 = scmp.lt.s32.totalorder %s22, 1
        %s299 = scalar_select %p298, %s22, 1
        %s300 = scalar_lea.vmem %s2, %s299
      $region28: #{s2b_stage_pallas.1} parent=15 // pred_fallthru
        _
      // Predicated region
      $region29: #{s2b_stage_pallas.1} parent=15 // pred_check
        %p301 = pneg %p124
      $region30: #{s2b_stage_pallas.1} parent=15 // pred_check_branch
        %303 = sbr.rel (%p301) target = $region32
      $region31: #{s2b_stage_pallas.1} parent=15 // pred_region
        %p304 = scmp.lt.s32.totalorder %s22, 1
        %s305 = scalar_select %p304, %s22, 1
        %s306 = scalar_lea.vmem %s3, %s305
      $region32: #{s2b_stage_pallas.1} parent=15 // pred_fallthru
        _
      // Predicated region
      $region33: #{s2b_stage_pallas.1} parent=15 // pred_check
        %p307 = pneg %p150
      $region34: #{s2b_stage_pallas.1} parent=15 // pred_check_branch
        %309 = sbr.rel (%p307) target = $region36
      $region35: #{s2b_stage_pallas.1} parent=15 // pred_region
        %p310 = scmp.lt.s32.totalorder %s22, 1
        %s311 = scalar_select %p310, %s22, 1
        %s312 = smul.addr %s311, 4
        %s313 = smul.addr %s312, 4
        %s314 = scalar_lea.vmem %s4, %s313
      $region36: #{s2b_stage_pallas.1} parent=15 // pred_fallthru
        _
      // Predicated region
      $region37: #{s2b_stage_pallas.1} parent=15 // pred_check
        %p315 = pneg %p176
      $region38: #{s2b_stage_pallas.1} parent=15 // pred_check_branch
        %317 = sbr.rel (%p315) target = $region40
      $region39: #{s2b_stage_pallas.1} parent=15 // pred_region
        %p318 = scmp.lt.s32.totalorder %s22, 1
        %s319 = scalar_select %p318, %s22, 1
        %s320 = scalar_lea.vmem %s5, %s319
      $region40: #{s2b_stage_pallas.1} parent=15 // pred_fallthru
        _
      // Predicated region
      $region41: #{s2b_stage_pallas.1} parent=15 // pred_check
        %p321 = pneg %p202
      $region42: #{s2b_stage_pallas.1} parent=15 // pred_check_branch
        %323 = sbr.rel (%p321) target = $region44
      $region43: #{s2b_stage_pallas.1} parent=15 // pred_region
        %p324 = scmp.lt.s32.totalorder %s22, 1
        %s325 = scalar_select %p324, %s22, 1
        %s326 = smul.addr %s325, 8
        %s327 = smul.addr %s326, 2
        %s328 = scalar_lea.vmem %s6, %s327
      $region44: #{s2b_stage_pallas.1} parent=15 // pred_fallthru
        _
      // Predicated region
      $region45: #{s2b_stage_pallas.1} parent=15 // pred_check
        %p329 = pneg %p228
      $region46: #{s2b_stage_pallas.1} parent=15 // pred_check_branch
        %331 = sbr.rel (%p329) target = $region48
      $region47: #{s2b_stage_pallas.1} parent=15 // pred_region
        %p332 = scmp.lt.s32.totalorder %s22, 1
        %s333 = scalar_select %p332, %s22, 1
        %s334 = scalar_lea.vmem %s7, %s333
      $region48: #{s2b_stage_pallas.1} parent=15 // pred_fallthru
        _
    $region16: #{s2b_stage_pallas.1} parent=5 // pred_fallthru
      _
    %p335 = scmp.le.s32.totalorder 1, %s14
    %p336 = scmp.lt.s32.totalorder %s14, 5
    %p337 = pnand %p335, %p336
    %p338 = pneg %p337
    // Predicated region
    $region49: #{s2b_stage_pallas.1} parent=5 // pred_check
      _
    $region50: #{s2b_stage_pallas.1} parent=5 // pred_check_branch
      %340 = sbr.rel (%p337) target = $region52
    $region51: #{s2b_stage_pallas.1} parent=5 // pred_region
      %s341 = ssub.s32 %s14, 1
      %p342 = scmp.lt.s32.totalorder %s23, 1
      %s343 = scalar_select %p342, %s23, 1
      %s344 = smul.addr %s343, 32
      %s345 = smul.addr %s344, 8
      %s346 = scalar_lea.vmem %s0, %s345
      %p347 = pneg %p52
      %p348 = pneg %p49
      %p349 = scmp.lt.s32.totalorder %s23, 1
      %s350 = scalar_select %p349, %s23, 1
      %s351 = smul.addr %s350, 32
      %s352 = smul.addr %s351, 8
      %s353 = scalar_lea.vmem %s1, %s352
      %p354 = pneg %p78
      %p355 = pneg %p75
      %p356 = scmp.lt.s32.totalorder %s24, 1
      %s357 = scalar_select %p356, %s24, 1
      %s358 = scalar_lea.vmem %s2, %s357
      %p359 = pneg %p104
      %p360 = pneg %p101
      %p361 = scmp.lt.s32.totalorder %s24, 1
      %s362 = scalar_select %p361, %s24, 1
      %s363 = scalar_lea.vmem %s3, %s362
      %p364 = pneg %p130
      %p365 = pneg %p127
      %p366 = scmp.lt.s32.totalorder %s24, 1
      %s367 = scalar_select %p366, %s24, 1
      %s368 = smul.addr %s367, 4
      %s369 = smul.addr %s368, 4
      %s370 = scalar_lea.vmem %s4, %s369
      %p371 = pneg %p156
      %p372 = pneg %p153
      %p373 = scmp.lt.s32.totalorder %s24, 1
      %s374 = scalar_select %p373, %s24, 1
      %s375 = scalar_lea.vmem %s5, %s374
      %p376 = pneg %p182
      %p377 = pneg %p179
      %p378 = scmp.lt.s32.totalorder %s24, 1
      %s379 = scalar_select %p378, %s24, 1
      %s380 = smul.addr %s379, 8
      %s381 = smul.addr %s380, 2
      %s382 = scalar_lea.vmem %s6, %s381
      %p383 = pneg %p208
      %p384 = pneg %p205
      %p385 = scmp.lt.s32.totalorder %s24, 1
      %s386 = scalar_select %p385, %s24, 1
      %s387 = scalar_lea.vmem %s7, %s386
      %p388 = pneg %p234
      %p389 = pneg %p231
      %p390 = pneg %p260
      %p391 = pneg %p257
      %p392 = scmp.lt.s32.totalorder %s23, 1
      %s393 = scalar_select %p392, %s23, 1
      %s394 = smul.addr %s393, 32
      %s395 = smul.addr %s394, 8
      %s396 = scalar_lea.vmem %s8, %s395
      %p397 = scmp.lt.s32.totalorder %s23, 1
      %s398 = scalar_select %p397, %s23, 1
      %s399 = smul.addr %s398, 32
      %s400 = smul.addr %s399, 8
      %s401 = scalar_lea.vmem %s0, %s400
      %p402 = scmp.lt.s32.totalorder %s23, 1
      %s403 = scalar_select %p402, %s23, 1
      %s404 = smul.addr %s403, 32
      %s405 = smul.addr %s404, 8
      %s406 = scalar_lea.vmem %s1, %s405
      %p407 = scmp.lt.s32.totalorder %s24, 1
      %s408 = scalar_select %p407, %s24, 1
      %s409 = scalar_lea.vmem %s2, %s408
      %p410 = scmp.lt.s32.totalorder %s24, 1
      %s411 = scalar_select %p410, %s24, 1
      %s412 = scalar_lea.vmem %s3, %s411
      %p413 = scmp.lt.s32.totalorder %s24, 1
      %s414 = scalar_select %p413, %s24, 1
      %s415 = smul.addr %s414, 4
      %s416 = smul.addr %s415, 4
      %s417 = scalar_lea.vmem %s4, %s416
      %p418 = scmp.lt.s32.totalorder %s24, 1
      %s419 = scalar_select %p418, %s24, 1
      %s420 = scalar_lea.vmem %s5, %s419
      %p421 = scmp.lt.s32.totalorder %s24, 1
      %s422 = scalar_select %p421, %s24, 1
      %s423 = smul.addr %s422, 8
      %s424 = smul.addr %s423, 2
      %s425 = scalar_lea.vmem %s6, %s424
      %p426 = scmp.lt.s32.totalorder %s24, 1
      %s427 = scalar_select %p426, %s24, 1
      %s428 = scalar_lea.vmem %s7, %s427
      %p429 = scmp.lt.s32.totalorder %s23, 1
      %s430 = scalar_select %p429, %s23, 1
      %s431 = smul.addr %s430, 32
      %s432 = smul.addr %s431, 8
      %s433 = scalar_lea.vmem %s8, %s432
      %p435 = scmp.eq.s32.totalorder %s24, 0
      // Predicated region
      $region53: #{s2b_stage_pallas.1} parent=51 // pred_check
        %p436 = pneg %p435
      $region54: #{s2b_stage_pallas.1} parent=51 // pred_check_branch
        %438 = sbr.rel (%p436) target = $region56
      $region55: #{s2b_stage_pallas.1} parent=51 // pred_region
        %v439 = vld [vmem:[%s401] sm:$0xff]
        %v440 = vld [vmem:[%s401 + $0x8] sm:$0xff]
        %v441 = vld [vmem:[%s401 + $0x10] sm:$0xff]
        %v442 = vld [vmem:[%s401 + $0x18] sm:$0xff]
        %v443 = vld [vmem:[%s401 + $0x20] sm:$0xff]
        %v444 = vld [vmem:[%s401 + $0x28] sm:$0xff]
        %v445 = vld [vmem:[%s401 + $0x30] sm:$0xff]
        %v446 = vld [vmem:[%s401 + $0x38] sm:$0xff]
        %v447 = vld [vmem:[%s401 + $0x40] sm:$0xff]
        %v448 = vld [vmem:[%s401 + $0x48] sm:$0xff]
        %v449 = vld [vmem:[%s401 + $0x50] sm:$0xff]
        %v450 = vld [vmem:[%s401 + $0x58] sm:$0xff]
        %v451 = vld [vmem:[%s401 + $0x60] sm:$0xff]
        %v452 = vld [vmem:[%s401 + $0x68] sm:$0xff]
        %v453 = vld [vmem:[%s401 + $0x70] sm:$0xff]
        %v454 = vld [vmem:[%s401 + $0x78] sm:$0xff]
        %v455 = vld [vmem:[%s401 + $0x80] sm:$0xff]
        %v456 = vld [vmem:[%s401 + $0x88] sm:$0xff]
        %v457 = vld [vmem:[%s401 + $0x90] sm:$0xff]
        %v458 = vld [vmem:[%s401 + $0x98] sm:$0xff]
        %v459 = vld [vmem:[%s401 + $0xa0] sm:$0xff]
        %v460 = vld [vmem:[%s401 + $0xa8] sm:$0xff]
        %v461 = vld [vmem:[%s401 + $0xb0] sm:$0xff]
        %v462 = vld [vmem:[%s401 + $0xb8] sm:$0xff]
        %v463 = vld [vmem:[%s401 + $0xc0] sm:$0xff]
        %v464 = vld [vmem:[%s401 + $0xc8] sm:$0xff]
        %v465 = vld [vmem:[%s401 + $0xd0] sm:$0xff]
        %v466 = vld [vmem:[%s401 + $0xd8] sm:$0xff]
        %v467 = vld [vmem:[%s401 + $0xe0] sm:$0xff]
        %v468 = vld [vmem:[%s401 + $0xe8] sm:$0xff]
        %v469 = vld [vmem:[%s401 + $0xf0] sm:$0xff]
        %v470 = vld [vmem:[%s401 + $0xf8] sm:$0xff]
        %vm471 = vcmask 261120
        %472 = vst.msk [vmem:[#allocation2] sm:$0xff] %vm471, %v439
        %473 = vst.msk [vmem:[#allocation2 + $0x8] sm:$0xff] %vm471, %v440
        %474 = vst.msk [vmem:[#allocation2 + $0x10] sm:$0xff] %vm471, %v441
        %475 = vst.msk [vmem:[#allocation2 + $0x18] sm:$0xff] %vm471, %v442
        %476 = vst.msk [vmem:[#allocation2 + $0x20] sm:$0xff] %vm471, %v443
        %477 = vst.msk [vmem:[#allocation2 + $0x28] sm:$0xff] %vm471, %v444
        %478 = vst.msk [vmem:[#allocation2 + $0x30] sm:$0xff] %vm471, %v445
        %479 = vst.msk [vmem:[#allocation2 + $0x38] sm:$0xff] %vm471, %v446
        %480 = vst.msk [vmem:[#allocation2 + $0x40] sm:$0xff] %vm471, %v447
        %481 = vst.msk [vmem:[#allocation2 + $0x48] sm:$0xff] %vm471, %v448
        %482 = vst.msk [vmem:[#allocation2 + $0x50] sm:$0xff] %vm471, %v449
        %483 = vst.msk [vmem:[#allocation2 + $0x58] sm:$0xff] %vm471, %v450
        %484 = vst.msk [vmem:[#allocation2 + $0x60] sm:$0xff] %vm471, %v451
        %485 = vst.msk [vmem:[#allocation2 + $0x68] sm:$0xff] %vm471, %v452
        %486 = vst.msk [vmem:[#allocation2 + $0x70] sm:$0xff] %vm471, %v453
        %487 = vst.msk [vmem:[#allocation2 + $0x78] sm:$0xff] %vm471, %v454
        %488 = vst.msk [vmem:[#allocation2 + $0x80] sm:$0xff] %vm471, %v455
        %489 = vst.msk [vmem:[#allocation2 + $0x88] sm:$0xff] %vm471, %v456
        %490 = vst.msk [vmem:[#allocation2 + $0x90] sm:$0xff] %vm471, %v457
        %491 = vst.msk [vmem:[#allocation2 + $0x98] sm:$0xff] %vm471, %v458
        %492 = vst.msk [vmem:[#allocation2 + $0xa0] sm:$0xff] %vm471, %v459
        %493 = vst.msk [vmem:[#allocation2 + $0xa8] sm:$0xff] %vm471, %v460
        %494 = vst.msk [vmem:[#allocation2 + $0xb0] sm:$0xff] %vm471, %v461
        %495 = vst.msk [vmem:[#allocation2 + $0xb8] sm:$0xff] %vm471, %v462
        %496 = vst.msk [vmem:[#allocation2 + $0xc0] sm:$0xff] %vm471, %v463
        %497 = vst.msk [vmem:[#allocation2 + $0xc8] sm:$0xff] %vm471, %v464
        %498 = vst.msk [vmem:[#allocation2 + $0xd0] sm:$0xff] %vm471, %v465
        %499 = vst.msk [vmem:[#allocation2 + $0xd8] sm:$0xff] %vm471, %v466
        %500 = vst.msk [vmem:[#allocation2 + $0xe0] sm:$0xff] %vm471, %v467
        %501 = vst.msk [vmem:[#allocation2 + $0xe8] sm:$0xff] %vm471, %v468
        %502 = vst.msk [vmem:[#allocation2 + $0xf0] sm:$0xff] %vm471, %v469
        %503 = vst.msk [vmem:[#allocation2 + $0xf8] sm:$0xff] %vm471, %v470
      $region56: #{s2b_stage_pallas.1} parent=51 // pred_fallthru
        _
      %v504 = vld [vmem:[#allocation2] sm:$0xff]
      %v505 = vld [vmem:[#allocation2 + $0x8] sm:$0xff]
      %v506 = vld [vmem:[#allocation2 + $0x10] sm:$0xff]
      %v507 = vld [vmem:[#allocation2 + $0x18] sm:$0xff]
      %v508 = vld [vmem:[#allocation2 + $0x20] sm:$0xff]
      %v509 = vld [vmem:[#allocation2 + $0x28] sm:$0xff]
      %v510 = vld [vmem:[#allocation2 + $0x30] sm:$0xff]
      %v511 = vld [vmem:[#allocation2 + $0x38] sm:$0xff]
      %v512 = vld [vmem:[#allocation2 + $0x40] sm:$0xff]
      %v513 = vld [vmem:[#allocation2 + $0x48] sm:$0xff]
      %v514 = vld [vmem:[#allocation2 + $0x50] sm:$0xff]
      %v515 = vld [vmem:[#allocation2 + $0x58] sm:$0xff]
      %v516 = vld [vmem:[#allocation2 + $0x60] sm:$0xff]
      %v517 = vld [vmem:[#allocation2 + $0x68] sm:$0xff]
      %v518 = vld [vmem:[#allocation2 + $0x70] sm:$0xff]
      %v519 = vld [vmem:[#allocation2 + $0x78] sm:$0xff]
      %v520 = vld [vmem:[#allocation2 + $0x80] sm:$0xff]
      %v521 = vld [vmem:[#allocation2 + $0x88] sm:$0xff]
      %v522 = vld [vmem:[#allocation2 + $0x90] sm:$0xff]
      %v523 = vld [vmem:[#allocation2 + $0x98] sm:$0xff]
      %v524 = vld [vmem:[#allocation2 + $0xa0] sm:$0xff]
      %v525 = vld [vmem:[#allocation2 + $0xa8] sm:$0xff]
      %v526 = vld [vmem:[#allocation2 + $0xb0] sm:$0xff]
      %v527 = vld [vmem:[#allocation2 + $0xb8] sm:$0xff]
      %v528 = vld [vmem:[#allocation2 + $0xc0] sm:$0xff]
      %v529 = vld [vmem:[#allocation2 + $0xc8] sm:$0xff]
      %v530 = vld [vmem:[#allocation2 + $0xd0] sm:$0xff]
      %v531 = vld [vmem:[#allocation2 + $0xd8] sm:$0xff]
      %v532 = vld [vmem:[#allocation2 + $0xe0] sm:$0xff]
      %v533 = vld [vmem:[#allocation2 + $0xe8] sm:$0xff]
      %v534 = vld [vmem:[#allocation2 + $0xf0] sm:$0xff]
      %v535 = vld [vmem:[#allocation2 + $0xf8] sm:$0xff]
      %vm536 = vcmask 261120
      %v537 = vsel %vm536, %v504, 0.0
      %538 = vadd.xlane.f32.xlu0 %v537
      %v539 = vpop.xlane.xlu0 %538
      %v540 = vsel %vm536, %v505, 0.0
      %541 = vadd.xlane.f32.xlu0 %v540
      %v542 = vpop.xlane.xlu0 %541
      %v543 = vsel %vm536, %v506, 0.0
      %544 = vadd.xlane.f32.xlu0 %v543
      %v545 = vpop.xlane.xlu0 %544
      %v546 = vsel %vm536, %v507, 0.0
      %547 = vadd.xlane.f32.xlu0 %v546
      %v548 = vpop.xlane.xlu0 %547
      %v549 = vsel %vm536, %v508, 0.0
      %550 = vadd.xlane.f32.xlu0 %v549
      %v551 = vpop.xlane.xlu0 %550
      %v552 = vsel %vm536, %v509, 0.0
      %553 = vadd.xlane.f32.xlu0 %v552
      %v554 = vpop.xlane.xlu0 %553
      %v555 = vsel %vm536, %v510, 0.0
      %556 = vadd.xlane.f32.xlu0 %v555
      %v557 = vpop.xlane.xlu0 %556
      %v558 = vsel %vm536, %v511, 0.0
      %559 = vadd.xlane.f32.xlu0 %v558
      %v560 = vpop.xlane.xlu0 %559
      %v561 = vsel %vm536, %v512, 0.0
      %562 = vadd.xlane.f32.xlu0 %v561
      %v563 = vpop.xlane.xlu0 %562
      %v564 = vsel %vm536, %v513, 0.0
      %565 = vadd.xlane.f32.xlu0 %v564
      %v566 = vpop.xlane.xlu0 %565
      %v567 = vsel %vm536, %v514, 0.0
      %568 = vadd.xlane.f32.xlu0 %v567
      %v569 = vpop.xlane.xlu0 %568
      %v570 = vsel %vm536, %v515, 0.0
      %571 = vadd.xlane.f32.xlu0 %v570
      %v572 = vpop.xlane.xlu0 %571
      %v573 = vsel %vm536, %v516, 0.0
      %574 = vadd.xlane.f32.xlu0 %v573
      %v575 = vpop.xlane.xlu0 %574
      %v576 = vsel %vm536, %v517, 0.0
      %577 = vadd.xlane.f32.xlu0 %v576
      %v578 = vpop.xlane.xlu0 %577
      %v579 = vsel %vm536, %v518, 0.0
      %580 = vadd.xlane.f32.xlu0 %v579
      %v581 = vpop.xlane.xlu0 %580
      %v582 = vsel %vm536, %v519, 0.0
      %583 = vadd.xlane.f32.xlu0 %v582
      %v584 = vpop.xlane.xlu0 %583
      %v585 = vsel %vm536, %v520, 0.0
      %586 = vadd.xlane.f32.xlu0 %v585
      %v587 = vpop.xlane.xlu0 %586
      %v588 = vsel %vm536, %v521, 0.0
      %589 = vadd.xlane.f32.xlu0 %v588
      %v590 = vpop.xlane.xlu0 %589
      %v591 = vsel %vm536, %v522, 0.0
      %592 = vadd.xlane.f32.xlu0 %v591
      %v593 = vpop.xlane.xlu0 %592
      %v594 = vsel %vm536, %v523, 0.0
      %595 = vadd.xlane.f32.xlu0 %v594
      %v596 = vpop.xlane.xlu0 %595
      %v597 = vsel %vm536, %v524, 0.0
      %598 = vadd.xlane.f32.xlu0 %v597
      %v599 = vpop.xlane.xlu0 %598
      %v600 = vsel %vm536, %v525, 0.0
      %601 = vadd.xlane.f32.xlu0 %v600
      %v602 = vpop.xlane.xlu0 %601
      %v603 = vsel %vm536, %v526, 0.0
      %604 = vadd.xlane.f32.xlu0 %v603
      %v605 = vpop.xlane.xlu0 %604
      %v606 = vsel %vm536, %v527, 0.0
      %607 = vadd.xlane.f32.xlu0 %v606
      %v608 = vpop.xlane.xlu0 %607
      %v609 = vsel %vm536, %v528, 0.0
      %610 = vadd.xlane.f32.xlu0 %v609
      %v611 = vpop.xlane.xlu0 %610
      %v612 = vsel %vm536, %v529, 0.0
      %613 = vadd.xlane.f32.xlu0 %v612
      %v614 = vpop.xlane.xlu0 %613
      %v615 = vsel %vm536, %v530, 0.0
      %616 = vadd.xlane.f32.xlu0 %v615
      %v617 = vpop.xlane.xlu0 %616
      %v618 = vsel %vm536, %v531, 0.0
      %619 = vadd.xlane.f32.xlu0 %v618
      %v620 = vpop.xlane.xlu0 %619
      %v621 = vsel %vm536, %v532, 0.0
      %622 = vadd.xlane.f32.xlu0 %v621
      %v623 = vpop.xlane.xlu0 %622
      %v624 = vsel %vm536, %v533, 0.0
      %625 = vadd.xlane.f32.xlu0 %v624
      %v626 = vpop.xlane.xlu0 %625
      %v627 = vsel %vm536, %v534, 0.0
      %628 = vadd.xlane.f32.xlu0 %v627
      %v629 = vpop.xlane.xlu0 %628
      %v630 = vsel %vm536, %v535, 0.0
      %631 = vadd.xlane.f32.xlu0 %v630
      %v632 = vpop.xlane.xlu0 %631
      %v633 = vrcp.pop 32.0
      %v634 = vmul.f32 %v539, %v633
      %v635 = vmul.f32 %v542, %v633
      %v636 = vmul.f32 %v545, %v633
      %v637 = vmul.f32 %v548, %v633
      %v638 = vmul.f32 %v551, %v633
      %v639 = vmul.f32 %v554, %v633
      %v640 = vmul.f32 %v557, %v633
      %v641 = vmul.f32 %v560, %v633
      %v642 = vmul.f32 %v563, %v633
      %v643 = vmul.f32 %v566, %v633
      %v644 = vmul.f32 %v569, %v633
      %v645 = vmul.f32 %v572, %v633
      %v646 = vmul.f32 %v575, %v633
      %v647 = vmul.f32 %v578, %v633
      %v648 = vmul.f32 %v581, %v633
      %v649 = vmul.f32 %v584, %v633
      %v650 = vmul.f32 %v587, %v633
      %v651 = vmul.f32 %v590, %v633
      %v652 = vmul.f32 %v593, %v633
      %v653 = vmul.f32 %v596, %v633
      %v654 = vmul.f32 %v599, %v633
      %v655 = vmul.f32 %v602, %v633
      %v656 = vmul.f32 %v605, %v633
      %v657 = vmul.f32 %v608, %v633
      %v658 = vmul.f32 %v611, %v633
      %v659 = vmul.f32 %v614, %v633
      %v660 = vmul.f32 %v617, %v633
      %v661 = vmul.f32 %v620, %v633
      %v662 = vmul.f32 %v623, %v633
      %v663 = vmul.f32 %v626, %v633
      %v664 = vmul.f32 %v629, %v633
      %v665 = vmul.f32 %v632, %v633
      %v666 = vsub.f32 %v504, %v634
      %v667 = vsub.f32 %v505, %v635
      %v668 = vsub.f32 %v506, %v636
      %v669 = vsub.f32 %v507, %v637
      %v670 = vsub.f32 %v508, %v638
      %v671 = vsub.f32 %v509, %v639
      %v672 = vsub.f32 %v510, %v640
      %v673 = vsub.f32 %v511, %v641
      %v674 = vsub.f32 %v512, %v642
      %v675 = vsub.f32 %v513, %v643
      %v676 = vsub.f32 %v514, %v644
      %v677 = vsub.f32 %v515, %v645
      %v678 = vsub.f32 %v516, %v646
      %v679 = vsub.f32 %v517, %v647
      %v680 = vsub.f32 %v518, %v648
      %v681 = vsub.f32 %v519, %v649
      %v682 = vsub.f32 %v520, %v650
      %v683 = vsub.f32 %v521, %v651
      %v684 = vsub.f32 %v522, %v652
      %v685 = vsub.f32 %v523, %v653
      %v686 = vsub.f32 %v524, %v654
      %v687 = vsub.f32 %v525, %v655
      %v688 = vsub.f32 %v526, %v656
      %v689 = vsub.f32 %v527, %v657
      %v690 = vsub.f32 %v528, %v658
      %v691 = vsub.f32 %v529, %v659
      %v692 = vsub.f32 %v530, %v660
      %v693 = vsub.f32 %v531, %v661
      %v694 = vsub.f32 %v532, %v662
      %v695 = vsub.f32 %v533, %v663
      %v696 = vsub.f32 %v534, %v664
      %v697 = vsub.f32 %v535, %v665
      %v698 = vmul.f32 %v666, %v666
      %v699 = vmul.f32 %v667, %v667
      %v700 = vmul.f32 %v668, %v668
      %v701 = vmul.f32 %v669, %v669
      %v702 = vmul.f32 %v670, %v670
      %v703 = vmul.f32 %v671, %v671
      %v704 = vmul.f32 %v672, %v672
      %v705 = vmul.f32 %v673, %v673
      %v706 = vmul.f32 %v674, %v674
      %v707 = vmul.f32 %v675, %v675
      %v708 = vmul.f32 %v676, %v676
      %v709 = vmul.f32 %v677, %v677
      %v710 = vmul.f32 %v678, %v678
      %v711 = vmul.f32 %v679, %v679
      %v712 = vmul.f32 %v680, %v680
      %v713 = vmul.f32 %v681, %v681
      %v714 = vmul.f32 %v682, %v682
      %v715 = vmul.f32 %v683, %v683
      %v716 = vmul.f32 %v684, %v684
      %v717 = vmul.f32 %v685, %v685
      %v718 = vmul.f32 %v686, %v686
      %v719 = vmul.f32 %v687, %v687
      %v720 = vmul.f32 %v688, %v688
      %v721 = vmul.f32 %v689, %v689
      %v722 = vmul.f32 %v690, %v690
      %v723 = vmul.f32 %v691, %v691
      %v724 = vmul.f32 %v692, %v692
      %v725 = vmul.f32 %v693, %v693
      %v726 = vmul.f32 %v694, %v694
      %v727 = vmul.f32 %v695, %v695
      %v728 = vmul.f32 %v696, %v696
      %v729 = vmul.f32 %v697, %v697
      %v730 = vsel %vm536, %v698, 0.0
      %731 = vadd.xlane.f32.xlu0 %v730
      %v732 = vpop.xlane.xlu0 %731
      %v733 = vsel %vm536, %v699, 0.0
      %734 = vadd.xlane.f32.xlu0 %v733
      %v735 = vpop.xlane.xlu0 %734
      %v736 = vsel %vm536, %v700, 0.0
      %737 = vadd.xlane.f32.xlu0 %v736
      %v738 = vpop.xlane.xlu0 %737
      %v739 = vsel %vm536, %v701, 0.0
      %740 = vadd.xlane.f32.xlu0 %v739
      %v741 = vpop.xlane.xlu0 %740
      %v742 = vsel %vm536, %v702, 0.0
      %743 = vadd.xlane.f32.xlu0 %v742
      %v744 = vpop.xlane.xlu0 %743
      %v745 = vsel %vm536, %v703, 0.0
      %746 = vadd.xlane.f32.xlu0 %v745
      %v747 = vpop.xlane.xlu0 %746
      %v748 = vsel %vm536, %v704, 0.0
      %749 = vadd.xlane.f32.xlu0 %v748
      %v750 = vpop.xlane.xlu0 %749
      %v751 = vsel %vm536, %v705, 0.0
      %752 = vadd.xlane.f32.xlu0 %v751
      %v753 = vpop.xlane.xlu0 %752
      %v754 = vsel %vm536, %v706, 0.0
      %755 = vadd.xlane.f32.xlu0 %v754
      %v756 = vpop.xlane.xlu0 %755
      %v757 = vsel %vm536, %v707, 0.0
      %758 = vadd.xlane.f32.xlu0 %v757
      %v759 = vpop.xlane.xlu0 %758
      %v760 = vsel %vm536, %v708, 0.0
      %761 = vadd.xlane.f32.xlu0 %v760
      %v762 = vpop.xlane.xlu0 %761
      %v763 = vsel %vm536, %v709, 0.0
      %764 = vadd.xlane.f32.xlu0 %v763
      %v765 = vpop.xlane.xlu0 %764
      %v766 = vsel %vm536, %v710, 0.0
      %767 = vadd.xlane.f32.xlu0 %v766
      %v768 = vpop.xlane.xlu0 %767
      %v769 = vsel %vm536, %v711, 0.0
      %770 = vadd.xlane.f32.xlu0 %v769
      %v771 = vpop.xlane.xlu0 %770
      %v772 = vsel %vm536, %v712, 0.0
      %773 = vadd.xlane.f32.xlu0 %v772
      %v774 = vpop.xlane.xlu0 %773
      %v775 = vsel %vm536, %v713, 0.0
      %776 = vadd.xlane.f32.xlu0 %v775
      %v777 = vpop.xlane.xlu0 %776
      %v778 = vsel %vm536, %v714, 0.0
      %779 = vadd.xlane.f32.xlu0 %v778
      %v780 = vpop.xlane.xlu0 %779
      %v781 = vsel %vm536, %v715, 0.0
      %782 = vadd.xlane.f32.xlu0 %v781
      %v783 = vpop.xlane.xlu0 %782
      %v784 = vsel %vm536, %v716, 0.0
      %785 = vadd.xlane.f32.xlu0 %v784
      %v786 = vpop.xlane.xlu0 %785
      %v787 = vsel %vm536, %v717, 0.0
      %788 = vadd.xlane.f32.xlu0 %v787
      %v789 = vpop.xlane.xlu0 %788
      %v790 = vsel %vm536, %v718, 0.0
      %791 = vadd.xlane.f32.xlu0 %v790
      %v792 = vpop.xlane.xlu0 %791
      %v793 = vsel %vm536, %v719, 0.0
      %794 = vadd.xlane.f32.xlu0 %v793
      %v795 = vpop.xlane.xlu0 %794
      %v796 = vsel %vm536, %v720, 0.0
      %797 = vadd.xlane.f32.xlu0 %v796
      %v798 = vpop.xlane.xlu0 %797
      %v799 = vsel %vm536, %v721, 0.0
      %800 = vadd.xlane.f32.xlu0 %v799
      %v801 = vpop.xlane.xlu0 %800
      %v802 = vsel %vm536, %v722, 0.0
      %803 = vadd.xlane.f32.xlu0 %v802
      %v804 = vpop.xlane.xlu0 %803
      %v805 = vsel %vm536, %v723, 0.0
      %806 = vadd.xlane.f32.xlu0 %v805
      %v807 = vpop.xlane.xlu0 %806
      %v808 = vsel %vm536, %v724, 0.0
      %809 = vadd.xlane.f32.xlu0 %v808
      %v810 = vpop.xlane.xlu0 %809
      %v811 = vsel %vm536, %v725, 0.0
      %812 = vadd.xlane.f32.xlu0 %v811
      %v813 = vpop.xlane.xlu0 %812
      %v814 = vsel %vm536, %v726, 0.0
      %815 = vadd.xlane.f32.xlu0 %v814
      %v816 = vpop.xlane.xlu0 %815
      %v817 = vsel %vm536, %v727, 0.0
      %818 = vadd.xlane.f32.xlu0 %v817
      %v819 = vpop.xlane.xlu0 %818
      %v820 = vsel %vm536, %v728, 0.0
      %821 = vadd.xlane.f32.xlu0 %v820
      %v822 = vpop.xlane.xlu0 %821
      %v823 = vsel %vm536, %v729, 0.0
      %824 = vadd.xlane.f32.xlu0 %v823
      %v825 = vpop.xlane.xlu0 %824
      %v826 = vmul.f32 %v732, %v633
      %v827 = vmul.f32 %v735, %v633
      %v828 = vmul.f32 %v738, %v633
      %v829 = vmul.f32 %v741, %v633
      %v830 = vmul.f32 %v744, %v633
      %v831 = vmul.f32 %v747, %v633
      %v832 = vmul.f32 %v750, %v633
      %v833 = vmul.f32 %v753, %v633
      %v834 = vmul.f32 %v756, %v633
      %v835 = vmul.f32 %v759, %v633
      %v836 = vmul.f32 %v762, %v633
      %v837 = vmul.f32 %v765, %v633
      %v838 = vmul.f32 %v768, %v633
      %v839 = vmul.f32 %v771, %v633
      %v840 = vmul.f32 %v774, %v633
      %v841 = vmul.f32 %v777, %v633
      %v842 = vmul.f32 %v780, %v633
      %v843 = vmul.f32 %v783, %v633
      %v844 = vmul.f32 %v786, %v633
      %v845 = vmul.f32 %v789, %v633
      %v846 = vmul.f32 %v792, %v633
      %v847 = vmul.f32 %v795, %v633
      %v848 = vmul.f32 %v798, %v633
      %v849 = vmul.f32 %v801, %v633
      %v850 = vmul.f32 %v804, %v633
      %v851 = vmul.f32 %v807, %v633
      %v852 = vmul.f32 %v810, %v633
      %v853 = vmul.f32 %v813, %v633
      %v854 = vmul.f32 %v816, %v633
      %v855 = vmul.f32 %v819, %v633
      %v856 = vmul.f32 %v822, %v633
      %v857 = vmul.f32 %v825, %v633
      %v858 = vadd.f32 %v826, 1e-05
      %v859 = vadd.f32 %v827, 1e-05
      %v860 = vadd.f32 %v828, 1e-05
      %v861 = vadd.f32 %v829, 1e-05
      %v862 = vadd.f32 %v830, 1e-05
      %v863 = vadd.f32 %v831, 1e-05
      %v864 = vadd.f32 %v832, 1e-05
      %v865 = vadd.f32 %v833, 1e-05
      %v866 = vadd.f32 %v834, 1e-05
      %v867 = vadd.f32 %v835, 1e-05
      %v868 = vadd.f32 %v836, 1e-05
      %v869 = vadd.f32 %v837, 1e-05
      %v870 = vadd.f32 %v838, 1e-05
      %v871 = vadd.f32 %v839, 1e-05
      %v872 = vadd.f32 %v840, 1e-05
      %v873 = vadd.f32 %v841, 1e-05
      %v874 = vadd.f32 %v842, 1e-05
      %v875 = vadd.f32 %v843, 1e-05
      %v876 = vadd.f32 %v844, 1e-05
      %v877 = vadd.f32 %v845, 1e-05
      %v878 = vadd.f32 %v846, 1e-05
      %v879 = vadd.f32 %v847, 1e-05
      %v880 = vadd.f32 %v848, 1e-05
      %v881 = vadd.f32 %v849, 1e-05
      %v882 = vadd.f32 %v850, 1e-05
      %v883 = vadd.f32 %v851, 1e-05
      %v884 = vadd.f32 %v852, 1e-05
      %v885 = vadd.f32 %v853, 1e-05
      %v886 = vadd.f32 %v854, 1e-05
      %v887 = vadd.f32 %v855, 1e-05
      %v888 = vadd.f32 %v856, 1e-05
      %v889 = vadd.f32 %v857, 1e-05
      %v890 = vrsqrt.pop %v858
      %v891 = vrsqrt.pop %v859
      %v892 = vrsqrt.pop %v860
      %v893 = vrsqrt.pop %v861
      %v894 = vrsqrt.pop %v862
      %v895 = vrsqrt.pop %v863
      %v896 = vrsqrt.pop %v864
      %v897 = vrsqrt.pop %v865
      %v898 = vrsqrt.pop %v866
      %v899 = vrsqrt.pop %v867
      %v900 = vrsqrt.pop %v868
      %v901 = vrsqrt.pop %v869
      %v902 = vrsqrt.pop %v870
      %v903 = vrsqrt.pop %v871
      %v904 = vrsqrt.pop %v872
      %v905 = vrsqrt.pop %v873
      %v906 = vrsqrt.pop %v874
      %v907 = vrsqrt.pop %v875
      %v908 = vrsqrt.pop %v876
      %v909 = vrsqrt.pop %v877
      %v910 = vrsqrt.pop %v878
      %v911 = vrsqrt.pop %v879
      %v912 = vrsqrt.pop %v880
      %v913 = vrsqrt.pop %v881
      %v914 = vrsqrt.pop %v882
      %v915 = vrsqrt.pop %v883
      %v916 = vrsqrt.pop %v884
      %v917 = vrsqrt.pop %v885
      %v918 = vrsqrt.pop %v886
      %v919 = vrsqrt.pop %v887
      %v920 = vrsqrt.pop %v888
      %v921 = vrsqrt.pop %v889
      %v922 = vmul.f32 %v666, %v890
      %v923 = vmul.f32 %v667, %v891
      %v924 = vmul.f32 %v668, %v892
      %v925 = vmul.f32 %v669, %v893
      %v926 = vmul.f32 %v670, %v894
      %v927 = vmul.f32 %v671, %v895
      %v928 = vmul.f32 %v672, %v896
      %v929 = vmul.f32 %v673, %v897
      %v930 = vmul.f32 %v674, %v898
      %v931 = vmul.f32 %v675, %v899
      %v932 = vmul.f32 %v676, %v900
      %v933 = vmul.f32 %v677, %v901
      %v934 = vmul.f32 %v678, %v902
      %v935 = vmul.f32 %v679, %v903
      %v936 = vmul.f32 %v680, %v904
      %v937 = vmul.f32 %v681, %v905
      %v938 = vmul.f32 %v682, %v906
      %v939 = vmul.f32 %v683, %v907
      %v940 = vmul.f32 %v684, %v908
      %v941 = vmul.f32 %v685, %v909
      %v942 = vmul.f32 %v686, %v910
      %v943 = vmul.f32 %v687, %v911
      %v944 = vmul.f32 %v688, %v912
      %v945 = vmul.f32 %v689, %v913
      %v946 = vmul.f32 %v690, %v914
      %v947 = vmul.f32 %v691, %v915
      %v948 = vmul.f32 %v692, %v916
      %v949 = vmul.f32 %v693, %v917
      %v950 = vmul.f32 %v694, %v918
      %v951 = vmul.f32 %v695, %v919
      %v952 = vmul.f32 %v696, %v920
      %v953 = vmul.f32 %v697, %v921
      %v954 = vld [vmem:[%s409] sm:$0x1]
      %v956 = vlaneseq
      %v957 = vshrl.u32 %v956, 7
      %v958 = vsub.s32 0, %v957
      %v959 = vrot.slane %v954, %v958
      %v961 = vmul.f32 %v922, %v959
      %v962 = vmul.f32 %v923, %v959
      %v963 = vmul.f32 %v924, %v959
      %v964 = vmul.f32 %v925, %v959
      %v965 = vmul.f32 %v926, %v959
      %v966 = vmul.f32 %v927, %v959
      %v967 = vmul.f32 %v928, %v959
      %v968 = vmul.f32 %v929, %v959
      %v969 = vmul.f32 %v930, %v959
      %v970 = vmul.f32 %v931, %v959
      %v971 = vmul.f32 %v932, %v959
      %v972 = vmul.f32 %v933, %v959
      %v973 = vmul.f32 %v934, %v959
      %v974 = vmul.f32 %v935, %v959
      %v975 = vmul.f32 %v936, %v959
      %v976 = vmul.f32 %v937, %v959
      %v977 = vmul.f32 %v938, %v959
      %v978 = vmul.f32 %v939, %v959
      %v979 = vmul.f32 %v940, %v959
      %v980 = vmul.f32 %v941, %v959
      %v981 = vmul.f32 %v942, %v959
      %v982 = vmul.f32 %v943, %v959
      %v983 = vmul.f32 %v944, %v959
      %v984 = vmul.f32 %v945, %v959
      %v985 = vmul.f32 %v946, %v959
      %v986 = vmul.f32 %v947, %v959
      %v987 = vmul.f32 %v948, %v959
      %v988 = vmul.f32 %v949, %v959
      %v989 = vmul.f32 %v950, %v959
      %v990 = vmul.f32 %v951, %v959
      %v991 = vmul.f32 %v952, %v959
      %v992 = vmul.f32 %v953, %v959
      %v993 = vld [vmem:[%s412] sm:$0x1]
      %v995 = vlaneseq
      %v996 = vshrl.u32 %v995, 7
      %v997 = vsub.s32 0, %v996
      %v998 = vrot.slane %v993, %v997
      %v1000 = vadd.f32 %v961, %v998
      %v1001 = vadd.f32 %v962, %v998
      %v1002 = vadd.f32 %v963, %v998
      %v1003 = vadd.f32 %v964, %v998
      %v1004 = vadd.f32 %v965, %v998
      %v1005 = vadd.f32 %v966, %v998
      %v1006 = vadd.f32 %v967, %v998
      %v1007 = vadd.f32 %v968, %v998
      %v1008 = vadd.f32 %v969, %v998
      %v1009 = vadd.f32 %v970, %v998
      %v1010 = vadd.f32 %v971, %v998
      %v1011 = vadd.f32 %v972, %v998
      %v1012 = vadd.f32 %v973, %v998
      %v1013 = vadd.f32 %v974, %v998
      %v1014 = vadd.f32 %v975, %v998
      %v1015 = vadd.f32 %v976, %v998
      %v1016 = vadd.f32 %v977, %v998
      %v1017 = vadd.f32 %v978, %v998
      %v1018 = vadd.f32 %v979, %v998
      %v1019 = vadd.f32 %v980, %v998
      %v1020 = vadd.f32 %v981, %v998
      %v1021 = vadd.f32 %v982, %v998
      %v1022 = vadd.f32 %v983, %v998
      %v1023 = vadd.f32 %v984, %v998
      %v1024 = vadd.f32 %v985, %v998
      %v1025 = vadd.f32 %v986, %v998
      %v1026 = vadd.f32 %v987, %v998
      %v1027 = vadd.f32 %v988, %v998
      %v1028 = vadd.f32 %v989, %v998
      %v1029 = vadd.f32 %v990, %v998
      %v1030 = vadd.f32 %v991, %v998
      %v1031 = vadd.f32 %v992, %v998
      %v1032 = vpack.c.bf16 %v1001, %v1000
      %v1033 = vpack.c.bf16 %v1003, %v1002
      %v1034 = vpack.c.bf16 %v1005, %v1004
      %v1035 = vpack.c.bf16 %v1007, %v1006
      %v1036 = vpack.c.bf16 %v1009, %v1008
      %v1037 = vpack.c.bf16 %v1011, %v1010
      %v1038 = vpack.c.bf16 %v1013, %v1012
      %v1039 = vpack.c.bf16 %v1015, %v1014
      %v1040 = vpack.c.bf16 %v1017, %v1016
      %v1041 = vpack.c.bf16 %v1019, %v1018
      %v1042 = vpack.c.bf16 %v1021, %v1020
      %v1043 = vpack.c.bf16 %v1023, %v1022
      %v1044 = vpack.c.bf16 %v1025, %v1024
      %v1045 = vpack.c.bf16 %v1027, %v1026
      %v1046 = vpack.c.bf16 %v1029, %v1028
      %v1047 = vpack.c.bf16 %v1031, %v1030
      %v1048 = vld [vmem:[%s417] sm:$0xf]
      %v1049 = vld [vmem:[%s417 + $0x4] sm:$0xf]
      %v1050 = vld [vmem:[%s417 + $0x8] sm:$0xf]
      %v1051 = vld [vmem:[%s417 + $0xc] sm:$0xf]
      %v1052 = vld [vmem:[%s420] sm:$0x1]
      %v1054 = vlaneseq
      %v1055 = vshrl.u32 %v1054, 7
      %v1056 = vsub.s32 0, %v1055
      %v1057 = vrot.slane %v1052, %v1056
      %v1063 = vunpack.c.l.b16 %v1048
      %v1064 = vunpack.c.l.b16 %v1049
      %v1065 = vunpack.c.l.b16 %v1050
      %v1066 = vunpack.c.l.b16 %v1051
      %v1067 = vpack.c.b16 %v1064, %v1063
      %v1068 = vpack.c.b16 %v1066, %v1065
      %v1072 = vsel %vm536, %v1032, 0
      %v1075 = vsel %vm536, %v1033, 0
      %v1078 = vsel %vm536, %v1034, 0
      %v1081 = vsel %vm536, %v1035, 0
      %v1084 = vsel %vm536, %v1036, 0
      %v1087 = vsel %vm536, %v1037, 0
      %v1090 = vsel %vm536, %v1038, 0
      %v1093 = vsel %vm536, %v1039, 0
      %v1096 = vsel %vm536, %v1040, 0
      %v1099 = vsel %vm536, %v1041, 0
      %v1102 = vsel %vm536, %v1042, 0
      %v1105 = vsel %vm536, %v1043, 0
      %v1108 = vsel %vm536, %v1044, 0
      %v1111 = vsel %vm536, %v1045, 0
      %v1114 = vsel %vm536, %v1046, 0
      %v1117 = vsel %vm536, %v1047, 0
      %1119 = vmatprep.subr.bf16.mxu0 0
      %1120 = vmatpush1.bf16.msra.mxu0 0
      %1121 = vmatprep.subr.bf16.mxu0 0
      %1122 = vmatpush1.bf16.msra.mxu0 0
      %1123 = vmatprep.subr.bf16.mxu0 0
      %1124 = vmatpush1.bf16.msra.mxu0 0
      %1125 = vmatprep.subr.bf16.mxu0 0
      %1126 = vmatpush1.bf16.msra.mxu0 0
      %1127 = vmatprep.subr.bf16.mxu0 0
      %1128 = vmatpush1.bf16.msra.mxu0 0
      %1129 = vmatprep.subr.bf16.mxu0 0
      %1130 = vmatpush1.bf16.msra.mxu0 0
      %1131 = vmatprep.subr.bf16.mxu0 0
      %1132 = vmatpush1.bf16.msra.mxu0 %v1068
      %1133 = vmatprep.subr.bf16.mxu0 0
      %1134 = vmatpush1.bf16.msra.mxu0 %v1067
      %1135 = vmatprep.subr.bf16.mxu0 0
      %1136 = vmatpush2.bf16.msra.mxu0 0
      %1137 = vmatprep.subr.bf16.mxu0 0
      %1138 = vmatpush2.bf16.msra.mxu0 0
      %1139 = vmatprep.subr.bf16.mxu0 0
      %1140 = vmatpush2.bf16.msra.mxu0 0
      %1141 = vmatprep.subr.bf16.mxu0 0
      %1142 = vmatpush2.bf16.msra.mxu0 0
      %1143 = vmatprep.subr.bf16.mxu0 0
      %1144 = vmatpush2.bf16.msra.mxu0 0
      %1145 = vmatprep.subr.bf16.mxu0 0
      %1146 = vmatpush2.bf16.msra.mxu0 0
      %1147 = vmatprep.subr.bf16.mxu0 0
      %1148 = vmatpush2.bf16.msra.mxu0 0
      %1149 = vmatprep.subr.bf16.mxu0 0
      %1150 = vmatpush2.bf16.msra.mxu0 0
      %1151 = vmatprep.mubr.bf16.mxu0 0
      %1152 = vmatmul.mubr.bf16.gmra.mxu0 %v1072
      %v1153 = vpop.f32.mrf.mxu0
      %v1154 = vadd.f32 %v1057, %v1153
      %v1155 = vpop.f32.mrf.mxu0
      %v1156 = vpop.f32.mrf.mxu0
      %v1157 = vadd.f32 %v1057, %v1156
      %v1158 = vpop.f32.mrf.mxu0
      %1159 = vmatprep.mubr.bf16.mxu0 0
      %1160 = vmatmul.mubr.bf16.gmra.mxu0 %v1075
      %v1161 = vpop.f32.mrf.mxu0
      %v1162 = vadd.f32 %v1057, %v1161
      %v1163 = vpop.f32.mrf.mxu0
      %v1164 = vpop.f32.mrf.mxu0
      %v1165 = vadd.f32 %v1057, %v1164
      %v1166 = vpop.f32.mrf.mxu0
      %1167 = vmatprep.mubr.bf16.mxu0 0
      %1168 = vmatmul.mubr.bf16.gmra.mxu0 %v1078
      %v1169 = vpop.f32.mrf.mxu0
      %v1170 = vadd.f32 %v1057, %v1169
      %v1171 = vpop.f32.mrf.mxu0
      %v1172 = vpop.f32.mrf.mxu0
      %v1173 = vadd.f32 %v1057, %v1172
      %v1174 = vpop.f32.mrf.mxu0
      %1175 = vmatprep.mubr.bf16.mxu0 0
      %1176 = vmatmul.mubr.bf16.gmra.mxu0 %v1081
      %v1177 = vpop.f32.mrf.mxu0
      %v1178 = vadd.f32 %v1057, %v1177
      %v1179 = vpop.f32.mrf.mxu0
      %v1180 = vpop.f32.mrf.mxu0
      %v1181 = vadd.f32 %v1057, %v1180
      %v1182 = vpop.f32.mrf.mxu0
      %1183 = vmatprep.mubr.bf16.mxu0 0
      %1184 = vmatmul.mubr.bf16.gmra.mxu0 %v1084
      %v1185 = vpop.f32.mrf.mxu0
      %v1186 = vadd.f32 %v1057, %v1185
      %v1187 = vpop.f32.mrf.mxu0
      %v1188 = vpop.f32.mrf.mxu0
      %v1189 = vadd.f32 %v1057, %v1188
      %v1190 = vpop.f32.mrf.mxu0
      %1191 = vmatprep.mubr.bf16.mxu0 0
      %1192 = vmatmul.mubr.bf16.gmra.mxu0 %v1087
      %v1193 = vpop.f32.mrf.mxu0
      %v1194 = vadd.f32 %v1057, %v1193
      %v1195 = vpop.f32.mrf.mxu0
      %v1196 = vpop.f32.mrf.mxu0
      %v1197 = vadd.f32 %v1057, %v1196
      %v1198 = vpop.f32.mrf.mxu0
      %1199 = vmatprep.mubr.bf16.mxu0 0
      %1200 = vmatmul.mubr.bf16.gmra.mxu0 %v1090
      %v1201 = vpop.f32.mrf.mxu0
      %v1202 = vadd.f32 %v1057, %v1201
      %v1203 = vpop.f32.mrf.mxu0
      %v1204 = vpop.f32.mrf.mxu0
      %v1205 = vadd.f32 %v1057, %v1204
      %v1206 = vpop.f32.mrf.mxu0
      %1207 = vmatprep.mubr.bf16.mxu0 0
      %1208 = vmatmul.mubr.bf16.gmra.mxu0 %v1093
      %v1209 = vpop.f32.mrf.mxu0
      %v1210 = vadd.f32 %v1057, %v1209
      %v1211 = vpop.f32.mrf.mxu0
      %v1212 = vpop.f32.mrf.mxu0
      %v1213 = vadd.f32 %v1057, %v1212
      %v1214 = vpop.f32.mrf.mxu0
      %1215 = vmatprep.mubr.bf16.mxu0 0
      %1216 = vmatmul.mubr.bf16.gmra.mxu0 %v1096
      %v1217 = vpop.f32.mrf.mxu0
      %v1218 = vadd.f32 %v1057, %v1217
      %v1219 = vpop.f32.mrf.mxu0
      %v1220 = vpop.f32.mrf.mxu0
      %v1221 = vadd.f32 %v1057, %v1220
      %v1222 = vpop.f32.mrf.mxu0
      %1223 = vmatprep.mubr.bf16.mxu0 0
      %1224 = vmatmul.mubr.bf16.gmra.mxu0 %v1099
      %v1225 = vpop.f32.mrf.mxu0
      %v1226 = vadd.f32 %v1057, %v1225
      %v1227 = vpop.f32.mrf.mxu0
      %v1228 = vpop.f32.mrf.mxu0
      %v1229 = vadd.f32 %v1057, %v1228
      %v1230 = vpop.f32.mrf.mxu0
      %1231 = vmatprep.mubr.bf16.mxu0 0
      %1232 = vmatmul.mubr.bf16.gmra.mxu0 %v1102
      %v1233 = vpop.f32.mrf.mxu0
      %v1234 = vadd.f32 %v1057, %v1233
      %v1235 = vpop.f32.mrf.mxu0
      %v1236 = vpop.f32.mrf.mxu0
      %v1237 = vadd.f32 %v1057, %v1236
      %v1238 = vpop.f32.mrf.mxu0
      %1239 = vmatprep.mubr.bf16.mxu0 0
      %1240 = vmatmul.mubr.bf16.gmra.mxu0 %v1105
      %v1241 = vpop.f32.mrf.mxu0
      %v1242 = vadd.f32 %v1057, %v1241
      %v1243 = vpop.f32.mrf.mxu0
      %v1244 = vpop.f32.mrf.mxu0
      %v1245 = vadd.f32 %v1057, %v1244
      %v1246 = vpop.f32.mrf.mxu0
      %1247 = vmatprep.mubr.bf16.mxu0 0
      %1248 = vmatmul.mubr.bf16.gmra.mxu0 %v1108
      %v1249 = vpop.f32.mrf.mxu0
      %v1250 = vadd.f32 %v1057, %v1249
      %v1251 = vpop.f32.mrf.mxu0
      %v1252 = vpop.f32.mrf.mxu0
      %v1253 = vadd.f32 %v1057, %v1252
      %v1254 = vpop.f32.mrf.mxu0
      %1255 = vmatprep.mubr.bf16.mxu0 0
      %1256 = vmatmul.mubr.bf16.gmra.mxu0 %v1111
      %v1257 = vpop.f32.mrf.mxu0
      %v1258 = vadd.f32 %v1057, %v1257
      %v1259 = vpop.f32.mrf.mxu0
      %v1260 = vpop.f32.mrf.mxu0
      %v1261 = vadd.f32 %v1057, %v1260
      %v1262 = vpop.f32.mrf.mxu0
      %1263 = vmatprep.mubr.bf16.mxu0 0
      %1264 = vmatmul.mubr.bf16.gmra.mxu0 %v1114
      %v1265 = vpop.f32.mrf.mxu0
      %v1266 = vadd.f32 %v1057, %v1265
      %v1267 = vpop.f32.mrf.mxu0
      %v1268 = vpop.f32.mrf.mxu0
      %v1269 = vadd.f32 %v1057, %v1268
      %v1270 = vpop.f32.mrf.mxu0
      %1271 = vmatprep.mubr.bf16.mxu0 0
      %1272 = vmatmul.mubr.bf16.gmra.mxu0 %v1117
      %v1273 = vpop.f32.mrf.mxu0
      %v1274 = vadd.f32 %v1057, %v1273
      %v1275 = vpop.f32.mrf.mxu0
      %v1276 = vpop.f32.mrf.mxu0
      %v1277 = vadd.f32 %v1057, %v1276
      %v1278 = vpop.f32.mrf.mxu0
      %1279 = vdwg.mxu0
      %v1280 = vld [vmem:[%s406] sm:$0xff]
      %v1281 = vld [vmem:[%s406 + $0x8] sm:$0xff]
      %v1282 = vld [vmem:[%s406 + $0x10] sm:$0xff]
      %v1283 = vld [vmem:[%s406 + $0x18] sm:$0xff]
      %v1284 = vld [vmem:[%s406 + $0x20] sm:$0xff]
      %v1285 = vld [vmem:[%s406 + $0x28] sm:$0xff]
      %v1286 = vld [vmem:[%s406 + $0x30] sm:$0xff]
      %v1287 = vld [vmem:[%s406 + $0x38] sm:$0xff]
      %v1288 = vld [vmem:[%s406 + $0x40] sm:$0xff]
      %v1289 = vld [vmem:[%s406 + $0x48] sm:$0xff]
      %v1290 = vld [vmem:[%s406 + $0x50] sm:$0xff]
      %v1291 = vld [vmem:[%s406 + $0x58] sm:$0xff]
      %v1292 = vld [vmem:[%s406 + $0x60] sm:$0xff]
      %v1293 = vld [vmem:[%s406 + $0x68] sm:$0xff]
      %v1294 = vld [vmem:[%s406 + $0x70] sm:$0xff]
      %v1295 = vld [vmem:[%s406 + $0x78] sm:$0xff]
      %v1296 = vld [vmem:[%s406 + $0x80] sm:$0xff]
      %v1297 = vld [vmem:[%s406 + $0x88] sm:$0xff]
      %v1298 = vld [vmem:[%s406 + $0x90] sm:$0xff]
      %v1299 = vld [vmem:[%s406 + $0x98] sm:$0xff]
      %v1300 = vld [vmem:[%s406 + $0xa0] sm:$0xff]
      %v1301 = vld [vmem:[%s406 + $0xa8] sm:$0xff]
      %v1302 = vld [vmem:[%s406 + $0xb0] sm:$0xff]
      %v1303 = vld [vmem:[%s406 + $0xb8] sm:$0xff]
      %v1304 = vld [vmem:[%s406 + $0xc0] sm:$0xff]
      %v1305 = vld [vmem:[%s406 + $0xc8] sm:$0xff]
      %v1306 = vld [vmem:[%s406 + $0xd0] sm:$0xff]
      %v1307 = vld [vmem:[%s406 + $0xd8] sm:$0xff]
      %v1308 = vld [vmem:[%s406 + $0xe0] sm:$0xff]
      %v1309 = vld [vmem:[%s406 + $0xe8] sm:$0xff]
      %v1310 = vld [vmem:[%s406 + $0xf0] sm:$0xff]
      %v1311 = vld [vmem:[%s406 + $0xf8] sm:$0xff]
      %v1312 = vpack.c.bf16 %v1157, %v1154
      %v1313 = vpack.c.bf16 %v1165, %v1162
      %v1314 = vpack.c.bf16 %v1173, %v1170
      %v1315 = vpack.c.bf16 %v1181, %v1178
      %v1316 = vpack.c.bf16 %v1189, %v1186
      %v1317 = vpack.c.bf16 %v1197, %v1194
      %v1318 = vpack.c.bf16 %v1205, %v1202
      %v1319 = vpack.c.bf16 %v1213, %v1210
      %v1320 = vpack.c.bf16 %v1221, %v1218
      %v1321 = vpack.c.bf16 %v1229, %v1226
      %v1322 = vpack.c.bf16 %v1237, %v1234
      %v1323 = vpack.c.bf16 %v1245, %v1242
      %v1324 = vpack.c.bf16 %v1253, %v1250
      %v1325 = vpack.c.bf16 %v1261, %v1258
      %v1326 = vpack.c.bf16 %v1269, %v1266
      %v1327 = vpack.c.bf16 %v1277, %v1274
      %1329 = vset.pattern.permute.xlu0 0
      %1330 = vperm.xlu0 %1329, %v1280
      %v1331 = vpop.permute.xlu0 %1330
      %1334 = vset.pattern.permute.xlu0 0
      %1335 = vperm.xlu0 %1334, %v1281
      %v1336 = vpop.permute.xlu0 %1335
      %1339 = vset.pattern.permute.xlu0 0
      %1340 = vperm.xlu0 %1339, %v1282
      %v1341 = vpop.permute.xlu0 %1340
      %1344 = vset.pattern.permute.xlu0 0
      %1345 = vperm.xlu0 %1344, %v1283
      %v1346 = vpop.permute.xlu0 %1345
      %1349 = vset.pattern.permute.xlu0 0
      %1350 = vperm.xlu0 %1349, %v1284
      %v1351 = vpop.permute.xlu0 %1350
      %1354 = vset.pattern.permute.xlu0 0
      %1355 = vperm.xlu0 %1354, %v1285
      %v1356 = vpop.permute.xlu0 %1355
      %1359 = vset.pattern.permute.xlu0 0
      %1360 = vperm.xlu0 %1359, %v1286
      %v1361 = vpop.permute.xlu0 %1360
      %1364 = vset.pattern.permute.xlu0 0
      %1365 = vperm.xlu0 %1364, %v1287
      %v1366 = vpop.permute.xlu0 %1365
      %1369 = vset.pattern.permute.xlu0 0
      %1370 = vperm.xlu0 %1369, %v1288
      %v1371 = vpop.permute.xlu0 %1370
      %1374 = vset.pattern.permute.xlu0 0
      %1375 = vperm.xlu0 %1374, %v1289
      %v1376 = vpop.permute.xlu0 %1375
      %1379 = vset.pattern.permute.xlu0 0
      %1380 = vperm.xlu0 %1379, %v1290
      %v1381 = vpop.permute.xlu0 %1380
      %1384 = vset.pattern.permute.xlu0 0
      %1385 = vperm.xlu0 %1384, %v1291
      %v1386 = vpop.permute.xlu0 %1385
      %1389 = vset.pattern.permute.xlu0 0
      %1390 = vperm.xlu0 %1389, %v1292
      %v1391 = vpop.permute.xlu0 %1390
      %1394 = vset.pattern.permute.xlu0 0
      %1395 = vperm.xlu0 %1394, %v1293
      %v1396 = vpop.permute.xlu0 %1395
      %1399 = vset.pattern.permute.xlu0 0
      %1400 = vperm.xlu0 %1399, %v1294
      %v1401 = vpop.permute.xlu0 %1400
      %1404 = vset.pattern.permute.xlu0 0
      %1405 = vperm.xlu0 %1404, %v1295
      %v1406 = vpop.permute.xlu0 %1405
      %1409 = vset.pattern.permute.xlu0 0
      %1410 = vperm.xlu0 %1409, %v1296
      %v1411 = vpop.permute.xlu0 %1410
      %1414 = vset.pattern.permute.xlu0 0
      %1415 = vperm.xlu0 %1414, %v1297
      %v1416 = vpop.permute.xlu0 %1415
      %1419 = vset.pattern.permute.xlu0 0
      %1420 = vperm.xlu0 %1419, %v1298
      %v1421 = vpop.permute.xlu0 %1420
      %1424 = vset.pattern.permute.xlu0 0
      %1425 = vperm.xlu0 %1424, %v1299
      %v1426 = vpop.permute.xlu0 %1425
      %1429 = vset.pattern.permute.xlu0 0
      %1430 = vperm.xlu0 %1429, %v1300
      %v1431 = vpop.permute.xlu0 %1430
      %1434 = vset.pattern.permute.xlu0 0
      %1435 = vperm.xlu0 %1434, %v1301
      %v1436 = vpop.permute.xlu0 %1435
      %1439 = vset.pattern.permute.xlu0 0
      %1440 = vperm.xlu0 %1439, %v1302
      %v1441 = vpop.permute.xlu0 %1440
      %1444 = vset.pattern.permute.xlu0 0
      %1445 = vperm.xlu0 %1444, %v1303
      %v1446 = vpop.permute.xlu0 %1445
      %1449 = vset.pattern.permute.xlu0 0
      %1450 = vperm.xlu0 %1449, %v1304
      %v1451 = vpop.permute.xlu0 %1450
      %1454 = vset.pattern.permute.xlu0 0
      %1455 = vperm.xlu0 %1454, %v1305
      %v1456 = vpop.permute.xlu0 %1455
      %1459 = vset.pattern.permute.xlu0 0
      %1460 = vperm.xlu0 %1459, %v1306
      %v1461 = vpop.permute.xlu0 %1460
      %1464 = vset.pattern.permute.xlu0 0
      %1465 = vperm.xlu0 %1464, %v1307
      %v1466 = vpop.permute.xlu0 %1465
      %1469 = vset.pattern.permute.xlu0 0
      %1470 = vperm.xlu0 %1469, %v1308
      %v1471 = vpop.permute.xlu0 %1470
      %1474 = vset.pattern.permute.xlu0 0
      %1475 = vperm.xlu0 %1474, %v1309
      %v1476 = vpop.permute.xlu0 %1475
      %1479 = vset.pattern.permute.xlu0 0
      %1480 = vperm.xlu0 %1479, %v1310
      %v1481 = vpop.permute.xlu0 %1480
      %1484 = vset.pattern.permute.xlu0 0
      %1485 = vperm.xlu0 %1484, %v1311
      %v1486 = vpop.permute.xlu0 %1485
      %v1488 = vmul.f32 %v1154, %v1331
      %v1489 = vmul.f32 %v1157, %v1336
      %v1490 = vmul.f32 %v1162, %v1341
      %v1491 = vmul.f32 %v1165, %v1346
      %v1492 = vmul.f32 %v1170, %v1351
      %v1493 = vmul.f32 %v1173, %v1356
      %v1494 = vmul.f32 %v1178, %v1361
      %v1495 = vmul.f32 %v1181, %v1366
      %v1496 = vmul.f32 %v1186, %v1371
      %v1497 = vmul.f32 %v1189, %v1376
      %v1498 = vmul.f32 %v1194, %v1381
      %v1499 = vmul.f32 %v1197, %v1386
      %v1500 = vmul.f32 %v1202, %v1391
      %v1501 = vmul.f32 %v1205, %v1396
      %v1502 = vmul.f32 %v1210, %v1401
      %v1503 = vmul.f32 %v1213, %v1406
      %v1504 = vmul.f32 %v1218, %v1411
      %v1505 = vmul.f32 %v1221, %v1416
      %v1506 = vmul.f32 %v1226, %v1421
      %v1507 = vmul.f32 %v1229, %v1426
      %v1508 = vmul.f32 %v1234, %v1431
      %v1509 = vmul.f32 %v1237, %v1436
      %v1510 = vmul.f32 %v1242, %v1441
      %v1511 = vmul.f32 %v1245, %v1446
      %v1512 = vmul.f32 %v1250, %v1451
      %v1513 = vmul.f32 %v1253, %v1456
      %v1514 = vmul.f32 %v1258, %v1461
      %v1515 = vmul.f32 %v1261, %v1466
      %v1516 = vmul.f32 %v1266, %v1471
      %v1517 = vmul.f32 %v1269, %v1476
      %v1518 = vmul.f32 %v1274, %v1481
      %v1519 = vmul.f32 %v1277, %v1486
      %v1520 = vpack.c.bf16 %v1489, %v1488
      %v1521 = vpack.c.bf16 %v1491, %v1490
      %v1522 = vpack.c.bf16 %v1493, %v1492
      %v1523 = vpack.c.bf16 %v1495, %v1494
      %v1524 = vpack.c.bf16 %v1497, %v1496
      %v1525 = vpack.c.bf16 %v1499, %v1498
      %v1526 = vpack.c.bf16 %v1501, %v1500
      %v1527 = vpack.c.bf16 %v1503, %v1502
      %v1528 = vpack.c.bf16 %v1505, %v1504
      %v1529 = vpack.c.bf16 %v1507, %v1506
      %v1530 = vpack.c.bf16 %v1509, %v1508
      %v1531 = vpack.c.bf16 %v1511, %v1510
      %v1532 = vpack.c.bf16 %v1513, %v1512
      %v1533 = vpack.c.bf16 %v1515, %v1514
      %v1534 = vpack.c.bf16 %v1517, %v1516
      %v1535 = vpack.c.bf16 %v1519, %v1518
      %1552 = vrot.lane.b32.xlu0 %v1520, 96
      %v1553 = vpop.permute.xlu0 %1552
      %1554 = vrot.lane.b32.xlu0 %v1521, 96
      %v1555 = vpop.permute.xlu0 %1554
      %1556 = vrot.lane.b32.xlu0 %v1522, 96
      %v1557 = vpop.permute.xlu0 %1556
      %1558 = vrot.lane.b32.xlu0 %v1523, 96
      %v1559 = vpop.permute.xlu0 %1558
      %1560 = vrot.lane.b32.xlu0 %v1524, 96
      %v1561 = vpop.permute.xlu0 %1560
      %1562 = vrot.lane.b32.xlu0 %v1525, 96
      %v1563 = vpop.permute.xlu0 %1562
      %1564 = vrot.lane.b32.xlu0 %v1526, 96
      %v1565 = vpop.permute.xlu0 %1564
      %1566 = vrot.lane.b32.xlu0 %v1527, 96
      %v1567 = vpop.permute.xlu0 %1566
      %1568 = vrot.lane.b32.xlu0 %v1528, 96
      %v1569 = vpop.permute.xlu0 %1568
      %1570 = vrot.lane.b32.xlu0 %v1529, 96
      %v1571 = vpop.permute.xlu0 %1570
      %1572 = vrot.lane.b32.xlu0 %v1530, 96
      %v1573 = vpop.permute.xlu0 %1572
      %1574 = vrot.lane.b32.xlu0 %v1531, 96
      %v1575 = vpop.permute.xlu0 %1574
      %1576 = vrot.lane.b32.xlu0 %v1532, 96
      %v1577 = vpop.permute.xlu0 %1576
      %1578 = vrot.lane.b32.xlu0 %v1533, 96
      %v1579 = vpop.permute.xlu0 %1578
      %1580 = vrot.lane.b32.xlu0 %v1534, 96
      %v1581 = vpop.permute.xlu0 %1580
      %1582 = vrot.lane.b32.xlu0 %v1535, 96
      %v1583 = vpop.permute.xlu0 %1582
      %vm1584 = vcmask 31744
      %v1586 = vsel %vm1584, %v1312, 0
      %v1589 = vsel %vm1584, %v1313, 0
      %v1592 = vsel %vm1584, %v1314, 0
      %v1595 = vsel %vm1584, %v1315, 0
      %v1598 = vsel %vm1584, %v1316, 0
      %v1601 = vsel %vm1584, %v1317, 0
      %v1604 = vsel %vm1584, %v1318, 0
      %v1607 = vsel %vm1584, %v1319, 0
      %v1610 = vsel %vm1584, %v1320, 0
      %v1613 = vsel %vm1584, %v1321, 0
      %v1616 = vsel %vm1584, %v1322, 0
      %v1619 = vsel %vm1584, %v1323, 0
      %v1622 = vsel %vm1584, %v1324, 0
      %v1625 = vsel %vm1584, %v1325, 0
      %v1628 = vsel %vm1584, %v1326, 0
      %v1631 = vsel %vm1584, %v1327, 0
      %v1634 = vsel %vm1584, %v1553, 0
      %v1637 = vsel %vm1584, %v1555, 0
      %v1640 = vsel %vm1584, %v1557, 0
      %v1643 = vsel %vm1584, %v1559, 0
      %v1646 = vsel %vm1584, %v1561, 0
      %v1649 = vsel %vm1584, %v1563, 0
      %v1652 = vsel %vm1584, %v1565, 0
      %v1655 = vsel %vm1584, %v1567, 0
      %v1658 = vsel %vm1584, %v1569, 0
      %v1661 = vsel %vm1584, %v1571, 0
      %v1664 = vsel %vm1584, %v1573, 0
      %v1667 = vsel %vm1584, %v1575, 0
      %v1670 = vsel %vm1584, %v1577, 0
      %v1673 = vsel %vm1584, %v1579, 0
      %v1676 = vsel %vm1584, %v1581, 0
      %v1679 = vsel %vm1584, %v1583, 0
      %1681 = vmatprep.subr.bf16.mxu0 0
      %1682 = vmatpush1.bf16.xpose.msra.mxu0 %v1655
      %1683 = vmatprep.subr.bf16.mxu0 0
      %1684 = vmatpush1.bf16.xpose.msra.mxu0 %v1652
      %1685 = vmatprep.subr.bf16.mxu0 0
      %1686 = vmatpush1.bf16.xpose.msra.mxu0 %v1649
      %1687 = vmatprep.subr.bf16.mxu0 0
      %1688 = vmatpush1.bf16.xpose.msra.mxu0 %v1646
      %1689 = vmatprep.subr.bf16.mxu0 0
      %1690 = vmatpush1.bf16.xpose.msra.mxu0 %v1643
      %1691 = vmatprep.subr.bf16.mxu0 0
      %1692 = vmatpush1.bf16.xpose.msra.mxu0 %v1640
      %1693 = vmatprep.subr.bf16.mxu0 0
      %1694 = vmatpush1.bf16.xpose.msra.mxu0 %v1637
      %1695 = vmatprep.subr.bf16.mxu0 0
      %1696 = vmatpush1.bf16.xpose.msra.mxu0 %v1634
      %1697 = vmatprep.subr.bf16.mxu0 0
      %1698 = vmatpush2.bf16.xpose.msra.mxu0 %v1679
      %1699 = vmatprep.subr.bf16.mxu0 0
      %1700 = vmatpush2.bf16.xpose.msra.mxu0 %v1676
      %1701 = vmatprep.subr.bf16.mxu0 0
      %1702 = vmatpush2.bf16.xpose.msra.mxu0 %v1673
      %1703 = vmatprep.subr.bf16.mxu0 0
      %1704 = vmatpush2.bf16.xpose.msra.mxu0 %v1670
      %1705 = vmatprep.subr.bf16.mxu0 0
      %1706 = vmatpush2.bf16.xpose.msra.mxu0 %v1667
      %1707 = vmatprep.subr.bf16.mxu0 0
      %1708 = vmatpush2.bf16.xpose.msra.mxu0 %v1664
      %1709 = vmatprep.subr.bf16.mxu0 0
      %1710 = vmatpush2.bf16.xpose.msra.mxu0 %v1661
      %1711 = vmatprep.subr.bf16.mxu0 0
      %1712 = vmatpush2.bf16.xpose.msra.mxu0 %v1658
      %1713 = vmatprep.mubr.bf16.mxu0 0
      %1714 = vmatmul.mubr.bf16.gmra.mxu0 %v1586
      %v1715 = vpop.f32.mrf.mxu0
      %v1716 = vadd.f32 0.0, %v1715
      %v1717 = vpop.f32.mrf.mxu0
      %v1718 = vadd.f32 0.0, %v1717
      %v1719 = vpop.f32.mrf.mxu0
      %v1720 = vadd.f32 0.0, %v1719
      %v1721 = vpop.f32.mrf.mxu0
      %v1722 = vadd.f32 0.0, %v1721
      %1723 = vmatprep.mubr.bf16.mxu0 0
      %1724 = vmatmul.mubr.bf16.gmra.mxu0 %v1589
      %v1725 = vpop.f32.mrf.mxu0
      %v1726 = vadd.f32 0.0, %v1725
      %v1727 = vpop.f32.mrf.mxu0
      %v1728 = vadd.f32 0.0, %v1727
      %v1729 = vpop.f32.mrf.mxu0
      %v1730 = vadd.f32 0.0, %v1729
      %v1731 = vpop.f32.mrf.mxu0
      %v1732 = vadd.f32 0.0, %v1731
      %1733 = vmatprep.mubr.bf16.mxu0 0
      %1734 = vmatmul.mubr.bf16.gmra.mxu0 %v1592
      %v1735 = vpop.f32.mrf.mxu0
      %v1736 = vadd.f32 0.0, %v1735
      %v1737 = vpop.f32.mrf.mxu0
      %v1738 = vadd.f32 0.0, %v1737
      %v1739 = vpop.f32.mrf.mxu0
      %v1740 = vadd.f32 0.0, %v1739
      %v1741 = vpop.f32.mrf.mxu0
      %v1742 = vadd.f32 0.0, %v1741
      %1743 = vmatprep.mubr.bf16.mxu0 0
      %1744 = vmatmul.mubr.bf16.gmra.mxu0 %v1595
      %v1745 = vpop.f32.mrf.mxu0
      %v1746 = vadd.f32 0.0, %v1745
      %v1747 = vpop.f32.mrf.mxu0
      %v1748 = vadd.f32 0.0, %v1747
      %v1749 = vpop.f32.mrf.mxu0
      %v1750 = vadd.f32 0.0, %v1749
      %v1751 = vpop.f32.mrf.mxu0
      %v1752 = vadd.f32 0.0, %v1751
      %1753 = vmatprep.mubr.bf16.mxu0 0
      %1754 = vmatmul.mubr.bf16.gmra.mxu0 %v1598
      %v1755 = vpop.f32.mrf.mxu0
      %v1756 = vadd.f32 0.0, %v1755
      %v1757 = vpop.f32.mrf.mxu0
      %v1758 = vadd.f32 0.0, %v1757
      %v1759 = vpop.f32.mrf.mxu0
      %v1760 = vadd.f32 0.0, %v1759
      %v1761 = vpop.f32.mrf.mxu0
      %v1762 = vadd.f32 0.0, %v1761
      %1763 = vmatprep.mubr.bf16.mxu0 0
      %1764 = vmatmul.mubr.bf16.gmra.mxu0 %v1601
      %v1765 = vpop.f32.mrf.mxu0
      %v1766 = vadd.f32 0.0, %v1765
      %v1767 = vpop.f32.mrf.mxu0
      %v1768 = vadd.f32 0.0, %v1767
      %v1769 = vpop.f32.mrf.mxu0
      %v1770 = vadd.f32 0.0, %v1769
      %v1771 = vpop.f32.mrf.mxu0
      %v1772 = vadd.f32 0.0, %v1771
      %1773 = vmatprep.mubr.bf16.mxu0 0
      %1774 = vmatmul.mubr.bf16.gmra.mxu0 %v1604
      %v1775 = vpop.f32.mrf.mxu0
      %v1776 = vadd.f32 0.0, %v1775
      %v1777 = vpop.f32.mrf.mxu0
      %v1778 = vadd.f32 0.0, %v1777
      %v1779 = vpop.f32.mrf.mxu0
      %v1780 = vadd.f32 0.0, %v1779
      %v1781 = vpop.f32.mrf.mxu0
      %v1782 = vadd.f32 0.0, %v1781
      %1783 = vmatprep.mubr.bf16.mxu0 0
      %1784 = vmatmul.mubr.bf16.gmra.mxu0 %v1607
      %v1785 = vpop.f32.mrf.mxu0
      %v1786 = vadd.f32 0.0, %v1785
      %v1787 = vpop.f32.mrf.mxu0
      %v1788 = vadd.f32 0.0, %v1787
      %v1789 = vpop.f32.mrf.mxu0
      %v1790 = vadd.f32 0.0, %v1789
      %v1791 = vpop.f32.mrf.mxu0
      %v1792 = vadd.f32 0.0, %v1791
      %1793 = vmatprep.mubr.bf16.mxu0 0
      %1794 = vmatmul.mubr.bf16.gmra.mxu0 %v1610
      %v1795 = vpop.f32.mrf.mxu0
      %v1796 = vadd.f32 0.0, %v1795
      %v1797 = vpop.f32.mrf.mxu0
      %v1798 = vadd.f32 0.0, %v1797
      %v1799 = vpop.f32.mrf.mxu0
      %v1800 = vadd.f32 0.0, %v1799
      %v1801 = vpop.f32.mrf.mxu0
      %v1802 = vadd.f32 0.0, %v1801
      %1803 = vmatprep.mubr.bf16.mxu0 0
      %1804 = vmatmul.mubr.bf16.gmra.mxu0 %v1613
      %v1805 = vpop.f32.mrf.mxu0
      %v1806 = vadd.f32 0.0, %v1805
      %v1807 = vpop.f32.mrf.mxu0
      %v1808 = vadd.f32 0.0, %v1807
      %v1809 = vpop.f32.mrf.mxu0
      %v1810 = vadd.f32 0.0, %v1809
      %v1811 = vpop.f32.mrf.mxu0
      %v1812 = vadd.f32 0.0, %v1811
      %1813 = vmatprep.mubr.bf16.mxu0 0
      %1814 = vmatmul.mubr.bf16.gmra.mxu0 %v1616
      %v1815 = vpop.f32.mrf.mxu0
      %v1816 = vadd.f32 0.0, %v1815
      %v1817 = vpop.f32.mrf.mxu0
      %v1818 = vadd.f32 0.0, %v1817
      %v1819 = vpop.f32.mrf.mxu0
      %v1820 = vadd.f32 0.0, %v1819
      %v1821 = vpop.f32.mrf.mxu0
      %v1822 = vadd.f32 0.0, %v1821
      %1823 = vmatprep.mubr.bf16.mxu0 0
      %1824 = vmatmul.mubr.bf16.gmra.mxu0 %v1619
      %v1825 = vpop.f32.mrf.mxu0
      %v1826 = vadd.f32 0.0, %v1825
      %v1827 = vpop.f32.mrf.mxu0
      %v1828 = vadd.f32 0.0, %v1827
      %v1829 = vpop.f32.mrf.mxu0
      %v1830 = vadd.f32 0.0, %v1829
      %v1831 = vpop.f32.mrf.mxu0
      %v1832 = vadd.f32 0.0, %v1831
      %1833 = vmatprep.mubr.bf16.mxu0 0
      %1834 = vmatmul.mubr.bf16.gmra.mxu0 %v1622
      %v1835 = vpop.f32.mrf.mxu0
      %v1836 = vadd.f32 0.0, %v1835
      %v1837 = vpop.f32.mrf.mxu0
      %v1838 = vadd.f32 0.0, %v1837
      %v1839 = vpop.f32.mrf.mxu0
      %v1840 = vadd.f32 0.0, %v1839
      %v1841 = vpop.f32.mrf.mxu0
      %v1842 = vadd.f32 0.0, %v1841
      %1843 = vmatprep.mubr.bf16.mxu0 0
      %1844 = vmatmul.mubr.bf16.gmra.mxu0 %v1625
      %v1845 = vpop.f32.mrf.mxu0
      %v1846 = vadd.f32 0.0, %v1845
      %v1847 = vpop.f32.mrf.mxu0
      %v1848 = vadd.f32 0.0, %v1847
      %v1849 = vpop.f32.mrf.mxu0
      %v1850 = vadd.f32 0.0, %v1849
      %v1851 = vpop.f32.mrf.mxu0
      %v1852 = vadd.f32 0.0, %v1851
      %1853 = vmatprep.mubr.bf16.mxu0 0
      %1854 = vmatmul.mubr.bf16.gmra.mxu0 %v1628
      %v1855 = vpop.f32.mrf.mxu0
      %v1856 = vadd.f32 0.0, %v1855
      %v1857 = vpop.f32.mrf.mxu0
      %v1858 = vadd.f32 0.0, %v1857
      %v1859 = vpop.f32.mrf.mxu0
      %v1860 = vadd.f32 0.0, %v1859
      %v1861 = vpop.f32.mrf.mxu0
      %v1862 = vadd.f32 0.0, %v1861
      %1863 = vmatprep.mubr.bf16.mxu0 0
      %1864 = vmatmul.mubr.bf16.gmra.mxu0 %v1631
      %v1865 = vpop.f32.mrf.mxu0
      %v1866 = vadd.f32 0.0, %v1865
      %v1867 = vpop.f32.mrf.mxu0
      %v1868 = vadd.f32 0.0, %v1867
      %v1869 = vpop.f32.mrf.mxu0
      %v1870 = vadd.f32 0.0, %v1869
      %v1871 = vpop.f32.mrf.mxu0
      %v1872 = vadd.f32 0.0, %v1871
      %1873 = vdwg.mxu0
      %v1874 = vmax.f32 %v1716, %v1718
      %1875 = vmax.xlane.f32.xlu0 %v1874
      %v1876 = vpop.xlane.xlu0 %1875
      %v1877 = vmax.f32 %v1720, %v1722
      %1878 = vmax.xlane.f32.xlu0 %v1877
      %v1879 = vpop.xlane.xlu0 %1878
      %v1880 = vmax.f32 %v1726, %v1728
      %1881 = vmax.xlane.f32.xlu0 %v1880
      %v1882 = vpop.xlane.xlu0 %1881
      %v1883 = vmax.f32 %v1730, %v1732
      %1884 = vmax.xlane.f32.xlu0 %v1883
      %v1885 = vpop.xlane.xlu0 %1884
      %v1886 = vmax.f32 %v1736, %v1738
      %1887 = vmax.xlane.f32.xlu0 %v1886
      %v1888 = vpop.xlane.xlu0 %1887
      %v1889 = vmax.f32 %v1740, %v1742
      %1890 = vmax.xlane.f32.xlu0 %v1889
      %v1891 = vpop.xlane.xlu0 %1890
      %v1892 = vmax.f32 %v1746, %v1748
      %1893 = vmax.xlane.f32.xlu0 %v1892
      %v1894 = vpop.xlane.xlu0 %1893
      %v1895 = vmax.f32 %v1750, %v1752
      %1896 = vmax.xlane.f32.xlu0 %v1895
      %v1897 = vpop.xlane.xlu0 %1896
      %v1898 = vmax.f32 %v1756, %v1758
      %1899 = vmax.xlane.f32.xlu0 %v1898
      %v1900 = vpop.xlane.xlu0 %1899
      %v1901 = vmax.f32 %v1760, %v1762
      %1902 = vmax.xlane.f32.xlu0 %v1901
      %v1903 = vpop.xlane.xlu0 %1902
      %v1904 = vmax.f32 %v1766, %v1768
      %1905 = vmax.xlane.f32.xlu0 %v1904
      %v1906 = vpop.xlane.xlu0 %1905
      %v1907 = vmax.f32 %v1770, %v1772
      %1908 = vmax.xlane.f32.xlu0 %v1907
      %v1909 = vpop.xlane.xlu0 %1908
      %v1910 = vmax.f32 %v1776, %v1778
      %1911 = vmax.xlane.f32.xlu0 %v1910
      %v1912 = vpop.xlane.xlu0 %1911
      %v1913 = vmax.f32 %v1780, %v1782
      %1914 = vmax.xlane.f32.xlu0 %v1913
      %v1915 = vpop.xlane.xlu0 %1914
      %v1916 = vmax.f32 %v1786, %v1788
      %1917 = vmax.xlane.f32.xlu0 %v1916
      %v1918 = vpop.xlane.xlu0 %1917
      %v1919 = vmax.f32 %v1790, %v1792
      %1920 = vmax.xlane.f32.xlu0 %v1919
      %v1921 = vpop.xlane.xlu0 %1920
      %v1922 = vmax.f32 %v1796, %v1798
      %1923 = vmax.xlane.f32.xlu0 %v1922
      %v1924 = vpop.xlane.xlu0 %1923
      %v1925 = vmax.f32 %v1800, %v1802
      %1926 = vmax.xlane.f32.xlu0 %v1925
      %v1927 = vpop.xlane.xlu0 %1926
      %v1928 = vmax.f32 %v1806, %v1808
      %1929 = vmax.xlane.f32.xlu0 %v1928
      %v1930 = vpop.xlane.xlu0 %1929
      %v1931 = vmax.f32 %v1810, %v1812
      %1932 = vmax.xlane.f32.xlu0 %v1931
      %v1933 = vpop.xlane.xlu0 %1932
      %v1934 = vmax.f32 %v1816, %v1818
      %1935 = vmax.xlane.f32.xlu0 %v1934
      %v1936 = vpop.xlane.xlu0 %1935
      %v1937 = vmax.f32 %v1820, %v1822
      %1938 = vmax.xlane.f32.xlu0 %v1937
      %v1939 = vpop.xlane.xlu0 %1938
      %v1940 = vmax.f32 %v1826, %v1828
      %1941 = vmax.xlane.f32.xlu0 %v1940
      %v1942 = vpop.xlane.xlu0 %1941
      %v1943 = vmax.f32 %v1830, %v1832
      %1944 = vmax.xlane.f32.xlu0 %v1943
      %v1945 = vpop.xlane.xlu0 %1944
      %v1946 = vmax.f32 %v1836, %v1838
      %1947 = vmax.xlane.f32.xlu0 %v1946
      %v1948 = vpop.xlane.xlu0 %1947
      %v1949 = vmax.f32 %v1840, %v1842
      %1950 = vmax.xlane.f32.xlu0 %v1949
      %v1951 = vpop.xlane.xlu0 %1950
      %v1952 = vmax.f32 %v1846, %v1848
      %1953 = vmax.xlane.f32.xlu0 %v1952
      %v1954 = vpop.xlane.xlu0 %1953
      %v1955 = vmax.f32 %v1850, %v1852
      %1956 = vmax.xlane.f32.xlu0 %v1955
      %v1957 = vpop.xlane.xlu0 %1956
      %v1958 = vmax.f32 %v1856, %v1858
      %1959 = vmax.xlane.f32.xlu0 %v1958
      %v1960 = vpop.xlane.xlu0 %1959
      %v1961 = vmax.f32 %v1860, %v1862
      %1962 = vmax.xlane.f32.xlu0 %v1961
      %v1963 = vpop.xlane.xlu0 %1962
      %v1964 = vmax.f32 %v1866, %v1868
      %1965 = vmax.xlane.f32.xlu0 %v1964
      %v1966 = vpop.xlane.xlu0 %1965
      %v1967 = vmax.f32 %v1870, %v1872
      %1968 = vmax.xlane.f32.xlu0 %v1967
      %v1969 = vpop.xlane.xlu0 %1968
      %v1970 = vsub.f32 %v1716, %v1876
      %v1971 = vsub.f32 %v1718, %v1876
      %v1972 = vsub.f32 %v1720, %v1879
      %v1973 = vsub.f32 %v1722, %v1879
      %v1974 = vsub.f32 %v1726, %v1882
      %v1975 = vsub.f32 %v1728, %v1882
      %v1976 = vsub.f32 %v1730, %v1885
      %v1977 = vsub.f32 %v1732, %v1885
      %v1978 = vsub.f32 %v1736, %v1888
      %v1979 = vsub.f32 %v1738, %v1888
      %v1980 = vsub.f32 %v1740, %v1891
      %v1981 = vsub.f32 %v1742, %v1891
      %v1982 = vsub.f32 %v1746, %v1894
      %v1983 = vsub.f32 %v1748, %v1894
      %v1984 = vsub.f32 %v1750, %v1897
      %v1985 = vsub.f32 %v1752, %v1897
      %v1986 = vsub.f32 %v1756, %v1900
      %v1987 = vsub.f32 %v1758, %v1900
      %v1988 = vsub.f32 %v1760, %v1903
      %v1989 = vsub.f32 %v1762, %v1903
      %v1990 = vsub.f32 %v1766, %v1906
      %v1991 = vsub.f32 %v1768, %v1906
      %v1992 = vsub.f32 %v1770, %v1909
      %v1993 = vsub.f32 %v1772, %v1909
      %v1994 = vsub.f32 %v1776, %v1912
      %v1995 = vsub.f32 %v1778, %v1912
      %v1996 = vsub.f32 %v1780, %v1915
      %v1997 = vsub.f32 %v1782, %v1915
      %v1998 = vsub.f32 %v1786, %v1918
      %v1999 = vsub.f32 %v1788, %v1918
      %v2000 = vsub.f32 %v1790, %v1921
      %v2001 = vsub.f32 %v1792, %v1921
      %v2002 = vsub.f32 %v1796, %v1924
      %v2003 = vsub.f32 %v1798, %v1924
      %v2004 = vsub.f32 %v1800, %v1927
      %v2005 = vsub.f32 %v1802, %v1927
      %v2006 = vsub.f32 %v1806, %v1930
      %v2007 = vsub.f32 %v1808, %v1930
      %v2008 = vsub.f32 %v1810, %v1933
      %v2009 = vsub.f32 %v1812, %v1933
      %v2010 = vsub.f32 %v1816, %v1936
      %v2011 = vsub.f32 %v1818, %v1936
      %v2012 = vsub.f32 %v1820, %v1939
      %v2013 = vsub.f32 %v1822, %v1939
      %v2014 = vsub.f32 %v1826, %v1942
      %v2015 = vsub.f32 %v1828, %v1942
      %v2016 = vsub.f32 %v1830, %v1945
      %v2017 = vsub.f32 %v1832, %v1945
      %v2018 = vsub.f32 %v1836, %v1948
      %v2019 = vsub.f32 %v1838, %v1948
      %v2020 = vsub.f32 %v1840, %v1951
      %v2021 = vsub.f32 %v1842, %v1951
      %v2022 = vsub.f32 %v1846, %v1954
      %v2023 = vsub.f32 %v1848, %v1954
      %v2024 = vsub.f32 %v1850, %v1957
      %v2025 = vsub.f32 %v1852, %v1957
      %v2026 = vsub.f32 %v1856, %v1960
      %v2027 = vsub.f32 %v1858, %v1960
      %v2028 = vsub.f32 %v1860, %v1963
      %v2029 = vsub.f32 %v1862, %v1963
      %v2030 = vsub.f32 %v1866, %v1966
      %v2031 = vsub.f32 %v1868, %v1966
      %v2032 = vsub.f32 %v1870, %v1969
      %v2033 = vsub.f32 %v1872, %v1969
      %v2034 = vmul.f32 %v1970, 1.442695
      %v2035 = vpow.pop %v2034
      %v2036 = vmul.f32 %v1971, 1.442695
      %v2037 = vpow.pop %v2036
      %v2038 = vmul.f32 %v1972, 1.442695
      %v2039 = vpow.pop %v2038
      %v2040 = vmul.f32 %v1973, 1.442695
      %v2041 = vpow.pop %v2040
      %v2042 = vmul.f32 %v1974, 1.442695
      %v2043 = vpow.pop %v2042
      %v2044 = vmul.f32 %v1975, 1.442695
      %v2045 = vpow.pop %v2044
      %v2046 = vmul.f32 %v1976, 1.442695
      %v2047 = vpow.pop %v2046
      %v2048 = vmul.f32 %v1977, 1.442695
      %v2049 = vpow.pop %v2048
      %v2050 = vmul.f32 %v1978, 1.442695
      %v2051 = vpow.pop %v2050
      %v2052 = vmul.f32 %v1979, 1.442695
      %v2053 = vpow.pop %v2052
      %v2054 = vmul.f32 %v1980, 1.442695
      %v2055 = vpow.pop %v2054
      %v2056 = vmul.f32 %v1981, 1.442695
      %v2057 = vpow.pop %v2056
      %v2058 = vmul.f32 %v1982, 1.442695
      %v2059 = vpow.pop %v2058
      %v2060 = vmul.f32 %v1983, 1.442695
      %v2061 = vpow.pop %v2060
      %v2062 = vmul.f32 %v1984, 1.442695
      %v2063 = vpow.pop %v2062
      %v2064 = vmul.f32 %v1985, 1.442695
      %v2065 = vpow.pop %v2064
      %v2066 = vmul.f32 %v1986, 1.442695
      %v2067 = vpow.pop %v2066
      %v2068 = vmul.f32 %v1987, 1.442695
      %v2069 = vpow.pop %v2068
      %v2070 = vmul.f32 %v1988, 1.442695
      %v2071 = vpow.pop %v2070
      %v2072 = vmul.f32 %v1989, 1.442695
      %v2073 = vpow.pop %v2072
      %v2074 = vmul.f32 %v1990, 1.442695
      %v2075 = vpow.pop %v2074
      %v2076 = vmul.f32 %v1991, 1.442695
      %v2077 = vpow.pop %v2076
      %v2078 = vmul.f32 %v1992, 1.442695
      %v2079 = vpow.pop %v2078
      %v2080 = vmul.f32 %v1993, 1.442695
      %v2081 = vpow.pop %v2080
      %v2082 = vmul.f32 %v1994, 1.442695
      %v2083 = vpow.pop %v2082
      %v2084 = vmul.f32 %v1995, 1.442695
      %v2085 = vpow.pop %v2084
      %v2086 = vmul.f32 %v1996, 1.442695
      %v2087 = vpow.pop %v2086
      %v2088 = vmul.f32 %v1997, 1.442695
      %v2089 = vpow.pop %v2088
      %v2090 = vmul.f32 %v1998, 1.442695
      %v2091 = vpow.pop %v2090
      %v2092 = vmul.f32 %v1999, 1.442695
      %v2093 = vpow.pop %v2092
      %v2094 = vmul.f32 %v2000, 1.442695
      %v2095 = vpow.pop %v2094
      %v2096 = vmul.f32 %v2001, 1.442695
      %v2097 = vpow.pop %v2096
      %v2098 = vmul.f32 %v2002, 1.442695
      %v2099 = vpow.pop %v2098
      %v2100 = vmul.f32 %v2003, 1.442695
      %v2101 = vpow.pop %v2100
      %v2102 = vmul.f32 %v2004, 1.442695
      %v2103 = vpow.pop %v2102
      %v2104 = vmul.f32 %v2005, 1.442695
      %v2105 = vpow.pop %v2104
      %v2106 = vmul.f32 %v2006, 1.442695
      %v2107 = vpow.pop %v2106
      %v2108 = vmul.f32 %v2007, 1.442695
      %v2109 = vpow.pop %v2108
      %v2110 = vmul.f32 %v2008, 1.442695
      %v2111 = vpow.pop %v2110
      %v2112 = vmul.f32 %v2009, 1.442695
      %v2113 = vpow.pop %v2112
      %v2114 = vmul.f32 %v2010, 1.442695
      %v2115 = vpow.pop %v2114
      %v2116 = vmul.f32 %v2011, 1.442695
      %v2117 = vpow.pop %v2116
      %v2118 = vmul.f32 %v2012, 1.442695
      %v2119 = vpow.pop %v2118
      %v2120 = vmul.f32 %v2013, 1.442695
      %v2121 = vpow.pop %v2120
      %v2122 = vmul.f32 %v2014, 1.442695
      %v2123 = vpow.pop %v2122
      %v2124 = vmul.f32 %v2015, 1.442695
      %v2125 = vpow.pop %v2124
      %v2126 = vmul.f32 %v2016, 1.442695
      %v2127 = vpow.pop %v2126
      %v2128 = vmul.f32 %v2017, 1.442695
      %v2129 = vpow.pop %v2128
      %v2130 = vmul.f32 %v2018, 1.442695
      %v2131 = vpow.pop %v2130
      %v2132 = vmul.f32 %v2019, 1.442695
      %v2133 = vpow.pop %v2132
      %v2134 = vmul.f32 %v2020, 1.442695
      %v2135 = vpow.pop %v2134
      %v2136 = vmul.f32 %v2021, 1.442695
      %v2137 = vpow.pop %v2136
      %v2138 = vmul.f32 %v2022, 1.442695
      %v2139 = vpow.pop %v2138
      %v2140 = vmul.f32 %v2023, 1.442695
      %v2141 = vpow.pop %v2140
      %v2142 = vmul.f32 %v2024, 1.442695
      %v2143 = vpow.pop %v2142
      %v2144 = vmul.f32 %v2025, 1.442695
      %v2145 = vpow.pop %v2144
      %v2146 = vmul.f32 %v2026, 1.442695
      %v2147 = vpow.pop %v2146
      %v2148 = vmul.f32 %v2027, 1.442695
      %v2149 = vpow.pop %v2148
      %v2150 = vmul.f32 %v2028, 1.442695
      %v2151 = vpow.pop %v2150
      %v2152 = vmul.f32 %v2029, 1.442695
      %v2153 = vpow.pop %v2152
      %v2154 = vmul.f32 %v2030, 1.442695
      %v2155 = vpow.pop %v2154
      %v2156 = vmul.f32 %v2031, 1.442695
      %v2157 = vpow.pop %v2156
      %v2158 = vmul.f32 %v2032, 1.442695
      %v2159 = vpow.pop %v2158
      %v2160 = vmul.f32 %v2033, 1.442695
      %v2161 = vpow.pop %v2160
      %v2162 = vadd.f32 %v2035, %v2037
      %2163 = vadd.xlane.f32.xlu0 %v2162
      %v2164 = vpop.xlane.xlu0 %2163
      %v2165 = vadd.f32 %v2039, %v2041
      %2166 = vadd.xlane.f32.xlu0 %v2165
      %v2167 = vpop.xlane.xlu0 %2166
      %v2168 = vadd.f32 %v2043, %v2045
      %2169 = vadd.xlane.f32.xlu0 %v2168
      %v2170 = vpop.xlane.xlu0 %2169
      %v2171 = vadd.f32 %v2047, %v2049
      %2172 = vadd.xlane.f32.xlu0 %v2171
      %v2173 = vpop.xlane.xlu0 %2172
      %v2174 = vadd.f32 %v2051, %v2053
      %2175 = vadd.xlane.f32.xlu0 %v2174
      %v2176 = vpop.xlane.xlu0 %2175
      %v2177 = vadd.f32 %v2055, %v2057
      %2178 = vadd.xlane.f32.xlu0 %v2177
      %v2179 = vpop.xlane.xlu0 %2178
      %v2180 = vadd.f32 %v2059, %v2061
      %2181 = vadd.xlane.f32.xlu0 %v2180
      %v2182 = vpop.xlane.xlu0 %2181
      %v2183 = vadd.f32 %v2063, %v2065
      %2184 = vadd.xlane.f32.xlu0 %v2183
      %v2185 = vpop.xlane.xlu0 %2184
      %v2186 = vadd.f32 %v2067, %v2069
      %2187 = vadd.xlane.f32.xlu0 %v2186
      %v2188 = vpop.xlane.xlu0 %2187
      %v2189 = vadd.f32 %v2071, %v2073
      %2190 = vadd.xlane.f32.xlu0 %v2189
      %v2191 = vpop.xlane.xlu0 %2190
      %v2192 = vadd.f32 %v2075, %v2077
      %2193 = vadd.xlane.f32.xlu0 %v2192
      %v2194 = vpop.xlane.xlu0 %2193
      %v2195 = vadd.f32 %v2079, %v2081
      %2196 = vadd.xlane.f32.xlu0 %v2195
      %v2197 = vpop.xlane.xlu0 %2196
      %v2198 = vadd.f32 %v2083, %v2085
      %2199 = vadd.xlane.f32.xlu0 %v2198
      %v2200 = vpop.xlane.xlu0 %2199
      %v2201 = vadd.f32 %v2087, %v2089
      %2202 = vadd.xlane.f32.xlu0 %v2201
      %v2203 = vpop.xlane.xlu0 %2202
      %v2204 = vadd.f32 %v2091, %v2093
      %2205 = vadd.xlane.f32.xlu0 %v2204
      %v2206 = vpop.xlane.xlu0 %2205
      %v2207 = vadd.f32 %v2095, %v2097
      %2208 = vadd.xlane.f32.xlu0 %v2207
      %v2209 = vpop.xlane.xlu0 %2208
      %v2210 = vadd.f32 %v2099, %v2101
      %2211 = vadd.xlane.f32.xlu0 %v2210
      %v2212 = vpop.xlane.xlu0 %2211
      %v2213 = vadd.f32 %v2103, %v2105
      %2214 = vadd.xlane.f32.xlu0 %v2213
      %v2215 = vpop.xlane.xlu0 %2214
      %v2216 = vadd.f32 %v2107, %v2109
      %2217 = vadd.xlane.f32.xlu0 %v2216
      %v2218 = vpop.xlane.xlu0 %2217
      %v2219 = vadd.f32 %v2111, %v2113
      %2220 = vadd.xlane.f32.xlu0 %v2219
      %v2221 = vpop.xlane.xlu0 %2220
      %v2222 = vadd.f32 %v2115, %v2117
      %2223 = vadd.xlane.f32.xlu0 %v2222
      %v2224 = vpop.xlane.xlu0 %2223
      %v2225 = vadd.f32 %v2119, %v2121
      %2226 = vadd.xlane.f32.xlu0 %v2225
      %v2227 = vpop.xlane.xlu0 %2226
      %v2228 = vadd.f32 %v2123, %v2125
      %2229 = vadd.xlane.f32.xlu0 %v2228
      %v2230 = vpop.xlane.xlu0 %2229
      %v2231 = vadd.f32 %v2127, %v2129
      %2232 = vadd.xlane.f32.xlu0 %v2231
      %v2233 = vpop.xlane.xlu0 %2232
      %v2234 = vadd.f32 %v2131, %v2133
      %2235 = vadd.xlane.f32.xlu0 %v2234
      %v2236 = vpop.xlane.xlu0 %2235
      %v2237 = vadd.f32 %v2135, %v2137
      %2238 = vadd.xlane.f32.xlu0 %v2237
      %v2239 = vpop.xlane.xlu0 %2238
      %v2240 = vadd.f32 %v2139, %v2141
      %2241 = vadd.xlane.f32.xlu0 %v2240
      %v2242 = vpop.xlane.xlu0 %2241
      %v2243 = vadd.f32 %v2143, %v2145
      %2244 = vadd.xlane.f32.xlu0 %v2243
      %v2245 = vpop.xlane.xlu0 %2244
      %v2246 = vadd.f32 %v2147, %v2149
      %2247 = vadd.xlane.f32.xlu0 %v2246
      %v2248 = vpop.xlane.xlu0 %2247
      %v2249 = vadd.f32 %v2151, %v2153
      %2250 = vadd.xlane.f32.xlu0 %v2249
      %v2251 = vpop.xlane.xlu0 %2250
      %v2252 = vadd.f32 %v2155, %v2157
      %2253 = vadd.xlane.f32.xlu0 %v2252
      %v2254 = vpop.xlane.xlu0 %2253
      %v2255 = vadd.f32 %v2159, %v2161
      %2256 = vadd.xlane.f32.xlu0 %v2255
      %v2257 = vpop.xlane.xlu0 %2256
      %v2258 = vrcp.pop %v2164
      %v2259 = vrcp.pop %v2167
      %v2260 = vrcp.pop %v2170
      %v2261 = vrcp.pop %v2173
      %v2262 = vrcp.pop %v2176
      %v2263 = vrcp.pop %v2179
      %v2264 = vrcp.pop %v2182
      %v2265 = vrcp.pop %v2185
      %v2266 = vrcp.pop %v2188
      %v2267 = vrcp.pop %v2191
      %v2268 = vrcp.pop %v2194
      %v2269 = vrcp.pop %v2197
      %v2270 = vrcp.pop %v2200
      %v2271 = vrcp.pop %v2203
      %v2272 = vrcp.pop %v2206
      %v2273 = vrcp.pop %v2209
      %v2274 = vrcp.pop %v2212
      %v2275 = vrcp.pop %v2215
      %v2276 = vrcp.pop %v2218
      %v2277 = vrcp.pop %v2221
      %v2278 = vrcp.pop %v2224
      %v2279 = vrcp.pop %v2227
      %v2280 = vrcp.pop %v2230
      %v2281 = vrcp.pop %v2233
      %v2282 = vrcp.pop %v2236
      %v2283 = vrcp.pop %v2239
      %v2284 = vrcp.pop %v2242
      %v2285 = vrcp.pop %v2245
      %v2286 = vrcp.pop %v2248
      %v2287 = vrcp.pop %v2251
      %v2288 = vrcp.pop %v2254
      %v2289 = vrcp.pop %v2257
      %v2290 = vmul.f32 %v2035, %v2258
      %v2291 = vmul.f32 %v2037, %v2258
      %v2292 = vmul.f32 %v2039, %v2259
      %v2293 = vmul.f32 %v2041, %v2259
      %v2294 = vmul.f32 %v2043, %v2260
      %v2295 = vmul.f32 %v2045, %v2260
      %v2296 = vmul.f32 %v2047, %v2261
      %v2297 = vmul.f32 %v2049, %v2261
      %v2298 = vmul.f32 %v2051, %v2262
      %v2299 = vmul.f32 %v2053, %v2262
      %v2300 = vmul.f32 %v2055, %v2263
      %v2301 = vmul.f32 %v2057, %v2263
      %v2302 = vmul.f32 %v2059, %v2264
      %v2303 = vmul.f32 %v2061, %v2264
      %v2304 = vmul.f32 %v2063, %v2265
      %v2305 = vmul.f32 %v2065, %v2265
      %v2306 = vmul.f32 %v2067, %v2266
      %v2307 = vmul.f32 %v2069, %v2266
      %v2308 = vmul.f32 %v2071, %v2267
      %v2309 = vmul.f32 %v2073, %v2267
      %v2310 = vmul.f32 %v2075, %v2268
      %v2311 = vmul.f32 %v2077, %v2268
      %v2312 = vmul.f32 %v2079, %v2269
      %v2313 = vmul.f32 %v2081, %v2269
      %v2314 = vmul.f32 %v2083, %v2270
      %v2315 = vmul.f32 %v2085, %v2270
      %v2316 = vmul.f32 %v2087, %v2271
      %v2317 = vmul.f32 %v2089, %v2271
      %v2318 = vmul.f32 %v2091, %v2272
      %v2319 = vmul.f32 %v2093, %v2272
      %v2320 = vmul.f32 %v2095, %v2273
      %v2321 = vmul.f32 %v2097, %v2273
      %v2322 = vmul.f32 %v2099, %v2274
      %v2323 = vmul.f32 %v2101, %v2274
      %v2324 = vmul.f32 %v2103, %v2275
      %v2325 = vmul.f32 %v2105, %v2275
      %v2326 = vmul.f32 %v2107, %v2276
      %v2327 = vmul.f32 %v2109, %v2276
      %v2328 = vmul.f32 %v2111, %v2277
      %v2329 = vmul.f32 %v2113, %v2277
      %v2330 = vmul.f32 %v2115, %v2278
      %v2331 = vmul.f32 %v2117, %v2278
      %v2332 = vmul.f32 %v2119, %v2279
      %v2333 = vmul.f32 %v2121, %v2279
      %v2334 = vmul.f32 %v2123, %v2280
      %v2335 = vmul.f32 %v2125, %v2280
      %v2336 = vmul.f32 %v2127, %v2281
      %v2337 = vmul.f32 %v2129, %v2281
      %v2338 = vmul.f32 %v2131, %v2282
      %v2339 = vmul.f32 %v2133, %v2282
      %v2340 = vmul.f32 %v2135, %v2283
      %v2341 = vmul.f32 %v2137, %v2283
      %v2342 = vmul.f32 %v2139, %v2284
      %v2343 = vmul.f32 %v2141, %v2284
      %v2344 = vmul.f32 %v2143, %v2285
      %v2345 = vmul.f32 %v2145, %v2285
      %v2346 = vmul.f32 %v2147, %v2286
      %v2347 = vmul.f32 %v2149, %v2286
      %v2348 = vmul.f32 %v2151, %v2287
      %v2349 = vmul.f32 %v2153, %v2287
      %v2350 = vmul.f32 %v2155, %v2288
      %v2351 = vmul.f32 %v2157, %v2288
      %v2352 = vmul.f32 %v2159, %v2289
      %v2353 = vmul.f32 %v2161, %v2289
      %v2354 = vpack.c.bf16 %v2292, %v2290
      %v2355 = vpack.c.bf16 %v2293, %v2291
      %v2356 = vpack.c.bf16 %v2296, %v2294
      %v2357 = vpack.c.bf16 %v2297, %v2295
      %v2358 = vpack.c.bf16 %v2300, %v2298
      %v2359 = vpack.c.bf16 %v2301, %v2299
      %v2360 = vpack.c.bf16 %v2304, %v2302
      %v2361 = vpack.c.bf16 %v2305, %v2303
      %v2362 = vpack.c.bf16 %v2308, %v2306
      %v2363 = vpack.c.bf16 %v2309, %v2307
      %v2364 = vpack.c.bf16 %v2312, %v2310
      %v2365 = vpack.c.bf16 %v2313, %v2311
      %v2366 = vpack.c.bf16 %v2316, %v2314
      %v2367 = vpack.c.bf16 %v2317, %v2315
      %v2368 = vpack.c.bf16 %v2320, %v2318
      %v2369 = vpack.c.bf16 %v2321, %v2319
      %v2370 = vpack.c.bf16 %v2324, %v2322
      %v2371 = vpack.c.bf16 %v2325, %v2323
      %v2372 = vpack.c.bf16 %v2328, %v2326
      %v2373 = vpack.c.bf16 %v2329, %v2327
      %v2374 = vpack.c.bf16 %v2332, %v2330
      %v2375 = vpack.c.bf16 %v2333, %v2331
      %v2376 = vpack.c.bf16 %v2336, %v2334
      %v2377 = vpack.c.bf16 %v2337, %v2335
      %v2378 = vpack.c.bf16 %v2340, %v2338
      %v2379 = vpack.c.bf16 %v2341, %v2339
      %v2380 = vpack.c.bf16 %v2344, %v2342
      %v2381 = vpack.c.bf16 %v2345, %v2343
      %v2382 = vpack.c.bf16 %v2348, %v2346
      %v2383 = vpack.c.bf16 %v2349, %v2347
      %v2384 = vpack.c.bf16 %v2352, %v2350
      %v2385 = vpack.c.bf16 %v2353, %v2351
      %2402 = vrot.lane.b32.xlu0 %v1312, 64
      %v2403 = vpop.permute.xlu0 %2402
      %2404 = vrot.lane.b32.xlu0 %v1313, 64
      %v2405 = vpop.permute.xlu0 %2404
      %2406 = vrot.lane.b32.xlu0 %v1314, 64
      %v2407 = vpop.permute.xlu0 %2406
      %2408 = vrot.lane.b32.xlu0 %v1315, 64
      %v2409 = vpop.permute.xlu0 %2408
      %2410 = vrot.lane.b32.xlu0 %v1316, 64
      %v2411 = vpop.permute.xlu0 %2410
      %2412 = vrot.lane.b32.xlu0 %v1317, 64
      %v2413 = vpop.permute.xlu0 %2412
      %2414 = vrot.lane.b32.xlu0 %v1318, 64
      %v2415 = vpop.permute.xlu0 %2414
      %2416 = vrot.lane.b32.xlu0 %v1319, 64
      %v2417 = vpop.permute.xlu0 %2416
      %2418 = vrot.lane.b32.xlu0 %v1320, 64
      %v2419 = vpop.permute.xlu0 %2418
      %2420 = vrot.lane.b32.xlu0 %v1321, 64
      %v2421 = vpop.permute.xlu0 %2420
      %2422 = vrot.lane.b32.xlu0 %v1322, 64
      %v2423 = vpop.permute.xlu0 %2422
      %2424 = vrot.lane.b32.xlu0 %v1323, 64
      %v2425 = vpop.permute.xlu0 %2424
      %2426 = vrot.lane.b32.xlu0 %v1324, 64
      %v2427 = vpop.permute.xlu0 %2426
      %2428 = vrot.lane.b32.xlu0 %v1325, 64
      %v2429 = vpop.permute.xlu0 %2428
      %2430 = vrot.lane.b32.xlu0 %v1326, 64
      %v2431 = vpop.permute.xlu0 %2430
      %2432 = vrot.lane.b32.xlu0 %v1327, 64
      %v2433 = vpop.permute.xlu0 %2432
      %2450 = vmatprep.subr.bf16.mxu0 0
      %2451 = vmatpush1.bf16.msra.mxu0 %v2417
      %2452 = vmatprep.subr.bf16.mxu0 0
      %2453 = vmatpush1.bf16.msra.mxu0 %v2415
      %2454 = vmatprep.subr.bf16.mxu0 0
      %2455 = vmatpush1.bf16.msra.mxu0 %v2413
      %2456 = vmatprep.subr.bf16.mxu0 0
      %2457 = vmatpush1.bf16.msra.mxu0 %v2411
      %2458 = vmatprep.subr.bf16.mxu0 0
      %2459 = vmatpush1.bf16.msra.mxu0 %v2409
      %2460 = vmatprep.subr.bf16.mxu0 0
      %2461 = vmatpush1.bf16.msra.mxu0 %v2407
      %2462 = vmatprep.subr.bf16.mxu0 0
      %2463 = vmatpush1.bf16.msra.mxu0 %v2405
      %2464 = vmatprep.subr.bf16.mxu0 0
      %2465 = vmatpush1.bf16.msra.mxu0 %v2403
      %2466 = vmatprep.subr.bf16.mxu0 0
      %2467 = vmatpush2.bf16.msra.mxu0 %v2433
      %2468 = vmatprep.subr.bf16.mxu0 0
      %2469 = vmatpush2.bf16.msra.mxu0 %v2431
      %2470 = vmatprep.subr.bf16.mxu0 0
      %2471 = vmatpush2.bf16.msra.mxu0 %v2429
      %2472 = vmatprep.subr.bf16.mxu0 0
      %2473 = vmatpush2.bf16.msra.mxu0 %v2427
      %2474 = vmatprep.subr.bf16.mxu0 0
      %2475 = vmatpush2.bf16.msra.mxu0 %v2425
      %2476 = vmatprep.subr.bf16.mxu0 0
      %2477 = vmatpush2.bf16.msra.mxu0 %v2423
      %2478 = vmatprep.subr.bf16.mxu0 0
      %2479 = vmatpush2.bf16.msra.mxu0 %v2421
      %2480 = vmatprep.subr.bf16.mxu0 0
      %2481 = vmatpush2.bf16.msra.mxu0 %v2419
      %2482 = vmatprep.mubr.bf16.mxu0 %v2355
      %2483 = vmatmul.mubr.bf16.gmra.mxu0 %v2354
      %v2484 = vpop.f32.mrf.mxu0
      %v2485 = vadd.f32 0.0, %v2484
      %v2486 = vpop.f32.mrf.mxu0
      %v2487 = vpop.f32.mrf.mxu0
      %v2488 = vadd.f32 0.0, %v2487
      %v2489 = vpop.f32.mrf.mxu0
      %2490 = vmatprep.mubr.bf16.mxu0 %v2357
      %2491 = vmatmul.mubr.bf16.gmra.mxu0 %v2356
      %v2492 = vpop.f32.mrf.mxu0
      %v2493 = vadd.f32 0.0, %v2492
      %v2494 = vpop.f32.mrf.mxu0
      %v2495 = vpop.f32.mrf.mxu0
      %v2496 = vadd.f32 0.0, %v2495
      %v2497 = vpop.f32.mrf.mxu0
      %2498 = vmatprep.mubr.bf16.mxu0 %v2359
      %2499 = vmatmul.mubr.bf16.gmra.mxu0 %v2358
      %v2500 = vpop.f32.mrf.mxu0
      %v2501 = vadd.f32 0.0, %v2500
      %v2502 = vpop.f32.mrf.mxu0
      %v2503 = vpop.f32.mrf.mxu0
      %v2504 = vadd.f32 0.0, %v2503
      %v2505 = vpop.f32.mrf.mxu0
      %2506 = vmatprep.mubr.bf16.mxu0 %v2361
      %2507 = vmatmul.mubr.bf16.gmra.mxu0 %v2360
      %v2508 = vpop.f32.mrf.mxu0
      %v2509 = vadd.f32 0.0, %v2508
      %v2510 = vpop.f32.mrf.mxu0
      %v2511 = vpop.f32.mrf.mxu0
      %v2512 = vadd.f32 0.0, %v2511
      %v2513 = vpop.f32.mrf.mxu0
      %2514 = vmatprep.mubr.bf16.mxu0 %v2363
      %2515 = vmatmul.mubr.bf16.gmra.mxu0 %v2362
      %v2516 = vpop.f32.mrf.mxu0
      %v2517 = vadd.f32 0.0, %v2516
      %v2518 = vpop.f32.mrf.mxu0
      %v2519 = vpop.f32.mrf.mxu0
      %v2520 = vadd.f32 0.0, %v2519
      %v2521 = vpop.f32.mrf.mxu0
      %2522 = vmatprep.mubr.bf16.mxu0 %v2365
      %2523 = vmatmul.mubr.bf16.gmra.mxu0 %v2364
      %v2524 = vpop.f32.mrf.mxu0
      %v2525 = vadd.f32 0.0, %v2524
      %v2526 = vpop.f32.mrf.mxu0
      %v2527 = vpop.f32.mrf.mxu0
      %v2528 = vadd.f32 0.0, %v2527
      %v2529 = vpop.f32.mrf.mxu0
      %2530 = vmatprep.mubr.bf16.mxu0 %v2367
      %2531 = vmatmul.mubr.bf16.gmra.mxu0 %v2366
      %v2532 = vpop.f32.mrf.mxu0
      %v2533 = vadd.f32 0.0, %v2532
      %v2534 = vpop.f32.mrf.mxu0
      %v2535 = vpop.f32.mrf.mxu0
      %v2536 = vadd.f32 0.0, %v2535
      %v2537 = vpop.f32.mrf.mxu0
      %2538 = vmatprep.mubr.bf16.mxu0 %v2369
      %2539 = vmatmul.mubr.bf16.gmra.mxu0 %v2368
      %v2540 = vpop.f32.mrf.mxu0
      %v2541 = vadd.f32 0.0, %v2540
      %v2542 = vpop.f32.mrf.mxu0
      %v2543 = vpop.f32.mrf.mxu0
      %v2544 = vadd.f32 0.0, %v2543
      %v2545 = vpop.f32.mrf.mxu0
      %2546 = vmatprep.mubr.bf16.mxu0 %v2371
      %2547 = vmatmul.mubr.bf16.gmra.mxu0 %v2370
      %v2548 = vpop.f32.mrf.mxu0
      %v2549 = vadd.f32 0.0, %v2548
      %v2550 = vpop.f32.mrf.mxu0
      %v2551 = vpop.f32.mrf.mxu0
      %v2552 = vadd.f32 0.0, %v2551
      %v2553 = vpop.f32.mrf.mxu0
      %2554 = vmatprep.mubr.bf16.mxu0 %v2373
      %2555 = vmatmul.mubr.bf16.gmra.mxu0 %v2372
      %v2556 = vpop.f32.mrf.mxu0
      %v2557 = vadd.f32 0.0, %v2556
      %v2558 = vpop.f32.mrf.mxu0
      %v2559 = vpop.f32.mrf.mxu0
      %v2560 = vadd.f32 0.0, %v2559
      %v2561 = vpop.f32.mrf.mxu0
      %2562 = vmatprep.mubr.bf16.mxu0 %v2375
      %2563 = vmatmul.mubr.bf16.gmra.mxu0 %v2374
      %v2564 = vpop.f32.mrf.mxu0
      %v2565 = vadd.f32 0.0, %v2564
      %v2566 = vpop.f32.mrf.mxu0
      %v2567 = vpop.f32.mrf.mxu0
      %v2568 = vadd.f32 0.0, %v2567
      %v2569 = vpop.f32.mrf.mxu0
      %2570 = vmatprep.mubr.bf16.mxu0 %v2377
      %2571 = vmatmul.mubr.bf16.gmra.mxu0 %v2376
      %v2572 = vpop.f32.mrf.mxu0
      %v2573 = vadd.f32 0.0, %v2572
      %v2574 = vpop.f32.mrf.mxu0
      %v2575 = vpop.f32.mrf.mxu0
      %v2576 = vadd.f32 0.0, %v2575
      %v2577 = vpop.f32.mrf.mxu0
      %2578 = vmatprep.mubr.bf16.mxu0 %v2379
      %2579 = vmatmul.mubr.bf16.gmra.mxu0 %v2378
      %v2580 = vpop.f32.mrf.mxu0
      %v2581 = vadd.f32 0.0, %v2580
      %v2582 = vpop.f32.mrf.mxu0
      %v2583 = vpop.f32.mrf.mxu0
      %v2584 = vadd.f32 0.0, %v2583
      %v2585 = vpop.f32.mrf.mxu0
      %2586 = vmatprep.mubr.bf16.mxu0 %v2381
      %2587 = vmatmul.mubr.bf16.gmra.mxu0 %v2380
      %v2588 = vpop.f32.mrf.mxu0
      %v2589 = vadd.f32 0.0, %v2588
      %v2590 = vpop.f32.mrf.mxu0
      %v2591 = vpop.f32.mrf.mxu0
      %v2592 = vadd.f32 0.0, %v2591
      %v2593 = vpop.f32.mrf.mxu0
      %2594 = vmatprep.mubr.bf16.mxu0 %v2383
      %2595 = vmatmul.mubr.bf16.gmra.mxu0 %v2382
      %v2596 = vpop.f32.mrf.mxu0
      %v2597 = vadd.f32 0.0, %v2596
      %v2598 = vpop.f32.mrf.mxu0
      %v2599 = vpop.f32.mrf.mxu0
      %v2600 = vadd.f32 0.0, %v2599
      %v2601 = vpop.f32.mrf.mxu0
      %2602 = vmatprep.mubr.bf16.mxu0 %v2385
      %2603 = vmatmul.mubr.bf16.gmra.mxu0 %v2384
      %v2604 = vpop.f32.mrf.mxu0
      %v2605 = vadd.f32 0.0, %v2604
      %v2606 = vpop.f32.mrf.mxu0
      %v2607 = vpop.f32.mrf.mxu0
      %v2608 = vadd.f32 0.0, %v2607
      %v2609 = vpop.f32.mrf.mxu0
      %2610 = vdwg.mxu0
      %v2611 = vpack.c.bf16 %v2488, %v2485
      %v2612 = vpack.c.bf16 %v2496, %v2493
      %v2613 = vpack.c.bf16 %v2504, %v2501
      %v2614 = vpack.c.bf16 %v2512, %v2509
      %v2615 = vpack.c.bf16 %v2520, %v2517
      %v2616 = vpack.c.bf16 %v2528, %v2525
      %v2617 = vpack.c.bf16 %v2536, %v2533
      %v2618 = vpack.c.bf16 %v2544, %v2541
      %v2619 = vpack.c.bf16 %v2552, %v2549
      %v2620 = vpack.c.bf16 %v2560, %v2557
      %v2621 = vpack.c.bf16 %v2568, %v2565
      %v2622 = vpack.c.bf16 %v2576, %v2573
      %v2623 = vpack.c.bf16 %v2584, %v2581
      %v2624 = vpack.c.bf16 %v2592, %v2589
      %v2625 = vpack.c.bf16 %v2600, %v2597
      %v2626 = vpack.c.bf16 %v2608, %v2605
      %v2627 = vld [vmem:[%s425] sm:$0x3]
      %2628 = vrot.lane.b32.xlu0 %v1312, 124
      %v2629 = vpop.permute.xlu0 %2628
      %2630 = vrot.lane.b32.xlu0 %v1313, 124
      %v2631 = vpop.permute.xlu0 %2630
      %2632 = vrot.lane.b32.xlu0 %v1314, 124
      %v2633 = vpop.permute.xlu0 %2632
      %2634 = vrot.lane.b32.xlu0 %v1315, 124
      %v2635 = vpop.permute.xlu0 %2634
      %2636 = vrot.lane.b32.xlu0 %v1316, 124
      %v2637 = vpop.permute.xlu0 %2636
      %2638 = vrot.lane.b32.xlu0 %v1317, 124
      %v2639 = vpop.permute.xlu0 %2638
      %2640 = vrot.lane.b32.xlu0 %v1318, 124
      %v2641 = vpop.permute.xlu0 %2640
      %2642 = vrot.lane.b32.xlu0 %v1319, 124
      %v2643 = vpop.permute.xlu0 %2642
      %2644 = vrot.lane.b32.xlu0 %v1320, 124
      %v2645 = vpop.permute.xlu0 %2644
      %2646 = vrot.lane.b32.xlu0 %v1321, 124
      %v2647 = vpop.permute.xlu0 %2646
      %2648 = vrot.lane.b32.xlu0 %v1322, 124
      %v2649 = vpop.permute.xlu0 %2648
      %2650 = vrot.lane.b32.xlu0 %v1323, 124
      %v2651 = vpop.permute.xlu0 %2650
      %2652 = vrot.lane.b32.xlu0 %v1324, 124
      %v2653 = vpop.permute.xlu0 %2652
      %2654 = vrot.lane.b32.xlu0 %v1325, 124
      %v2655 = vpop.permute.xlu0 %2654
      %2656 = vrot.lane.b32.xlu0 %v1326, 124
      %v2657 = vpop.permute.xlu0 %2656
      %2658 = vrot.lane.b32.xlu0 %v1327, 124
      %v2659 = vpop.permute.xlu0 %2658
      %2660 = vrot.lane.b32.xlu0 %v1520, 92
      %v2661 = vpop.permute.xlu0 %2660
      %2662 = vrot.lane.b32.xlu0 %v1521, 92
      %v2663 = vpop.permute.xlu0 %2662
      %2664 = vrot.lane.b32.xlu0 %v1522, 92
      %v2665 = vpop.permute.xlu0 %2664
      %2666 = vrot.lane.b32.xlu0 %v1523, 92
      %v2667 = vpop.permute.xlu0 %2666
      %2668 = vrot.lane.b32.xlu0 %v1524, 92
      %v2669 = vpop.permute.xlu0 %2668
      %2670 = vrot.lane.b32.xlu0 %v1525, 92
      %v2671 = vpop.permute.xlu0 %2670
      %2672 = vrot.lane.b32.xlu0 %v1526, 92
      %v2673 = vpop.permute.xlu0 %2672
      %2674 = vrot.lane.b32.xlu0 %v1527, 92
      %v2675 = vpop.permute.xlu0 %2674
      %2676 = vrot.lane.b32.xlu0 %v1528, 92
      %v2677 = vpop.permute.xlu0 %2676
      %2678 = vrot.lane.b32.xlu0 %v1529, 92
      %v2679 = vpop.permute.xlu0 %2678
      %2680 = vrot.lane.b32.xlu0 %v1530, 92
      %v2681 = vpop.permute.xlu0 %2680
      %2682 = vrot.lane.b32.xlu0 %v1531, 92
      %v2683 = vpop.permute.xlu0 %2682
      %2684 = vrot.lane.b32.xlu0 %v1532, 92
      %v2685 = vpop.permute.xlu0 %2684
      %2686 = vrot.lane.b32.xlu0 %v1533, 92
      %v2687 = vpop.permute.xlu0 %2686
      %2688 = vrot.lane.b32.xlu0 %v1534, 92
      %v2689 = vpop.permute.xlu0 %2688
      %2690 = vrot.lane.b32.xlu0 %v1535, 92
      %v2691 = vpop.permute.xlu0 %2690
      %v2693 = vsel %vm1584, %v2629, 0
      %v2696 = vsel %vm1584, %v2631, 0
      %v2699 = vsel %vm1584, %v2633, 0
      %v2702 = vsel %vm1584, %v2635, 0
      %v2705 = vsel %vm1584, %v2637, 0
      %v2708 = vsel %vm1584, %v2639, 0
      %v2711 = vsel %vm1584, %v2641, 0
      %v2714 = vsel %vm1584, %v2643, 0
      %v2717 = vsel %vm1584, %v2645, 0
      %v2720 = vsel %vm1584, %v2647, 0
      %v2723 = vsel %vm1584, %v2649, 0
      %v2726 = vsel %vm1584, %v2651, 0
      %v2729 = vsel %vm1584, %v2653, 0
      %v2732 = vsel %vm1584, %v2655, 0
      %v2735 = vsel %vm1584, %v2657, 0
      %v2738 = vsel %vm1584, %v2659, 0
      %v2741 = vsel %vm1584, %v2661, 0
      %v2744 = vsel %vm1584, %v2663, 0
      %v2747 = vsel %vm1584, %v2665, 0
      %v2750 = vsel %vm1584, %v2667, 0
      %v2753 = vsel %vm1584, %v2669, 0
      %v2756 = vsel %vm1584, %v2671, 0
      %v2759 = vsel %vm1584, %v2673, 0
      %v2762 = vsel %vm1584, %v2675, 0
      %v2765 = vsel %vm1584, %v2677, 0
      %v2768 = vsel %vm1584, %v2679, 0
      %v2771 = vsel %vm1584, %v2681, 0
      %v2774 = vsel %vm1584, %v2683, 0
      %v2777 = vsel %vm1584, %v2685, 0
      %v2780 = vsel %vm1584, %v2687, 0
      %v2783 = vsel %vm1584, %v2689, 0
      %v2786 = vsel %vm1584, %v2691, 0
      %2788 = vmatprep.subr.bf16.mxu0 0
      %2789 = vmatpush1.bf16.xpose.msra.mxu0 %v2762
      %2790 = vmatprep.subr.bf16.mxu0 0
      %2791 = vmatpush1.bf16.xpose.msra.mxu0 %v2759
      %2792 = vmatprep.subr.bf16.mxu0 0
      %2793 = vmatpush1.bf16.xpose.msra.mxu0 %v2756
      %2794 = vmatprep.subr.bf16.mxu0 0
      %2795 = vmatpush1.bf16.xpose.msra.mxu0 %v2753
      %2796 = vmatprep.subr.bf16.mxu0 0
      %2797 = vmatpush1.bf16.xpose.msra.mxu0 %v2750
      %2798 = vmatprep.subr.bf16.mxu0 0
      %2799 = vmatpush1.bf16.xpose.msra.mxu0 %v2747
      %2800 = vmatprep.subr.bf16.mxu0 0
      %2801 = vmatpush1.bf16.xpose.msra.mxu0 %v2744
      %2802 = vmatprep.subr.bf16.mxu0 0
      %2803 = vmatpush1.bf16.xpose.msra.mxu0 %v2741
      %2804 = vmatprep.subr.bf16.mxu0 0
      %2805 = vmatpush2.bf16.xpose.msra.mxu0 %v2786
      %2806 = vmatprep.subr.bf16.mxu0 0
      %2807 = vmatpush2.bf16.xpose.msra.mxu0 %v2783
      %2808 = vmatprep.subr.bf16.mxu0 0
      %2809 = vmatpush2.bf16.xpose.msra.mxu0 %v2780
      %2810 = vmatprep.subr.bf16.mxu0 0
      %2811 = vmatpush2.bf16.xpose.msra.mxu0 %v2777
      %2812 = vmatprep.subr.bf16.mxu0 0
      %2813 = vmatpush2.bf16.xpose.msra.mxu0 %v2774
      %2814 = vmatprep.subr.bf16.mxu0 0
      %2815 = vmatpush2.bf16.xpose.msra.mxu0 %v2771
      %2816 = vmatprep.subr.bf16.mxu0 0
      %2817 = vmatpush2.bf16.xpose.msra.mxu0 %v2768
      %2818 = vmatprep.subr.bf16.mxu0 0
      %2819 = vmatpush2.bf16.xpose.msra.mxu0 %v2765
      %2820 = vmatprep.mubr.bf16.mxu0 0
      %2821 = vmatmul.mubr.bf16.gmra.mxu0 %v2693
      %v2822 = vpop.f32.mrf.mxu0
      %v2823 = vadd.f32 0.0, %v2822
      %v2824 = vpop.f32.mrf.mxu0
      %v2825 = vadd.f32 0.0, %v2824
      %v2826 = vpop.f32.mrf.mxu0
      %v2827 = vadd.f32 0.0, %v2826
      %v2828 = vpop.f32.mrf.mxu0
      %v2829 = vadd.f32 0.0, %v2828
      %2830 = vmatprep.mubr.bf16.mxu0 0
      %2831 = vmatmul.mubr.bf16.gmra.mxu0 %v2696
      %v2832 = vpop.f32.mrf.mxu0
      %v2833 = vadd.f32 0.0, %v2832
      %v2834 = vpop.f32.mrf.mxu0
      %v2835 = vadd.f32 0.0, %v2834
      %v2836 = vpop.f32.mrf.mxu0
      %v2837 = vadd.f32 0.0, %v2836
      %v2838 = vpop.f32.mrf.mxu0
      %v2839 = vadd.f32 0.0, %v2838
      %2840 = vmatprep.mubr.bf16.mxu0 0
      %2841 = vmatmul.mubr.bf16.gmra.mxu0 %v2699
      %v2842 = vpop.f32.mrf.mxu0
      %v2843 = vadd.f32 0.0, %v2842
      %v2844 = vpop.f32.mrf.mxu0
      %v2845 = vadd.f32 0.0, %v2844
      %v2846 = vpop.f32.mrf.mxu0
      %v2847 = vadd.f32 0.0, %v2846
      %v2848 = vpop.f32.mrf.mxu0
      %v2849 = vadd.f32 0.0, %v2848
      %2850 = vmatprep.mubr.bf16.mxu0 0
      %2851 = vmatmul.mubr.bf16.gmra.mxu0 %v2702
      %v2852 = vpop.f32.mrf.mxu0
      %v2853 = vadd.f32 0.0, %v2852
      %v2854 = vpop.f32.mrf.mxu0
      %v2855 = vadd.f32 0.0, %v2854
      %v2856 = vpop.f32.mrf.mxu0
      %v2857 = vadd.f32 0.0, %v2856
      %v2858 = vpop.f32.mrf.mxu0
      %v2859 = vadd.f32 0.0, %v2858
      %2860 = vmatprep.mubr.bf16.mxu0 0
      %2861 = vmatmul.mubr.bf16.gmra.mxu0 %v2705
      %v2862 = vpop.f32.mrf.mxu0
      %v2863 = vadd.f32 0.0, %v2862
      %v2864 = vpop.f32.mrf.mxu0
      %v2865 = vadd.f32 0.0, %v2864
      %v2866 = vpop.f32.mrf.mxu0
      %v2867 = vadd.f32 0.0, %v2866
      %v2868 = vpop.f32.mrf.mxu0
      %v2869 = vadd.f32 0.0, %v2868
      %2870 = vmatprep.mubr.bf16.mxu0 0
      %2871 = vmatmul.mubr.bf16.gmra.mxu0 %v2708
      %v2872 = vpop.f32.mrf.mxu0
      %v2873 = vadd.f32 0.0, %v2872
      %v2874 = vpop.f32.mrf.mxu0
      %v2875 = vadd.f32 0.0, %v2874
      %v2876 = vpop.f32.mrf.mxu0
      %v2877 = vadd.f32 0.0, %v2876
      %v2878 = vpop.f32.mrf.mxu0
      %v2879 = vadd.f32 0.0, %v2878
      %2880 = vmatprep.mubr.bf16.mxu0 0
      %2881 = vmatmul.mubr.bf16.gmra.mxu0 %v2711
      %v2882 = vpop.f32.mrf.mxu0
      %v2883 = vadd.f32 0.0, %v2882
      %v2884 = vpop.f32.mrf.mxu0
      %v2885 = vadd.f32 0.0, %v2884
      %v2886 = vpop.f32.mrf.mxu0
      %v2887 = vadd.f32 0.0, %v2886
      %v2888 = vpop.f32.mrf.mxu0
      %v2889 = vadd.f32 0.0, %v2888
      %2890 = vmatprep.mubr.bf16.mxu0 0
      %2891 = vmatmul.mubr.bf16.gmra.mxu0 %v2714
      %v2892 = vpop.f32.mrf.mxu0
      %v2893 = vadd.f32 0.0, %v2892
      %v2894 = vpop.f32.mrf.mxu0
      %v2895 = vadd.f32 0.0, %v2894
      %v2896 = vpop.f32.mrf.mxu0
      %v2897 = vadd.f32 0.0, %v2896
      %v2898 = vpop.f32.mrf.mxu0
      %v2899 = vadd.f32 0.0, %v2898
      %2900 = vmatprep.mubr.bf16.mxu0 0
      %2901 = vmatmul.mubr.bf16.gmra.mxu0 %v2717
      %v2902 = vpop.f32.mrf.mxu0
      %v2903 = vadd.f32 0.0, %v2902
      %v2904 = vpop.f32.mrf.mxu0
      %v2905 = vadd.f32 0.0, %v2904
      %v2906 = vpop.f32.mrf.mxu0
      %v2907 = vadd.f32 0.0, %v2906
      %v2908 = vpop.f32.mrf.mxu0
      %v2909 = vadd.f32 0.0, %v2908
      %2910 = vmatprep.mubr.bf16.mxu0 0
      %2911 = vmatmul.mubr.bf16.gmra.mxu0 %v2720
      %v2912 = vpop.f32.mrf.mxu0
      %v2913 = vadd.f32 0.0, %v2912
      %v2914 = vpop.f32.mrf.mxu0
      %v2915 = vadd.f32 0.0, %v2914
      %v2916 = vpop.f32.mrf.mxu0
      %v2917 = vadd.f32 0.0, %v2916
      %v2918 = vpop.f32.mrf.mxu0
      %v2919 = vadd.f32 0.0, %v2918
      %2920 = vmatprep.mubr.bf16.mxu0 0
      %2921 = vmatmul.mubr.bf16.gmra.mxu0 %v2723
      %v2922 = vpop.f32.mrf.mxu0
      %v2923 = vadd.f32 0.0, %v2922
      %v2924 = vpop.f32.mrf.mxu0
      %v2925 = vadd.f32 0.0, %v2924
      %v2926 = vpop.f32.mrf.mxu0
      %v2927 = vadd.f32 0.0, %v2926
      %v2928 = vpop.f32.mrf.mxu0
      %v2929 = vadd.f32 0.0, %v2928
      %2930 = vmatprep.mubr.bf16.mxu0 0
      %2931 = vmatmul.mubr.bf16.gmra.mxu0 %v2726
      %v2932 = vpop.f32.mrf.mxu0
      %v2933 = vadd.f32 0.0, %v2932
      %v2934 = vpop.f32.mrf.mxu0
      %v2935 = vadd.f32 0.0, %v2934
      %v2936 = vpop.f32.mrf.mxu0
      %v2937 = vadd.f32 0.0, %v2936
      %v2938 = vpop.f32.mrf.mxu0
      %v2939 = vadd.f32 0.0, %v2938
      %2940 = vmatprep.mubr.bf16.mxu0 0
      %2941 = vmatmul.mubr.bf16.gmra.mxu0 %v2729
      %v2942 = vpop.f32.mrf.mxu0
      %v2943 = vadd.f32 0.0, %v2942
      %v2944 = vpop.f32.mrf.mxu0
      %v2945 = vadd.f32 0.0, %v2944
      %v2946 = vpop.f32.mrf.mxu0
      %v2947 = vadd.f32 0.0, %v2946
      %v2948 = vpop.f32.mrf.mxu0
      %v2949 = vadd.f32 0.0, %v2948
      %2950 = vmatprep.mubr.bf16.mxu0 0
      %2951 = vmatmul.mubr.bf16.gmra.mxu0 %v2732
      %v2952 = vpop.f32.mrf.mxu0
      %v2953 = vadd.f32 0.0, %v2952
      %v2954 = vpop.f32.mrf.mxu0
      %v2955 = vadd.f32 0.0, %v2954
      %v2956 = vpop.f32.mrf.mxu0
      %v2957 = vadd.f32 0.0, %v2956
      %v2958 = vpop.f32.mrf.mxu0
      %v2959 = vadd.f32 0.0, %v2958
      %2960 = vmatprep.mubr.bf16.mxu0 0
      %2961 = vmatmul.mubr.bf16.gmra.mxu0 %v2735
      %v2962 = vpop.f32.mrf.mxu0
      %v2963 = vadd.f32 0.0, %v2962
      %v2964 = vpop.f32.mrf.mxu0
      %v2965 = vadd.f32 0.0, %v2964
      %v2966 = vpop.f32.mrf.mxu0
      %v2967 = vadd.f32 0.0, %v2966
      %v2968 = vpop.f32.mrf.mxu0
      %v2969 = vadd.f32 0.0, %v2968
      %2970 = vmatprep.mubr.bf16.mxu0 0
      %2971 = vmatmul.mubr.bf16.gmra.mxu0 %v2738
      %v2972 = vpop.f32.mrf.mxu0
      %v2973 = vadd.f32 0.0, %v2972
      %v2974 = vpop.f32.mrf.mxu0
      %v2975 = vadd.f32 0.0, %v2974
      %v2976 = vpop.f32.mrf.mxu0
      %v2977 = vadd.f32 0.0, %v2976
      %v2978 = vpop.f32.mrf.mxu0
      %v2979 = vadd.f32 0.0, %v2978
      %2980 = vdwg.mxu0
      %v2981 = vmax.f32 %v2823, %v2825
      %2982 = vmax.xlane.f32.xlu0 %v2981
      %v2983 = vpop.xlane.xlu0 %2982
      %v2984 = vmax.f32 %v2827, %v2829
      %2985 = vmax.xlane.f32.xlu0 %v2984
      %v2986 = vpop.xlane.xlu0 %2985
      %v2987 = vmax.f32 %v2833, %v2835
      %2988 = vmax.xlane.f32.xlu0 %v2987
      %v2989 = vpop.xlane.xlu0 %2988
      %v2990 = vmax.f32 %v2837, %v2839
      %2991 = vmax.xlane.f32.xlu0 %v2990
      %v2992 = vpop.xlane.xlu0 %2991
      %v2993 = vmax.f32 %v2843, %v2845
      %2994 = vmax.xlane.f32.xlu0 %v2993
      %v2995 = vpop.xlane.xlu0 %2994
      %v2996 = vmax.f32 %v2847, %v2849
      %2997 = vmax.xlane.f32.xlu0 %v2996
      %v2998 = vpop.xlane.xlu0 %2997
      %v2999 = vmax.f32 %v2853, %v2855
      %3000 = vmax.xlane.f32.xlu0 %v2999
      %v3001 = vpop.xlane.xlu0 %3000
      %v3002 = vmax.f32 %v2857, %v2859
      %3003 = vmax.xlane.f32.xlu0 %v3002
      %v3004 = vpop.xlane.xlu0 %3003
      %v3005 = vmax.f32 %v2863, %v2865
      %3006 = vmax.xlane.f32.xlu0 %v3005
      %v3007 = vpop.xlane.xlu0 %3006
      %v3008 = vmax.f32 %v2867, %v2869
      %3009 = vmax.xlane.f32.xlu0 %v3008
      %v3010 = vpop.xlane.xlu0 %3009
      %v3011 = vmax.f32 %v2873, %v2875
      %3012 = vmax.xlane.f32.xlu0 %v3011
      %v3013 = vpop.xlane.xlu0 %3012
      %v3014 = vmax.f32 %v2877, %v2879
      %3015 = vmax.xlane.f32.xlu0 %v3014
      %v3016 = vpop.xlane.xlu0 %3015
      %v3017 = vmax.f32 %v2883, %v2885
      %3018 = vmax.xlane.f32.xlu0 %v3017
      %v3019 = vpop.xlane.xlu0 %3018
      %v3020 = vmax.f32 %v2887, %v2889
      %3021 = vmax.xlane.f32.xlu0 %v3020
      %v3022 = vpop.xlane.xlu0 %3021
      %v3023 = vmax.f32 %v2893, %v2895
      %3024 = vmax.xlane.f32.xlu0 %v3023
      %v3025 = vpop.xlane.xlu0 %3024
      %v3026 = vmax.f32 %v2897, %v2899
      %3027 = vmax.xlane.f32.xlu0 %v3026
      %v3028 = vpop.xlane.xlu0 %3027
      %v3029 = vmax.f32 %v2903, %v2905
      %3030 = vmax.xlane.f32.xlu0 %v3029
      %v3031 = vpop.xlane.xlu0 %3030
      %v3032 = vmax.f32 %v2907, %v2909
      %3033 = vmax.xlane.f32.xlu0 %v3032
      %v3034 = vpop.xlane.xlu0 %3033
      %v3035 = vmax.f32 %v2913, %v2915
      %3036 = vmax.xlane.f32.xlu0 %v3035
      %v3037 = vpop.xlane.xlu0 %3036
      %v3038 = vmax.f32 %v2917, %v2919
      %3039 = vmax.xlane.f32.xlu0 %v3038
      %v3040 = vpop.xlane.xlu0 %3039
      %v3041 = vmax.f32 %v2923, %v2925
      %3042 = vmax.xlane.f32.xlu0 %v3041
      %v3043 = vpop.xlane.xlu0 %3042
      %v3044 = vmax.f32 %v2927, %v2929
      %3045 = vmax.xlane.f32.xlu0 %v3044
      %v3046 = vpop.xlane.xlu0 %3045
      %v3047 = vmax.f32 %v2933, %v2935
      %3048 = vmax.xlane.f32.xlu0 %v3047
      %v3049 = vpop.xlane.xlu0 %3048
      %v3050 = vmax.f32 %v2937, %v2939
      %3051 = vmax.xlane.f32.xlu0 %v3050
      %v3052 = vpop.xlane.xlu0 %3051
      %v3053 = vmax.f32 %v2943, %v2945
      %3054 = vmax.xlane.f32.xlu0 %v3053
      %v3055 = vpop.xlane.xlu0 %3054
      %v3056 = vmax.f32 %v2947, %v2949
      %3057 = vmax.xlane.f32.xlu0 %v3056
      %v3058 = vpop.xlane.xlu0 %3057
      %v3059 = vmax.f32 %v2953, %v2955
      %3060 = vmax.xlane.f32.xlu0 %v3059
      %v3061 = vpop.xlane.xlu0 %3060
      %v3062 = vmax.f32 %v2957, %v2959
      %3063 = vmax.xlane.f32.xlu0 %v3062
      %v3064 = vpop.xlane.xlu0 %3063
      %v3065 = vmax.f32 %v2963, %v2965
      %3066 = vmax.xlane.f32.xlu0 %v3065
      %v3067 = vpop.xlane.xlu0 %3066
      %v3068 = vmax.f32 %v2967, %v2969
      %3069 = vmax.xlane.f32.xlu0 %v3068
      %v3070 = vpop.xlane.xlu0 %3069
      %v3071 = vmax.f32 %v2973, %v2975
      %3072 = vmax.xlane.f32.xlu0 %v3071
      %v3073 = vpop.xlane.xlu0 %3072
      %v3074 = vmax.f32 %v2977, %v2979
      %3075 = vmax.xlane.f32.xlu0 %v3074
      %v3076 = vpop.xlane.xlu0 %3075
      %v3077 = vsub.f32 %v2823, %v2983
      %v3078 = vsub.f32 %v2825, %v2983
      %v3079 = vsub.f32 %v2827, %v2986
      %v3080 = vsub.f32 %v2829, %v2986
      %v3081 = vsub.f32 %v2833, %v2989
      %v3082 = vsub.f32 %v2835, %v2989
      %v3083 = vsub.f32 %v2837, %v2992
      %v3084 = vsub.f32 %v2839, %v2992
      %v3085 = vsub.f32 %v2843, %v2995
      %v3086 = vsub.f32 %v2845, %v2995
      %v3087 = vsub.f32 %v2847, %v2998
      %v3088 = vsub.f32 %v2849, %v2998
      %v3089 = vsub.f32 %v2853, %v3001
      %v3090 = vsub.f32 %v2855, %v3001
      %v3091 = vsub.f32 %v2857, %v3004
      %v3092 = vsub.f32 %v2859, %v3004
      %v3093 = vsub.f32 %v2863, %v3007
      %v3094 = vsub.f32 %v2865, %v3007
      %v3095 = vsub.f32 %v2867, %v3010
      %v3096 = vsub.f32 %v2869, %v3010
      %v3097 = vsub.f32 %v2873, %v3013
      %v3098 = vsub.f32 %v2875, %v3013
      %v3099 = vsub.f32 %v2877, %v3016
      %v3100 = vsub.f32 %v2879, %v3016
      %v3101 = vsub.f32 %v2883, %v3019
      %v3102 = vsub.f32 %v2885, %v3019
      %v3103 = vsub.f32 %v2887, %v3022
      %v3104 = vsub.f32 %v2889, %v3022
      %v3105 = vsub.f32 %v2893, %v3025
      %v3106 = vsub.f32 %v2895, %v3025
      %v3107 = vsub.f32 %v2897, %v3028
      %v3108 = vsub.f32 %v2899, %v3028
      %v3109 = vsub.f32 %v2903, %v3031
      %v3110 = vsub.f32 %v2905, %v3031
      %v3111 = vsub.f32 %v2907, %v3034
      %v3112 = vsub.f32 %v2909, %v3034
      %v3113 = vsub.f32 %v2913, %v3037
      %v3114 = vsub.f32 %v2915, %v3037
      %v3115 = vsub.f32 %v2917, %v3040
      %v3116 = vsub.f32 %v2919, %v3040
      %v3117 = vsub.f32 %v2923, %v3043
      %v3118 = vsub.f32 %v2925, %v3043
      %v3119 = vsub.f32 %v2927, %v3046
      %v3120 = vsub.f32 %v2929, %v3046
      %v3121 = vsub.f32 %v2933, %v3049
      %v3122 = vsub.f32 %v2935, %v3049
      %v3123 = vsub.f32 %v2937, %v3052
      %v3124 = vsub.f32 %v2939, %v3052
      %v3125 = vsub.f32 %v2943, %v3055
      %v3126 = vsub.f32 %v2945, %v3055
      %v3127 = vsub.f32 %v2947, %v3058
      %v3128 = vsub.f32 %v2949, %v3058
      %v3129 = vsub.f32 %v2953, %v3061
      %v3130 = vsub.f32 %v2955, %v3061
      %v3131 = vsub.f32 %v2957, %v3064
      %v3132 = vsub.f32 %v2959, %v3064
      %v3133 = vsub.f32 %v2963, %v3067
      %v3134 = vsub.f32 %v2965, %v3067
      %v3135 = vsub.f32 %v2967, %v3070
      %v3136 = vsub.f32 %v2969, %v3070
      %v3137 = vsub.f32 %v2973, %v3073
      %v3138 = vsub.f32 %v2975, %v3073
      %v3139 = vsub.f32 %v2977, %v3076
      %v3140 = vsub.f32 %v2979, %v3076
      %v3141 = vmul.f32 %v3077, 1.442695
      %v3142 = vpow.pop %v3141
      %v3143 = vmul.f32 %v3078, 1.442695
      %v3144 = vpow.pop %v3143
      %v3145 = vmul.f32 %v3079, 1.442695
      %v3146 = vpow.pop %v3145
      %v3147 = vmul.f32 %v3080, 1.442695
      %v3148 = vpow.pop %v3147
      %v3149 = vmul.f32 %v3081, 1.442695
      %v3150 = vpow.pop %v3149
      %v3151 = vmul.f32 %v3082, 1.442695
      %v3152 = vpow.pop %v3151
      %v3153 = vmul.f32 %v3083, 1.442695
      %v3154 = vpow.pop %v3153
      %v3155 = vmul.f32 %v3084, 1.442695
      %v3156 = vpow.pop %v3155
      %v3157 = vmul.f32 %v3085, 1.442695
      %v3158 = vpow.pop %v3157
      %v3159 = vmul.f32 %v3086, 1.442695
      %v3160 = vpow.pop %v3159
      %v3161 = vmul.f32 %v3087, 1.442695
      %v3162 = vpow.pop %v3161
      %v3163 = vmul.f32 %v3088, 1.442695
      %v3164 = vpow.pop %v3163
      %v3165 = vmul.f32 %v3089, 1.442695
      %v3166 = vpow.pop %v3165
      %v3167 = vmul.f32 %v3090, 1.442695
      %v3168 = vpow.pop %v3167
      %v3169 = vmul.f32 %v3091, 1.442695
      %v3170 = vpow.pop %v3169
      %v3171 = vmul.f32 %v3092, 1.442695
      %v3172 = vpow.pop %v3171
      %v3173 = vmul.f32 %v3093, 1.442695
      %v3174 = vpow.pop %v3173
      %v3175 = vmul.f32 %v3094, 1.442695
      %v3176 = vpow.pop %v3175
      %v3177 = vmul.f32 %v3095, 1.442695
      %v3178 = vpow.pop %v3177
      %v3179 = vmul.f32 %v3096, 1.442695
      %v3180 = vpow.pop %v3179
      %v3181 = vmul.f32 %v3097, 1.442695
      %v3182 = vpow.pop %v3181
      %v3183 = vmul.f32 %v3098, 1.442695
      %v3184 = vpow.pop %v3183
      %v3185 = vmul.f32 %v3099, 1.442695
      %v3186 = vpow.pop %v3185
      %v3187 = vmul.f32 %v3100, 1.442695
      %v3188 = vpow.pop %v3187
      %v3189 = vmul.f32 %v3101, 1.442695
      %v3190 = vpow.pop %v3189
      %v3191 = vmul.f32 %v3102, 1.442695
      %v3192 = vpow.pop %v3191
      %v3193 = vmul.f32 %v3103, 1.442695
      %v3194 = vpow.pop %v3193
      %v3195 = vmul.f32 %v3104, 1.442695
      %v3196 = vpow.pop %v3195
      %v3197 = vmul.f32 %v3105, 1.442695
      %v3198 = vpow.pop %v3197
      %v3199 = vmul.f32 %v3106, 1.442695
      %v3200 = vpow.pop %v3199
      %v3201 = vmul.f32 %v3107, 1.442695
      %v3202 = vpow.pop %v3201
      %v3203 = vmul.f32 %v3108, 1.442695
      %v3204 = vpow.pop %v3203
      %v3205 = vmul.f32 %v3109, 1.442695
      %v3206 = vpow.pop %v3205
      %v3207 = vmul.f32 %v3110, 1.442695
      %v3208 = vpow.pop %v3207
      %v3209 = vmul.f32 %v3111, 1.442695
      %v3210 = vpow.pop %v3209
      %v3211 = vmul.f32 %v3112, 1.442695
      %v3212 = vpow.pop %v3211
      %v3213 = vmul.f32 %v3113, 1.442695
      %v3214 = vpow.pop %v3213
      %v3215 = vmul.f32 %v3114, 1.442695
      %v3216 = vpow.pop %v3215
      %v3217 = vmul.f32 %v3115, 1.442695
      %v3218 = vpow.pop %v3217
      %v3219 = vmul.f32 %v3116, 1.442695
      %v3220 = vpow.pop %v3219
      %v3221 = vmul.f32 %v3117, 1.442695
      %v3222 = vpow.pop %v3221
      %v3223 = vmul.f32 %v3118, 1.442695
      %v3224 = vpow.pop %v3223
      %v3225 = vmul.f32 %v3119, 1.442695
      %v3226 = vpow.pop %v3225
      %v3227 = vmul.f32 %v3120, 1.442695
      %v3228 = vpow.pop %v3227
      %v3229 = vmul.f32 %v3121, 1.442695
      %v3230 = vpow.pop %v3229
      %v3231 = vmul.f32 %v3122, 1.442695
      %v3232 = vpow.pop %v3231
      %v3233 = vmul.f32 %v3123, 1.442695
      %v3234 = vpow.pop %v3233
      %v3235 = vmul.f32 %v3124, 1.442695
      %v3236 = vpow.pop %v3235
      %v3237 = vmul.f32 %v3125, 1.442695
      %v3238 = vpow.pop %v3237
      %v3239 = vmul.f32 %v3126, 1.442695
      %v3240 = vpow.pop %v3239
      %v3241 = vmul.f32 %v3127, 1.442695
      %v3242 = vpow.pop %v3241
      %v3243 = vmul.f32 %v3128, 1.442695
      %v3244 = vpow.pop %v3243
      %v3245 = vmul.f32 %v3129, 1.442695
      %v3246 = vpow.pop %v3245
      %v3247 = vmul.f32 %v3130, 1.442695
      %v3248 = vpow.pop %v3247
      %v3249 = vmul.f32 %v3131, 1.442695
      %v3250 = vpow.pop %v3249
      %v3251 = vmul.f32 %v3132, 1.442695
      %v3252 = vpow.pop %v3251
      %v3253 = vmul.f32 %v3133, 1.442695
      %v3254 = vpow.pop %v3253
      %v3255 = vmul.f32 %v3134, 1.442695
      %v3256 = vpow.pop %v3255
      %v3257 = vmul.f32 %v3135, 1.442695
      %v3258 = vpow.pop %v3257
      %v3259 = vmul.f32 %v3136, 1.442695
      %v3260 = vpow.pop %v3259
      %v3261 = vmul.f32 %v3137, 1.442695
      %v3262 = vpow.pop %v3261
      %v3263 = vmul.f32 %v3138, 1.442695
      %v3264 = vpow.pop %v3263
      %v3265 = vmul.f32 %v3139, 1.442695
      %v3266 = vpow.pop %v3265
      %v3267 = vmul.f32 %v3140, 1.442695
      %v3268 = vpow.pop %v3267
      %v3269 = vadd.f32 %v3142, %v3144
      %3270 = vadd.xlane.f32.xlu0 %v3269
      %v3271 = vpop.xlane.xlu0 %3270
      %v3272 = vadd.f32 %v3146, %v3148
      %3273 = vadd.xlane.f32.xlu0 %v3272
      %v3274 = vpop.xlane.xlu0 %3273
      %v3275 = vadd.f32 %v3150, %v3152
      %3276 = vadd.xlane.f32.xlu0 %v3275
      %v3277 = vpop.xlane.xlu0 %3276
      %v3278 = vadd.f32 %v3154, %v3156
      %3279 = vadd.xlane.f32.xlu0 %v3278
      %v3280 = vpop.xlane.xlu0 %3279
      %v3281 = vadd.f32 %v3158, %v3160
      %3282 = vadd.xlane.f32.xlu0 %v3281
      %v3283 = vpop.xlane.xlu0 %3282
      %v3284 = vadd.f32 %v3162, %v3164
      %3285 = vadd.xlane.f32.xlu0 %v3284
      %v3286 = vpop.xlane.xlu0 %3285
      %v3287 = vadd.f32 %v3166, %v3168
      %3288 = vadd.xlane.f32.xlu0 %v3287
      %v3289 = vpop.xlane.xlu0 %3288
      %v3290 = vadd.f32 %v3170, %v3172
      %3291 = vadd.xlane.f32.xlu0 %v3290
      %v3292 = vpop.xlane.xlu0 %3291
      %v3293 = vadd.f32 %v3174, %v3176
      %3294 = vadd.xlane.f32.xlu0 %v3293
      %v3295 = vpop.xlane.xlu0 %3294
      %v3296 = vadd.f32 %v3178, %v3180
      %3297 = vadd.xlane.f32.xlu0 %v3296
      %v3298 = vpop.xlane.xlu0 %3297
      %v3299 = vadd.f32 %v3182, %v3184
      %3300 = vadd.xlane.f32.xlu0 %v3299
      %v3301 = vpop.xlane.xlu0 %3300
      %v3302 = vadd.f32 %v3186, %v3188
      %3303 = vadd.xlane.f32.xlu0 %v3302
      %v3304 = vpop.xlane.xlu0 %3303
      %v3305 = vadd.f32 %v3190, %v3192
      %3306 = vadd.xlane.f32.xlu0 %v3305
      %v3307 = vpop.xlane.xlu0 %3306
      %v3308 = vadd.f32 %v3194, %v3196
      %3309 = vadd.xlane.f32.xlu0 %v3308
      %v3310 = vpop.xlane.xlu0 %3309
      %v3311 = vadd.f32 %v3198, %v3200
      %3312 = vadd.xlane.f32.xlu0 %v3311
      %v3313 = vpop.xlane.xlu0 %3312
      %v3314 = vadd.f32 %v3202, %v3204
      %3315 = vadd.xlane.f32.xlu0 %v3314
      %v3316 = vpop.xlane.xlu0 %3315
      %v3317 = vadd.f32 %v3206, %v3208
      %3318 = vadd.xlane.f32.xlu0 %v3317
      %v3319 = vpop.xlane.xlu0 %3318
      %v3320 = vadd.f32 %v3210, %v3212
      %3321 = vadd.xlane.f32.xlu0 %v3320
      %v3322 = vpop.xlane.xlu0 %3321
      %v3323 = vadd.f32 %v3214, %v3216
      %3324 = vadd.xlane.f32.xlu0 %v3323
      %v3325 = vpop.xlane.xlu0 %3324
      %v3326 = vadd.f32 %v3218, %v3220
      %3327 = vadd.xlane.f32.xlu0 %v3326
      %v3328 = vpop.xlane.xlu0 %3327
      %v3329 = vadd.f32 %v3222, %v3224
      %3330 = vadd.xlane.f32.xlu0 %v3329
      %v3331 = vpop.xlane.xlu0 %3330
      %v3332 = vadd.f32 %v3226, %v3228
      %3333 = vadd.xlane.f32.xlu0 %v3332
      %v3334 = vpop.xlane.xlu0 %3333
      %v3335 = vadd.f32 %v3230, %v3232
      %3336 = vadd.xlane.f32.xlu0 %v3335
      %v3337 = vpop.xlane.xlu0 %3336
      %v3338 = vadd.f32 %v3234, %v3236
      %3339 = vadd.xlane.f32.xlu0 %v3338
      %v3340 = vpop.xlane.xlu0 %3339
      %v3341 = vadd.f32 %v3238, %v3240
      %3342 = vadd.xlane.f32.xlu0 %v3341
      %v3343 = vpop.xlane.xlu0 %3342
      %v3344 = vadd.f32 %v3242, %v3244
      %3345 = vadd.xlane.f32.xlu0 %v3344
      %v3346 = vpop.xlane.xlu0 %3345
      %v3347 = vadd.f32 %v3246, %v3248
      %3348 = vadd.xlane.f32.xlu0 %v3347
      %v3349 = vpop.xlane.xlu0 %3348
      %v3350 = vadd.f32 %v3250, %v3252
      %3351 = vadd.xlane.f32.xlu0 %v3350
      %v3352 = vpop.xlane.xlu0 %3351
      %v3353 = vadd.f32 %v3254, %v3256
      %3354 = vadd.xlane.f32.xlu0 %v3353
      %v3355 = vpop.xlane.xlu0 %3354
      %v3356 = vadd.f32 %v3258, %v3260
      %3357 = vadd.xlane.f32.xlu0 %v3356
      %v3358 = vpop.xlane.xlu0 %3357
      %v3359 = vadd.f32 %v3262, %v3264
      %3360 = vadd.xlane.f32.xlu0 %v3359
      %v3361 = vpop.xlane.xlu0 %3360
      %v3362 = vadd.f32 %v3266, %v3268
      %3363 = vadd.xlane.f32.xlu0 %v3362
      %v3364 = vpop.xlane.xlu0 %3363
      %v3365 = vrcp.pop %v3271
      %v3366 = vrcp.pop %v3274
      %v3367 = vrcp.pop %v3277
      %v3368 = vrcp.pop %v3280
      %v3369 = vrcp.pop %v3283
      %v3370 = vrcp.pop %v3286
      %v3371 = vrcp.pop %v3289
      %v3372 = vrcp.pop %v3292
      %v3373 = vrcp.pop %v3295
      %v3374 = vrcp.pop %v3298
      %v3375 = vrcp.pop %v3301
      %v3376 = vrcp.pop %v3304
      %v3377 = vrcp.pop %v3307
      %v3378 = vrcp.pop %v3310
      %v3379 = vrcp.pop %v3313
      %v3380 = vrcp.pop %v3316
      %v3381 = vrcp.pop %v3319
      %v3382 = vrcp.pop %v3322
      %v3383 = vrcp.pop %v3325
      %v3384 = vrcp.pop %v3328
      %v3385 = vrcp.pop %v3331
      %v3386 = vrcp.pop %v3334
      %v3387 = vrcp.pop %v3337
      %v3388 = vrcp.pop %v3340
      %v3389 = vrcp.pop %v3343
      %v3390 = vrcp.pop %v3346
      %v3391 = vrcp.pop %v3349
      %v3392 = vrcp.pop %v3352
      %v3393 = vrcp.pop %v3355
      %v3394 = vrcp.pop %v3358
      %v3395 = vrcp.pop %v3361
      %v3396 = vrcp.pop %v3364
      %v3397 = vmul.f32 %v3142, %v3365
      %v3398 = vmul.f32 %v3144, %v3365
      %v3399 = vmul.f32 %v3146, %v3366
      %v3400 = vmul.f32 %v3148, %v3366
      %v3401 = vmul.f32 %v3150, %v3367
      %v3402 = vmul.f32 %v3152, %v3367
      %v3403 = vmul.f32 %v3154, %v3368
      %v3404 = vmul.f32 %v3156, %v3368
      %v3405 = vmul.f32 %v3158, %v3369
      %v3406 = vmul.f32 %v3160, %v3369
      %v3407 = vmul.f32 %v3162, %v3370
      %v3408 = vmul.f32 %v3164, %v3370
      %v3409 = vmul.f32 %v3166, %v3371
      %v3410 = vmul.f32 %v3168, %v3371
      %v3411 = vmul.f32 %v3170, %v3372
      %v3412 = vmul.f32 %v3172, %v3372
      %v3413 = vmul.f32 %v3174, %v3373
      %v3414 = vmul.f32 %v3176, %v3373
      %v3415 = vmul.f32 %v3178, %v3374
      %v3416 = vmul.f32 %v3180, %v3374
      %v3417 = vmul.f32 %v3182, %v3375
      %v3418 = vmul.f32 %v3184, %v3375
      %v3419 = vmul.f32 %v3186, %v3376
      %v3420 = vmul.f32 %v3188, %v3376
      %v3421 = vmul.f32 %v3190, %v3377
      %v3422 = vmul.f32 %v3192, %v3377
      %v3423 = vmul.f32 %v3194, %v3378
      %v3424 = vmul.f32 %v3196, %v3378
      %v3425 = vmul.f32 %v3198, %v3379
      %v3426 = vmul.f32 %v3200, %v3379
      %v3427 = vmul.f32 %v3202, %v3380
      %v3428 = vmul.f32 %v3204, %v3380
      %v3429 = vmul.f32 %v3206, %v3381
      %v3430 = vmul.f32 %v3208, %v3381
      %v3431 = vmul.f32 %v3210, %v3382
      %v3432 = vmul.f32 %v3212, %v3382
      %v3433 = vmul.f32 %v3214, %v3383
      %v3434 = vmul.f32 %v3216, %v3383
      %v3435 = vmul.f32 %v3218, %v3384
      %v3436 = vmul.f32 %v3220, %v3384
      %v3437 = vmul.f32 %v3222, %v3385
      %v3438 = vmul.f32 %v3224, %v3385
      %v3439 = vmul.f32 %v3226, %v3386
      %v3440 = vmul.f32 %v3228, %v3386
      %v3441 = vmul.f32 %v3230, %v3387
      %v3442 = vmul.f32 %v3232, %v3387
      %v3443 = vmul.f32 %v3234, %v3388
      %v3444 = vmul.f32 %v3236, %v3388
      %v3445 = vmul.f32 %v3238, %v3389
      %v3446 = vmul.f32 %v3240, %v3389
      %v3447 = vmul.f32 %v3242, %v3390
      %v3448 = vmul.f32 %v3244, %v3390
      %v3449 = vmul.f32 %v3246, %v3391
      %v3450 = vmul.f32 %v3248, %v3391
      %v3451 = vmul.f32 %v3250, %v3392
      %v3452 = vmul.f32 %v3252, %v3392
      %v3453 = vmul.f32 %v3254, %v3393
      %v3454 = vmul.f32 %v3256, %v3393
      %v3455 = vmul.f32 %v3258, %v3394
      %v3456 = vmul.f32 %v3260, %v3394
      %v3457 = vmul.f32 %v3262, %v3395
      %v3458 = vmul.f32 %v3264, %v3395
      %v3459 = vmul.f32 %v3266, %v3396
      %v3460 = vmul.f32 %v3268, %v3396
      %v3461 = vpack.c.bf16 %v3399, %v3397
      %v3462 = vpack.c.bf16 %v3400, %v3398
      %v3463 = vpack.c.bf16 %v3403, %v3401
      %v3464 = vpack.c.bf16 %v3404, %v3402
      %v3465 = vpack.c.bf16 %v3407, %v3405
      %v3466 = vpack.c.bf16 %v3408, %v3406
      %v3467 = vpack.c.bf16 %v3411, %v3409
      %v3468 = vpack.c.bf16 %v3412, %v3410
      %v3469 = vpack.c.bf16 %v3415, %v3413
      %v3470 = vpack.c.bf16 %v3416, %v3414
      %v3471 = vpack.c.bf16 %v3419, %v3417
      %v3472 = vpack.c.bf16 %v3420, %v3418
      %v3473 = vpack.c.bf16 %v3423, %v3421
      %v3474 = vpack.c.bf16 %v3424, %v3422
      %v3475 = vpack.c.bf16 %v3427, %v3425
      %v3476 = vpack.c.bf16 %v3428, %v3426
      %v3477 = vpack.c.bf16 %v3431, %v3429
      %v3478 = vpack.c.bf16 %v3432, %v3430
      %v3479 = vpack.c.bf16 %v3435, %v3433
      %v3480 = vpack.c.bf16 %v3436, %v3434
      %v3481 = vpack.c.bf16 %v3439, %v3437
      %v3482 = vpack.c.bf16 %v3440, %v3438
      %v3483 = vpack.c.bf16 %v3443, %v3441
      %v3484 = vpack.c.bf16 %v3444, %v3442
      %v3485 = vpack.c.bf16 %v3447, %v3445
      %v3486 = vpack.c.bf16 %v3448, %v3446
      %v3487 = vpack.c.bf16 %v3451, %v3449
      %v3488 = vpack.c.bf16 %v3452, %v3450
      %v3489 = vpack.c.bf16 %v3455, %v3453
      %v3490 = vpack.c.bf16 %v3456, %v3454
      %v3491 = vpack.c.bf16 %v3459, %v3457
      %v3492 = vpack.c.bf16 %v3460, %v3458
      %3493 = vrot.lane.b32.xlu0 %v1312, 60
      %v3494 = vpop.permute.xlu0 %3493
      %3495 = vrot.lane.b32.xlu0 %v1313, 60
      %v3496 = vpop.permute.xlu0 %3495
      %3497 = vrot.lane.b32.xlu0 %v1314, 60
      %v3498 = vpop.permute.xlu0 %3497
      %3499 = vrot.lane.b32.xlu0 %v1315, 60
      %v3500 = vpop.permute.xlu0 %3499
      %3501 = vrot.lane.b32.xlu0 %v1316, 60
      %v3502 = vpop.permute.xlu0 %3501
      %3503 = vrot.lane.b32.xlu0 %v1317, 60
      %v3504 = vpop.permute.xlu0 %3503
      %3505 = vrot.lane.b32.xlu0 %v1318, 60
      %v3506 = vpop.permute.xlu0 %3505
      %3507 = vrot.lane.b32.xlu0 %v1319, 60
      %v3508 = vpop.permute.xlu0 %3507
      %3509 = vrot.lane.b32.xlu0 %v1320, 60
      %v3510 = vpop.permute.xlu0 %3509
      %3511 = vrot.lane.b32.xlu0 %v1321, 60
      %v3512 = vpop.permute.xlu0 %3511
      %3513 = vrot.lane.b32.xlu0 %v1322, 60
      %v3514 = vpop.permute.xlu0 %3513
      %3515 = vrot.lane.b32.xlu0 %v1323, 60
      %v3516 = vpop.permute.xlu0 %3515
      %3517 = vrot.lane.b32.xlu0 %v1324, 60
      %v3518 = vpop.permute.xlu0 %3517
      %3519 = vrot.lane.b32.xlu0 %v1325, 60
      %v3520 = vpop.permute.xlu0 %3519
      %3521 = vrot.lane.b32.xlu0 %v1326, 60
      %v3522 = vpop.permute.xlu0 %3521
      %3523 = vrot.lane.b32.xlu0 %v1327, 60
      %v3524 = vpop.permute.xlu0 %3523
      %3541 = vmatprep.subr.bf16.mxu0 0
      %3542 = vmatpush1.bf16.msra.mxu0 %v3508
      %3543 = vmatprep.subr.bf16.mxu0 0
      %3544 = vmatpush1.bf16.msra.mxu0 %v3506
      %3545 = vmatprep.subr.bf16.mxu0 0
      %3546 = vmatpush1.bf16.msra.mxu0 %v3504
      %3547 = vmatprep.subr.bf16.mxu0 0
      %3548 = vmatpush1.bf16.msra.mxu0 %v3502
      %3549 = vmatprep.subr.bf16.mxu0 0
      %3550 = vmatpush1.bf16.msra.mxu0 %v3500
      %3551 = vmatprep.subr.bf16.mxu0 0
      %3552 = vmatpush1.bf16.msra.mxu0 %v3498
      %3553 = vmatprep.subr.bf16.mxu0 0
      %3554 = vmatpush1.bf16.msra.mxu0 %v3496
      %3555 = vmatprep.subr.bf16.mxu0 0
      %3556 = vmatpush1.bf16.msra.mxu0 %v3494
      %3557 = vmatprep.subr.bf16.mxu0 0
      %3558 = vmatpush2.bf16.msra.mxu0 %v3524
      %3559 = vmatprep.subr.bf16.mxu0 0
      %3560 = vmatpush2.bf16.msra.mxu0 %v3522
      %3561 = vmatprep.subr.bf16.mxu0 0
      %3562 = vmatpush2.bf16.msra.mxu0 %v3520
      %3563 = vmatprep.subr.bf16.mxu0 0
      %3564 = vmatpush2.bf16.msra.mxu0 %v3518
      %3565 = vmatprep.subr.bf16.mxu0 0
      %3566 = vmatpush2.bf16.msra.mxu0 %v3516
      %3567 = vmatprep.subr.bf16.mxu0 0
      %3568 = vmatpush2.bf16.msra.mxu0 %v3514
      %3569 = vmatprep.subr.bf16.mxu0 0
      %3570 = vmatpush2.bf16.msra.mxu0 %v3512
      %3571 = vmatprep.subr.bf16.mxu0 0
      %3572 = vmatpush2.bf16.msra.mxu0 %v3510
      %3573 = vmatprep.mubr.bf16.mxu0 %v3462
      %3574 = vmatmul.mubr.bf16.gmra.mxu0 %v3461
      %v3575 = vpop.f32.mrf.mxu0
      %v3576 = vadd.f32 0.0, %v3575
      %v3577 = vpop.f32.mrf.mxu0
      %v3578 = vpop.f32.mrf.mxu0
      %v3579 = vadd.f32 0.0, %v3578
      %v3580 = vpop.f32.mrf.mxu0
      %3581 = vmatprep.mubr.bf16.mxu0 %v3464
      %3582 = vmatmul.mubr.bf16.gmra.mxu0 %v3463
      %v3583 = vpop.f32.mrf.mxu0
      %v3584 = vadd.f32 0.0, %v3583
      %v3585 = vpop.f32.mrf.mxu0
      %v3586 = vpop.f32.mrf.mxu0
      %v3587 = vadd.f32 0.0, %v3586
      %v3588 = vpop.f32.mrf.mxu0
      %3589 = vmatprep.mubr.bf16.mxu0 %v3466
      %3590 = vmatmul.mubr.bf16.gmra.mxu0 %v3465
      %v3591 = vpop.f32.mrf.mxu0
      %v3592 = vadd.f32 0.0, %v3591
      %v3593 = vpop.f32.mrf.mxu0
      %v3594 = vpop.f32.mrf.mxu0
      %v3595 = vadd.f32 0.0, %v3594
      %v3596 = vpop.f32.mrf.mxu0
      %3597 = vmatprep.mubr.bf16.mxu0 %v3468
      %3598 = vmatmul.mubr.bf16.gmra.mxu0 %v3467
      %v3599 = vpop.f32.mrf.mxu0
      %v3600 = vadd.f32 0.0, %v3599
      %v3601 = vpop.f32.mrf.mxu0
      %v3602 = vpop.f32.mrf.mxu0
      %v3603 = vadd.f32 0.0, %v3602
      %v3604 = vpop.f32.mrf.mxu0
      %3605 = vmatprep.mubr.bf16.mxu0 %v3470
      %3606 = vmatmul.mubr.bf16.gmra.mxu0 %v3469
      %v3607 = vpop.f32.mrf.mxu0
      %v3608 = vadd.f32 0.0, %v3607
      %v3609 = vpop.f32.mrf.mxu0
      %v3610 = vpop.f32.mrf.mxu0
      %v3611 = vadd.f32 0.0, %v3610
      %v3612 = vpop.f32.mrf.mxu0
      %3613 = vmatprep.mubr.bf16.mxu0 %v3472
      %3614 = vmatmul.mubr.bf16.gmra.mxu0 %v3471
      %v3615 = vpop.f32.mrf.mxu0
      %v3616 = vadd.f32 0.0, %v3615
      %v3617 = vpop.f32.mrf.mxu0
      %v3618 = vpop.f32.mrf.mxu0
      %v3619 = vadd.f32 0.0, %v3618
      %v3620 = vpop.f32.mrf.mxu0
      %3621 = vmatprep.mubr.bf16.mxu0 %v3474
      %3622 = vmatmul.mubr.bf16.gmra.mxu0 %v3473
      %v3623 = vpop.f32.mrf.mxu0
      %v3624 = vadd.f32 0.0, %v3623
      %v3625 = vpop.f32.mrf.mxu0
      %v3626 = vpop.f32.mrf.mxu0
      %v3627 = vadd.f32 0.0, %v3626
      %v3628 = vpop.f32.mrf.mxu0
      %3629 = vmatprep.mubr.bf16.mxu0 %v3476
      %3630 = vmatmul.mubr.bf16.gmra.mxu0 %v3475
      %v3631 = vpop.f32.mrf.mxu0
      %v3632 = vadd.f32 0.0, %v3631
      %v3633 = vpop.f32.mrf.mxu0
      %v3634 = vpop.f32.mrf.mxu0
      %v3635 = vadd.f32 0.0, %v3634
      %v3636 = vpop.f32.mrf.mxu0
      %3637 = vmatprep.mubr.bf16.mxu0 %v3478
      %3638 = vmatmul.mubr.bf16.gmra.mxu0 %v3477
      %v3639 = vpop.f32.mrf.mxu0
      %v3640 = vadd.f32 0.0, %v3639
      %v3641 = vpop.f32.mrf.mxu0
      %v3642 = vpop.f32.mrf.mxu0
      %v3643 = vadd.f32 0.0, %v3642
      %v3644 = vpop.f32.mrf.mxu0
      %3645 = vmatprep.mubr.bf16.mxu0 %v3480
      %3646 = vmatmul.mubr.bf16.gmra.mxu0 %v3479
      %v3647 = vpop.f32.mrf.mxu0
      %v3648 = vadd.f32 0.0, %v3647
      %v3649 = vpop.f32.mrf.mxu0
      %v3650 = vpop.f32.mrf.mxu0
      %v3651 = vadd.f32 0.0, %v3650
      %v3652 = vpop.f32.mrf.mxu0
      %3653 = vmatprep.mubr.bf16.mxu0 %v3482
      %3654 = vmatmul.mubr.bf16.gmra.mxu0 %v3481
      %v3655 = vpop.f32.mrf.mxu0
      %v3656 = vadd.f32 0.0, %v3655
      %v3657 = vpop.f32.mrf.mxu0
      %v3658 = vpop.f32.mrf.mxu0
      %v3659 = vadd.f32 0.0, %v3658
      %v3660 = vpop.f32.mrf.mxu0
      %3661 = vmatprep.mubr.bf16.mxu0 %v3484
      %3662 = vmatmul.mubr.bf16.gmra.mxu0 %v3483
      %v3663 = vpop.f32.mrf.mxu0
      %v3664 = vadd.f32 0.0, %v3663
      %v3665 = vpop.f32.mrf.mxu0
      %v3666 = vpop.f32.mrf.mxu0
      %v3667 = vadd.f32 0.0, %v3666
      %v3668 = vpop.f32.mrf.mxu0
      %3669 = vmatprep.mubr.bf16.mxu0 %v3486
      %3670 = vmatmul.mubr.bf16.gmra.mxu0 %v3485
      %v3671 = vpop.f32.mrf.mxu0
      %v3672 = vadd.f32 0.0, %v3671
      %v3673 = vpop.f32.mrf.mxu0
      %v3674 = vpop.f32.mrf.mxu0
      %v3675 = vadd.f32 0.0, %v3674
      %v3676 = vpop.f32.mrf.mxu0
      %3677 = vmatprep.mubr.bf16.mxu0 %v3488
      %3678 = vmatmul.mubr.bf16.gmra.mxu0 %v3487
      %v3679 = vpop.f32.mrf.mxu0
      %v3680 = vadd.f32 0.0, %v3679
      %v3681 = vpop.f32.mrf.mxu0
      %v3682 = vpop.f32.mrf.mxu0
      %v3683 = vadd.f32 0.0, %v3682
      %v3684 = vpop.f32.mrf.mxu0
      %3685 = vmatprep.mubr.bf16.mxu0 %v3490
      %3686 = vmatmul.mubr.bf16.gmra.mxu0 %v3489
      %v3687 = vpop.f32.mrf.mxu0
      %v3688 = vadd.f32 0.0, %v3687
      %v3689 = vpop.f32.mrf.mxu0
      %v3690 = vpop.f32.mrf.mxu0
      %v3691 = vadd.f32 0.0, %v3690
      %v3692 = vpop.f32.mrf.mxu0
      %3693 = vmatprep.mubr.bf16.mxu0 %v3492
      %3694 = vmatmul.mubr.bf16.gmra.mxu0 %v3491
      %v3695 = vpop.f32.mrf.mxu0
      %v3696 = vadd.f32 0.0, %v3695
      %v3697 = vpop.f32.mrf.mxu0
      %v3698 = vpop.f32.mrf.mxu0
      %v3699 = vadd.f32 0.0, %v3698
      %v3700 = vpop.f32.mrf.mxu0
      %3701 = vdwg.mxu0
      %v3702 = vpack.c.bf16 %v3579, %v3576
      %v3703 = vpack.c.bf16 %v3587, %v3584
      %v3704 = vpack.c.bf16 %v3595, %v3592
      %v3705 = vpack.c.bf16 %v3603, %v3600
      %v3706 = vpack.c.bf16 %v3611, %v3608
      %v3707 = vpack.c.bf16 %v3619, %v3616
      %v3708 = vpack.c.bf16 %v3627, %v3624
      %v3709 = vpack.c.bf16 %v3635, %v3632
      %v3710 = vpack.c.bf16 %v3643, %v3640
      %v3711 = vpack.c.bf16 %v3651, %v3648
      %v3712 = vpack.c.bf16 %v3659, %v3656
      %v3713 = vpack.c.bf16 %v3667, %v3664
      %v3714 = vpack.c.bf16 %v3675, %v3672
      %v3715 = vpack.c.bf16 %v3683, %v3680
      %v3716 = vpack.c.bf16 %v3691, %v3688
      %v3717 = vpack.c.bf16 %v3699, %v3696
      %s3718 = scalar_lea.vmem %s425, 2
      %v3719 = vld [vmem:[%s3718] sm:$0x3]
      %v3721 = vsel %vm1584, %v3702, 0
      %v3724 = vsel %vm1584, %v3703, 0
      %v3727 = vsel %vm1584, %v3704, 0
      %v3730 = vsel %vm1584, %v3705, 0
      %v3733 = vsel %vm1584, %v3706, 0
      %v3736 = vsel %vm1584, %v3707, 0
      %v3739 = vsel %vm1584, %v3708, 0
      %v3742 = vsel %vm1584, %v3709, 0
      %v3745 = vsel %vm1584, %v3710, 0
      %v3748 = vsel %vm1584, %v3711, 0
      %v3751 = vsel %vm1584, %v3712, 0
      %v3754 = vsel %vm1584, %v3713, 0
      %v3757 = vsel %vm1584, %v3714, 0
      %v3760 = vsel %vm1584, %v3715, 0
      %v3763 = vsel %vm1584, %v3716, 0
      %v3766 = vsel %vm1584, %v3717, 0
      %vm3768 = vcmask 1041408
      %v3770 = vsel %vm3768, %v3719, 0
      %3772 = vmatprep.subr.bf16.mxu0 0
      %3773 = vmatpush1.bf16.msra.mxu0 0
      %3774 = vmatprep.subr.bf16.mxu0 0
      %3775 = vmatpush1.bf16.msra.mxu0 0
      %3776 = vmatprep.subr.bf16.mxu0 0
      %3777 = vmatpush1.bf16.msra.mxu0 0
      %3778 = vmatprep.subr.bf16.mxu0 0
      %3779 = vmatpush1.bf16.msra.mxu0 0
      %3780 = vmatprep.subr.bf16.mxu0 0
      %3781 = vmatpush1.bf16.msra.mxu0 0
      %3782 = vmatprep.subr.bf16.mxu0 0
      %3783 = vmatpush1.bf16.msra.mxu0 0
      %3784 = vmatprep.subr.bf16.mxu0 0
      %3785 = vmatpush1.bf16.msra.mxu0 0
      %3786 = vmatprep.subr.bf16.mxu0 0
      %3787 = vmatpush1.bf16.msra.mxu0 %v3770
      %3788 = vmatprep.subr.bf16.mxu0 0
      %3789 = vmatpush2.bf16.msra.mxu0 0
      %3790 = vmatprep.subr.bf16.mxu0 0
      %3791 = vmatpush2.bf16.msra.mxu0 0
      %3792 = vmatprep.subr.bf16.mxu0 0
      %3793 = vmatpush2.bf16.msra.mxu0 0
      %3794 = vmatprep.subr.bf16.mxu0 0
      %3795 = vmatpush2.bf16.msra.mxu0 0
      %3796 = vmatprep.subr.bf16.mxu0 0
      %3797 = vmatpush2.bf16.msra.mxu0 0
      %3798 = vmatprep.subr.bf16.mxu0 0
      %3799 = vmatpush2.bf16.msra.mxu0 0
      %3800 = vmatprep.subr.bf16.mxu0 0
      %3801 = vmatpush2.bf16.msra.mxu0 0
      %3802 = vmatprep.subr.bf16.mxu0 0
      %3803 = vmatpush2.bf16.msra.mxu0 0
      %3804 = vmatprep.mubr.bf16.mxu0 0
      %3805 = vmatmul.mubr.bf16.gmra.mxu0 %v3721
      %v3806 = vpop.f32.mrf.mxu0
      %v3807 = vadd.f32 0.0, %v3806
      %v3808 = vpop.f32.mrf.mxu0
      %v3809 = vpop.f32.mrf.mxu0
      %v3810 = vadd.f32 0.0, %v3809
      %v3811 = vpop.f32.mrf.mxu0
      %3812 = vmatprep.mubr.bf16.mxu0 0
      %3813 = vmatmul.mubr.bf16.gmra.mxu0 %v3724
      %v3814 = vpop.f32.mrf.mxu0
      %v3815 = vadd.f32 0.0, %v3814
      %v3816 = vpop.f32.mrf.mxu0
      %v3817 = vpop.f32.mrf.mxu0
      %v3818 = vadd.f32 0.0, %v3817
      %v3819 = vpop.f32.mrf.mxu0
      %3820 = vmatprep.mubr.bf16.mxu0 0
      %3821 = vmatmul.mubr.bf16.gmra.mxu0 %v3727
      %v3822 = vpop.f32.mrf.mxu0
      %v3823 = vadd.f32 0.0, %v3822
      %v3824 = vpop.f32.mrf.mxu0
      %v3825 = vpop.f32.mrf.mxu0
      %v3826 = vadd.f32 0.0, %v3825
      %v3827 = vpop.f32.mrf.mxu0
      %3828 = vmatprep.mubr.bf16.mxu0 0
      %3829 = vmatmul.mubr.bf16.gmra.mxu0 %v3730
      %v3830 = vpop.f32.mrf.mxu0
      %v3831 = vadd.f32 0.0, %v3830
      %v3832 = vpop.f32.mrf.mxu0
      %v3833 = vpop.f32.mrf.mxu0
      %v3834 = vadd.f32 0.0, %v3833
      %v3835 = vpop.f32.mrf.mxu0
      %3836 = vmatprep.mubr.bf16.mxu0 0
      %3837 = vmatmul.mubr.bf16.gmra.mxu0 %v3733
      %v3838 = vpop.f32.mrf.mxu0
      %v3839 = vadd.f32 0.0, %v3838
      %v3840 = vpop.f32.mrf.mxu0
      %v3841 = vpop.f32.mrf.mxu0
      %v3842 = vadd.f32 0.0, %v3841
      %v3843 = vpop.f32.mrf.mxu0
      %3844 = vmatprep.mubr.bf16.mxu0 0
      %3845 = vmatmul.mubr.bf16.gmra.mxu0 %v3736
      %v3846 = vpop.f32.mrf.mxu0
      %v3847 = vadd.f32 0.0, %v3846
      %v3848 = vpop.f32.mrf.mxu0
      %v3849 = vpop.f32.mrf.mxu0
      %v3850 = vadd.f32 0.0, %v3849
      %v3851 = vpop.f32.mrf.mxu0
      %3852 = vmatprep.mubr.bf16.mxu0 0
      %3853 = vmatmul.mubr.bf16.gmra.mxu0 %v3739
      %v3854 = vpop.f32.mrf.mxu0
      %v3855 = vadd.f32 0.0, %v3854
      %v3856 = vpop.f32.mrf.mxu0
      %v3857 = vpop.f32.mrf.mxu0
      %v3858 = vadd.f32 0.0, %v3857
      %v3859 = vpop.f32.mrf.mxu0
      %3860 = vmatprep.mubr.bf16.mxu0 0
      %3861 = vmatmul.mubr.bf16.gmra.mxu0 %v3742
      %v3862 = vpop.f32.mrf.mxu0
      %v3863 = vadd.f32 0.0, %v3862
      %v3864 = vpop.f32.mrf.mxu0
      %v3865 = vpop.f32.mrf.mxu0
      %v3866 = vadd.f32 0.0, %v3865
      %v3867 = vpop.f32.mrf.mxu0
      %3868 = vmatprep.mubr.bf16.mxu0 0
      %3869 = vmatmul.mubr.bf16.gmra.mxu0 %v3745
      %v3870 = vpop.f32.mrf.mxu0
      %v3871 = vadd.f32 0.0, %v3870
      %v3872 = vpop.f32.mrf.mxu0
      %v3873 = vpop.f32.mrf.mxu0
      %v3874 = vadd.f32 0.0, %v3873
      %v3875 = vpop.f32.mrf.mxu0
      %3876 = vmatprep.mubr.bf16.mxu0 0
      %3877 = vmatmul.mubr.bf16.gmra.mxu0 %v3748
      %v3878 = vpop.f32.mrf.mxu0
      %v3879 = vadd.f32 0.0, %v3878
      %v3880 = vpop.f32.mrf.mxu0
      %v3881 = vpop.f32.mrf.mxu0
      %v3882 = vadd.f32 0.0, %v3881
      %v3883 = vpop.f32.mrf.mxu0
      %3884 = vmatprep.mubr.bf16.mxu0 0
      %3885 = vmatmul.mubr.bf16.gmra.mxu0 %v3751
      %v3886 = vpop.f32.mrf.mxu0
      %v3887 = vadd.f32 0.0, %v3886
      %v3888 = vpop.f32.mrf.mxu0
      %v3889 = vpop.f32.mrf.mxu0
      %v3890 = vadd.f32 0.0, %v3889
      %v3891 = vpop.f32.mrf.mxu0
      %3892 = vmatprep.mubr.bf16.mxu0 0
      %3893 = vmatmul.mubr.bf16.gmra.mxu0 %v3754
      %v3894 = vpop.f32.mrf.mxu0
      %v3895 = vadd.f32 0.0, %v3894
      %v3896 = vpop.f32.mrf.mxu0
      %v3897 = vpop.f32.mrf.mxu0
      %v3898 = vadd.f32 0.0, %v3897
      %v3899 = vpop.f32.mrf.mxu0
      %3900 = vmatprep.mubr.bf16.mxu0 0
      %3901 = vmatmul.mubr.bf16.gmra.mxu0 %v3757
      %v3902 = vpop.f32.mrf.mxu0
      %v3903 = vadd.f32 0.0, %v3902
      %v3904 = vpop.f32.mrf.mxu0
      %v3905 = vpop.f32.mrf.mxu0
      %v3906 = vadd.f32 0.0, %v3905
      %v3907 = vpop.f32.mrf.mxu0
      %3908 = vmatprep.mubr.bf16.mxu0 0
      %3909 = vmatmul.mubr.bf16.gmra.mxu0 %v3760
      %v3910 = vpop.f32.mrf.mxu0
      %v3911 = vadd.f32 0.0, %v3910
      %v3912 = vpop.f32.mrf.mxu0
      %v3913 = vpop.f32.mrf.mxu0
      %v3914 = vadd.f32 0.0, %v3913
      %v3915 = vpop.f32.mrf.mxu0
      %3916 = vmatprep.mubr.bf16.mxu0 0
      %3917 = vmatmul.mubr.bf16.gmra.mxu0 %v3763
      %v3918 = vpop.f32.mrf.mxu0
      %v3919 = vadd.f32 0.0, %v3918
      %v3920 = vpop.f32.mrf.mxu0
      %v3921 = vpop.f32.mrf.mxu0
      %v3922 = vadd.f32 0.0, %v3921
      %v3923 = vpop.f32.mrf.mxu0
      %3924 = vmatprep.mubr.bf16.mxu0 0
      %3925 = vmatmul.mubr.bf16.gmra.mxu0 %v3766
      %v3926 = vpop.f32.mrf.mxu0
      %v3927 = vadd.f32 0.0, %v3926
      %v3928 = vpop.f32.mrf.mxu0
      %v3929 = vpop.f32.mrf.mxu0
      %v3930 = vadd.f32 0.0, %v3929
      %v3931 = vpop.f32.mrf.mxu0
      %3932 = vdwg.mxu0
      %v3934 = vsel %vm1584, %v2611, 0
      %v3937 = vsel %vm1584, %v2612, 0
      %v3940 = vsel %vm1584, %v2613, 0
      %v3943 = vsel %vm1584, %v2614, 0
      %v3946 = vsel %vm1584, %v2615, 0
      %v3949 = vsel %vm1584, %v2616, 0
      %v3952 = vsel %vm1584, %v2617, 0
      %v3955 = vsel %vm1584, %v2618, 0
      %v3958 = vsel %vm1584, %v2619, 0
      %v3961 = vsel %vm1584, %v2620, 0
      %v3964 = vsel %vm1584, %v2621, 0
      %v3967 = vsel %vm1584, %v2622, 0
      %v3970 = vsel %vm1584, %v2623, 0
      %v3973 = vsel %vm1584, %v2624, 0
      %v3976 = vsel %vm1584, %v2625, 0
      %v3979 = vsel %vm1584, %v2626, 0
      %v3982 = vsel %vm3768, %v2627, 0
      %3984 = vmatprep.subr.bf16.mxu0 0
      %3985 = vmatpush1.bf16.msra.mxu0 0
      %3986 = vmatprep.subr.bf16.mxu0 0
      %3987 = vmatpush1.bf16.msra.mxu0 0
      %3988 = vmatprep.subr.bf16.mxu0 0
      %3989 = vmatpush1.bf16.msra.mxu0 0
      %3990 = vmatprep.subr.bf16.mxu0 0
      %3991 = vmatpush1.bf16.msra.mxu0 0
      %3992 = vmatprep.subr.bf16.mxu0 0
      %3993 = vmatpush1.bf16.msra.mxu0 0
      %3994 = vmatprep.subr.bf16.mxu0 0
      %3995 = vmatpush1.bf16.msra.mxu0 0
      %3996 = vmatprep.subr.bf16.mxu0 0
      %3997 = vmatpush1.bf16.msra.mxu0 0
      %3998 = vmatprep.subr.bf16.mxu0 0
      %3999 = vmatpush1.bf16.msra.mxu0 %v3982
      %4000 = vmatprep.subr.bf16.mxu0 0
      %4001 = vmatpush2.bf16.msra.mxu0 0
      %4002 = vmatprep.subr.bf16.mxu0 0
      %4003 = vmatpush2.bf16.msra.mxu0 0
      %4004 = vmatprep.subr.bf16.mxu0 0
      %4005 = vmatpush2.bf16.msra.mxu0 0
      %4006 = vmatprep.subr.bf16.mxu0 0
      %4007 = vmatpush2.bf16.msra.mxu0 0
      %4008 = vmatprep.subr.bf16.mxu0 0
      %4009 = vmatpush2.bf16.msra.mxu0 0
      %4010 = vmatprep.subr.bf16.mxu0 0
      %4011 = vmatpush2.bf16.msra.mxu0 0
      %4012 = vmatprep.subr.bf16.mxu0 0
      %4013 = vmatpush2.bf16.msra.mxu0 0
      %4014 = vmatprep.subr.bf16.mxu0 0
      %4015 = vmatpush2.bf16.msra.mxu0 0
      %4016 = vmatprep.mubr.bf16.mxu0 0
      %4017 = vmatmul.mubr.bf16.gmra.mxu0 %v3934
      %v4018 = vpop.f32.mrf.mxu0
      %v4019 = vadd.f32 %v3807, %v4018
      %v4020 = vpop.f32.mrf.mxu0
      %v4021 = vpop.f32.mrf.mxu0
      %v4022 = vadd.f32 %v3810, %v4021
      %v4023 = vpop.f32.mrf.mxu0
      %4024 = vmatprep.mubr.bf16.mxu0 0
      %4025 = vmatmul.mubr.bf16.gmra.mxu0 %v3937
      %v4026 = vpop.f32.mrf.mxu0
      %v4027 = vadd.f32 %v3815, %v4026
      %v4028 = vpop.f32.mrf.mxu0
      %v4029 = vpop.f32.mrf.mxu0
      %v4030 = vadd.f32 %v3818, %v4029
      %v4031 = vpop.f32.mrf.mxu0
      %4032 = vmatprep.mubr.bf16.mxu0 0
      %4033 = vmatmul.mubr.bf16.gmra.mxu0 %v3940
      %v4034 = vpop.f32.mrf.mxu0
      %v4035 = vadd.f32 %v3823, %v4034
      %v4036 = vpop.f32.mrf.mxu0
      %v4037 = vpop.f32.mrf.mxu0
      %v4038 = vadd.f32 %v3826, %v4037
      %v4039 = vpop.f32.mrf.mxu0
      %4040 = vmatprep.mubr.bf16.mxu0 0
      %4041 = vmatmul.mubr.bf16.gmra.mxu0 %v3943
      %v4042 = vpop.f32.mrf.mxu0
      %v4043 = vadd.f32 %v3831, %v4042
      %v4044 = vpop.f32.mrf.mxu0
      %v4045 = vpop.f32.mrf.mxu0
      %v4046 = vadd.f32 %v3834, %v4045
      %v4047 = vpop.f32.mrf.mxu0
      %4048 = vmatprep.mubr.bf16.mxu0 0
      %4049 = vmatmul.mubr.bf16.gmra.mxu0 %v3946
      %v4050 = vpop.f32.mrf.mxu0
      %v4051 = vadd.f32 %v3839, %v4050
      %v4052 = vpop.f32.mrf.mxu0
      %v4053 = vpop.f32.mrf.mxu0
      %v4054 = vadd.f32 %v3842, %v4053
      %v4055 = vpop.f32.mrf.mxu0
      %4056 = vmatprep.mubr.bf16.mxu0 0
      %4057 = vmatmul.mubr.bf16.gmra.mxu0 %v3949
      %v4058 = vpop.f32.mrf.mxu0
      %v4059 = vadd.f32 %v3847, %v4058
      %v4060 = vpop.f32.mrf.mxu0
      %v4061 = vpop.f32.mrf.mxu0
      %v4062 = vadd.f32 %v3850, %v4061
      %v4063 = vpop.f32.mrf.mxu0
      %4064 = vmatprep.mubr.bf16.mxu0 0
      %4065 = vmatmul.mubr.bf16.gmra.mxu0 %v3952
      %v4066 = vpop.f32.mrf.mxu0
      %v4067 = vadd.f32 %v3855, %v4066
      %v4068 = vpop.f32.mrf.mxu0
      %v4069 = vpop.f32.mrf.mxu0
      %v4070 = vadd.f32 %v3858, %v4069
      %v4071 = vpop.f32.mrf.mxu0
      %4072 = vmatprep.mubr.bf16.mxu0 0
      %4073 = vmatmul.mubr.bf16.gmra.mxu0 %v3955
      %v4074 = vpop.f32.mrf.mxu0
      %v4075 = vadd.f32 %v3863, %v4074
      %v4076 = vpop.f32.mrf.mxu0
      %v4077 = vpop.f32.mrf.mxu0
      %v4078 = vadd.f32 %v3866, %v4077
      %v4079 = vpop.f32.mrf.mxu0
      %4080 = vmatprep.mubr.bf16.mxu0 0
      %4081 = vmatmul.mubr.bf16.gmra.mxu0 %v3958
      %v4082 = vpop.f32.mrf.mxu0
      %v4083 = vadd.f32 %v3871, %v4082
      %v4084 = vpop.f32.mrf.mxu0
      %v4085 = vpop.f32.mrf.mxu0
      %v4086 = vadd.f32 %v3874, %v4085
      %v4087 = vpop.f32.mrf.mxu0
      %4088 = vmatprep.mubr.bf16.mxu0 0
      %4089 = vmatmul.mubr.bf16.gmra.mxu0 %v3961
      %v4090 = vpop.f32.mrf.mxu0
      %v4091 = vadd.f32 %v3879, %v4090
      %v4092 = vpop.f32.mrf.mxu0
      %v4093 = vpop.f32.mrf.mxu0
      %v4094 = vadd.f32 %v3882, %v4093
      %v4095 = vpop.f32.mrf.mxu0
      %4096 = vmatprep.mubr.bf16.mxu0 0
      %4097 = vmatmul.mubr.bf16.gmra.mxu0 %v3964
      %v4098 = vpop.f32.mrf.mxu0
      %v4099 = vadd.f32 %v3887, %v4098
      %v4100 = vpop.f32.mrf.mxu0
      %v4101 = vpop.f32.mrf.mxu0
      %v4102 = vadd.f32 %v3890, %v4101
      %v4103 = vpop.f32.mrf.mxu0
      %4104 = vmatprep.mubr.bf16.mxu0 0
      %4105 = vmatmul.mubr.bf16.gmra.mxu0 %v3967
      %v4106 = vpop.f32.mrf.mxu0
      %v4107 = vadd.f32 %v3895, %v4106
      %v4108 = vpop.f32.mrf.mxu0
      %v4109 = vpop.f32.mrf.mxu0
      %v4110 = vadd.f32 %v3898, %v4109
      %v4111 = vpop.f32.mrf.mxu0
      %4112 = vmatprep.mubr.bf16.mxu0 0
      %4113 = vmatmul.mubr.bf16.gmra.mxu0 %v3970
      %v4114 = vpop.f32.mrf.mxu0
      %v4115 = vadd.f32 %v3903, %v4114
      %v4116 = vpop.f32.mrf.mxu0
      %v4117 = vpop.f32.mrf.mxu0
      %v4118 = vadd.f32 %v3906, %v4117
      %v4119 = vpop.f32.mrf.mxu0
      %4120 = vmatprep.mubr.bf16.mxu0 0
      %4121 = vmatmul.mubr.bf16.gmra.mxu0 %v3973
      %v4122 = vpop.f32.mrf.mxu0
      %v4123 = vadd.f32 %v3911, %v4122
      %v4124 = vpop.f32.mrf.mxu0
      %v4125 = vpop.f32.mrf.mxu0
      %v4126 = vadd.f32 %v3914, %v4125
      %v4127 = vpop.f32.mrf.mxu0
      %4128 = vmatprep.mubr.bf16.mxu0 0
      %4129 = vmatmul.mubr.bf16.gmra.mxu0 %v3976
      %v4130 = vpop.f32.mrf.mxu0
      %v4131 = vadd.f32 %v3919, %v4130
      %v4132 = vpop.f32.mrf.mxu0
      %v4133 = vpop.f32.mrf.mxu0
      %v4134 = vadd.f32 %v3922, %v4133
      %v4135 = vpop.f32.mrf.mxu0
      %4136 = vmatprep.mubr.bf16.mxu0 0
      %4137 = vmatmul.mubr.bf16.gmra.mxu0 %v3979
      %v4138 = vpop.f32.mrf.mxu0
      %v4139 = vadd.f32 %v3927, %v4138
      %v4140 = vpop.f32.mrf.mxu0
      %v4141 = vpop.f32.mrf.mxu0
      %v4142 = vadd.f32 %v3930, %v4141
      %v4143 = vpop.f32.mrf.mxu0
      %4144 = vdwg.mxu0
      %4145 = vrot.lane.b32.xlu0 %v1312, 120
      %v4146 = vpop.permute.xlu0 %4145
      %4147 = vrot.lane.b32.xlu0 %v1313, 120
      %v4148 = vpop.permute.xlu0 %4147
      %4149 = vrot.lane.b32.xlu0 %v1314, 120
      %v4150 = vpop.permute.xlu0 %4149
      %4151 = vrot.lane.b32.xlu0 %v1315, 120
      %v4152 = vpop.permute.xlu0 %4151
      %4153 = vrot.lane.b32.xlu0 %v1316, 120
      %v4154 = vpop.permute.xlu0 %4153
      %4155 = vrot.lane.b32.xlu0 %v1317, 120
      %v4156 = vpop.permute.xlu0 %4155
      %4157 = vrot.lane.b32.xlu0 %v1318, 120
      %v4158 = vpop.permute.xlu0 %4157
      %4159 = vrot.lane.b32.xlu0 %v1319, 120
      %v4160 = vpop.permute.xlu0 %4159
      %4161 = vrot.lane.b32.xlu0 %v1320, 120
      %v4162 = vpop.permute.xlu0 %4161
      %4163 = vrot.lane.b32.xlu0 %v1321, 120
      %v4164 = vpop.permute.xlu0 %4163
      %4165 = vrot.lane.b32.xlu0 %v1322, 120
      %v4166 = vpop.permute.xlu0 %4165
      %4167 = vrot.lane.b32.xlu0 %v1323, 120
      %v4168 = vpop.permute.xlu0 %4167
      %4169 = vrot.lane.b32.xlu0 %v1324, 120
      %v4170 = vpop.permute.xlu0 %4169
      %4171 = vrot.lane.b32.xlu0 %v1325, 120
      %v4172 = vpop.permute.xlu0 %4171
      %4173 = vrot.lane.b32.xlu0 %v1326, 120
      %v4174 = vpop.permute.xlu0 %4173
      %4175 = vrot.lane.b32.xlu0 %v1327, 120
      %v4176 = vpop.permute.xlu0 %4175
      %4177 = vrot.lane.b32.xlu0 %v1520, 88
      %v4178 = vpop.permute.xlu0 %4177
      %4179 = vrot.lane.b32.xlu0 %v1521, 88
      %v4180 = vpop.permute.xlu0 %4179
      %4181 = vrot.lane.b32.xlu0 %v1522, 88
      %v4182 = vpop.permute.xlu0 %4181
      %4183 = vrot.lane.b32.xlu0 %v1523, 88
      %v4184 = vpop.permute.xlu0 %4183
      %4185 = vrot.lane.b32.xlu0 %v1524, 88
      %v4186 = vpop.permute.xlu0 %4185
      %4187 = vrot.lane.b32.xlu0 %v1525, 88
      %v4188 = vpop.permute.xlu0 %4187
      %4189 = vrot.lane.b32.xlu0 %v1526, 88
      %v4190 = vpop.permute.xlu0 %4189
      %4191 = vrot.lane.b32.xlu0 %v1527, 88
      %v4192 = vpop.permute.xlu0 %4191
      %4193 = vrot.lane.b32.xlu0 %v1528, 88
      %v4194 = vpop.permute.xlu0 %4193
      %4195 = vrot.lane.b32.xlu0 %v1529, 88
      %v4196 = vpop.permute.xlu0 %4195
      %4197 = vrot.lane.b32.xlu0 %v1530, 88
      %v4198 = vpop.permute.xlu0 %4197
      %4199 = vrot.lane.b32.xlu0 %v1531, 88
      %v4200 = vpop.permute.xlu0 %4199
      %4201 = vrot.lane.b32.xlu0 %v1532, 88
      %v4202 = vpop.permute.xlu0 %4201
      %4203 = vrot.lane.b32.xlu0 %v1533, 88
      %v4204 = vpop.permute.xlu0 %4203
      %4205 = vrot.lane.b32.xlu0 %v1534, 88
      %v4206 = vpop.permute.xlu0 %4205
      %4207 = vrot.lane.b32.xlu0 %v1535, 88
      %v4208 = vpop.permute.xlu0 %4207
      %v4210 = vsel %vm1584, %v4146, 0
      %v4213 = vsel %vm1584, %v4148, 0
      %v4216 = vsel %vm1584, %v4150, 0
      %v4219 = vsel %vm1584, %v4152, 0
      %v4222 = vsel %vm1584, %v4154, 0
      %v4225 = vsel %vm1584, %v4156, 0
      %v4228 = vsel %vm1584, %v4158, 0
      %v4231 = vsel %vm1584, %v4160, 0
      %v4234 = vsel %vm1584, %v4162, 0
      %v4237 = vsel %vm1584, %v4164, 0
      %v4240 = vsel %vm1584, %v4166, 0
      %v4243 = vsel %vm1584, %v4168, 0
      %v4246 = vsel %vm1584, %v4170, 0
      %v4249 = vsel %vm1584, %v4172, 0
      %v4252 = vsel %vm1584, %v4174, 0
      %v4255 = vsel %vm1584, %v4176, 0
      %v4258 = vsel %vm1584, %v4178, 0
      %v4261 = vsel %vm1584, %v4180, 0
      %v4264 = vsel %vm1584, %v4182, 0
      %v4267 = vsel %vm1584, %v4184, 0
      %v4270 = vsel %vm1584, %v4186, 0
      %v4273 = vsel %vm1584, %v4188, 0
      %v4276 = vsel %vm1584, %v4190, 0
      %v4279 = vsel %vm1584, %v4192, 0
      %v4282 = vsel %vm1584, %v4194, 0
      %v4285 = vsel %vm1584, %v4196, 0
      %v4288 = vsel %vm1584, %v4198, 0
      %v4291 = vsel %vm1584, %v4200, 0
      %v4294 = vsel %vm1584, %v4202, 0
      %v4297 = vsel %vm1584, %v4204, 0
      %v4300 = vsel %vm1584, %v4206, 0
      %v4303 = vsel %vm1584, %v4208, 0
      %4305 = vmatprep.subr.bf16.mxu0 0
      %4306 = vmatpush1.bf16.xpose.msra.mxu0 %v4279
      %4307 = vmatprep.subr.bf16.mxu0 0
      %4308 = vmatpush1.bf16.xpose.msra.mxu0 %v4276
      %4309 = vmatprep.subr.bf16.mxu0 0
      %4310 = vmatpush1.bf16.xpose.msra.mxu0 %v4273
      %4311 = vmatprep.subr.bf16.mxu0 0
      %4312 = vmatpush1.bf16.xpose.msra.mxu0 %v4270
      %4313 = vmatprep.subr.bf16.mxu0 0
      %4314 = vmatpush1.bf16.xpose.msra.mxu0 %v4267
      %4315 = vmatprep.subr.bf16.mxu0 0
      %4316 = vmatpush1.bf16.xpose.msra.mxu0 %v4264
      %4317 = vmatprep.subr.bf16.mxu0 0
      %4318 = vmatpush1.bf16.xpose.msra.mxu0 %v4261
      %4319 = vmatprep.subr.bf16.mxu0 0
      %4320 = vmatpush1.bf16.xpose.msra.mxu0 %v4258
      %4321 = vmatprep.subr.bf16.mxu0 0
      %4322 = vmatpush2.bf16.xpose.msra.mxu0 %v4303
      %4323 = vmatprep.subr.bf16.mxu0 0
      %4324 = vmatpush2.bf16.xpose.msra.mxu0 %v4300
      %4325 = vmatprep.subr.bf16.mxu0 0
      %4326 = vmatpush2.bf16.xpose.msra.mxu0 %v4297
      %4327 = vmatprep.subr.bf16.mxu0 0
      %4328 = vmatpush2.bf16.xpose.msra.mxu0 %v4294
      %4329 = vmatprep.subr.bf16.mxu0 0
      %4330 = vmatpush2.bf16.xpose.msra.mxu0 %v4291
      %4331 = vmatprep.subr.bf16.mxu0 0
      %4332 = vmatpush2.bf16.xpose.msra.mxu0 %v4288
      %4333 = vmatprep.subr.bf16.mxu0 0
      %4334 = vmatpush2.bf16.xpose.msra.mxu0 %v4285
      %4335 = vmatprep.subr.bf16.mxu0 0
      %4336 = vmatpush2.bf16.xpose.msra.mxu0 %v4282
      %4337 = vmatprep.mubr.bf16.mxu0 0
      %4338 = vmatmul.mubr.bf16.gmra.mxu0 %v4210
      %v4339 = vpop.f32.mrf.mxu0
      %v4340 = vadd.f32 0.0, %v4339
      %v4341 = vpop.f32.mrf.mxu0
      %v4342 = vadd.f32 0.0, %v4341
      %v4343 = vpop.f32.mrf.mxu0
      %v4344 = vadd.f32 0.0, %v4343
      %v4345 = vpop.f32.mrf.mxu0
      %v4346 = vadd.f32 0.0, %v4345
      %4347 = vmatprep.mubr.bf16.mxu0 0
      %4348 = vmatmul.mubr.bf16.gmra.mxu0 %v4213
      %v4349 = vpop.f32.mrf.mxu0
      %v4350 = vadd.f32 0.0, %v4349
      %v4351 = vpop.f32.mrf.mxu0
      %v4352 = vadd.f32 0.0, %v4351
      %v4353 = vpop.f32.mrf.mxu0
      %v4354 = vadd.f32 0.0, %v4353
      %v4355 = vpop.f32.mrf.mxu0
      %v4356 = vadd.f32 0.0, %v4355
      %4357 = vmatprep.mubr.bf16.mxu0 0
      %4358 = vmatmul.mubr.bf16.gmra.mxu0 %v4216
      %v4359 = vpop.f32.mrf.mxu0
      %v4360 = vadd.f32 0.0, %v4359
      %v4361 = vpop.f32.mrf.mxu0
      %v4362 = vadd.f32 0.0, %v4361
      %v4363 = vpop.f32.mrf.mxu0
      %v4364 = vadd.f32 0.0, %v4363
      %v4365 = vpop.f32.mrf.mxu0
      %v4366 = vadd.f32 0.0, %v4365
      %4367 = vmatprep.mubr.bf16.mxu0 0
      %4368 = vmatmul.mubr.bf16.gmra.mxu0 %v4219
      %v4369 = vpop.f32.mrf.mxu0
      %v4370 = vadd.f32 0.0, %v4369
      %v4371 = vpop.f32.mrf.mxu0
      %v4372 = vadd.f32 0.0, %v4371
      %v4373 = vpop.f32.mrf.mxu0
      %v4374 = vadd.f32 0.0, %v4373
      %v4375 = vpop.f32.mrf.mxu0
      %v4376 = vadd.f32 0.0, %v4375
      %4377 = vmatprep.mubr.bf16.mxu0 0
      %4378 = vmatmul.mubr.bf16.gmra.mxu0 %v4222
      %v4379 = vpop.f32.mrf.mxu0
      %v4380 = vadd.f32 0.0, %v4379
      %v4381 = vpop.f32.mrf.mxu0
      %v4382 = vadd.f32 0.0, %v4381
      %v4383 = vpop.f32.mrf.mxu0
      %v4384 = vadd.f32 0.0, %v4383
      %v4385 = vpop.f32.mrf.mxu0
      %v4386 = vadd.f32 0.0, %v4385
      %4387 = vmatprep.mubr.bf16.mxu0 0
      %4388 = vmatmul.mubr.bf16.gmra.mxu0 %v4225
      %v4389 = vpop.f32.mrf.mxu0
      %v4390 = vadd.f32 0.0, %v4389
      %v4391 = vpop.f32.mrf.mxu0
      %v4392 = vadd.f32 0.0, %v4391
      %v4393 = vpop.f32.mrf.mxu0
      %v4394 = vadd.f32 0.0, %v4393
      %v4395 = vpop.f32.mrf.mxu0
      %v4396 = vadd.f32 0.0, %v4395
      %4397 = vmatprep.mubr.bf16.mxu0 0
      %4398 = vmatmul.mubr.bf16.gmra.mxu0 %v4228
      %v4399 = vpop.f32.mrf.mxu0
      %v4400 = vadd.f32 0.0, %v4399
      %v4401 = vpop.f32.mrf.mxu0
      %v4402 = vadd.f32 0.0, %v4401
      %v4403 = vpop.f32.mrf.mxu0
      %v4404 = vadd.f32 0.0, %v4403
      %v4405 = vpop.f32.mrf.mxu0
      %v4406 = vadd.f32 0.0, %v4405
      %4407 = vmatprep.mubr.bf16.mxu0 0
      %4408 = vmatmul.mubr.bf16.gmra.mxu0 %v4231
      %v4409 = vpop.f32.mrf.mxu0
      %v4410 = vadd.f32 0.0, %v4409
      %v4411 = vpop.f32.mrf.mxu0
      %v4412 = vadd.f32 0.0, %v4411
      %v4413 = vpop.f32.mrf.mxu0
      %v4414 = vadd.f32 0.0, %v4413
      %v4415 = vpop.f32.mrf.mxu0
      %v4416 = vadd.f32 0.0, %v4415
      %4417 = vmatprep.mubr.bf16.mxu0 0
      %4418 = vmatmul.mubr.bf16.gmra.mxu0 %v4234
      %v4419 = vpop.f32.mrf.mxu0
      %v4420 = vadd.f32 0.0, %v4419
      %v4421 = vpop.f32.mrf.mxu0
      %v4422 = vadd.f32 0.0, %v4421
      %v4423 = vpop.f32.mrf.mxu0
      %v4424 = vadd.f32 0.0, %v4423
      %v4425 = vpop.f32.mrf.mxu0
      %v4426 = vadd.f32 0.0, %v4425
      %4427 = vmatprep.mubr.bf16.mxu0 0
      %4428 = vmatmul.mubr.bf16.gmra.mxu0 %v4237
      %v4429 = vpop.f32.mrf.mxu0
      %v4430 = vadd.f32 0.0, %v4429
      %v4431 = vpop.f32.mrf.mxu0
      %v4432 = vadd.f32 0.0, %v4431
      %v4433 = vpop.f32.mrf.mxu0
      %v4434 = vadd.f32 0.0, %v4433
      %v4435 = vpop.f32.mrf.mxu0
      %v4436 = vadd.f32 0.0, %v4435
      %4437 = vmatprep.mubr.bf16.mxu0 0
      %4438 = vmatmul.mubr.bf16.gmra.mxu0 %v4240
      %v4439 = vpop.f32.mrf.mxu0
      %v4440 = vadd.f32 0.0, %v4439
      %v4441 = vpop.f32.mrf.mxu0
      %v4442 = vadd.f32 0.0, %v4441
      %v4443 = vpop.f32.mrf.mxu0
      %v4444 = vadd.f32 0.0, %v4443
      %v4445 = vpop.f32.mrf.mxu0
      %v4446 = vadd.f32 0.0, %v4445
      %4447 = vmatprep.mubr.bf16.mxu0 0
      %4448 = vmatmul.mubr.bf16.gmra.mxu0 %v4243
      %v4449 = vpop.f32.mrf.mxu0
      %v4450 = vadd.f32 0.0, %v4449
      %v4451 = vpop.f32.mrf.mxu0
      %v4452 = vadd.f32 0.0, %v4451
      %v4453 = vpop.f32.mrf.mxu0
      %v4454 = vadd.f32 0.0, %v4453
      %v4455 = vpop.f32.mrf.mxu0
      %v4456 = vadd.f32 0.0, %v4455
      %4457 = vmatprep.mubr.bf16.mxu0 0
      %4458 = vmatmul.mubr.bf16.gmra.mxu0 %v4246
      %v4459 = vpop.f32.mrf.mxu0
      %v4460 = vadd.f32 0.0, %v4459
      %v4461 = vpop.f32.mrf.mxu0
      %v4462 = vadd.f32 0.0, %v4461
      %v4463 = vpop.f32.mrf.mxu0
      %v4464 = vadd.f32 0.0, %v4463
      %v4465 = vpop.f32.mrf.mxu0
      %v4466 = vadd.f32 0.0, %v4465
      %4467 = vmatprep.mubr.bf16.mxu0 0
      %4468 = vmatmul.mubr.bf16.gmra.mxu0 %v4249
      %v4469 = vpop.f32.mrf.mxu0
      %v4470 = vadd.f32 0.0, %v4469
      %v4471 = vpop.f32.mrf.mxu0
      %v4472 = vadd.f32 0.0, %v4471
      %v4473 = vpop.f32.mrf.mxu0
      %v4474 = vadd.f32 0.0, %v4473
      %v4475 = vpop.f32.mrf.mxu0
      %v4476 = vadd.f32 0.0, %v4475
      %4477 = vmatprep.mubr.bf16.mxu0 0
      %4478 = vmatmul.mubr.bf16.gmra.mxu0 %v4252
      %v4479 = vpop.f32.mrf.mxu0
      %v4480 = vadd.f32 0.0, %v4479
      %v4481 = vpop.f32.mrf.mxu0
      %v4482 = vadd.f32 0.0, %v4481
      %v4483 = vpop.f32.mrf.mxu0
      %v4484 = vadd.f32 0.0, %v4483
      %v4485 = vpop.f32.mrf.mxu0
      %v4486 = vadd.f32 0.0, %v4485
      %4487 = vmatprep.mubr.bf16.mxu0 0
      %4488 = vmatmul.mubr.bf16.gmra.mxu0 %v4255
      %v4489 = vpop.f32.mrf.mxu0
      %v4490 = vadd.f32 0.0, %v4489
      %v4491 = vpop.f32.mrf.mxu0
      %v4492 = vadd.f32 0.0, %v4491
      %v4493 = vpop.f32.mrf.mxu0
      %v4494 = vadd.f32 0.0, %v4493
      %v4495 = vpop.f32.mrf.mxu0
      %v4496 = vadd.f32 0.0, %v4495
      %4497 = vdwg.mxu0
      %v4498 = vmax.f32 %v4340, %v4342
      %4499 = vmax.xlane.f32.xlu0 %v4498
      %v4500 = vpop.xlane.xlu0 %4499
      %v4501 = vmax.f32 %v4344, %v4346
      %4502 = vmax.xlane.f32.xlu0 %v4501
      %v4503 = vpop.xlane.xlu0 %4502
      %v4504 = vmax.f32 %v4350, %v4352
      %4505 = vmax.xlane.f32.xlu0 %v4504
      %v4506 = vpop.xlane.xlu0 %4505
      %v4507 = vmax.f32 %v4354, %v4356
      %4508 = vmax.xlane.f32.xlu0 %v4507
      %v4509 = vpop.xlane.xlu0 %4508
      %v4510 = vmax.f32 %v4360, %v4362
      %4511 = vmax.xlane.f32.xlu0 %v4510
      %v4512 = vpop.xlane.xlu0 %4511
      %v4513 = vmax.f32 %v4364, %v4366
      %4514 = vmax.xlane.f32.xlu0 %v4513
      %v4515 = vpop.xlane.xlu0 %4514
      %v4516 = vmax.f32 %v4370, %v4372
      %4517 = vmax.xlane.f32.xlu0 %v4516
      %v4518 = vpop.xlane.xlu0 %4517
      %v4519 = vmax.f32 %v4374, %v4376
      %4520 = vmax.xlane.f32.xlu0 %v4519
      %v4521 = vpop.xlane.xlu0 %4520
      %v4522 = vmax.f32 %v4380, %v4382
      %4523 = vmax.xlane.f32.xlu0 %v4522
      %v4524 = vpop.xlane.xlu0 %4523
      %v4525 = vmax.f32 %v4384, %v4386
      %4526 = vmax.xlane.f32.xlu0 %v4525
      %v4527 = vpop.xlane.xlu0 %4526
      %v4528 = vmax.f32 %v4390, %v4392
      %4529 = vmax.xlane.f32.xlu0 %v4528
      %v4530 = vpop.xlane.xlu0 %4529
      %v4531 = vmax.f32 %v4394, %v4396
      %4532 = vmax.xlane.f32.xlu0 %v4531
      %v4533 = vpop.xlane.xlu0 %4532
      %v4534 = vmax.f32 %v4400, %v4402
      %4535 = vmax.xlane.f32.xlu0 %v4534
      %v4536 = vpop.xlane.xlu0 %4535
      %v4537 = vmax.f32 %v4404, %v4406
      %4538 = vmax.xlane.f32.xlu0 %v4537
      %v4539 = vpop.xlane.xlu0 %4538
      %v4540 = vmax.f32 %v4410, %v4412
      %4541 = vmax.xlane.f32.xlu0 %v4540
      %v4542 = vpop.xlane.xlu0 %4541
      %v4543 = vmax.f32 %v4414, %v4416
      %4544 = vmax.xlane.f32.xlu0 %v4543
      %v4545 = vpop.xlane.xlu0 %4544
      %v4546 = vmax.f32 %v4420, %v4422
      %4547 = vmax.xlane.f32.xlu0 %v4546
      %v4548 = vpop.xlane.xlu0 %4547
      %v4549 = vmax.f32 %v4424, %v4426
      %4550 = vmax.xlane.f32.xlu0 %v4549
      %v4551 = vpop.xlane.xlu0 %4550
      %v4552 = vmax.f32 %v4430, %v4432
      %4553 = vmax.xlane.f32.xlu0 %v4552
      %v4554 = vpop.xlane.xlu0 %4553
      %v4555 = vmax.f32 %v4434, %v4436
      %4556 = vmax.xlane.f32.xlu0 %v4555
      %v4557 = vpop.xlane.xlu0 %4556
      %v4558 = vmax.f32 %v4440, %v4442
      %4559 = vmax.xlane.f32.xlu0 %v4558
      %v4560 = vpop.xlane.xlu0 %4559
      %v4561 = vmax.f32 %v4444, %v4446
      %4562 = vmax.xlane.f32.xlu0 %v4561
      %v4563 = vpop.xlane.xlu0 %4562
      %v4564 = vmax.f32 %v4450, %v4452
      %4565 = vmax.xlane.f32.xlu0 %v4564
      %v4566 = vpop.xlane.xlu0 %4565
      %v4567 = vmax.f32 %v4454, %v4456
      %4568 = vmax.xlane.f32.xlu0 %v4567
      %v4569 = vpop.xlane.xlu0 %4568
      %v4570 = vmax.f32 %v4460, %v4462
      %4571 = vmax.xlane.f32.xlu0 %v4570
      %v4572 = vpop.xlane.xlu0 %4571
      %v4573 = vmax.f32 %v4464, %v4466
      %4574 = vmax.xlane.f32.xlu0 %v4573
      %v4575 = vpop.xlane.xlu0 %4574
      %v4576 = vmax.f32 %v4470, %v4472
      %4577 = vmax.xlane.f32.xlu0 %v4576
      %v4578 = vpop.xlane.xlu0 %4577
      %v4579 = vmax.f32 %v4474, %v4476
      %4580 = vmax.xlane.f32.xlu0 %v4579
      %v4581 = vpop.xlane.xlu0 %4580
      %v4582 = vmax.f32 %v4480, %v4482
      %4583 = vmax.xlane.f32.xlu0 %v4582
      %v4584 = vpop.xlane.xlu0 %4583
      %v4585 = vmax.f32 %v4484, %v4486
      %4586 = vmax.xlane.f32.xlu0 %v4585
      %v4587 = vpop.xlane.xlu0 %4586
      %v4588 = vmax.f32 %v4490, %v4492
      %4589 = vmax.xlane.f32.xlu0 %v4588
      %v4590 = vpop.xlane.xlu0 %4589
      %v4591 = vmax.f32 %v4494, %v4496
      %4592 = vmax.xlane.f32.xlu0 %v4591
      %v4593 = vpop.xlane.xlu0 %4592
      %v4594 = vsub.f32 %v4340, %v4500
      %v4595 = vsub.f32 %v4342, %v4500
      %v4596 = vsub.f32 %v4344, %v4503
      %v4597 = vsub.f32 %v4346, %v4503
      %v4598 = vsub.f32 %v4350, %v4506
      %v4599 = vsub.f32 %v4352, %v4506
      %v4600 = vsub.f32 %v4354, %v4509
      %v4601 = vsub.f32 %v4356, %v4509
      %v4602 = vsub.f32 %v4360, %v4512
      %v4603 = vsub.f32 %v4362, %v4512
      %v4604 = vsub.f32 %v4364, %v4515
      %v4605 = vsub.f32 %v4366, %v4515
      %v4606 = vsub.f32 %v4370, %v4518
      %v4607 = vsub.f32 %v4372, %v4518
      %v4608 = vsub.f32 %v4374, %v4521
      %v4609 = vsub.f32 %v4376, %v4521
      %v4610 = vsub.f32 %v4380, %v4524
      %v4611 = vsub.f32 %v4382, %v4524
      %v4612 = vsub.f32 %v4384, %v4527
      %v4613 = vsub.f32 %v4386, %v4527
      %v4614 = vsub.f32 %v4390, %v4530
      %v4615 = vsub.f32 %v4392, %v4530
      %v4616 = vsub.f32 %v4394, %v4533
      %v4617 = vsub.f32 %v4396, %v4533
      %v4618 = vsub.f32 %v4400, %v4536
      %v4619 = vsub.f32 %v4402, %v4536
      %v4620 = vsub.f32 %v4404, %v4539
      %v4621 = vsub.f32 %v4406, %v4539
      %v4622 = vsub.f32 %v4410, %v4542
      %v4623 = vsub.f32 %v4412, %v4542
      %v4624 = vsub.f32 %v4414, %v4545
      %v4625 = vsub.f32 %v4416, %v4545
      %v4626 = vsub.f32 %v4420, %v4548
      %v4627 = vsub.f32 %v4422, %v4548
      %v4628 = vsub.f32 %v4424, %v4551
      %v4629 = vsub.f32 %v4426, %v4551
      %v4630 = vsub.f32 %v4430, %v4554
      %v4631 = vsub.f32 %v4432, %v4554
      %v4632 = vsub.f32 %v4434, %v4557
      %v4633 = vsub.f32 %v4436, %v4557
      %v4634 = vsub.f32 %v4440, %v4560
      %v4635 = vsub.f32 %v4442, %v4560
      %v4636 = vsub.f32 %v4444, %v4563
      %v4637 = vsub.f32 %v4446, %v4563
      %v4638 = vsub.f32 %v4450, %v4566
      %v4639 = vsub.f32 %v4452, %v4566
      %v4640 = vsub.f32 %v4454, %v4569
      %v4641 = vsub.f32 %v4456, %v4569
      %v4642 = vsub.f32 %v4460, %v4572
      %v4643 = vsub.f32 %v4462, %v4572
      %v4644 = vsub.f32 %v4464, %v4575
      %v4645 = vsub.f32 %v4466, %v4575
      %v4646 = vsub.f32 %v4470, %v4578
      %v4647 = vsub.f32 %v4472, %v4578
      %v4648 = vsub.f32 %v4474, %v4581
      %v4649 = vsub.f32 %v4476, %v4581
      %v4650 = vsub.f32 %v4480, %v4584
      %v4651 = vsub.f32 %v4482, %v4584
      %v4652 = vsub.f32 %v4484, %v4587
      %v4653 = vsub.f32 %v4486, %v4587
      %v4654 = vsub.f32 %v4490, %v4590
      %v4655 = vsub.f32 %v4492, %v4590
      %v4656 = vsub.f32 %v4494, %v4593
      %v4657 = vsub.f32 %v4496, %v4593
      %v4658 = vmul.f32 %v4594, 1.442695
      %v4659 = vpow.pop %v4658
      %v4660 = vmul.f32 %v4595, 1.442695
      %v4661 = vpow.pop %v4660
      %v4662 = vmul.f32 %v4596, 1.442695
      %v4663 = vpow.pop %v4662
      %v4664 = vmul.f32 %v4597, 1.442695
      %v4665 = vpow.pop %v4664
      %v4666 = vmul.f32 %v4598, 1.442695
      %v4667 = vpow.pop %v4666
      %v4668 = vmul.f32 %v4599, 1.442695
      %v4669 = vpow.pop %v4668
      %v4670 = vmul.f32 %v4600, 1.442695
      %v4671 = vpow.pop %v4670
      %v4672 = vmul.f32 %v4601, 1.442695
      %v4673 = vpow.pop %v4672
      %v4674 = vmul.f32 %v4602, 1.442695
      %v4675 = vpow.pop %v4674
      %v4676 = vmul.f32 %v4603, 1.442695
      %v4677 = vpow.pop %v4676
      %v4678 = vmul.f32 %v4604, 1.442695
      %v4679 = vpow.pop %v4678
      %v4680 = vmul.f32 %v4605, 1.442695
      %v4681 = vpow.pop %v4680
      %v4682 = vmul.f32 %v4606, 1.442695
      %v4683 = vpow.pop %v4682
      %v4684 = vmul.f32 %v4607, 1.442695
      %v4685 = vpow.pop %v4684
      %v4686 = vmul.f32 %v4608, 1.442695
      %v4687 = vpow.pop %v4686
      %v4688 = vmul.f32 %v4609, 1.442695
      %v4689 = vpow.pop %v4688
      %v4690 = vmul.f32 %v4610, 1.442695
      %v4691 = vpow.pop %v4690
      %v4692 = vmul.f32 %v4611, 1.442695
      %v4693 = vpow.pop %v4692
      %v4694 = vmul.f32 %v4612, 1.442695
      %v4695 = vpow.pop %v4694
      %v4696 = vmul.f32 %v4613, 1.442695
      %v4697 = vpow.pop %v4696
      %v4698 = vmul.f32 %v4614, 1.442695
      %v4699 = vpow.pop %v4698
      %v4700 = vmul.f32 %v4615, 1.442695
      %v4701 = vpow.pop %v4700
      %v4702 = vmul.f32 %v4616, 1.442695
      %v4703 = vpow.pop %v4702
      %v4704 = vmul.f32 %v4617, 1.442695
      %v4705 = vpow.pop %v4704
      %v4706 = vmul.f32 %v4618, 1.442695
      %v4707 = vpow.pop %v4706
      %v4708 = vmul.f32 %v4619, 1.442695
      %v4709 = vpow.pop %v4708
      %v4710 = vmul.f32 %v4620, 1.442695
      %v4711 = vpow.pop %v4710
      %v4712 = vmul.f32 %v4621, 1.442695
      %v4713 = vpow.pop %v4712
      %v4714 = vmul.f32 %v4622, 1.442695
      %v4715 = vpow.pop %v4714
      %v4716 = vmul.f32 %v4623, 1.442695
      %v4717 = vpow.pop %v4716
      %v4718 = vmul.f32 %v4624, 1.442695
      %v4719 = vpow.pop %v4718
      %v4720 = vmul.f32 %v4625, 1.442695
      %v4721 = vpow.pop %v4720
      %v4722 = vmul.f32 %v4626, 1.442695
      %v4723 = vpow.pop %v4722
      %v4724 = vmul.f32 %v4627, 1.442695
      %v4725 = vpow.pop %v4724
      %v4726 = vmul.f32 %v4628, 1.442695
      %v4727 = vpow.pop %v4726
      %v4728 = vmul.f32 %v4629, 1.442695
      %v4729 = vpow.pop %v4728
      %v4730 = vmul.f32 %v4630, 1.442695
      %v4731 = vpow.pop %v4730
      %v4732 = vmul.f32 %v4631, 1.442695
      %v4733 = vpow.pop %v4732
      %v4734 = vmul.f32 %v4632, 1.442695
      %v4735 = vpow.pop %v4734
      %v4736 = vmul.f32 %v4633, 1.442695
      %v4737 = vpow.pop %v4736
      %v4738 = vmul.f32 %v4634, 1.442695
      %v4739 = vpow.pop %v4738
      %v4740 = vmul.f32 %v4635, 1.442695
      %v4741 = vpow.pop %v4740
      %v4742 = vmul.f32 %v4636, 1.442695
      %v4743 = vpow.pop %v4742
      %v4744 = vmul.f32 %v4637, 1.442695
      %v4745 = vpow.pop %v4744
      %v4746 = vmul.f32 %v4638, 1.442695
      %v4747 = vpow.pop %v4746
      %v4748 = vmul.f32 %v4639, 1.442695
      %v4749 = vpow.pop %v4748
      %v4750 = vmul.f32 %v4640, 1.442695
      %v4751 = vpow.pop %v4750
      %v4752 = vmul.f32 %v4641, 1.442695
      %v4753 = vpow.pop %v4752
      %v4754 = vmul.f32 %v4642, 1.442695
      %v4755 = vpow.pop %v4754
      %v4756 = vmul.f32 %v4643, 1.442695
      %v4757 = vpow.pop %v4756
      %v4758 = vmul.f32 %v4644, 1.442695
      %v4759 = vpow.pop %v4758
      %v4760 = vmul.f32 %v4645, 1.442695
      %v4761 = vpow.pop %v4760
      %v4762 = vmul.f32 %v4646, 1.442695
      %v4763 = vpow.pop %v4762
      %v4764 = vmul.f32 %v4647, 1.442695
      %v4765 = vpow.pop %v4764
      %v4766 = vmul.f32 %v4648, 1.442695
      %v4767 = vpow.pop %v4766
      %v4768 = vmul.f32 %v4649, 1.442695
      %v4769 = vpow.pop %v4768
      %v4770 = vmul.f32 %v4650, 1.442695
      %v4771 = vpow.pop %v4770
      %v4772 = vmul.f32 %v4651, 1.442695
      %v4773 = vpow.pop %v4772
      %v4774 = vmul.f32 %v4652, 1.442695
      %v4775 = vpow.pop %v4774
      %v4776 = vmul.f32 %v4653, 1.442695
      %v4777 = vpow.pop %v4776
      %v4778 = vmul.f32 %v4654, 1.442695
      %v4779 = vpow.pop %v4778
      %v4780 = vmul.f32 %v4655, 1.442695
      %v4781 = vpow.pop %v4780
      %v4782 = vmul.f32 %v4656, 1.442695
      %v4783 = vpow.pop %v4782
      %v4784 = vmul.f32 %v4657, 1.442695
      %v4785 = vpow.pop %v4784
      %v4786 = vadd.f32 %v4659, %v4661
      %4787 = vadd.xlane.f32.xlu0 %v4786
      %v4788 = vpop.xlane.xlu0 %4787
      %v4789 = vadd.f32 %v4663, %v4665
      %4790 = vadd.xlane.f32.xlu0 %v4789
      %v4791 = vpop.xlane.xlu0 %4790
      %v4792 = vadd.f32 %v4667, %v4669
      %4793 = vadd.xlane.f32.xlu0 %v4792
      %v4794 = vpop.xlane.xlu0 %4793
      %v4795 = vadd.f32 %v4671, %v4673
      %4796 = vadd.xlane.f32.xlu0 %v4795
      %v4797 = vpop.xlane.xlu0 %4796
      %v4798 = vadd.f32 %v4675, %v4677
      %4799 = vadd.xlane.f32.xlu0 %v4798
      %v4800 = vpop.xlane.xlu0 %4799
      %v4801 = vadd.f32 %v4679, %v4681
      %4802 = vadd.xlane.f32.xlu0 %v4801
      %v4803 = vpop.xlane.xlu0 %4802
      %v4804 = vadd.f32 %v4683, %v4685
      %4805 = vadd.xlane.f32.xlu0 %v4804
      %v4806 = vpop.xlane.xlu0 %4805
      %v4807 = vadd.f32 %v4687, %v4689
      %4808 = vadd.xlane.f32.xlu0 %v4807
      %v4809 = vpop.xlane.xlu0 %4808
      %v4810 = vadd.f32 %v4691, %v4693
      %4811 = vadd.xlane.f32.xlu0 %v4810
      %v4812 = vpop.xlane.xlu0 %4811
      %v4813 = vadd.f32 %v4695, %v4697
      %4814 = vadd.xlane.f32.xlu0 %v4813
      %v4815 = vpop.xlane.xlu0 %4814
      %v4816 = vadd.f32 %v4699, %v4701
      %4817 = vadd.xlane.f32.xlu0 %v4816
      %v4818 = vpop.xlane.xlu0 %4817
      %v4819 = vadd.f32 %v4703, %v4705
      %4820 = vadd.xlane.f32.xlu0 %v4819
      %v4821 = vpop.xlane.xlu0 %4820
      %v4822 = vadd.f32 %v4707, %v4709
      %4823 = vadd.xlane.f32.xlu0 %v4822
      %v4824 = vpop.xlane.xlu0 %4823
      %v4825 = vadd.f32 %v4711, %v4713
      %4826 = vadd.xlane.f32.xlu0 %v4825
      %v4827 = vpop.xlane.xlu0 %4826
      %v4828 = vadd.f32 %v4715, %v4717
      %4829 = vadd.xlane.f32.xlu0 %v4828
      %v4830 = vpop.xlane.xlu0 %4829
      %v4831 = vadd.f32 %v4719, %v4721
      %4832 = vadd.xlane.f32.xlu0 %v4831
      %v4833 = vpop.xlane.xlu0 %4832
      %v4834 = vadd.f32 %v4723, %v4725
      %4835 = vadd.xlane.f32.xlu0 %v4834
      %v4836 = vpop.xlane.xlu0 %4835
      %v4837 = vadd.f32 %v4727, %v4729
      %4838 = vadd.xlane.f32.xlu0 %v4837
      %v4839 = vpop.xlane.xlu0 %4838
      %v4840 = vadd.f32 %v4731, %v4733
      %4841 = vadd.xlane.f32.xlu0 %v4840
      %v4842 = vpop.xlane.xlu0 %4841
      %v4843 = vadd.f32 %v4735, %v4737
      %4844 = vadd.xlane.f32.xlu0 %v4843
      %v4845 = vpop.xlane.xlu0 %4844
      %v4846 = vadd.f32 %v4739, %v4741
      %4847 = vadd.xlane.f32.xlu0 %v4846
      %v4848 = vpop.xlane.xlu0 %4847
      %v4849 = vadd.f32 %v4743, %v4745
      %4850 = vadd.xlane.f32.xlu0 %v4849
      %v4851 = vpop.xlane.xlu0 %4850
      %v4852 = vadd.f32 %v4747, %v4749
      %4853 = vadd.xlane.f32.xlu0 %v4852
      %v4854 = vpop.xlane.xlu0 %4853
      %v4855 = vadd.f32 %v4751, %v4753
      %4856 = vadd.xlane.f32.xlu0 %v4855
      %v4857 = vpop.xlane.xlu0 %4856
      %v4858 = vadd.f32 %v4755, %v4757
      %4859 = vadd.xlane.f32.xlu0 %v4858
      %v4860 = vpop.xlane.xlu0 %4859
      %v4861 = vadd.f32 %v4759, %v4761
      %4862 = vadd.xlane.f32.xlu0 %v4861
      %v4863 = vpop.xlane.xlu0 %4862
      %v4864 = vadd.f32 %v4763, %v4765
      %4865 = vadd.xlane.f32.xlu0 %v4864
      %v4866 = vpop.xlane.xlu0 %4865
      %v4867 = vadd.f32 %v4767, %v4769
      %4868 = vadd.xlane.f32.xlu0 %v4867
      %v4869 = vpop.xlane.xlu0 %4868
      %v4870 = vadd.f32 %v4771, %v4773
      %4871 = vadd.xlane.f32.xlu0 %v4870
      %v4872 = vpop.xlane.xlu0 %4871
      %v4873 = vadd.f32 %v4775, %v4777
      %4874 = vadd.xlane.f32.xlu0 %v4873
      %v4875 = vpop.xlane.xlu0 %4874
      %v4876 = vadd.f32 %v4779, %v4781
      %4877 = vadd.xlane.f32.xlu0 %v4876
      %v4878 = vpop.xlane.xlu0 %4877
      %v4879 = vadd.f32 %v4783, %v4785
      %4880 = vadd.xlane.f32.xlu0 %v4879
      %v4881 = vpop.xlane.xlu0 %4880
      %v4882 = vrcp.pop %v4788
      %v4883 = vrcp.pop %v4791
      %v4884 = vrcp.pop %v4794
      %v4885 = vrcp.pop %v4797
      %v4886 = vrcp.pop %v4800
      %v4887 = vrcp.pop %v4803
      %v4888 = vrcp.pop %v4806
      %v4889 = vrcp.pop %v4809
      %v4890 = vrcp.pop %v4812
      %v4891 = vrcp.pop %v4815
      %v4892 = vrcp.pop %v4818
      %v4893 = vrcp.pop %v4821
      %v4894 = vrcp.pop %v4824
      %v4895 = vrcp.pop %v4827
      %v4896 = vrcp.pop %v4830
      %v4897 = vrcp.pop %v4833
      %v4898 = vrcp.pop %v4836
      %v4899 = vrcp.pop %v4839
      %v4900 = vrcp.pop %v4842
      %v4901 = vrcp.pop %v4845
      %v4902 = vrcp.pop %v4848
      %v4903 = vrcp.pop %v4851
      %v4904 = vrcp.pop %v4854
      %v4905 = vrcp.pop %v4857
      %v4906 = vrcp.pop %v4860
      %v4907 = vrcp.pop %v4863
      %v4908 = vrcp.pop %v4866
      %v4909 = vrcp.pop %v4869
      %v4910 = vrcp.pop %v4872
      %v4911 = vrcp.pop %v4875
      %v4912 = vrcp.pop %v4878
      %v4913 = vrcp.pop %v4881
      %v4914 = vmul.f32 %v4659, %v4882
      %v4915 = vmul.f32 %v4661, %v4882
      %v4916 = vmul.f32 %v4663, %v4883
      %v4917 = vmul.f32 %v4665, %v4883
      %v4918 = vmul.f32 %v4667, %v4884
      %v4919 = vmul.f32 %v4669, %v4884
      %v4920 = vmul.f32 %v4671, %v4885
      %v4921 = vmul.f32 %v4673, %v4885
      %v4922 = vmul.f32 %v4675, %v4886
      %v4923 = vmul.f32 %v4677, %v4886
      %v4924 = vmul.f32 %v4679, %v4887
      %v4925 = vmul.f32 %v4681, %v4887
      %v4926 = vmul.f32 %v4683, %v4888
      %v4927 = vmul.f32 %v4685, %v4888
      %v4928 = vmul.f32 %v4687, %v4889
      %v4929 = vmul.f32 %v4689, %v4889
      %v4930 = vmul.f32 %v4691, %v4890
      %v4931 = vmul.f32 %v4693, %v4890
      %v4932 = vmul.f32 %v4695, %v4891
      %v4933 = vmul.f32 %v4697, %v4891
      %v4934 = vmul.f32 %v4699, %v4892
      %v4935 = vmul.f32 %v4701, %v4892
      %v4936 = vmul.f32 %v4703, %v4893
      %v4937 = vmul.f32 %v4705, %v4893
      %v4938 = vmul.f32 %v4707, %v4894
      %v4939 = vmul.f32 %v4709, %v4894
      %v4940 = vmul.f32 %v4711, %v4895
      %v4941 = vmul.f32 %v4713, %v4895
      %v4942 = vmul.f32 %v4715, %v4896
      %v4943 = vmul.f32 %v4717, %v4896
      %v4944 = vmul.f32 %v4719, %v4897
      %v4945 = vmul.f32 %v4721, %v4897
      %v4946 = vmul.f32 %v4723, %v4898
      %v4947 = vmul.f32 %v4725, %v4898
      %v4948 = vmul.f32 %v4727, %v4899
      %v4949 = vmul.f32 %v4729, %v4899
      %v4950 = vmul.f32 %v4731, %v4900
      %v4951 = vmul.f32 %v4733, %v4900
      %v4952 = vmul.f32 %v4735, %v4901
      %v4953 = vmul.f32 %v4737, %v4901
      %v4954 = vmul.f32 %v4739, %v4902
      %v4955 = vmul.f32 %v4741, %v4902
      %v4956 = vmul.f32 %v4743, %v4903
      %v4957 = vmul.f32 %v4745, %v4903
      %v4958 = vmul.f32 %v4747, %v4904
      %v4959 = vmul.f32 %v4749, %v4904
      %v4960 = vmul.f32 %v4751, %v4905
      %v4961 = vmul.f32 %v4753, %v4905
      %v4962 = vmul.f32 %v4755, %v4906
      %v4963 = vmul.f32 %v4757, %v4906
      %v4964 = vmul.f32 %v4759, %v4907
      %v4965 = vmul.f32 %v4761, %v4907
      %v4966 = vmul.f32 %v4763, %v4908
      %v4967 = vmul.f32 %v4765, %v4908
      %v4968 = vmul.f32 %v4767, %v4909
      %v4969 = vmul.f32 %v4769, %v4909
      %v4970 = vmul.f32 %v4771, %v4910
      %v4971 = vmul.f32 %v4773, %v4910
      %v4972 = vmul.f32 %v4775, %v4911
      %v4973 = vmul.f32 %v4777, %v4911
      %v4974 = vmul.f32 %v4779, %v4912
      %v4975 = vmul.f32 %v4781, %v4912
      %v4976 = vmul.f32 %v4783, %v4913
      %v4977 = vmul.f32 %v4785, %v4913
      %v4978 = vpack.c.bf16 %v4916, %v4914
      %v4979 = vpack.c.bf16 %v4917, %v4915
      %v4980 = vpack.c.bf16 %v4920, %v4918
      %v4981 = vpack.c.bf16 %v4921, %v4919
      %v4982 = vpack.c.bf16 %v4924, %v4922
      %v4983 = vpack.c.bf16 %v4925, %v4923
      %v4984 = vpack.c.bf16 %v4928, %v4926
      %v4985 = vpack.c.bf16 %v4929, %v4927
      %v4986 = vpack.c.bf16 %v4932, %v4930
      %v4987 = vpack.c.bf16 %v4933, %v4931
      %v4988 = vpack.c.bf16 %v4936, %v4934
      %v4989 = vpack.c.bf16 %v4937, %v4935
      %v4990 = vpack.c.bf16 %v4940, %v4938
      %v4991 = vpack.c.bf16 %v4941, %v4939
      %v4992 = vpack.c.bf16 %v4944, %v4942
      %v4993 = vpack.c.bf16 %v4945, %v4943
      %v4994 = vpack.c.bf16 %v4948, %v4946
      %v4995 = vpack.c.bf16 %v4949, %v4947
      %v4996 = vpack.c.bf16 %v4952, %v4950
      %v4997 = vpack.c.bf16 %v4953, %v4951
      %v4998 = vpack.c.bf16 %v4956, %v4954
      %v4999 = vpack.c.bf16 %v4957, %v4955
      %v5000 = vpack.c.bf16 %v4960, %v4958
      %v5001 = vpack.c.bf16 %v4961, %v4959
      %v5002 = vpack.c.bf16 %v4964, %v4962
      %v5003 = vpack.c.bf16 %v4965, %v4963
      %v5004 = vpack.c.bf16 %v4968, %v4966
      %v5005 = vpack.c.bf16 %v4969, %v4967
      %v5006 = vpack.c.bf16 %v4972, %v4970
      %v5007 = vpack.c.bf16 %v4973, %v4971
      %v5008 = vpack.c.bf16 %v4976, %v4974
      %v5009 = vpack.c.bf16 %v4977, %v4975
      %5010 = vrot.lane.b32.xlu0 %v1312, 56
      %v5011 = vpop.permute.xlu0 %5010
      %5012 = vrot.lane.b32.xlu0 %v1313, 56
      %v5013 = vpop.permute.xlu0 %5012
      %5014 = vrot.lane.b32.xlu0 %v1314, 56
      %v5015 = vpop.permute.xlu0 %5014
      %5016 = vrot.lane.b32.xlu0 %v1315, 56
      %v5017 = vpop.permute.xlu0 %5016
      %5018 = vrot.lane.b32.xlu0 %v1316, 56
      %v5019 = vpop.permute.xlu0 %5018
      %5020 = vrot.lane.b32.xlu0 %v1317, 56
      %v5021 = vpop.permute.xlu0 %5020
      %5022 = vrot.lane.b32.xlu0 %v1318, 56
      %v5023 = vpop.permute.xlu0 %5022
      %5024 = vrot.lane.b32.xlu0 %v1319, 56
      %v5025 = vpop.permute.xlu0 %5024
      %5026 = vrot.lane.b32.xlu0 %v1320, 56
      %v5027 = vpop.permute.xlu0 %5026
      %5028 = vrot.lane.b32.xlu0 %v1321, 56
      %v5029 = vpop.permute.xlu0 %5028
      %5030 = vrot.lane.b32.xlu0 %v1322, 56
      %v5031 = vpop.permute.xlu0 %5030
      %5032 = vrot.lane.b32.xlu0 %v1323, 56
      %v5033 = vpop.permute.xlu0 %5032
      %5034 = vrot.lane.b32.xlu0 %v1324, 56
      %v5035 = vpop.permute.xlu0 %5034
      %5036 = vrot.lane.b32.xlu0 %v1325, 56
      %v5037 = vpop.permute.xlu0 %5036
      %5038 = vrot.lane.b32.xlu0 %v1326, 56
      %v5039 = vpop.permute.xlu0 %5038
      %5040 = vrot.lane.b32.xlu0 %v1327, 56
      %v5041 = vpop.permute.xlu0 %5040
      %5058 = vmatprep.subr.bf16.mxu0 0
      %5059 = vmatpush1.bf16.msra.mxu0 %v5025
      %5060 = vmatprep.subr.bf16.mxu0 0
      %5061 = vmatpush1.bf16.msra.mxu0 %v5023
      %5062 = vmatprep.subr.bf16.mxu0 0
      %5063 = vmatpush1.bf16.msra.mxu0 %v5021
      %5064 = vmatprep.subr.bf16.mxu0 0
      %5065 = vmatpush1.bf16.msra.mxu0 %v5019
      %5066 = vmatprep.subr.bf16.mxu0 0
      %5067 = vmatpush1.bf16.msra.mxu0 %v5017
      %5068 = vmatprep.subr.bf16.mxu0 0
      %5069 = vmatpush1.bf16.msra.mxu0 %v5015
      %5070 = vmatprep.subr.bf16.mxu0 0
      %5071 = vmatpush1.bf16.msra.mxu0 %v5013
      %5072 = vmatprep.subr.bf16.mxu0 0
      %5073 = vmatpush1.bf16.msra.mxu0 %v5011
      %5074 = vmatprep.subr.bf16.mxu0 0
      %5075 = vmatpush2.bf16.msra.mxu0 %v5041
      %5076 = vmatprep.subr.bf16.mxu0 0
      %5077 = vmatpush2.bf16.msra.mxu0 %v5039
      %5078 = vmatprep.subr.bf16.mxu0 0
      %5079 = vmatpush2.bf16.msra.mxu0 %v5037
      %5080 = vmatprep.subr.bf16.mxu0 0
      %5081 = vmatpush2.bf16.msra.mxu0 %v5035
      %5082 = vmatprep.subr.bf16.mxu0 0
      %5083 = vmatpush2.bf16.msra.mxu0 %v5033
      %5084 = vmatprep.subr.bf16.mxu0 0
      %5085 = vmatpush2.bf16.msra.mxu0 %v5031
      %5086 = vmatprep.subr.bf16.mxu0 0
      %5087 = vmatpush2.bf16.msra.mxu0 %v5029
      %5088 = vmatprep.subr.bf16.mxu0 0
      %5089 = vmatpush2.bf16.msra.mxu0 %v5027
      %5090 = vmatprep.mubr.bf16.mxu0 %v4979
      %5091 = vmatmul.mubr.bf16.gmra.mxu0 %v4978
      %v5092 = vpop.f32.mrf.mxu0
      %v5093 = vadd.f32 0.0, %v5092
      %v5094 = vpop.f32.mrf.mxu0
      %v5095 = vpop.f32.mrf.mxu0
      %v5096 = vadd.f32 0.0, %v5095
      %v5097 = vpop.f32.mrf.mxu0
      %5098 = vmatprep.mubr.bf16.mxu0 %v4981
      %5099 = vmatmul.mubr.bf16.gmra.mxu0 %v4980
      %v5100 = vpop.f32.mrf.mxu0
      %v5101 = vadd.f32 0.0, %v5100
      %v5102 = vpop.f32.mrf.mxu0
      %v5103 = vpop.f32.mrf.mxu0
      %v5104 = vadd.f32 0.0, %v5103
      %v5105 = vpop.f32.mrf.mxu0
      %5106 = vmatprep.mubr.bf16.mxu0 %v4983
      %5107 = vmatmul.mubr.bf16.gmra.mxu0 %v4982
      %v5108 = vpop.f32.mrf.mxu0
      %v5109 = vadd.f32 0.0, %v5108
      %v5110 = vpop.f32.mrf.mxu0
      %v5111 = vpop.f32.mrf.mxu0
      %v5112 = vadd.f32 0.0, %v5111
      %v5113 = vpop.f32.mrf.mxu0
      %5114 = vmatprep.mubr.bf16.mxu0 %v4985
      %5115 = vmatmul.mubr.bf16.gmra.mxu0 %v4984
      %v5116 = vpop.f32.mrf.mxu0
      %v5117 = vadd.f32 0.0, %v5116
      %v5118 = vpop.f32.mrf.mxu0
      %v5119 = vpop.f32.mrf.mxu0
      %v5120 = vadd.f32 0.0, %v5119
      %v5121 = vpop.f32.mrf.mxu0
      %5122 = vmatprep.mubr.bf16.mxu0 %v4987
      %5123 = vmatmul.mubr.bf16.gmra.mxu0 %v4986
      %v5124 = vpop.f32.mrf.mxu0
      %v5125 = vadd.f32 0.0, %v5124
      %v5126 = vpop.f32.mrf.mxu0
      %v5127 = vpop.f32.mrf.mxu0
      %v5128 = vadd.f32 0.0, %v5127
      %v5129 = vpop.f32.mrf.mxu0
      %5130 = vmatprep.mubr.bf16.mxu0 %v4989
      %5131 = vmatmul.mubr.bf16.gmra.mxu0 %v4988
      %v5132 = vpop.f32.mrf.mxu0
      %v5133 = vadd.f32 0.0, %v5132
      %v5134 = vpop.f32.mrf.mxu0
      %v5135 = vpop.f32.mrf.mxu0
      %v5136 = vadd.f32 0.0, %v5135
      %v5137 = vpop.f32.mrf.mxu0
      %5138 = vmatprep.mubr.bf16.mxu0 %v4991
      %5139 = vmatmul.mubr.bf16.gmra.mxu0 %v4990
      %v5140 = vpop.f32.mrf.mxu0
      %v5141 = vadd.f32 0.0, %v5140
      %v5142 = vpop.f32.mrf.mxu0
      %v5143 = vpop.f32.mrf.mxu0
      %v5144 = vadd.f32 0.0, %v5143
      %v5145 = vpop.f32.mrf.mxu0
      %5146 = vmatprep.mubr.bf16.mxu0 %v4993
      %5147 = vmatmul.mubr.bf16.gmra.mxu0 %v4992
      %v5148 = vpop.f32.mrf.mxu0
      %v5149 = vadd.f32 0.0, %v5148
      %v5150 = vpop.f32.mrf.mxu0
      %v5151 = vpop.f32.mrf.mxu0
      %v5152 = vadd.f32 0.0, %v5151
      %v5153 = vpop.f32.mrf.mxu0
      %5154 = vmatprep.mubr.bf16.mxu0 %v4995
      %5155 = vmatmul.mubr.bf16.gmra.mxu0 %v4994
      %v5156 = vpop.f32.mrf.mxu0
      %v5157 = vadd.f32 0.0, %v5156
      %v5158 = vpop.f32.mrf.mxu0
      %v5159 = vpop.f32.mrf.mxu0
      %v5160 = vadd.f32 0.0, %v5159
      %v5161 = vpop.f32.mrf.mxu0
      %5162 = vmatprep.mubr.bf16.mxu0 %v4997
      %5163 = vmatmul.mubr.bf16.gmra.mxu0 %v4996
      %v5164 = vpop.f32.mrf.mxu0
      %v5165 = vadd.f32 0.0, %v5164
      %v5166 = vpop.f32.mrf.mxu0
      %v5167 = vpop.f32.mrf.mxu0
      %v5168 = vadd.f32 0.0, %v5167
      %v5169 = vpop.f32.mrf.mxu0
      %5170 = vmatprep.mubr.bf16.mxu0 %v4999
      %5171 = vmatmul.mubr.bf16.gmra.mxu0 %v4998
      %v5172 = vpop.f32.mrf.mxu0
      %v5173 = vadd.f32 0.0, %v5172
      %v5174 = vpop.f32.mrf.mxu0
      %v5175 = vpop.f32.mrf.mxu0
      %v5176 = vadd.f32 0.0, %v5175
      %v5177 = vpop.f32.mrf.mxu0
      %5178 = vmatprep.mubr.bf16.mxu0 %v5001
      %5179 = vmatmul.mubr.bf16.gmra.mxu0 %v5000
      %v5180 = vpop.f32.mrf.mxu0
      %v5181 = vadd.f32 0.0, %v5180
      %v5182 = vpop.f32.mrf.mxu0
      %v5183 = vpop.f32.mrf.mxu0
      %v5184 = vadd.f32 0.0, %v5183
      %v5185 = vpop.f32.mrf.mxu0
      %5186 = vmatprep.mubr.bf16.mxu0 %v5003
      %5187 = vmatmul.mubr.bf16.gmra.mxu0 %v5002
      %v5188 = vpop.f32.mrf.mxu0
      %v5189 = vadd.f32 0.0, %v5188
      %v5190 = vpop.f32.mrf.mxu0
      %v5191 = vpop.f32.mrf.mxu0
      %v5192 = vadd.f32 0.0, %v5191
      %v5193 = vpop.f32.mrf.mxu0
      %5194 = vmatprep.mubr.bf16.mxu0 %v5005
      %5195 = vmatmul.mubr.bf16.gmra.mxu0 %v5004
      %v5196 = vpop.f32.mrf.mxu0
      %v5197 = vadd.f32 0.0, %v5196
      %v5198 = vpop.f32.mrf.mxu0
      %v5199 = vpop.f32.mrf.mxu0
      %v5200 = vadd.f32 0.0, %v5199
      %v5201 = vpop.f32.mrf.mxu0
      %5202 = vmatprep.mubr.bf16.mxu0 %v5007
      %5203 = vmatmul.mubr.bf16.gmra.mxu0 %v5006
      %v5204 = vpop.f32.mrf.mxu0
      %v5205 = vadd.f32 0.0, %v5204
      %v5206 = vpop.f32.mrf.mxu0
      %v5207 = vpop.f32.mrf.mxu0
      %v5208 = vadd.f32 0.0, %v5207
      %v5209 = vpop.f32.mrf.mxu0
      %5210 = vmatprep.mubr.bf16.mxu0 %v5009
      %5211 = vmatmul.mubr.bf16.gmra.mxu0 %v5008
      %v5212 = vpop.f32.mrf.mxu0
      %v5213 = vadd.f32 0.0, %v5212
      %v5214 = vpop.f32.mrf.mxu0
      %v5215 = vpop.f32.mrf.mxu0
      %v5216 = vadd.f32 0.0, %v5215
      %v5217 = vpop.f32.mrf.mxu0
      %5218 = vdwg.mxu0
      %v5219 = vpack.c.bf16 %v5096, %v5093
      %v5220 = vpack.c.bf16 %v5104, %v5101
      %v5221 = vpack.c.bf16 %v5112, %v5109
      %v5222 = vpack.c.bf16 %v5120, %v5117
      %v5223 = vpack.c.bf16 %v5128, %v5125
      %v5224 = vpack.c.bf16 %v5136, %v5133
      %v5225 = vpack.c.bf16 %v5144, %v5141
      %v5226 = vpack.c.bf16 %v5152, %v5149
      %v5227 = vpack.c.bf16 %v5160, %v5157
      %v5228 = vpack.c.bf16 %v5168, %v5165
      %v5229 = vpack.c.bf16 %v5176, %v5173
      %v5230 = vpack.c.bf16 %v5184, %v5181
      %v5231 = vpack.c.bf16 %v5192, %v5189
      %v5232 = vpack.c.bf16 %v5200, %v5197
      %v5233 = vpack.c.bf16 %v5208, %v5205
      %v5234 = vpack.c.bf16 %v5216, %v5213
      %s5235 = scalar_lea.vmem %s425, 4
      %v5236 = vld [vmem:[%s5235] sm:$0x3]
      %v5238 = vsel %vm1584, %v5219, 0
      %v5241 = vsel %vm1584, %v5220, 0
      %v5244 = vsel %vm1584, %v5221, 0
      %v5247 = vsel %vm1584, %v5222, 0
      %v5250 = vsel %vm1584, %v5223, 0
      %v5253 = vsel %vm1584, %v5224, 0
      %v5256 = vsel %vm1584, %v5225, 0
      %v5259 = vsel %vm1584, %v5226, 0
      %v5262 = vsel %vm1584, %v5227, 0
      %v5265 = vsel %vm1584, %v5228, 0
      %v5268 = vsel %vm1584, %v5229, 0
      %v5271 = vsel %vm1584, %v5230, 0
      %v5274 = vsel %vm1584, %v5231, 0
      %v5277 = vsel %vm1584, %v5232, 0
      %v5280 = vsel %vm1584, %v5233, 0
      %v5283 = vsel %vm1584, %v5234, 0
      %v5286 = vsel %vm3768, %v5236, 0
      %5288 = vmatprep.subr.bf16.mxu0 0
      %5289 = vmatpush1.bf16.msra.mxu0 0
      %5290 = vmatprep.subr.bf16.mxu0 0
      %5291 = vmatpush1.bf16.msra.mxu0 0
      %5292 = vmatprep.subr.bf16.mxu0 0
      %5293 = vmatpush1.bf16.msra.mxu0 0
      %5294 = vmatprep.subr.bf16.mxu0 0
      %5295 = vmatpush1.bf16.msra.mxu0 0
      %5296 = vmatprep.subr.bf16.mxu0 0
      %5297 = vmatpush1.bf16.msra.mxu0 0
      %5298 = vmatprep.subr.bf16.mxu0 0
      %5299 = vmatpush1.bf16.msra.mxu0 0
      %5300 = vmatprep.subr.bf16.mxu0 0
      %5301 = vmatpush1.bf16.msra.mxu0 0
      %5302 = vmatprep.subr.bf16.mxu0 0
      %5303 = vmatpush1.bf16.msra.mxu0 %v5286
      %5304 = vmatprep.subr.bf16.mxu0 0
      %5305 = vmatpush2.bf16.msra.mxu0 0
      %5306 = vmatprep.subr.bf16.mxu0 0
      %5307 = vmatpush2.bf16.msra.mxu0 0
      %5308 = vmatprep.subr.bf16.mxu0 0
      %5309 = vmatpush2.bf16.msra.mxu0 0
      %5310 = vmatprep.subr.bf16.mxu0 0
      %5311 = vmatpush2.bf16.msra.mxu0 0
      %5312 = vmatprep.subr.bf16.mxu0 0
      %5313 = vmatpush2.bf16.msra.mxu0 0
      %5314 = vmatprep.subr.bf16.mxu0 0
      %5315 = vmatpush2.bf16.msra.mxu0 0
      %5316 = vmatprep.subr.bf16.mxu0 0
      %5317 = vmatpush2.bf16.msra.mxu0 0
      %5318 = vmatprep.subr.bf16.mxu0 0
      %5319 = vmatpush2.bf16.msra.mxu0 0
      %5320 = vmatprep.mubr.bf16.mxu0 0
      %5321 = vmatmul.mubr.bf16.gmra.mxu0 %v5238
      %v5322 = vpop.f32.mrf.mxu0
      %v5323 = vadd.f32 0.0, %v5322
      %v5324 = vpop.f32.mrf.mxu0
      %v5325 = vpop.f32.mrf.mxu0
      %v5326 = vadd.f32 0.0, %v5325
      %v5327 = vpop.f32.mrf.mxu0
      %5328 = vmatprep.mubr.bf16.mxu0 0
      %5329 = vmatmul.mubr.bf16.gmra.mxu0 %v5241
      %v5330 = vpop.f32.mrf.mxu0
      %v5331 = vadd.f32 0.0, %v5330
      %v5332 = vpop.f32.mrf.mxu0
      %v5333 = vpop.f32.mrf.mxu0
      %v5334 = vadd.f32 0.0, %v5333
      %v5335 = vpop.f32.mrf.mxu0
      %5336 = vmatprep.mubr.bf16.mxu0 0
      %5337 = vmatmul.mubr.bf16.gmra.mxu0 %v5244
      %v5338 = vpop.f32.mrf.mxu0
      %v5339 = vadd.f32 0.0, %v5338
      %v5340 = vpop.f32.mrf.mxu0
      %v5341 = vpop.f32.mrf.mxu0
      %v5342 = vadd.f32 0.0, %v5341
      %v5343 = vpop.f32.mrf.mxu0
      %5344 = vmatprep.mubr.bf16.mxu0 0
      %5345 = vmatmul.mubr.bf16.gmra.mxu0 %v5247
      %v5346 = vpop.f32.mrf.mxu0
      %v5347 = vadd.f32 0.0, %v5346
      %v5348 = vpop.f32.mrf.mxu0
      %v5349 = vpop.f32.mrf.mxu0
      %v5350 = vadd.f32 0.0, %v5349
      %v5351 = vpop.f32.mrf.mxu0
      %5352 = vmatprep.mubr.bf16.mxu0 0
      %5353 = vmatmul.mubr.bf16.gmra.mxu0 %v5250
      %v5354 = vpop.f32.mrf.mxu0
      %v5355 = vadd.f32 0.0, %v5354
      %v5356 = vpop.f32.mrf.mxu0
      %v5357 = vpop.f32.mrf.mxu0
      %v5358 = vadd.f32 0.0, %v5357
      %v5359 = vpop.f32.mrf.mxu0
      %5360 = vmatprep.mubr.bf16.mxu0 0
      %5361 = vmatmul.mubr.bf16.gmra.mxu0 %v5253
      %v5362 = vpop.f32.mrf.mxu0
      %v5363 = vadd.f32 0.0, %v5362
      %v5364 = vpop.f32.mrf.mxu0
      %v5365 = vpop.f32.mrf.mxu0
      %v5366 = vadd.f32 0.0, %v5365
      %v5367 = vpop.f32.mrf.mxu0
      %5368 = vmatprep.mubr.bf16.mxu0 0
      %5369 = vmatmul.mubr.bf16.gmra.mxu0 %v5256
      %v5370 = vpop.f32.mrf.mxu0
      %v5371 = vadd.f32 0.0, %v5370
      %v5372 = vpop.f32.mrf.mxu0
      %v5373 = vpop.f32.mrf.mxu0
      %v5374 = vadd.f32 0.0, %v5373
      %v5375 = vpop.f32.mrf.mxu0
      %5376 = vmatprep.mubr.bf16.mxu0 0
      %5377 = vmatmul.mubr.bf16.gmra.mxu0 %v5259
      %v5378 = vpop.f32.mrf.mxu0
      %v5379 = vadd.f32 0.0, %v5378
      %v5380 = vpop.f32.mrf.mxu0
      %v5381 = vpop.f32.mrf.mxu0
      %v5382 = vadd.f32 0.0, %v5381
      %v5383 = vpop.f32.mrf.mxu0
      %5384 = vmatprep.mubr.bf16.mxu0 0
      %5385 = vmatmul.mubr.bf16.gmra.mxu0 %v5262
      %v5386 = vpop.f32.mrf.mxu0
      %v5387 = vadd.f32 0.0, %v5386
      %v5388 = vpop.f32.mrf.mxu0
      %v5389 = vpop.f32.mrf.mxu0
      %v5390 = vadd.f32 0.0, %v5389
      %v5391 = vpop.f32.mrf.mxu0
      %5392 = vmatprep.mubr.bf16.mxu0 0
      %5393 = vmatmul.mubr.bf16.gmra.mxu0 %v5265
      %v5394 = vpop.f32.mrf.mxu0
      %v5395 = vadd.f32 0.0, %v5394
      %v5396 = vpop.f32.mrf.mxu0
      %v5397 = vpop.f32.mrf.mxu0
      %v5398 = vadd.f32 0.0, %v5397
      %v5399 = vpop.f32.mrf.mxu0
      %5400 = vmatprep.mubr.bf16.mxu0 0
      %5401 = vmatmul.mubr.bf16.gmra.mxu0 %v5268
      %v5402 = vpop.f32.mrf.mxu0
      %v5403 = vadd.f32 0.0, %v5402
      %v5404 = vpop.f32.mrf.mxu0
      %v5405 = vpop.f32.mrf.mxu0
      %v5406 = vadd.f32 0.0, %v5405
      %v5407 = vpop.f32.mrf.mxu0
      %5408 = vmatprep.mubr.bf16.mxu0 0
      %5409 = vmatmul.mubr.bf16.gmra.mxu0 %v5271
      %v5410 = vpop.f32.mrf.mxu0
      %v5411 = vadd.f32 0.0, %v5410
      %v5412 = vpop.f32.mrf.mxu0
      %v5413 = vpop.f32.mrf.mxu0
      %v5414 = vadd.f32 0.0, %v5413
      %v5415 = vpop.f32.mrf.mxu0
      %5416 = vmatprep.mubr.bf16.mxu0 0
      %5417 = vmatmul.mubr.bf16.gmra.mxu0 %v5274
      %v5418 = vpop.f32.mrf.mxu0
      %v5419 = vadd.f32 0.0, %v5418
      %v5420 = vpop.f32.mrf.mxu0
      %v5421 = vpop.f32.mrf.mxu0
      %v5422 = vadd.f32 0.0, %v5421
      %v5423 = vpop.f32.mrf.mxu0
      %5424 = vmatprep.mubr.bf16.mxu0 0
      %5425 = vmatmul.mubr.bf16.gmra.mxu0 %v5277
      %v5426 = vpop.f32.mrf.mxu0
      %v5427 = vadd.f32 0.0, %v5426
      %v5428 = vpop.f32.mrf.mxu0
      %v5429 = vpop.f32.mrf.mxu0
      %v5430 = vadd.f32 0.0, %v5429
      %v5431 = vpop.f32.mrf.mxu0
      %5432 = vmatprep.mubr.bf16.mxu0 0
      %5433 = vmatmul.mubr.bf16.gmra.mxu0 %v5280
      %v5434 = vpop.f32.mrf.mxu0
      %v5435 = vadd.f32 0.0, %v5434
      %v5436 = vpop.f32.mrf.mxu0
      %v5437 = vpop.f32.mrf.mxu0
      %v5438 = vadd.f32 0.0, %v5437
      %v5439 = vpop.f32.mrf.mxu0
      %5440 = vmatprep.mubr.bf16.mxu0 0
      %5441 = vmatmul.mubr.bf16.gmra.mxu0 %v5283
      %v5442 = vpop.f32.mrf.mxu0
      %v5443 = vadd.f32 0.0, %v5442
      %v5444 = vpop.f32.mrf.mxu0
      %v5445 = vpop.f32.mrf.mxu0
      %v5446 = vadd.f32 0.0, %v5445
      %v5447 = vpop.f32.mrf.mxu0
      %5448 = vdwg.mxu0
      %v5449 = vadd.f32 %v4019, %v5323
      %v5450 = vadd.f32 %v4022, %v5326
      %v5451 = vadd.f32 %v4027, %v5331
      %v5452 = vadd.f32 %v4030, %v5334
      %v5453 = vadd.f32 %v4035, %v5339
      %v5454 = vadd.f32 %v4038, %v5342
      %v5455 = vadd.f32 %v4043, %v5347
      %v5456 = vadd.f32 %v4046, %v5350
      %v5457 = vadd.f32 %v4051, %v5355
      %v5458 = vadd.f32 %v4054, %v5358
      %v5459 = vadd.f32 %v4059, %v5363
      %v5460 = vadd.f32 %v4062, %v5366
      %v5461 = vadd.f32 %v4067, %v5371
      %v5462 = vadd.f32 %v4070, %v5374
      %v5463 = vadd.f32 %v4075, %v5379
      %v5464 = vadd.f32 %v4078, %v5382
      %v5465 = vadd.f32 %v4083, %v5387
      %v5466 = vadd.f32 %v4086, %v5390
      %v5467 = vadd.f32 %v4091, %v5395
      %v5468 = vadd.f32 %v4094, %v5398
      %v5469 = vadd.f32 %v4099, %v5403
      %v5470 = vadd.f32 %v4102, %v5406
      %v5471 = vadd.f32 %v4107, %v5411
      %v5472 = vadd.f32 %v4110, %v5414
      %v5473 = vadd.f32 %v4115, %v5419
      %v5474 = vadd.f32 %v4118, %v5422
      %v5475 = vadd.f32 %v4123, %v5427
      %v5476 = vadd.f32 %v4126, %v5430
      %v5477 = vadd.f32 %v4131, %v5435
      %v5478 = vadd.f32 %v4134, %v5438
      %v5479 = vadd.f32 %v4139, %v5443
      %v5480 = vadd.f32 %v4142, %v5446
      %5481 = vrot.lane.b32.xlu0 %v1312, 116
      %v5482 = vpop.permute.xlu0 %5481
      %5483 = vrot.lane.b32.xlu0 %v1313, 116
      %v5484 = vpop.permute.xlu0 %5483
      %5485 = vrot.lane.b32.xlu0 %v1314, 116
      %v5486 = vpop.permute.xlu0 %5485
      %5487 = vrot.lane.b32.xlu0 %v1315, 116
      %v5488 = vpop.permute.xlu0 %5487
      %5489 = vrot.lane.b32.xlu0 %v1316, 116
      %v5490 = vpop.permute.xlu0 %5489
      %5491 = vrot.lane.b32.xlu0 %v1317, 116
      %v5492 = vpop.permute.xlu0 %5491
      %5493 = vrot.lane.b32.xlu0 %v1318, 116
      %v5494 = vpop.permute.xlu0 %5493
      %5495 = vrot.lane.b32.xlu0 %v1319, 116
      %v5496 = vpop.permute.xlu0 %5495
      %5497 = vrot.lane.b32.xlu0 %v1320, 116
      %v5498 = vpop.permute.xlu0 %5497
      %5499 = vrot.lane.b32.xlu0 %v1321, 116
      %v5500 = vpop.permute.xlu0 %5499
      %5501 = vrot.lane.b32.xlu0 %v1322, 116
      %v5502 = vpop.permute.xlu0 %5501
      %5503 = vrot.lane.b32.xlu0 %v1323, 116
      %v5504 = vpop.permute.xlu0 %5503
      %5505 = vrot.lane.b32.xlu0 %v1324, 116
      %v5506 = vpop.permute.xlu0 %5505
      %5507 = vrot.lane.b32.xlu0 %v1325, 116
      %v5508 = vpop.permute.xlu0 %5507
      %5509 = vrot.lane.b32.xlu0 %v1326, 116
      %v5510 = vpop.permute.xlu0 %5509
      %5511 = vrot.lane.b32.xlu0 %v1327, 116
      %v5512 = vpop.permute.xlu0 %5511
      %5513 = vrot.lane.b32.xlu0 %v1520, 84
      %v5514 = vpop.permute.xlu0 %5513
      %5515 = vrot.lane.b32.xlu0 %v1521, 84
      %v5516 = vpop.permute.xlu0 %5515
      %5517 = vrot.lane.b32.xlu0 %v1522, 84
      %v5518 = vpop.permute.xlu0 %5517
      %5519 = vrot.lane.b32.xlu0 %v1523, 84
      %v5520 = vpop.permute.xlu0 %5519
      %5521 = vrot.lane.b32.xlu0 %v1524, 84
      %v5522 = vpop.permute.xlu0 %5521
      %5523 = vrot.lane.b32.xlu0 %v1525, 84
      %v5524 = vpop.permute.xlu0 %5523
      %5525 = vrot.lane.b32.xlu0 %v1526, 84
      %v5526 = vpop.permute.xlu0 %5525
      %5527 = vrot.lane.b32.xlu0 %v1527, 84
      %v5528 = vpop.permute.xlu0 %5527
      %5529 = vrot.lane.b32.xlu0 %v1528, 84
      %v5530 = vpop.permute.xlu0 %5529
      %5531 = vrot.lane.b32.xlu0 %v1529, 84
      %v5532 = vpop.permute.xlu0 %5531
      %5533 = vrot.lane.b32.xlu0 %v1530, 84
      %v5534 = vpop.permute.xlu0 %5533
      %5535 = vrot.lane.b32.xlu0 %v1531, 84
      %v5536 = vpop.permute.xlu0 %5535
      %5537 = vrot.lane.b32.xlu0 %v1532, 84
      %v5538 = vpop.permute.xlu0 %5537
      %5539 = vrot.lane.b32.xlu0 %v1533, 84
      %v5540 = vpop.permute.xlu0 %5539
      %5541 = vrot.lane.b32.xlu0 %v1534, 84
      %v5542 = vpop.permute.xlu0 %5541
      %5543 = vrot.lane.b32.xlu0 %v1535, 84
      %v5544 = vpop.permute.xlu0 %5543
      %v5546 = vsel %vm1584, %v5482, 0
      %v5549 = vsel %vm1584, %v5484, 0
      %v5552 = vsel %vm1584, %v5486, 0
      %v5555 = vsel %vm1584, %v5488, 0
      %v5558 = vsel %vm1584, %v5490, 0
      %v5561 = vsel %vm1584, %v5492, 0
      %v5564 = vsel %vm1584, %v5494, 0
      %v5567 = vsel %vm1584, %v5496, 0
      %v5570 = vsel %vm1584, %v5498, 0
      %v5573 = vsel %vm1584, %v5500, 0
      %v5576 = vsel %vm1584, %v5502, 0
      %v5579 = vsel %vm1584, %v5504, 0
      %v5582 = vsel %vm1584, %v5506, 0
      %v5585 = vsel %vm1584, %v5508, 0
      %v5588 = vsel %vm1584, %v5510, 0
      %v5591 = vsel %vm1584, %v5512, 0
      %v5594 = vsel %vm1584, %v5514, 0
      %v5597 = vsel %vm1584, %v5516, 0
      %v5600 = vsel %vm1584, %v5518, 0
      %v5603 = vsel %vm1584, %v5520, 0
      %v5606 = vsel %vm1584, %v5522, 0
      %v5609 = vsel %vm1584, %v5524, 0
      %v5612 = vsel %vm1584, %v5526, 0
      %v5615 = vsel %vm1584, %v5528, 0
      %v5618 = vsel %vm1584, %v5530, 0
      %v5621 = vsel %vm1584, %v5532, 0
      %v5624 = vsel %vm1584, %v5534, 0
      %v5627 = vsel %vm1584, %v5536, 0
      %v5630 = vsel %vm1584, %v5538, 0
      %v5633 = vsel %vm1584, %v5540, 0
      %v5636 = vsel %vm1584, %v5542, 0
      %v5639 = vsel %vm1584, %v5544, 0
      %5641 = vmatprep.subr.bf16.mxu0 0
      %5642 = vmatpush1.bf16.xpose.msra.mxu0 %v5615
      %5643 = vmatprep.subr.bf16.mxu0 0
      %5644 = vmatpush1.bf16.xpose.msra.mxu0 %v5612
      %5645 = vmatprep.subr.bf16.mxu0 0
      %5646 = vmatpush1.bf16.xpose.msra.mxu0 %v5609
      %5647 = vmatprep.subr.bf16.mxu0 0
      %5648 = vmatpush1.bf16.xpose.msra.mxu0 %v5606
      %5649 = vmatprep.subr.bf16.mxu0 0
      %5650 = vmatpush1.bf16.xpose.msra.mxu0 %v5603
      %5651 = vmatprep.subr.bf16.mxu0 0
      %5652 = vmatpush1.bf16.xpose.msra.mxu0 %v5600
      %5653 = vmatprep.subr.bf16.mxu0 0
      %5654 = vmatpush1.bf16.xpose.msra.mxu0 %v5597
      %5655 = vmatprep.subr.bf16.mxu0 0
      %5656 = vmatpush1.bf16.xpose.msra.mxu0 %v5594
      %5657 = vmatprep.subr.bf16.mxu0 0
      %5658 = vmatpush2.bf16.xpose.msra.mxu0 %v5639
      %5659 = vmatprep.subr.bf16.mxu0 0
      %5660 = vmatpush2.bf16.xpose.msra.mxu0 %v5636
      %5661 = vmatprep.subr.bf16.mxu0 0
      %5662 = vmatpush2.bf16.xpose.msra.mxu0 %v5633
      %5663 = vmatprep.subr.bf16.mxu0 0
      %5664 = vmatpush2.bf16.xpose.msra.mxu0 %v5630
      %5665 = vmatprep.subr.bf16.mxu0 0
      %5666 = vmatpush2.bf16.xpose.msra.mxu0 %v5627
      %5667 = vmatprep.subr.bf16.mxu0 0
      %5668 = vmatpush2.bf16.xpose.msra.mxu0 %v5624
      %5669 = vmatprep.subr.bf16.mxu0 0
      %5670 = vmatpush2.bf16.xpose.msra.mxu0 %v5621
      %5671 = vmatprep.subr.bf16.mxu0 0
      %5672 = vmatpush2.bf16.xpose.msra.mxu0 %v5618
      %5673 = vmatprep.mubr.bf16.mxu0 0
      %5674 = vmatmul.mubr.bf16.gmra.mxu0 %v5546
      %v5675 = vpop.f32.mrf.mxu0
      %v5676 = vadd.f32 0.0, %v5675
      %v5677 = vpop.f32.mrf.mxu0
      %v5678 = vadd.f32 0.0, %v5677
      %v5679 = vpop.f32.mrf.mxu0
      %v5680 = vadd.f32 0.0, %v5679
      %v5681 = vpop.f32.mrf.mxu0
      %v5682 = vadd.f32 0.0, %v5681
      %5683 = vmatprep.mubr.bf16.mxu0 0
      %5684 = vmatmul.mubr.bf16.gmra.mxu0 %v5549
      %v5685 = vpop.f32.mrf.mxu0
      %v5686 = vadd.f32 0.0, %v5685
      %v5687 = vpop.f32.mrf.mxu0
      %v5688 = vadd.f32 0.0, %v5687
      %v5689 = vpop.f32.mrf.mxu0
      %v5690 = vadd.f32 0.0, %v5689
      %v5691 = vpop.f32.mrf.mxu0
      %v5692 = vadd.f32 0.0, %v5691
      %5693 = vmatprep.mubr.bf16.mxu0 0
      %5694 = vmatmul.mubr.bf16.gmra.mxu0 %v5552
      %v5695 = vpop.f32.mrf.mxu0
      %v5696 = vadd.f32 0.0, %v5695
      %v5697 = vpop.f32.mrf.mxu0
      %v5698 = vadd.f32 0.0, %v5697
      %v5699 = vpop.f32.mrf.mxu0
      %v5700 = vadd.f32 0.0, %v5699
      %v5701 = vpop.f32.mrf.mxu0
      %v5702 = vadd.f32 0.0, %v5701
      %5703 = vmatprep.mubr.bf16.mxu0 0
      %5704 = vmatmul.mubr.bf16.gmra.mxu0 %v5555
      %v5705 = vpop.f32.mrf.mxu0
      %v5706 = vadd.f32 0.0, %v5705
      %v5707 = vpop.f32.mrf.mxu0
      %v5708 = vadd.f32 0.0, %v5707
      %v5709 = vpop.f32.mrf.mxu0
      %v5710 = vadd.f32 0.0, %v5709
      %v5711 = vpop.f32.mrf.mxu0
      %v5712 = vadd.f32 0.0, %v5711
      %5713 = vmatprep.mubr.bf16.mxu0 0
      %5714 = vmatmul.mubr.bf16.gmra.mxu0 %v5558
      %v5715 = vpop.f32.mrf.mxu0
      %v5716 = vadd.f32 0.0, %v5715
      %v5717 = vpop.f32.mrf.mxu0
      %v5718 = vadd.f32 0.0, %v5717
      %v5719 = vpop.f32.mrf.mxu0
      %v5720 = vadd.f32 0.0, %v5719
      %v5721 = vpop.f32.mrf.mxu0
      %v5722 = vadd.f32 0.0, %v5721
      %5723 = vmatprep.mubr.bf16.mxu0 0
      %5724 = vmatmul.mubr.bf16.gmra.mxu0 %v5561
      %v5725 = vpop.f32.mrf.mxu0
      %v5726 = vadd.f32 0.0, %v5725
      %v5727 = vpop.f32.mrf.mxu0
      %v5728 = vadd.f32 0.0, %v5727
      %v5729 = vpop.f32.mrf.mxu0
      %v5730 = vadd.f32 0.0, %v5729
      %v5731 = vpop.f32.mrf.mxu0
      %v5732 = vadd.f32 0.0, %v5731
      %5733 = vmatprep.mubr.bf16.mxu0 0
      %5734 = vmatmul.mubr.bf16.gmra.mxu0 %v5564
      %v5735 = vpop.f32.mrf.mxu0
      %v5736 = vadd.f32 0.0, %v5735
      %v5737 = vpop.f32.mrf.mxu0
      %v5738 = vadd.f32 0.0, %v5737
      %v5739 = vpop.f32.mrf.mxu0
      %v5740 = vadd.f32 0.0, %v5739
      %v5741 = vpop.f32.mrf.mxu0
      %v5742 = vadd.f32 0.0, %v5741
      %5743 = vmatprep.mubr.bf16.mxu0 0
      %5744 = vmatmul.mubr.bf16.gmra.mxu0 %v5567
      %v5745 = vpop.f32.mrf.mxu0
      %v5746 = vadd.f32 0.0, %v5745
      %v5747 = vpop.f32.mrf.mxu0
      %v5748 = vadd.f32 0.0, %v5747
      %v5749 = vpop.f32.mrf.mxu0
      %v5750 = vadd.f32 0.0, %v5749
      %v5751 = vpop.f32.mrf.mxu0
      %v5752 = vadd.f32 0.0, %v5751
      %5753 = vmatprep.mubr.bf16.mxu0 0
      %5754 = vmatmul.mubr.bf16.gmra.mxu0 %v5570
      %v5755 = vpop.f32.mrf.mxu0
      %v5756 = vadd.f32 0.0, %v5755
      %v5757 = vpop.f32.mrf.mxu0
      %v5758 = vadd.f32 0.0, %v5757
      %v5759 = vpop.f32.mrf.mxu0
      %v5760 = vadd.f32 0.0, %v5759
      %v5761 = vpop.f32.mrf.mxu0
      %v5762 = vadd.f32 0.0, %v5761
      %5763 = vmatprep.mubr.bf16.mxu0 0
      %5764 = vmatmul.mubr.bf16.gmra.mxu0 %v5573
      %v5765 = vpop.f32.mrf.mxu0
      %v5766 = vadd.f32 0.0, %v5765
      %v5767 = vpop.f32.mrf.mxu0
      %v5768 = vadd.f32 0.0, %v5767
      %v5769 = vpop.f32.mrf.mxu0
      %v5770 = vadd.f32 0.0, %v5769
      %v5771 = vpop.f32.mrf.mxu0
      %v5772 = vadd.f32 0.0, %v5771
      %5773 = vmatprep.mubr.bf16.mxu0 0
      %5774 = vmatmul.mubr.bf16.gmra.mxu0 %v5576
      %v5775 = vpop.f32.mrf.mxu0
      %v5776 = vadd.f32 0.0, %v5775
      %v5777 = vpop.f32.mrf.mxu0
      %v5778 = vadd.f32 0.0, %v5777
      %v5779 = vpop.f32.mrf.mxu0
      %v5780 = vadd.f32 0.0, %v5779
      %v5781 = vpop.f32.mrf.mxu0
      %v5782 = vadd.f32 0.0, %v5781
      %5783 = vmatprep.mubr.bf16.mxu0 0
      %5784 = vmatmul.mubr.bf16.gmra.mxu0 %v5579
      %v5785 = vpop.f32.mrf.mxu0
      %v5786 = vadd.f32 0.0, %v5785
      %v5787 = vpop.f32.mrf.mxu0
      %v5788 = vadd.f32 0.0, %v5787
      %v5789 = vpop.f32.mrf.mxu0
      %v5790 = vadd.f32 0.0, %v5789
      %v5791 = vpop.f32.mrf.mxu0
      %v5792 = vadd.f32 0.0, %v5791
      %5793 = vmatprep.mubr.bf16.mxu0 0
      %5794 = vmatmul.mubr.bf16.gmra.mxu0 %v5582
      %v5795 = vpop.f32.mrf.mxu0
      %v5796 = vadd.f32 0.0, %v5795
      %v5797 = vpop.f32.mrf.mxu0
      %v5798 = vadd.f32 0.0, %v5797
      %v5799 = vpop.f32.mrf.mxu0
      %v5800 = vadd.f32 0.0, %v5799
      %v5801 = vpop.f32.mrf.mxu0
      %v5802 = vadd.f32 0.0, %v5801
      %5803 = vmatprep.mubr.bf16.mxu0 0
      %5804 = vmatmul.mubr.bf16.gmra.mxu0 %v5585
      %v5805 = vpop.f32.mrf.mxu0
      %v5806 = vadd.f32 0.0, %v5805
      %v5807 = vpop.f32.mrf.mxu0
      %v5808 = vadd.f32 0.0, %v5807
      %v5809 = vpop.f32.mrf.mxu0
      %v5810 = vadd.f32 0.0, %v5809
      %v5811 = vpop.f32.mrf.mxu0
      %v5812 = vadd.f32 0.0, %v5811
      %5813 = vmatprep.mubr.bf16.mxu0 0
      %5814 = vmatmul.mubr.bf16.gmra.mxu0 %v5588
      %v5815 = vpop.f32.mrf.mxu0
      %v5816 = vadd.f32 0.0, %v5815
      %v5817 = vpop.f32.mrf.mxu0
      %v5818 = vadd.f32 0.0, %v5817
      %v5819 = vpop.f32.mrf.mxu0
      %v5820 = vadd.f32 0.0, %v5819
      %v5821 = vpop.f32.mrf.mxu0
      %v5822 = vadd.f32 0.0, %v5821
      %5823 = vmatprep.mubr.bf16.mxu0 0
      %5824 = vmatmul.mubr.bf16.gmra.mxu0 %v5591
      %v5825 = vpop.f32.mrf.mxu0
      %v5826 = vadd.f32 0.0, %v5825
      %v5827 = vpop.f32.mrf.mxu0
      %v5828 = vadd.f32 0.0, %v5827
      %v5829 = vpop.f32.mrf.mxu0
      %v5830 = vadd.f32 0.0, %v5829
      %v5831 = vpop.f32.mrf.mxu0
      %v5832 = vadd.f32 0.0, %v5831
      %5833 = vdwg.mxu0
      %v5834 = vmax.f32 %v5676, %v5678
      %5835 = vmax.xlane.f32.xlu0 %v5834
      %v5836 = vpop.xlane.xlu0 %5835
      %v5837 = vmax.f32 %v5680, %v5682
      %5838 = vmax.xlane.f32.xlu0 %v5837
      %v5839 = vpop.xlane.xlu0 %5838
      %v5840 = vmax.f32 %v5686, %v5688
      %5841 = vmax.xlane.f32.xlu0 %v5840
      %v5842 = vpop.xlane.xlu0 %5841
      %v5843 = vmax.f32 %v5690, %v5692
      %5844 = vmax.xlane.f32.xlu0 %v5843
      %v5845 = vpop.xlane.xlu0 %5844
      %v5846 = vmax.f32 %v5696, %v5698
      %5847 = vmax.xlane.f32.xlu0 %v5846
      %v5848 = vpop.xlane.xlu0 %5847
      %v5849 = vmax.f32 %v5700, %v5702
      %5850 = vmax.xlane.f32.xlu0 %v5849
      %v5851 = vpop.xlane.xlu0 %5850
      %v5852 = vmax.f32 %v5706, %v5708
      %5853 = vmax.xlane.f32.xlu0 %v5852
      %v5854 = vpop.xlane.xlu0 %5853
      %v5855 = vmax.f32 %v5710, %v5712
      %5856 = vmax.xlane.f32.xlu0 %v5855
      %v5857 = vpop.xlane.xlu0 %5856
      %v5858 = vmax.f32 %v5716, %v5718
      %5859 = vmax.xlane.f32.xlu0 %v5858
      %v5860 = vpop.xlane.xlu0 %5859
      %v5861 = vmax.f32 %v5720, %v5722
      %5862 = vmax.xlane.f32.xlu0 %v5861
      %v5863 = vpop.xlane.xlu0 %5862
      %v5864 = vmax.f32 %v5726, %v5728
      %5865 = vmax.xlane.f32.xlu0 %v5864
      %v5866 = vpop.xlane.xlu0 %5865
      %v5867 = vmax.f32 %v5730, %v5732
      %5868 = vmax.xlane.f32.xlu0 %v5867
      %v5869 = vpop.xlane.xlu0 %5868
      %v5870 = vmax.f32 %v5736, %v5738
      %5871 = vmax.xlane.f32.xlu0 %v5870
      %v5872 = vpop.xlane.xlu0 %5871
      %v5873 = vmax.f32 %v5740, %v5742
      %5874 = vmax.xlane.f32.xlu0 %v5873
      %v5875 = vpop.xlane.xlu0 %5874
      %v5876 = vmax.f32 %v5746, %v5748
      %5877 = vmax.xlane.f32.xlu0 %v5876
      %v5878 = vpop.xlane.xlu0 %5877
      %v5879 = vmax.f32 %v5750, %v5752
      %5880 = vmax.xlane.f32.xlu0 %v5879
      %v5881 = vpop.xlane.xlu0 %5880
      %v5882 = vmax.f32 %v5756, %v5758
      %5883 = vmax.xlane.f32.xlu0 %v5882
      %v5884 = vpop.xlane.xlu0 %5883
      %v5885 = vmax.f32 %v5760, %v5762
      %5886 = vmax.xlane.f32.xlu0 %v5885
      %v5887 = vpop.xlane.xlu0 %5886
      %v5888 = vmax.f32 %v5766, %v5768
      %5889 = vmax.xlane.f32.xlu0 %v5888
      %v5890 = vpop.xlane.xlu0 %5889
      %v5891 = vmax.f32 %v5770, %v5772
      %5892 = vmax.xlane.f32.xlu0 %v5891
      %v5893 = vpop.xlane.xlu0 %5892
      %v5894 = vmax.f32 %v5776, %v5778
      %5895 = vmax.xlane.f32.xlu0 %v5894
      %v5896 = vpop.xlane.xlu0 %5895
      %v5897 = vmax.f32 %v5780, %v5782
      %5898 = vmax.xlane.f32.xlu0 %v5897
      %v5899 = vpop.xlane.xlu0 %5898
      %v5900 = vmax.f32 %v5786, %v5788
      %5901 = vmax.xlane.f32.xlu0 %v5900
      %v5902 = vpop.xlane.xlu0 %5901
      %v5903 = vmax.f32 %v5790, %v5792
      %5904 = vmax.xlane.f32.xlu0 %v5903
      %v5905 = vpop.xlane.xlu0 %5904
      %v5906 = vmax.f32 %v5796, %v5798
      %5907 = vmax.xlane.f32.xlu0 %v5906
      %v5908 = vpop.xlane.xlu0 %5907
      %v5909 = vmax.f32 %v5800, %v5802
      %5910 = vmax.xlane.f32.xlu0 %v5909
      %v5911 = vpop.xlane.xlu0 %5910
      %v5912 = vmax.f32 %v5806, %v5808
      %5913 = vmax.xlane.f32.xlu0 %v5912
      %v5914 = vpop.xlane.xlu0 %5913
      %v5915 = vmax.f32 %v5810, %v5812
      %5916 = vmax.xlane.f32.xlu0 %v5915
      %v5917 = vpop.xlane.xlu0 %5916
      %v5918 = vmax.f32 %v5816, %v5818
      %5919 = vmax.xlane.f32.xlu0 %v5918
      %v5920 = vpop.xlane.xlu0 %5919
      %v5921 = vmax.f32 %v5820, %v5822
      %5922 = vmax.xlane.f32.xlu0 %v5921
      %v5923 = vpop.xlane.xlu0 %5922
      %v5924 = vmax.f32 %v5826, %v5828
      %5925 = vmax.xlane.f32.xlu0 %v5924
      %v5926 = vpop.xlane.xlu0 %5925
      %v5927 = vmax.f32 %v5830, %v5832
      %5928 = vmax.xlane.f32.xlu0 %v5927
      %v5929 = vpop.xlane.xlu0 %5928
      %v5930 = vsub.f32 %v5676, %v5836
      %v5931 = vsub.f32 %v5678, %v5836
      %v5932 = vsub.f32 %v5680, %v5839
      %v5933 = vsub.f32 %v5682, %v5839
      %v5934 = vsub.f32 %v5686, %v5842
      %v5935 = vsub.f32 %v5688, %v5842
      %v5936 = vsub.f32 %v5690, %v5845
      %v5937 = vsub.f32 %v5692, %v5845
      %v5938 = vsub.f32 %v5696, %v5848
      %v5939 = vsub.f32 %v5698, %v5848
      %v5940 = vsub.f32 %v5700, %v5851
      %v5941 = vsub.f32 %v5702, %v5851
      %v5942 = vsub.f32 %v5706, %v5854
      %v5943 = vsub.f32 %v5708, %v5854
      %v5944 = vsub.f32 %v5710, %v5857
      %v5945 = vsub.f32 %v5712, %v5857
      %v5946 = vsub.f32 %v5716, %v5860
      %v5947 = vsub.f32 %v5718, %v5860
      %v5948 = vsub.f32 %v5720, %v5863
      %v5949 = vsub.f32 %v5722, %v5863
      %v5950 = vsub.f32 %v5726, %v5866
      %v5951 = vsub.f32 %v5728, %v5866
      %v5952 = vsub.f32 %v5730, %v5869
      %v5953 = vsub.f32 %v5732, %v5869
      %v5954 = vsub.f32 %v5736, %v5872
      %v5955 = vsub.f32 %v5738, %v5872
      %v5956 = vsub.f32 %v5740, %v5875
      %v5957 = vsub.f32 %v5742, %v5875
      %v5958 = vsub.f32 %v5746, %v5878
      %v5959 = vsub.f32 %v5748, %v5878
      %v5960 = vsub.f32 %v5750, %v5881
      %v5961 = vsub.f32 %v5752, %v5881
      %v5962 = vsub.f32 %v5756, %v5884
      %v5963 = vsub.f32 %v5758, %v5884
      %v5964 = vsub.f32 %v5760, %v5887
      %v5965 = vsub.f32 %v5762, %v5887
      %v5966 = vsub.f32 %v5766, %v5890
      %v5967 = vsub.f32 %v5768, %v5890
      %v5968 = vsub.f32 %v5770, %v5893
      %v5969 = vsub.f32 %v5772, %v5893
      %v5970 = vsub.f32 %v5776, %v5896
      %v5971 = vsub.f32 %v5778, %v5896
      %v5972 = vsub.f32 %v5780, %v5899
      %v5973 = vsub.f32 %v5782, %v5899
      %v5974 = vsub.f32 %v5786, %v5902
      %v5975 = vsub.f32 %v5788, %v5902
      %v5976 = vsub.f32 %v5790, %v5905
      %v5977 = vsub.f32 %v5792, %v5905
      %v5978 = vsub.f32 %v5796, %v5908
      %v5979 = vsub.f32 %v5798, %v5908
      %v5980 = vsub.f32 %v5800, %v5911
      %v5981 = vsub.f32 %v5802, %v5911
      %v5982 = vsub.f32 %v5806, %v5914
      %v5983 = vsub.f32 %v5808, %v5914
      %v5984 = vsub.f32 %v5810, %v5917
      %v5985 = vsub.f32 %v5812, %v5917
      %v5986 = vsub.f32 %v5816, %v5920
      %v5987 = vsub.f32 %v5818, %v5920
      %v5988 = vsub.f32 %v5820, %v5923
      %v5989 = vsub.f32 %v5822, %v5923
      %v5990 = vsub.f32 %v5826, %v5926
      %v5991 = vsub.f32 %v5828, %v5926
      %v5992 = vsub.f32 %v5830, %v5929
      %v5993 = vsub.f32 %v5832, %v5929
      %v5994 = vmul.f32 %v5930, 1.442695
      %v5995 = vpow.pop %v5994
      %v5996 = vmul.f32 %v5931, 1.442695
      %v5997 = vpow.pop %v5996
      %v5998 = vmul.f32 %v5932, 1.442695
      %v5999 = vpow.pop %v5998
      %v6000 = vmul.f32 %v5933, 1.442695
      %v6001 = vpow.pop %v6000
      %v6002 = vmul.f32 %v5934, 1.442695
      %v6003 = vpow.pop %v6002
      %v6004 = vmul.f32 %v5935, 1.442695
      %v6005 = vpow.pop %v6004
      %v6006 = vmul.f32 %v5936, 1.442695
      %v6007 = vpow.pop %v6006
      %v6008 = vmul.f32 %v5937, 1.442695
      %v6009 = vpow.pop %v6008
      %v6010 = vmul.f32 %v5938, 1.442695
      %v6011 = vpow.pop %v6010
      %v6012 = vmul.f32 %v5939, 1.442695
      %v6013 = vpow.pop %v6012
      %v6014 = vmul.f32 %v5940, 1.442695
      %v6015 = vpow.pop %v6014
      %v6016 = vmul.f32 %v5941, 1.442695
      %v6017 = vpow.pop %v6016
      %v6018 = vmul.f32 %v5942, 1.442695
      %v6019 = vpow.pop %v6018
      %v6020 = vmul.f32 %v5943, 1.442695
      %v6021 = vpow.pop %v6020
      %v6022 = vmul.f32 %v5944, 1.442695
      %v6023 = vpow.pop %v6022
      %v6024 = vmul.f32 %v5945, 1.442695
      %v6025 = vpow.pop %v6024
      %v6026 = vmul.f32 %v5946, 1.442695
      %v6027 = vpow.pop %v6026
      %v6028 = vmul.f32 %v5947, 1.442695
      %v6029 = vpow.pop %v6028
      %v6030 = vmul.f32 %v5948, 1.442695
      %v6031 = vpow.pop %v6030
      %v6032 = vmul.f32 %v5949, 1.442695
      %v6033 = vpow.pop %v6032
      %v6034 = vmul.f32 %v5950, 1.442695
      %v6035 = vpow.pop %v6034
      %v6036 = vmul.f32 %v5951, 1.442695
      %v6037 = vpow.pop %v6036
      %v6038 = vmul.f32 %v5952, 1.442695
      %v6039 = vpow.pop %v6038
      %v6040 = vmul.f32 %v5953, 1.442695
      %v6041 = vpow.pop %v6040
      %v6042 = vmul.f32 %v5954, 1.442695
      %v6043 = vpow.pop %v6042
      %v6044 = vmul.f32 %v5955, 1.442695
      %v6045 = vpow.pop %v6044
      %v6046 = vmul.f32 %v5956, 1.442695
      %v6047 = vpow.pop %v6046
      %v6048 = vmul.f32 %v5957, 1.442695
      %v6049 = vpow.pop %v6048
      %v6050 = vmul.f32 %v5958, 1.442695
      %v6051 = vpow.pop %v6050
      %v6052 = vmul.f32 %v5959, 1.442695
      %v6053 = vpow.pop %v6052
      %v6054 = vmul.f32 %v5960, 1.442695
      %v6055 = vpow.pop %v6054
      %v6056 = vmul.f32 %v5961, 1.442695
      %v6057 = vpow.pop %v6056
      %v6058 = vmul.f32 %v5962, 1.442695
      %v6059 = vpow.pop %v6058
      %v6060 = vmul.f32 %v5963, 1.442695
      %v6061 = vpow.pop %v6060
      %v6062 = vmul.f32 %v5964, 1.442695
      %v6063 = vpow.pop %v6062
      %v6064 = vmul.f32 %v5965, 1.442695
      %v6065 = vpow.pop %v6064
      %v6066 = vmul.f32 %v5966, 1.442695
      %v6067 = vpow.pop %v6066
      %v6068 = vmul.f32 %v5967, 1.442695
      %v6069 = vpow.pop %v6068
      %v6070 = vmul.f32 %v5968, 1.442695
      %v6071 = vpow.pop %v6070
      %v6072 = vmul.f32 %v5969, 1.442695
      %v6073 = vpow.pop %v6072
      %v6074 = vmul.f32 %v5970, 1.442695
      %v6075 = vpow.pop %v6074
      %v6076 = vmul.f32 %v5971, 1.442695
      %v6077 = vpow.pop %v6076
      %v6078 = vmul.f32 %v5972, 1.442695
      %v6079 = vpow.pop %v6078
      %v6080 = vmul.f32 %v5973, 1.442695
      %v6081 = vpow.pop %v6080
      %v6082 = vmul.f32 %v5974, 1.442695
      %v6083 = vpow.pop %v6082
      %v6084 = vmul.f32 %v5975, 1.442695
      %v6085 = vpow.pop %v6084
      %v6086 = vmul.f32 %v5976, 1.442695
      %v6087 = vpow.pop %v6086
      %v6088 = vmul.f32 %v5977, 1.442695
      %v6089 = vpow.pop %v6088
      %v6090 = vmul.f32 %v5978, 1.442695
      %v6091 = vpow.pop %v6090
      %v6092 = vmul.f32 %v5979, 1.442695
      %v6093 = vpow.pop %v6092
      %v6094 = vmul.f32 %v5980, 1.442695
      %v6095 = vpow.pop %v6094
      %v6096 = vmul.f32 %v5981, 1.442695
      %v6097 = vpow.pop %v6096
      %v6098 = vmul.f32 %v5982, 1.442695
      %v6099 = vpow.pop %v6098
      %v6100 = vmul.f32 %v5983, 1.442695
      %v6101 = vpow.pop %v6100
      %v6102 = vmul.f32 %v5984, 1.442695
      %v6103 = vpow.pop %v6102
      %v6104 = vmul.f32 %v5985, 1.442695
      %v6105 = vpow.pop %v6104
      %v6106 = vmul.f32 %v5986, 1.442695
      %v6107 = vpow.pop %v6106
      %v6108 = vmul.f32 %v5987, 1.442695
      %v6109 = vpow.pop %v6108
      %v6110 = vmul.f32 %v5988, 1.442695
      %v6111 = vpow.pop %v6110
      %v6112 = vmul.f32 %v5989, 1.442695
      %v6113 = vpow.pop %v6112
      %v6114 = vmul.f32 %v5990, 1.442695
      %v6115 = vpow.pop %v6114
      %v6116 = vmul.f32 %v5991, 1.442695
      %v6117 = vpow.pop %v6116
      %v6118 = vmul.f32 %v5992, 1.442695
      %v6119 = vpow.pop %v6118
      %v6120 = vmul.f32 %v5993, 1.442695
      %v6121 = vpow.pop %v6120
      %v6122 = vadd.f32 %v5995, %v5997
      %6123 = vadd.xlane.f32.xlu0 %v6122
      %v6124 = vpop.xlane.xlu0 %6123
      %v6125 = vadd.f32 %v5999, %v6001
      %6126 = vadd.xlane.f32.xlu0 %v6125
      %v6127 = vpop.xlane.xlu0 %6126
      %v6128 = vadd.f32 %v6003, %v6005
      %6129 = vadd.xlane.f32.xlu0 %v6128
      %v6130 = vpop.xlane.xlu0 %6129
      %v6131 = vadd.f32 %v6007, %v6009
      %6132 = vadd.xlane.f32.xlu0 %v6131
      %v6133 = vpop.xlane.xlu0 %6132
      %v6134 = vadd.f32 %v6011, %v6013
      %6135 = vadd.xlane.f32.xlu0 %v6134
      %v6136 = vpop.xlane.xlu0 %6135
      %v6137 = vadd.f32 %v6015, %v6017
      %6138 = vadd.xlane.f32.xlu0 %v6137
      %v6139 = vpop.xlane.xlu0 %6138
      %v6140 = vadd.f32 %v6019, %v6021
      %6141 = vadd.xlane.f32.xlu0 %v6140
      %v6142 = vpop.xlane.xlu0 %6141
      %v6143 = vadd.f32 %v6023, %v6025
      %6144 = vadd.xlane.f32.xlu0 %v6143
      %v6145 = vpop.xlane.xlu0 %6144
      %v6146 = vadd.f32 %v6027, %v6029
      %6147 = vadd.xlane.f32.xlu0 %v6146
      %v6148 = vpop.xlane.xlu0 %6147
      %v6149 = vadd.f32 %v6031, %v6033
      %6150 = vadd.xlane.f32.xlu0 %v6149
      %v6151 = vpop.xlane.xlu0 %6150
      %v6152 = vadd.f32 %v6035, %v6037
      %6153 = vadd.xlane.f32.xlu0 %v6152
      %v6154 = vpop.xlane.xlu0 %6153
      %v6155 = vadd.f32 %v6039, %v6041
      %6156 = vadd.xlane.f32.xlu0 %v6155
      %v6157 = vpop.xlane.xlu0 %6156
      %v6158 = vadd.f32 %v6043, %v6045
      %6159 = vadd.xlane.f32.xlu0 %v6158
      %v6160 = vpop.xlane.xlu0 %6159
      %v6161 = vadd.f32 %v6047, %v6049
      %6162 = vadd.xlane.f32.xlu0 %v6161
      %v6163 = vpop.xlane.xlu0 %6162
      %v6164 = vadd.f32 %v6051, %v6053
      %6165 = vadd.xlane.f32.xlu0 %v6164
      %v6166 = vpop.xlane.xlu0 %6165
      %v6167 = vadd.f32 %v6055, %v6057
      %6168 = vadd.xlane.f32.xlu0 %v6167
      %v6169 = vpop.xlane.xlu0 %6168
      %v6170 = vadd.f32 %v6059, %v6061
      %6171 = vadd.xlane.f32.xlu0 %v6170
      %v6172 = vpop.xlane.xlu0 %6171
      %v6173 = vadd.f32 %v6063, %v6065
      %6174 = vadd.xlane.f32.xlu0 %v6173
      %v6175 = vpop.xlane.xlu0 %6174
      %v6176 = vadd.f32 %v6067, %v6069
      %6177 = vadd.xlane.f32.xlu0 %v6176
      %v6178 = vpop.xlane.xlu0 %6177
      %v6179 = vadd.f32 %v6071, %v6073
      %6180 = vadd.xlane.f32.xlu0 %v6179
      %v6181 = vpop.xlane.xlu0 %6180
      %v6182 = vadd.f32 %v6075, %v6077
      %6183 = vadd.xlane.f32.xlu0 %v6182
      %v6184 = vpop.xlane.xlu0 %6183
      %v6185 = vadd.f32 %v6079, %v6081
      %6186 = vadd.xlane.f32.xlu0 %v6185
      %v6187 = vpop.xlane.xlu0 %6186
      %v6188 = vadd.f32 %v6083, %v6085
      %6189 = vadd.xlane.f32.xlu0 %v6188
      %v6190 = vpop.xlane.xlu0 %6189
      %v6191 = vadd.f32 %v6087, %v6089
      %6192 = vadd.xlane.f32.xlu0 %v6191
      %v6193 = vpop.xlane.xlu0 %6192
      %v6194 = vadd.f32 %v6091, %v6093
      %6195 = vadd.xlane.f32.xlu0 %v6194
      %v6196 = vpop.xlane.xlu0 %6195
      %v6197 = vadd.f32 %v6095, %v6097
      %6198 = vadd.xlane.f32.xlu0 %v6197
      %v6199 = vpop.xlane.xlu0 %6198
      %v6200 = vadd.f32 %v6099, %v6101
      %6201 = vadd.xlane.f32.xlu0 %v6200
      %v6202 = vpop.xlane.xlu0 %6201
      %v6203 = vadd.f32 %v6103, %v6105
      %6204 = vadd.xlane.f32.xlu0 %v6203
      %v6205 = vpop.xlane.xlu0 %6204
      %v6206 = vadd.f32 %v6107, %v6109
      %6207 = vadd.xlane.f32.xlu0 %v6206
      %v6208 = vpop.xlane.xlu0 %6207
      %v6209 = vadd.f32 %v6111, %v6113
      %6210 = vadd.xlane.f32.xlu0 %v6209
      %v6211 = vpop.xlane.xlu0 %6210
      %v6212 = vadd.f32 %v6115, %v6117
      %6213 = vadd.xlane.f32.xlu0 %v6212
      %v6214 = vpop.xlane.xlu0 %6213
      %v6215 = vadd.f32 %v6119, %v6121
      %6216 = vadd.xlane.f32.xlu0 %v6215
      %v6217 = vpop.xlane.xlu0 %6216
      %v6218 = vrcp.pop %v6124
      %v6219 = vrcp.pop %v6127
      %v6220 = vrcp.pop %v6130
      %v6221 = vrcp.pop %v6133
      %v6222 = vrcp.pop %v6136
      %v6223 = vrcp.pop %v6139
      %v6224 = vrcp.pop %v6142
      %v6225 = vrcp.pop %v6145
      %v6226 = vrcp.pop %v6148
      %v6227 = vrcp.pop %v6151
      %v6228 = vrcp.pop %v6154
      %v6229 = vrcp.pop %v6157
      %v6230 = vrcp.pop %v6160
      %v6231 = vrcp.pop %v6163
      %v6232 = vrcp.pop %v6166
      %v6233 = vrcp.pop %v6169
      %v6234 = vrcp.pop %v6172
      %v6235 = vrcp.pop %v6175
      %v6236 = vrcp.pop %v6178
      %v6237 = vrcp.pop %v6181
      %v6238 = vrcp.pop %v6184
      %v6239 = vrcp.pop %v6187
      %v6240 = vrcp.pop %v6190
      %v6241 = vrcp.pop %v6193
      %v6242 = vrcp.pop %v6196
      %v6243 = vrcp.pop %v6199
      %v6244 = vrcp.pop %v6202
      %v6245 = vrcp.pop %v6205
      %v6246 = vrcp.pop %v6208
      %v6247 = vrcp.pop %v6211
      %v6248 = vrcp.pop %v6214
      %v6249 = vrcp.pop %v6217
      %v6250 = vmul.f32 %v5995, %v6218
      %v6251 = vmul.f32 %v5997, %v6218
      %v6252 = vmul.f32 %v5999, %v6219
      %v6253 = vmul.f32 %v6001, %v6219
      %v6254 = vmul.f32 %v6003, %v6220
      %v6255 = vmul.f32 %v6005, %v6220
      %v6256 = vmul.f32 %v6007, %v6221
      %v6257 = vmul.f32 %v6009, %v6221
      %v6258 = vmul.f32 %v6011, %v6222
      %v6259 = vmul.f32 %v6013, %v6222
      %v6260 = vmul.f32 %v6015, %v6223
      %v6261 = vmul.f32 %v6017, %v6223
      %v6262 = vmul.f32 %v6019, %v6224
      %v6263 = vmul.f32 %v6021, %v6224
      %v6264 = vmul.f32 %v6023, %v6225
      %v6265 = vmul.f32 %v6025, %v6225
      %v6266 = vmul.f32 %v6027, %v6226
      %v6267 = vmul.f32 %v6029, %v6226
      %v6268 = vmul.f32 %v6031, %v6227
      %v6269 = vmul.f32 %v6033, %v6227
      %v6270 = vmul.f32 %v6035, %v6228
      %v6271 = vmul.f32 %v6037, %v6228
      %v6272 = vmul.f32 %v6039, %v6229
      %v6273 = vmul.f32 %v6041, %v6229
      %v6274 = vmul.f32 %v6043, %v6230
      %v6275 = vmul.f32 %v6045, %v6230
      %v6276 = vmul.f32 %v6047, %v6231
      %v6277 = vmul.f32 %v6049, %v6231
      %v6278 = vmul.f32 %v6051, %v6232
      %v6279 = vmul.f32 %v6053, %v6232
      %v6280 = vmul.f32 %v6055, %v6233
      %v6281 = vmul.f32 %v6057, %v6233
      %v6282 = vmul.f32 %v6059, %v6234
      %v6283 = vmul.f32 %v6061, %v6234
      %v6284 = vmul.f32 %v6063, %v6235
      %v6285 = vmul.f32 %v6065, %v6235
      %v6286 = vmul.f32 %v6067, %v6236
      %v6287 = vmul.f32 %v6069, %v6236
      %v6288 = vmul.f32 %v6071, %v6237
      %v6289 = vmul.f32 %v6073, %v6237
      %v6290 = vmul.f32 %v6075, %v6238
      %v6291 = vmul.f32 %v6077, %v6238
      %v6292 = vmul.f32 %v6079, %v6239
      %v6293 = vmul.f32 %v6081, %v6239
      %v6294 = vmul.f32 %v6083, %v6240
      %v6295 = vmul.f32 %v6085, %v6240
      %v6296 = vmul.f32 %v6087, %v6241
      %v6297 = vmul.f32 %v6089, %v6241
      %v6298 = vmul.f32 %v6091, %v6242
      %v6299 = vmul.f32 %v6093, %v6242
      %v6300 = vmul.f32 %v6095, %v6243
      %v6301 = vmul.f32 %v6097, %v6243
      %v6302 = vmul.f32 %v6099, %v6244
      %v6303 = vmul.f32 %v6101, %v6244
      %v6304 = vmul.f32 %v6103, %v6245
      %v6305 = vmul.f32 %v6105, %v6245
      %v6306 = vmul.f32 %v6107, %v6246
      %v6307 = vmul.f32 %v6109, %v6246
      %v6308 = vmul.f32 %v6111, %v6247
      %v6309 = vmul.f32 %v6113, %v6247
      %v6310 = vmul.f32 %v6115, %v6248
      %v6311 = vmul.f32 %v6117, %v6248
      %v6312 = vmul.f32 %v6119, %v6249
      %v6313 = vmul.f32 %v6121, %v6249
      %v6314 = vpack.c.bf16 %v6252, %v6250
      %v6315 = vpack.c.bf16 %v6253, %v6251
      %v6316 = vpack.c.bf16 %v6256, %v6254
      %v6317 = vpack.c.bf16 %v6257, %v6255
      %v6318 = vpack.c.bf16 %v6260, %v6258
      %v6319 = vpack.c.bf16 %v6261, %v6259
      %v6320 = vpack.c.bf16 %v6264, %v6262
      %v6321 = vpack.c.bf16 %v6265, %v6263
      %v6322 = vpack.c.bf16 %v6268, %v6266
      %v6323 = vpack.c.bf16 %v6269, %v6267
      %v6324 = vpack.c.bf16 %v6272, %v6270
      %v6325 = vpack.c.bf16 %v6273, %v6271
      %v6326 = vpack.c.bf16 %v6276, %v6274
      %v6327 = vpack.c.bf16 %v6277, %v6275
      %v6328 = vpack.c.bf16 %v6280, %v6278
      %v6329 = vpack.c.bf16 %v6281, %v6279
      %v6330 = vpack.c.bf16 %v6284, %v6282
      %v6331 = vpack.c.bf16 %v6285, %v6283
      %v6332 = vpack.c.bf16 %v6288, %v6286
      %v6333 = vpack.c.bf16 %v6289, %v6287
      %v6334 = vpack.c.bf16 %v6292, %v6290
      %v6335 = vpack.c.bf16 %v6293, %v6291
      %v6336 = vpack.c.bf16 %v6296, %v6294
      %v6337 = vpack.c.bf16 %v6297, %v6295
      %v6338 = vpack.c.bf16 %v6300, %v6298
      %v6339 = vpack.c.bf16 %v6301, %v6299
      %v6340 = vpack.c.bf16 %v6304, %v6302
      %v6341 = vpack.c.bf16 %v6305, %v6303
      %v6342 = vpack.c.bf16 %v6308, %v6306
      %v6343 = vpack.c.bf16 %v6309, %v6307
      %v6344 = vpack.c.bf16 %v6312, %v6310
      %v6345 = vpack.c.bf16 %v6313, %v6311
      %6346 = vrot.lane.b32.xlu0 %v1312, 52
      %v6347 = vpop.permute.xlu0 %6346
      %6348 = vrot.lane.b32.xlu0 %v1313, 52
      %v6349 = vpop.permute.xlu0 %6348
      %6350 = vrot.lane.b32.xlu0 %v1314, 52
      %v6351 = vpop.permute.xlu0 %6350
      %6352 = vrot.lane.b32.xlu0 %v1315, 52
      %v6353 = vpop.permute.xlu0 %6352
      %6354 = vrot.lane.b32.xlu0 %v1316, 52
      %v6355 = vpop.permute.xlu0 %6354
      %6356 = vrot.lane.b32.xlu0 %v1317, 52
      %v6357 = vpop.permute.xlu0 %6356
      %6358 = vrot.lane.b32.xlu0 %v1318, 52
      %v6359 = vpop.permute.xlu0 %6358
      %6360 = vrot.lane.b32.xlu0 %v1319, 52
      %v6361 = vpop.permute.xlu0 %6360
      %6362 = vrot.lane.b32.xlu0 %v1320, 52
      %v6363 = vpop.permute.xlu0 %6362
      %6364 = vrot.lane.b32.xlu0 %v1321, 52
      %v6365 = vpop.permute.xlu0 %6364
      %6366 = vrot.lane.b32.xlu0 %v1322, 52
      %v6367 = vpop.permute.xlu0 %6366
      %6368 = vrot.lane.b32.xlu0 %v1323, 52
      %v6369 = vpop.permute.xlu0 %6368
      %6370 = vrot.lane.b32.xlu0 %v1324, 52
      %v6371 = vpop.permute.xlu0 %6370
      %6372 = vrot.lane.b32.xlu0 %v1325, 52
      %v6373 = vpop.permute.xlu0 %6372
      %6374 = vrot.lane.b32.xlu0 %v1326, 52
      %v6375 = vpop.permute.xlu0 %6374
      %6376 = vrot.lane.b32.xlu0 %v1327, 52
      %v6377 = vpop.permute.xlu0 %6376
      %6394 = vmatprep.subr.bf16.mxu0 0
      %6395 = vmatpush1.bf16.msra.mxu0 %v6361
      %6396 = vmatprep.subr.bf16.mxu0 0
      %6397 = vmatpush1.bf16.msra.mxu0 %v6359
      %6398 = vmatprep.subr.bf16.mxu0 0
      %6399 = vmatpush1.bf16.msra.mxu0 %v6357
      %6400 = vmatprep.subr.bf16.mxu0 0
      %6401 = vmatpush1.bf16.msra.mxu0 %v6355
      %6402 = vmatprep.subr.bf16.mxu0 0
      %6403 = vmatpush1.bf16.msra.mxu0 %v6353
      %6404 = vmatprep.subr.bf16.mxu0 0
      %6405 = vmatpush1.bf16.msra.mxu0 %v6351
      %6406 = vmatprep.subr.bf16.mxu0 0
      %6407 = vmatpush1.bf16.msra.mxu0 %v6349
      %6408 = vmatprep.subr.bf16.mxu0 0
      %6409 = vmatpush1.bf16.msra.mxu0 %v6347
      %6410 = vmatprep.subr.bf16.mxu0 0
      %6411 = vmatpush2.bf16.msra.mxu0 %v6377
      %6412 = vmatprep.subr.bf16.mxu0 0
      %6413 = vmatpush2.bf16.msra.mxu0 %v6375
      %6414 = vmatprep.subr.bf16.mxu0 0
      %6415 = vmatpush2.bf16.msra.mxu0 %v6373
      %6416 = vmatprep.subr.bf16.mxu0 0
      %6417 = vmatpush2.bf16.msra.mxu0 %v6371
      %6418 = vmatprep.subr.bf16.mxu0 0
      %6419 = vmatpush2.bf16.msra.mxu0 %v6369
      %6420 = vmatprep.subr.bf16.mxu0 0
      %6421 = vmatpush2.bf16.msra.mxu0 %v6367
      %6422 = vmatprep.subr.bf16.mxu0 0
      %6423 = vmatpush2.bf16.msra.mxu0 %v6365
      %6424 = vmatprep.subr.bf16.mxu0 0
      %6425 = vmatpush2.bf16.msra.mxu0 %v6363
      %6426 = vmatprep.mubr.bf16.mxu0 %v6315
      %6427 = vmatmul.mubr.bf16.gmra.mxu0 %v6314
      %v6428 = vpop.f32.mrf.mxu0
      %v6429 = vadd.f32 0.0, %v6428
      %v6430 = vpop.f32.mrf.mxu0
      %v6431 = vpop.f32.mrf.mxu0
      %v6432 = vadd.f32 0.0, %v6431
      %v6433 = vpop.f32.mrf.mxu0
      %6434 = vmatprep.mubr.bf16.mxu0 %v6317
      %6435 = vmatmul.mubr.bf16.gmra.mxu0 %v6316
      %v6436 = vpop.f32.mrf.mxu0
      %v6437 = vadd.f32 0.0, %v6436
      %v6438 = vpop.f32.mrf.mxu0
      %v6439 = vpop.f32.mrf.mxu0
      %v6440 = vadd.f32 0.0, %v6439
      %v6441 = vpop.f32.mrf.mxu0
      %6442 = vmatprep.mubr.bf16.mxu0 %v6319
      %6443 = vmatmul.mubr.bf16.gmra.mxu0 %v6318
      %v6444 = vpop.f32.mrf.mxu0
      %v6445 = vadd.f32 0.0, %v6444
      %v6446 = vpop.f32.mrf.mxu0
      %v6447 = vpop.f32.mrf.mxu0
      %v6448 = vadd.f32 0.0, %v6447
      %v6449 = vpop.f32.mrf.mxu0
      %6450 = vmatprep.mubr.bf16.mxu0 %v6321
      %6451 = vmatmul.mubr.bf16.gmra.mxu0 %v6320
      %v6452 = vpop.f32.mrf.mxu0
      %v6453 = vadd.f32 0.0, %v6452
      %v6454 = vpop.f32.mrf.mxu0
      %v6455 = vpop.f32.mrf.mxu0
      %v6456 = vadd.f32 0.0, %v6455
      %v6457 = vpop.f32.mrf.mxu0
      %6458 = vmatprep.mubr.bf16.mxu0 %v6323
      %6459 = vmatmul.mubr.bf16.gmra.mxu0 %v6322
      %v6460 = vpop.f32.mrf.mxu0
      %v6461 = vadd.f32 0.0, %v6460
      %v6462 = vpop.f32.mrf.mxu0
      %v6463 = vpop.f32.mrf.mxu0
      %v6464 = vadd.f32 0.0, %v6463
      %v6465 = vpop.f32.mrf.mxu0
      %6466 = vmatprep.mubr.bf16.mxu0 %v6325
      %6467 = vmatmul.mubr.bf16.gmra.mxu0 %v6324
      %v6468 = vpop.f32.mrf.mxu0
      %v6469 = vadd.f32 0.0, %v6468
      %v6470 = vpop.f32.mrf.mxu0
      %v6471 = vpop.f32.mrf.mxu0
      %v6472 = vadd.f32 0.0, %v6471
      %v6473 = vpop.f32.mrf.mxu0
      %6474 = vmatprep.mubr.bf16.mxu0 %v6327
      %6475 = vmatmul.mubr.bf16.gmra.mxu0 %v6326
      %v6476 = vpop.f32.mrf.mxu0
      %v6477 = vadd.f32 0.0, %v6476
      %v6478 = vpop.f32.mrf.mxu0
      %v6479 = vpop.f32.mrf.mxu0
      %v6480 = vadd.f32 0.0, %v6479
      %v6481 = vpop.f32.mrf.mxu0
      %6482 = vmatprep.mubr.bf16.mxu0 %v6329
      %6483 = vmatmul.mubr.bf16.gmra.mxu0 %v6328
      %v6484 = vpop.f32.mrf.mxu0
      %v6485 = vadd.f32 0.0, %v6484
      %v6486 = vpop.f32.mrf.mxu0
      %v6487 = vpop.f32.mrf.mxu0
      %v6488 = vadd.f32 0.0, %v6487
      %v6489 = vpop.f32.mrf.mxu0
      %6490 = vmatprep.mubr.bf16.mxu0 %v6331
      %6491 = vmatmul.mubr.bf16.gmra.mxu0 %v6330
      %v6492 = vpop.f32.mrf.mxu0
      %v6493 = vadd.f32 0.0, %v6492
      %v6494 = vpop.f32.mrf.mxu0
      %v6495 = vpop.f32.mrf.mxu0
      %v6496 = vadd.f32 0.0, %v6495
      %v6497 = vpop.f32.mrf.mxu0
      %6498 = vmatprep.mubr.bf16.mxu0 %v6333
      %6499 = vmatmul.mubr.bf16.gmra.mxu0 %v6332
      %v6500 = vpop.f32.mrf.mxu0
      %v6501 = vadd.f32 0.0, %v6500
      %v6502 = vpop.f32.mrf.mxu0
      %v6503 = vpop.f32.mrf.mxu0
      %v6504 = vadd.f32 0.0, %v6503
      %v6505 = vpop.f32.mrf.mxu0
      %6506 = vmatprep.mubr.bf16.mxu0 %v6335
      %6507 = vmatmul.mubr.bf16.gmra.mxu0 %v6334
      %v6508 = vpop.f32.mrf.mxu0
      %v6509 = vadd.f32 0.0, %v6508
      %v6510 = vpop.f32.mrf.mxu0
      %v6511 = vpop.f32.mrf.mxu0
      %v6512 = vadd.f32 0.0, %v6511
      %v6513 = vpop.f32.mrf.mxu0
      %6514 = vmatprep.mubr.bf16.mxu0 %v6337
      %6515 = vmatmul.mubr.bf16.gmra.mxu0 %v6336
      %v6516 = vpop.f32.mrf.mxu0
      %v6517 = vadd.f32 0.0, %v6516
      %v6518 = vpop.f32.mrf.mxu0
      %v6519 = vpop.f32.mrf.mxu0
      %v6520 = vadd.f32 0.0, %v6519
      %v6521 = vpop.f32.mrf.mxu0
      %6522 = vmatprep.mubr.bf16.mxu0 %v6339
      %6523 = vmatmul.mubr.bf16.gmra.mxu0 %v6338
      %v6524 = vpop.f32.mrf.mxu0
      %v6525 = vadd.f32 0.0, %v6524
      %v6526 = vpop.f32.mrf.mxu0
      %v6527 = vpop.f32.mrf.mxu0
      %v6528 = vadd.f32 0.0, %v6527
      %v6529 = vpop.f32.mrf.mxu0
      %6530 = vmatprep.mubr.bf16.mxu0 %v6341
      %6531 = vmatmul.mubr.bf16.gmra.mxu0 %v6340
      %v6532 = vpop.f32.mrf.mxu0
      %v6533 = vadd.f32 0.0, %v6532
      %v6534 = vpop.f32.mrf.mxu0
      %v6535 = vpop.f32.mrf.mxu0
      %v6536 = vadd.f32 0.0, %v6535
      %v6537 = vpop.f32.mrf.mxu0
      %6538 = vmatprep.mubr.bf16.mxu0 %v6343
      %6539 = vmatmul.mubr.bf16.gmra.mxu0 %v6342
      %v6540 = vpop.f32.mrf.mxu0
      %v6541 = vadd.f32 0.0, %v6540
      %v6542 = vpop.f32.mrf.mxu0
      %v6543 = vpop.f32.mrf.mxu0
      %v6544 = vadd.f32 0.0, %v6543
      %v6545 = vpop.f32.mrf.mxu0
      %6546 = vmatprep.mubr.bf16.mxu0 %v6345
      %6547 = vmatmul.mubr.bf16.gmra.mxu0 %v6344
      %v6548 = vpop.f32.mrf.mxu0
      %v6549 = vadd.f32 0.0, %v6548
      %v6550 = vpop.f32.mrf.mxu0
      %v6551 = vpop.f32.mrf.mxu0
      %v6552 = vadd.f32 0.0, %v6551
      %v6553 = vpop.f32.mrf.mxu0
      %6554 = vdwg.mxu0
      %v6555 = vpack.c.bf16 %v6432, %v6429
      %v6556 = vpack.c.bf16 %v6440, %v6437
      %v6557 = vpack.c.bf16 %v6448, %v6445
      %v6558 = vpack.c.bf16 %v6456, %v6453
      %v6559 = vpack.c.bf16 %v6464, %v6461
      %v6560 = vpack.c.bf16 %v6472, %v6469
      %v6561 = vpack.c.bf16 %v6480, %v6477
      %v6562 = vpack.c.bf16 %v6488, %v6485
      %v6563 = vpack.c.bf16 %v6496, %v6493
      %v6564 = vpack.c.bf16 %v6504, %v6501
      %v6565 = vpack.c.bf16 %v6512, %v6509
      %v6566 = vpack.c.bf16 %v6520, %v6517
      %v6567 = vpack.c.bf16 %v6528, %v6525
      %v6568 = vpack.c.bf16 %v6536, %v6533
      %v6569 = vpack.c.bf16 %v6544, %v6541
      %v6570 = vpack.c.bf16 %v6552, %v6549
      %s6571 = scalar_lea.vmem %s425, 6
      %v6572 = vld [vmem:[%s6571] sm:$0x3]
      %v6574 = vsel %vm1584, %v6555, 0
      %v6577 = vsel %vm1584, %v6556, 0
      %v6580 = vsel %vm1584, %v6557, 0
      %v6583 = vsel %vm1584, %v6558, 0
      %v6586 = vsel %vm1584, %v6559, 0
      %v6589 = vsel %vm1584, %v6560, 0
      %v6592 = vsel %vm1584, %v6561, 0
      %v6595 = vsel %vm1584, %v6562, 0
      %v6598 = vsel %vm1584, %v6563, 0
      %v6601 = vsel %vm1584, %v6564, 0
      %v6604 = vsel %vm1584, %v6565, 0
      %v6607 = vsel %vm1584, %v6566, 0
      %v6610 = vsel %vm1584, %v6567, 0
      %v6613 = vsel %vm1584, %v6568, 0
      %v6616 = vsel %vm1584, %v6569, 0
      %v6619 = vsel %vm1584, %v6570, 0
      %v6622 = vsel %vm3768, %v6572, 0
      %6624 = vmatprep.subr.bf16.mxu0 0
      %6625 = vmatpush1.bf16.msra.mxu0 0
      %6626 = vmatprep.subr.bf16.mxu0 0
      %6627 = vmatpush1.bf16.msra.mxu0 0
      %6628 = vmatprep.subr.bf16.mxu0 0
      %6629 = vmatpush1.bf16.msra.mxu0 0
      %6630 = vmatprep.subr.bf16.mxu0 0
      %6631 = vmatpush1.bf16.msra.mxu0 0
      %6632 = vmatprep.subr.bf16.mxu0 0
      %6633 = vmatpush1.bf16.msra.mxu0 0
      %6634 = vmatprep.subr.bf16.mxu0 0
      %6635 = vmatpush1.bf16.msra.mxu0 0
      %6636 = vmatprep.subr.bf16.mxu0 0
      %6637 = vmatpush1.bf16.msra.mxu0 0
      %6638 = vmatprep.subr.bf16.mxu0 0
      %6639 = vmatpush1.bf16.msra.mxu0 %v6622
      %6640 = vmatprep.subr.bf16.mxu0 0
      %6641 = vmatpush2.bf16.msra.mxu0 0
      %6642 = vmatprep.subr.bf16.mxu0 0
      %6643 = vmatpush2.bf16.msra.mxu0 0
      %6644 = vmatprep.subr.bf16.mxu0 0
      %6645 = vmatpush2.bf16.msra.mxu0 0
      %6646 = vmatprep.subr.bf16.mxu0 0
      %6647 = vmatpush2.bf16.msra.mxu0 0
      %6648 = vmatprep.subr.bf16.mxu0 0
      %6649 = vmatpush2.bf16.msra.mxu0 0
      %6650 = vmatprep.subr.bf16.mxu0 0
      %6651 = vmatpush2.bf16.msra.mxu0 0
      %6652 = vmatprep.subr.bf16.mxu0 0
      %6653 = vmatpush2.bf16.msra.mxu0 0
      %6654 = vmatprep.subr.bf16.mxu0 0
      %6655 = vmatpush2.bf16.msra.mxu0 0
      %6656 = vmatprep.mubr.bf16.mxu0 0
      %6657 = vmatmul.mubr.bf16.gmra.mxu0 %v6574
      %v6658 = vpop.f32.mrf.mxu0
      %v6659 = vadd.f32 0.0, %v6658
      %v6660 = vpop.f32.mrf.mxu0
      %v6661 = vpop.f32.mrf.mxu0
      %v6662 = vadd.f32 0.0, %v6661
      %v6663 = vpop.f32.mrf.mxu0
      %6664 = vmatprep.mubr.bf16.mxu0 0
      %6665 = vmatmul.mubr.bf16.gmra.mxu0 %v6577
      %v6666 = vpop.f32.mrf.mxu0
      %v6667 = vadd.f32 0.0, %v6666
      %v6668 = vpop.f32.mrf.mxu0
      %v6669 = vpop.f32.mrf.mxu0
      %v6670 = vadd.f32 0.0, %v6669
      %v6671 = vpop.f32.mrf.mxu0
      %6672 = vmatprep.mubr.bf16.mxu0 0
      %6673 = vmatmul.mubr.bf16.gmra.mxu0 %v6580
      %v6674 = vpop.f32.mrf.mxu0
      %v6675 = vadd.f32 0.0, %v6674
      %v6676 = vpop.f32.mrf.mxu0
      %v6677 = vpop.f32.mrf.mxu0
      %v6678 = vadd.f32 0.0, %v6677
      %v6679 = vpop.f32.mrf.mxu0
      %6680 = vmatprep.mubr.bf16.mxu0 0
      %6681 = vmatmul.mubr.bf16.gmra.mxu0 %v6583
      %v6682 = vpop.f32.mrf.mxu0
      %v6683 = vadd.f32 0.0, %v6682
      %v6684 = vpop.f32.mrf.mxu0
      %v6685 = vpop.f32.mrf.mxu0
      %v6686 = vadd.f32 0.0, %v6685
      %v6687 = vpop.f32.mrf.mxu0
      %6688 = vmatprep.mubr.bf16.mxu0 0
      %6689 = vmatmul.mubr.bf16.gmra.mxu0 %v6586
      %v6690 = vpop.f32.mrf.mxu0
      %v6691 = vadd.f32 0.0, %v6690
      %v6692 = vpop.f32.mrf.mxu0
      %v6693 = vpop.f32.mrf.mxu0
      %v6694 = vadd.f32 0.0, %v6693
      %v6695 = vpop.f32.mrf.mxu0
      %6696 = vmatprep.mubr.bf16.mxu0 0
      %6697 = vmatmul.mubr.bf16.gmra.mxu0 %v6589
      %v6698 = vpop.f32.mrf.mxu0
      %v6699 = vadd.f32 0.0, %v6698
      %v6700 = vpop.f32.mrf.mxu0
      %v6701 = vpop.f32.mrf.mxu0
      %v6702 = vadd.f32 0.0, %v6701
      %v6703 = vpop.f32.mrf.mxu0
      %6704 = vmatprep.mubr.bf16.mxu0 0
      %6705 = vmatmul.mubr.bf16.gmra.mxu0 %v6592
      %v6706 = vpop.f32.mrf.mxu0
      %v6707 = vadd.f32 0.0, %v6706
      %v6708 = vpop.f32.mrf.mxu0
      %v6709 = vpop.f32.mrf.mxu0
      %v6710 = vadd.f32 0.0, %v6709
      %v6711 = vpop.f32.mrf.mxu0
      %6712 = vmatprep.mubr.bf16.mxu0 0
      %6713 = vmatmul.mubr.bf16.gmra.mxu0 %v6595
      %v6714 = vpop.f32.mrf.mxu0
      %v6715 = vadd.f32 0.0, %v6714
      %v6716 = vpop.f32.mrf.mxu0
      %v6717 = vpop.f32.mrf.mxu0
      %v6718 = vadd.f32 0.0, %v6717
      %v6719 = vpop.f32.mrf.mxu0
      %6720 = vmatprep.mubr.bf16.mxu0 0
      %6721 = vmatmul.mubr.bf16.gmra.mxu0 %v6598
      %v6722 = vpop.f32.mrf.mxu0
      %v6723 = vadd.f32 0.0, %v6722
      %v6724 = vpop.f32.mrf.mxu0
      %v6725 = vpop.f32.mrf.mxu0
      %v6726 = vadd.f32 0.0, %v6725
      %v6727 = vpop.f32.mrf.mxu0
      %6728 = vmatprep.mubr.bf16.mxu0 0
      %6729 = vmatmul.mubr.bf16.gmra.mxu0 %v6601
      %v6730 = vpop.f32.mrf.mxu0
      %v6731 = vadd.f32 0.0, %v6730
      %v6732 = vpop.f32.mrf.mxu0
      %v6733 = vpop.f32.mrf.mxu0
      %v6734 = vadd.f32 0.0, %v6733
      %v6735 = vpop.f32.mrf.mxu0
      %6736 = vmatprep.mubr.bf16.mxu0 0
      %6737 = vmatmul.mubr.bf16.gmra.mxu0 %v6604
      %v6738 = vpop.f32.mrf.mxu0
      %v6739 = vadd.f32 0.0, %v6738
      %v6740 = vpop.f32.mrf.mxu0
      %v6741 = vpop.f32.mrf.mxu0
      %v6742 = vadd.f32 0.0, %v6741
      %v6743 = vpop.f32.mrf.mxu0
      %6744 = vmatprep.mubr.bf16.mxu0 0
      %6745 = vmatmul.mubr.bf16.gmra.mxu0 %v6607
      %v6746 = vpop.f32.mrf.mxu0
      %v6747 = vadd.f32 0.0, %v6746
      %v6748 = vpop.f32.mrf.mxu0
      %v6749 = vpop.f32.mrf.mxu0
      %v6750 = vadd.f32 0.0, %v6749
      %v6751 = vpop.f32.mrf.mxu0
      %6752 = vmatprep.mubr.bf16.mxu0 0
      %6753 = vmatmul.mubr.bf16.gmra.mxu0 %v6610
      %v6754 = vpop.f32.mrf.mxu0
      %v6755 = vadd.f32 0.0, %v6754
      %v6756 = vpop.f32.mrf.mxu0
      %v6757 = vpop.f32.mrf.mxu0
      %v6758 = vadd.f32 0.0, %v6757
      %v6759 = vpop.f32.mrf.mxu0
      %6760 = vmatprep.mubr.bf16.mxu0 0
      %6761 = vmatmul.mubr.bf16.gmra.mxu0 %v6613
      %v6762 = vpop.f32.mrf.mxu0
      %v6763 = vadd.f32 0.0, %v6762
      %v6764 = vpop.f32.mrf.mxu0
      %v6765 = vpop.f32.mrf.mxu0
      %v6766 = vadd.f32 0.0, %v6765
      %v6767 = vpop.f32.mrf.mxu0
      %6768 = vmatprep.mubr.bf16.mxu0 0
      %6769 = vmatmul.mubr.bf16.gmra.mxu0 %v6616
      %v6770 = vpop.f32.mrf.mxu0
      %v6771 = vadd.f32 0.0, %v6770
      %v6772 = vpop.f32.mrf.mxu0
      %v6773 = vpop.f32.mrf.mxu0
      %v6774 = vadd.f32 0.0, %v6773
      %v6775 = vpop.f32.mrf.mxu0
      %6776 = vmatprep.mubr.bf16.mxu0 0
      %6777 = vmatmul.mubr.bf16.gmra.mxu0 %v6619
      %v6778 = vpop.f32.mrf.mxu0
      %v6779 = vadd.f32 0.0, %v6778
      %v6780 = vpop.f32.mrf.mxu0
      %v6781 = vpop.f32.mrf.mxu0
      %v6782 = vadd.f32 0.0, %v6781
      %v6783 = vpop.f32.mrf.mxu0
      %6784 = vdwg.mxu0
      %v6785 = vadd.f32 %v5449, %v6659
      %v6786 = vadd.f32 %v5450, %v6662
      %v6787 = vadd.f32 %v5451, %v6667
      %v6788 = vadd.f32 %v5452, %v6670
      %v6789 = vadd.f32 %v5453, %v6675
      %v6790 = vadd.f32 %v5454, %v6678
      %v6791 = vadd.f32 %v5455, %v6683
      %v6792 = vadd.f32 %v5456, %v6686
      %v6793 = vadd.f32 %v5457, %v6691
      %v6794 = vadd.f32 %v5458, %v6694
      %v6795 = vadd.f32 %v5459, %v6699
      %v6796 = vadd.f32 %v5460, %v6702
      %v6797 = vadd.f32 %v5461, %v6707
      %v6798 = vadd.f32 %v5462, %v6710
      %v6799 = vadd.f32 %v5463, %v6715
      %v6800 = vadd.f32 %v5464, %v6718
      %v6801 = vadd.f32 %v5465, %v6723
      %v6802 = vadd.f32 %v5466, %v6726
      %v6803 = vadd.f32 %v5467, %v6731
      %v6804 = vadd.f32 %v5468, %v6734
      %v6805 = vadd.f32 %v5469, %v6739
      %v6806 = vadd.f32 %v5470, %v6742
      %v6807 = vadd.f32 %v5471, %v6747
      %v6808 = vadd.f32 %v5472, %v6750
      %v6809 = vadd.f32 %v5473, %v6755
      %v6810 = vadd.f32 %v5474, %v6758
      %v6811 = vadd.f32 %v5475, %v6763
      %v6812 = vadd.f32 %v5476, %v6766
      %v6813 = vadd.f32 %v5477, %v6771
      %v6814 = vadd.f32 %v5478, %v6774
      %v6815 = vadd.f32 %v5479, %v6779
      %v6816 = vadd.f32 %v5480, %v6782
      %6817 = vrot.lane.b32.xlu0 %v1312, 112
      %v6818 = vpop.permute.xlu0 %6817
      %6819 = vrot.lane.b32.xlu0 %v1313, 112
      %v6820 = vpop.permute.xlu0 %6819
      %6821 = vrot.lane.b32.xlu0 %v1314, 112
      %v6822 = vpop.permute.xlu0 %6821
      %6823 = vrot.lane.b32.xlu0 %v1315, 112
      %v6824 = vpop.permute.xlu0 %6823
      %6825 = vrot.lane.b32.xlu0 %v1316, 112
      %v6826 = vpop.permute.xlu0 %6825
      %6827 = vrot.lane.b32.xlu0 %v1317, 112
      %v6828 = vpop.permute.xlu0 %6827
      %6829 = vrot.lane.b32.xlu0 %v1318, 112
      %v6830 = vpop.permute.xlu0 %6829
      %6831 = vrot.lane.b32.xlu0 %v1319, 112
      %v6832 = vpop.permute.xlu0 %6831
      %6833 = vrot.lane.b32.xlu0 %v1320, 112
      %v6834 = vpop.permute.xlu0 %6833
      %6835 = vrot.lane.b32.xlu0 %v1321, 112
      %v6836 = vpop.permute.xlu0 %6835
      %6837 = vrot.lane.b32.xlu0 %v1322, 112
      %v6838 = vpop.permute.xlu0 %6837
      %6839 = vrot.lane.b32.xlu0 %v1323, 112
      %v6840 = vpop.permute.xlu0 %6839
      %6841 = vrot.lane.b32.xlu0 %v1324, 112
      %v6842 = vpop.permute.xlu0 %6841
      %6843 = vrot.lane.b32.xlu0 %v1325, 112
      %v6844 = vpop.permute.xlu0 %6843
      %6845 = vrot.lane.b32.xlu0 %v1326, 112
      %v6846 = vpop.permute.xlu0 %6845
      %6847 = vrot.lane.b32.xlu0 %v1327, 112
      %v6848 = vpop.permute.xlu0 %6847
      %6849 = vrot.lane.b32.xlu0 %v1520, 80
      %v6850 = vpop.permute.xlu0 %6849
      %6851 = vrot.lane.b32.xlu0 %v1521, 80
      %v6852 = vpop.permute.xlu0 %6851
      %6853 = vrot.lane.b32.xlu0 %v1522, 80
      %v6854 = vpop.permute.xlu0 %6853
      %6855 = vrot.lane.b32.xlu0 %v1523, 80
      %v6856 = vpop.permute.xlu0 %6855
      %6857 = vrot.lane.b32.xlu0 %v1524, 80
      %v6858 = vpop.permute.xlu0 %6857
      %6859 = vrot.lane.b32.xlu0 %v1525, 80
      %v6860 = vpop.permute.xlu0 %6859
      %6861 = vrot.lane.b32.xlu0 %v1526, 80
      %v6862 = vpop.permute.xlu0 %6861
      %6863 = vrot.lane.b32.xlu0 %v1527, 80
      %v6864 = vpop.permute.xlu0 %6863
      %6865 = vrot.lane.b32.xlu0 %v1528, 80
      %v6866 = vpop.permute.xlu0 %6865
      %6867 = vrot.lane.b32.xlu0 %v1529, 80
      %v6868 = vpop.permute.xlu0 %6867
      %6869 = vrot.lane.b32.xlu0 %v1530, 80
      %v6870 = vpop.permute.xlu0 %6869
      %6871 = vrot.lane.b32.xlu0 %v1531, 80
      %v6872 = vpop.permute.xlu0 %6871
      %6873 = vrot.lane.b32.xlu0 %v1532, 80
      %v6874 = vpop.permute.xlu0 %6873
      %6875 = vrot.lane.b32.xlu0 %v1533, 80
      %v6876 = vpop.permute.xlu0 %6875
      %6877 = vrot.lane.b32.xlu0 %v1534, 80
      %v6878 = vpop.permute.xlu0 %6877
      %6879 = vrot.lane.b32.xlu0 %v1535, 80
      %v6880 = vpop.permute.xlu0 %6879
      %v6882 = vsel %vm1584, %v6818, 0
      %v6885 = vsel %vm1584, %v6820, 0
      %v6888 = vsel %vm1584, %v6822, 0
      %v6891 = vsel %vm1584, %v6824, 0
      %v6894 = vsel %vm1584, %v6826, 0
      %v6897 = vsel %vm1584, %v6828, 0
      %v6900 = vsel %vm1584, %v6830, 0
      %v6903 = vsel %vm1584, %v6832, 0
      %v6906 = vsel %vm1584, %v6834, 0
      %v6909 = vsel %vm1584, %v6836, 0
      %v6912 = vsel %vm1584, %v6838, 0
      %v6915 = vsel %vm1584, %v6840, 0
      %v6918 = vsel %vm1584, %v6842, 0
      %v6921 = vsel %vm1584, %v6844, 0
      %v6924 = vsel %vm1584, %v6846, 0
      %v6927 = vsel %vm1584, %v6848, 0
      %v6930 = vsel %vm1584, %v6850, 0
      %v6933 = vsel %vm1584, %v6852, 0
      %v6936 = vsel %vm1584, %v6854, 0
      %v6939 = vsel %vm1584, %v6856, 0
      %v6942 = vsel %vm1584, %v6858, 0
      %v6945 = vsel %vm1584, %v6860, 0
      %v6948 = vsel %vm1584, %v6862, 0
      %v6951 = vsel %vm1584, %v6864, 0
      %v6954 = vsel %vm1584, %v6866, 0
      %v6957 = vsel %vm1584, %v6868, 0
      %v6960 = vsel %vm1584, %v6870, 0
      %v6963 = vsel %vm1584, %v6872, 0
      %v6966 = vsel %vm1584, %v6874, 0
      %v6969 = vsel %vm1584, %v6876, 0
      %v6972 = vsel %vm1584, %v6878, 0
      %v6975 = vsel %vm1584, %v6880, 0
      %6977 = vmatprep.subr.bf16.mxu0 0
      %6978 = vmatpush1.bf16.xpose.msra.mxu0 %v6951
      %6979 = vmatprep.subr.bf16.mxu0 0
      %6980 = vmatpush1.bf16.xpose.msra.mxu0 %v6948
      %6981 = vmatprep.subr.bf16.mxu0 0
      %6982 = vmatpush1.bf16.xpose.msra.mxu0 %v6945
      %6983 = vmatprep.subr.bf16.mxu0 0
      %6984 = vmatpush1.bf16.xpose.msra.mxu0 %v6942
      %6985 = vmatprep.subr.bf16.mxu0 0
      %6986 = vmatpush1.bf16.xpose.msra.mxu0 %v6939
      %6987 = vmatprep.subr.bf16.mxu0 0
      %6988 = vmatpush1.bf16.xpose.msra.mxu0 %v6936
      %6989 = vmatprep.subr.bf16.mxu0 0
      %6990 = vmatpush1.bf16.xpose.msra.mxu0 %v6933
      %6991 = vmatprep.subr.bf16.mxu0 0
      %6992 = vmatpush1.bf16.xpose.msra.mxu0 %v6930
      %6993 = vmatprep.subr.bf16.mxu0 0
      %6994 = vmatpush2.bf16.xpose.msra.mxu0 %v6975
      %6995 = vmatprep.subr.bf16.mxu0 0
      %6996 = vmatpush2.bf16.xpose.msra.mxu0 %v6972
      %6997 = vmatprep.subr.bf16.mxu0 0
      %6998 = vmatpush2.bf16.xpose.msra.mxu0 %v6969
      %6999 = vmatprep.subr.bf16.mxu0 0
      %7000 = vmatpush2.bf16.xpose.msra.mxu0 %v6966
      %7001 = vmatprep.subr.bf16.mxu0 0
      %7002 = vmatpush2.bf16.xpose.msra.mxu0 %v6963
      %7003 = vmatprep.subr.bf16.mxu0 0
      %7004 = vmatpush2.bf16.xpose.msra.mxu0 %v6960
      %7005 = vmatprep.subr.bf16.mxu0 0
      %7006 = vmatpush2.bf16.xpose.msra.mxu0 %v6957
      %7007 = vmatprep.subr.bf16.mxu0 0
      %7008 = vmatpush2.bf16.xpose.msra.mxu0 %v6954
      %7009 = vmatprep.mubr.bf16.mxu0 0
      %7010 = vmatmul.mubr.bf16.gmra.mxu0 %v6882
      %v7011 = vpop.f32.mrf.mxu0
      %v7012 = vadd.f32 0.0, %v7011
      %v7013 = vpop.f32.mrf.mxu0
      %v7014 = vadd.f32 0.0, %v7013
      %v7015 = vpop.f32.mrf.mxu0
      %v7016 = vadd.f32 0.0, %v7015
      %v7017 = vpop.f32.mrf.mxu0
      %v7018 = vadd.f32 0.0, %v7017
      %7019 = vmatprep.mubr.bf16.mxu0 0
      %7020 = vmatmul.mubr.bf16.gmra.mxu0 %v6885
      %v7021 = vpop.f32.mrf.mxu0
      %v7022 = vadd.f32 0.0, %v7021
      %v7023 = vpop.f32.mrf.mxu0
      %v7024 = vadd.f32 0.0, %v7023
      %v7025 = vpop.f32.mrf.mxu0
      %v7026 = vadd.f32 0.0, %v7025
      %v7027 = vpop.f32.mrf.mxu0
      %v7028 = vadd.f32 0.0, %v7027
      %7029 = vmatprep.mubr.bf16.mxu0 0
      %7030 = vmatmul.mubr.bf16.gmra.mxu0 %v6888
      %v7031 = vpop.f32.mrf.mxu0
      %v7032 = vadd.f32 0.0, %v7031
      %v7033 = vpop.f32.mrf.mxu0
      %v7034 = vadd.f32 0.0, %v7033
      %v7035 = vpop.f32.mrf.mxu0
      %v7036 = vadd.f32 0.0, %v7035
      %v7037 = vpop.f32.mrf.mxu0
      %v7038 = vadd.f32 0.0, %v7037
      %7039 = vmatprep.mubr.bf16.mxu0 0
      %7040 = vmatmul.mubr.bf16.gmra.mxu0 %v6891
      %v7041 = vpop.f32.mrf.mxu0
      %v7042 = vadd.f32 0.0, %v7041
      %v7043 = vpop.f32.mrf.mxu0
      %v7044 = vadd.f32 0.0, %v7043
      %v7045 = vpop.f32.mrf.mxu0
      %v7046 = vadd.f32 0.0, %v7045
      %v7047 = vpop.f32.mrf.mxu0
      %v7048 = vadd.f32 0.0, %v7047
      %7049 = vmatprep.mubr.bf16.mxu0 0
      %7050 = vmatmul.mubr.bf16.gmra.mxu0 %v6894
      %v7051 = vpop.f32.mrf.mxu0
      %v7052 = vadd.f32 0.0, %v7051
      %v7053 = vpop.f32.mrf.mxu0
      %v7054 = vadd.f32 0.0, %v7053
      %v7055 = vpop.f32.mrf.mxu0
      %v7056 = vadd.f32 0.0, %v7055
      %v7057 = vpop.f32.mrf.mxu0
      %v7058 = vadd.f32 0.0, %v7057
      %7059 = vmatprep.mubr.bf16.mxu0 0
      %7060 = vmatmul.mubr.bf16.gmra.mxu0 %v6897
      %v7061 = vpop.f32.mrf.mxu0
      %v7062 = vadd.f32 0.0, %v7061
      %v7063 = vpop.f32.mrf.mxu0
      %v7064 = vadd.f32 0.0, %v7063
      %v7065 = vpop.f32.mrf.mxu0
      %v7066 = vadd.f32 0.0, %v7065
      %v7067 = vpop.f32.mrf.mxu0
      %v7068 = vadd.f32 0.0, %v7067
      %7069 = vmatprep.mubr.bf16.mxu0 0
      %7070 = vmatmul.mubr.bf16.gmra.mxu0 %v6900
      %v7071 = vpop.f32.mrf.mxu0
      %v7072 = vadd.f32 0.0, %v7071
      %v7073 = vpop.f32.mrf.mxu0
      %v7074 = vadd.f32 0.0, %v7073
      %v7075 = vpop.f32.mrf.mxu0
      %v7076 = vadd.f32 0.0, %v7075
      %v7077 = vpop.f32.mrf.mxu0
      %v7078 = vadd.f32 0.0, %v7077
      %7079 = vmatprep.mubr.bf16.mxu0 0
      %7080 = vmatmul.mubr.bf16.gmra.mxu0 %v6903
      %v7081 = vpop.f32.mrf.mxu0
      %v7082 = vadd.f32 0.0, %v7081
      %v7083 = vpop.f32.mrf.mxu0
      %v7084 = vadd.f32 0.0, %v7083
      %v7085 = vpop.f32.mrf.mxu0
      %v7086 = vadd.f32 0.0, %v7085
      %v7087 = vpop.f32.mrf.mxu0
      %v7088 = vadd.f32 0.0, %v7087
      %7089 = vmatprep.mubr.bf16.mxu0 0
      %7090 = vmatmul.mubr.bf16.gmra.mxu0 %v6906
      %v7091 = vpop.f32.mrf.mxu0
      %v7092 = vadd.f32 0.0, %v7091
      %v7093 = vpop.f32.mrf.mxu0
      %v7094 = vadd.f32 0.0, %v7093
      %v7095 = vpop.f32.mrf.mxu0
      %v7096 = vadd.f32 0.0, %v7095
      %v7097 = vpop.f32.mrf.mxu0
      %v7098 = vadd.f32 0.0, %v7097
      %7099 = vmatprep.mubr.bf16.mxu0 0
      %7100 = vmatmul.mubr.bf16.gmra.mxu0 %v6909
      %v7101 = vpop.f32.mrf.mxu0
      %v7102 = vadd.f32 0.0, %v7101
      %v7103 = vpop.f32.mrf.mxu0
      %v7104 = vadd.f32 0.0, %v7103
      %v7105 = vpop.f32.mrf.mxu0
      %v7106 = vadd.f32 0.0, %v7105
      %v7107 = vpop.f32.mrf.mxu0
      %v7108 = vadd.f32 0.0, %v7107
      %7109 = vmatprep.mubr.bf16.mxu0 0
      %7110 = vmatmul.mubr.bf16.gmra.mxu0 %v6912
      %v7111 = vpop.f32.mrf.mxu0
      %v7112 = vadd.f32 0.0, %v7111
      %v7113 = vpop.f32.mrf.mxu0
      %v7114 = vadd.f32 0.0, %v7113
      %v7115 = vpop.f32.mrf.mxu0
      %v7116 = vadd.f32 0.0, %v7115
      %v7117 = vpop.f32.mrf.mxu0
      %v7118 = vadd.f32 0.0, %v7117
      %7119 = vmatprep.mubr.bf16.mxu0 0
      %7120 = vmatmul.mubr.bf16.gmra.mxu0 %v6915
      %v7121 = vpop.f32.mrf.mxu0
      %v7122 = vadd.f32 0.0, %v7121
      %v7123 = vpop.f32.mrf.mxu0
      %v7124 = vadd.f32 0.0, %v7123
      %v7125 = vpop.f32.mrf.mxu0
      %v7126 = vadd.f32 0.0, %v7125
      %v7127 = vpop.f32.mrf.mxu0
      %v7128 = vadd.f32 0.0, %v7127
      %7129 = vmatprep.mubr.bf16.mxu0 0
      %7130 = vmatmul.mubr.bf16.gmra.mxu0 %v6918
      %v7131 = vpop.f32.mrf.mxu0
      %v7132 = vadd.f32 0.0, %v7131
      %v7133 = vpop.f32.mrf.mxu0
      %v7134 = vadd.f32 0.0, %v7133
      %v7135 = vpop.f32.mrf.mxu0
      %v7136 = vadd.f32 0.0, %v7135
      %v7137 = vpop.f32.mrf.mxu0
      %v7138 = vadd.f32 0.0, %v7137
      %7139 = vmatprep.mubr.bf16.mxu0 0
      %7140 = vmatmul.mubr.bf16.gmra.mxu0 %v6921
      %v7141 = vpop.f32.mrf.mxu0
      %v7142 = vadd.f32 0.0, %v7141
      %v7143 = vpop.f32.mrf.mxu0
      %v7144 = vadd.f32 0.0, %v7143
      %v7145 = vpop.f32.mrf.mxu0
      %v7146 = vadd.f32 0.0, %v7145
      %v7147 = vpop.f32.mrf.mxu0
      %v7148 = vadd.f32 0.0, %v7147
      %7149 = vmatprep.mubr.bf16.mxu0 0
      %7150 = vmatmul.mubr.bf16.gmra.mxu0 %v6924
      %v7151 = vpop.f32.mrf.mxu0
      %v7152 = vadd.f32 0.0, %v7151
      %v7153 = vpop.f32.mrf.mxu0
      %v7154 = vadd.f32 0.0, %v7153
      %v7155 = vpop.f32.mrf.mxu0
      %v7156 = vadd.f32 0.0, %v7155
      %v7157 = vpop.f32.mrf.mxu0
      %v7158 = vadd.f32 0.0, %v7157
      %7159 = vmatprep.mubr.bf16.mxu0 0
      %7160 = vmatmul.mubr.bf16.gmra.mxu0 %v6927
      %v7161 = vpop.f32.mrf.mxu0
      %v7162 = vadd.f32 0.0, %v7161
      %v7163 = vpop.f32.mrf.mxu0
      %v7164 = vadd.f32 0.0, %v7163
      %v7165 = vpop.f32.mrf.mxu0
      %v7166 = vadd.f32 0.0, %v7165
      %v7167 = vpop.f32.mrf.mxu0
      %v7168 = vadd.f32 0.0, %v7167
      %7169 = vdwg.mxu0
      %v7170 = vmax.f32 %v7012, %v7014
      %7171 = vmax.xlane.f32.xlu0 %v7170
      %v7172 = vpop.xlane.xlu0 %7171
      %v7173 = vmax.f32 %v7016, %v7018
      %7174 = vmax.xlane.f32.xlu0 %v7173
      %v7175 = vpop.xlane.xlu0 %7174
      %v7176 = vmax.f32 %v7022, %v7024
      %7177 = vmax.xlane.f32.xlu0 %v7176
      %v7178 = vpop.xlane.xlu0 %7177
      %v7179 = vmax.f32 %v7026, %v7028
      %7180 = vmax.xlane.f32.xlu0 %v7179
      %v7181 = vpop.xlane.xlu0 %7180
      %v7182 = vmax.f32 %v7032, %v7034
      %7183 = vmax.xlane.f32.xlu0 %v7182
      %v7184 = vpop.xlane.xlu0 %7183
      %v7185 = vmax.f32 %v7036, %v7038
      %7186 = vmax.xlane.f32.xlu0 %v7185
      %v7187 = vpop.xlane.xlu0 %7186
      %v7188 = vmax.f32 %v7042, %v7044
      %7189 = vmax.xlane.f32.xlu0 %v7188
      %v7190 = vpop.xlane.xlu0 %7189
      %v7191 = vmax.f32 %v7046, %v7048
      %7192 = vmax.xlane.f32.xlu0 %v7191
      %v7193 = vpop.xlane.xlu0 %7192
      %v7194 = vmax.f32 %v7052, %v7054
      %7195 = vmax.xlane.f32.xlu0 %v7194
      %v7196 = vpop.xlane.xlu0 %7195
      %v7197 = vmax.f32 %v7056, %v7058
      %7198 = vmax.xlane.f32.xlu0 %v7197
      %v7199 = vpop.xlane.xlu0 %7198
      %v7200 = vmax.f32 %v7062, %v7064
      %7201 = vmax.xlane.f32.xlu0 %v7200
      %v7202 = vpop.xlane.xlu0 %7201
      %v7203 = vmax.f32 %v7066, %v7068
      %7204 = vmax.xlane.f32.xlu0 %v7203
      %v7205 = vpop.xlane.xlu0 %7204
      %v7206 = vmax.f32 %v7072, %v7074
      %7207 = vmax.xlane.f32.xlu0 %v7206
      %v7208 = vpop.xlane.xlu0 %7207
      %v7209 = vmax.f32 %v7076, %v7078
      %7210 = vmax.xlane.f32.xlu0 %v7209
      %v7211 = vpop.xlane.xlu0 %7210
      %v7212 = vmax.f32 %v7082, %v7084
      %7213 = vmax.xlane.f32.xlu0 %v7212
      %v7214 = vpop.xlane.xlu0 %7213
      %v7215 = vmax.f32 %v7086, %v7088
      %7216 = vmax.xlane.f32.xlu0 %v7215
      %v7217 = vpop.xlane.xlu0 %7216
      %v7218 = vmax.f32 %v7092, %v7094
      %7219 = vmax.xlane.f32.xlu0 %v7218
      %v7220 = vpop.xlane.xlu0 %7219
      %v7221 = vmax.f32 %v7096, %v7098
      %7222 = vmax.xlane.f32.xlu0 %v7221
      %v7223 = vpop.xlane.xlu0 %7222
      %v7224 = vmax.f32 %v7102, %v7104
      %7225 = vmax.xlane.f32.xlu0 %v7224
      %v7226 = vpop.xlane.xlu0 %7225
      %v7227 = vmax.f32 %v7106, %v7108
      %7228 = vmax.xlane.f32.xlu0 %v7227
      %v7229 = vpop.xlane.xlu0 %7228
      %v7230 = vmax.f32 %v7112, %v7114
      %7231 = vmax.xlane.f32.xlu0 %v7230
      %v7232 = vpop.xlane.xlu0 %7231
      %v7233 = vmax.f32 %v7116, %v7118
      %7234 = vmax.xlane.f32.xlu0 %v7233
      %v7235 = vpop.xlane.xlu0 %7234
      %v7236 = vmax.f32 %v7122, %v7124
      %7237 = vmax.xlane.f32.xlu0 %v7236
      %v7238 = vpop.xlane.xlu0 %7237
      %v7239 = vmax.f32 %v7126, %v7128
      %7240 = vmax.xlane.f32.xlu0 %v7239
      %v7241 = vpop.xlane.xlu0 %7240
      %v7242 = vmax.f32 %v7132, %v7134
      %7243 = vmax.xlane.f32.xlu0 %v7242
      %v7244 = vpop.xlane.xlu0 %7243
      %v7245 = vmax.f32 %v7136, %v7138
      %7246 = vmax.xlane.f32.xlu0 %v7245
      %v7247 = vpop.xlane.xlu0 %7246
      %v7248 = vmax.f32 %v7142, %v7144
      %7249 = vmax.xlane.f32.xlu0 %v7248
      %v7250 = vpop.xlane.xlu0 %7249
      %v7251 = vmax.f32 %v7146, %v7148
      %7252 = vmax.xlane.f32.xlu0 %v7251
      %v7253 = vpop.xlane.xlu0 %7252
      %v7254 = vmax.f32 %v7152, %v7154
      %7255 = vmax.xlane.f32.xlu0 %v7254
      %v7256 = vpop.xlane.xlu0 %7255
      %v7257 = vmax.f32 %v7156, %v7158
      %7258 = vmax.xlane.f32.xlu0 %v7257
      %v7259 = vpop.xlane.xlu0 %7258
      %v7260 = vmax.f32 %v7162, %v7164
      %7261 = vmax.xlane.f32.xlu0 %v7260
      %v7262 = vpop.xlane.xlu0 %7261
      %v7263 = vmax.f32 %v7166, %v7168
      %7264 = vmax.xlane.f32.xlu0 %v7263
      %v7265 = vpop.xlane.xlu0 %7264
      %v7266 = vsub.f32 %v7012, %v7172
      %v7267 = vsub.f32 %v7014, %v7172
      %v7268 = vsub.f32 %v7016, %v7175
      %v7269 = vsub.f32 %v7018, %v7175
      %v7270 = vsub.f32 %v7022, %v7178
      %v7271 = vsub.f32 %v7024, %v7178
      %v7272 = vsub.f32 %v7026, %v7181
      %v7273 = vsub.f32 %v7028, %v7181
      %v7274 = vsub.f32 %v7032, %v7184
      %v7275 = vsub.f32 %v7034, %v7184
      %v7276 = vsub.f32 %v7036, %v7187
      %v7277 = vsub.f32 %v7038, %v7187
      %v7278 = vsub.f32 %v7042, %v7190
      %v7279 = vsub.f32 %v7044, %v7190
      %v7280 = vsub.f32 %v7046, %v7193
      %v7281 = vsub.f32 %v7048, %v7193
      %v7282 = vsub.f32 %v7052, %v7196
      %v7283 = vsub.f32 %v7054, %v7196
      %v7284 = vsub.f32 %v7056, %v7199
      %v7285 = vsub.f32 %v7058, %v7199
      %v7286 = vsub.f32 %v7062, %v7202
      %v7287 = vsub.f32 %v7064, %v7202
      %v7288 = vsub.f32 %v7066, %v7205
      %v7289 = vsub.f32 %v7068, %v7205
      %v7290 = vsub.f32 %v7072, %v7208
      %v7291 = vsub.f32 %v7074, %v7208
      %v7292 = vsub.f32 %v7076, %v7211
      %v7293 = vsub.f32 %v7078, %v7211
      %v7294 = vsub.f32 %v7082, %v7214
      %v7295 = vsub.f32 %v7084, %v7214
      %v7296 = vsub.f32 %v7086, %v7217
      %v7297 = vsub.f32 %v7088, %v7217
      %v7298 = vsub.f32 %v7092, %v7220
      %v7299 = vsub.f32 %v7094, %v7220
      %v7300 = vsub.f32 %v7096, %v7223
      %v7301 = vsub.f32 %v7098, %v7223
      %v7302 = vsub.f32 %v7102, %v7226
      %v7303 = vsub.f32 %v7104, %v7226
      %v7304 = vsub.f32 %v7106, %v7229
      %v7305 = vsub.f32 %v7108, %v7229
      %v7306 = vsub.f32 %v7112, %v7232
      %v7307 = vsub.f32 %v7114, %v7232
      %v7308 = vsub.f32 %v7116, %v7235
      %v7309 = vsub.f32 %v7118, %v7235
      %v7310 = vsub.f32 %v7122, %v7238
      %v7311 = vsub.f32 %v7124, %v7238
      %v7312 = vsub.f32 %v7126, %v7241
      %v7313 = vsub.f32 %v7128, %v7241
      %v7314 = vsub.f32 %v7132, %v7244
      %v7315 = vsub.f32 %v7134, %v7244
      %v7316 = vsub.f32 %v7136, %v7247
      %v7317 = vsub.f32 %v7138, %v7247
      %v7318 = vsub.f32 %v7142, %v7250
      %v7319 = vsub.f32 %v7144, %v7250
      %v7320 = vsub.f32 %v7146, %v7253
      %v7321 = vsub.f32 %v7148, %v7253
      %v7322 = vsub.f32 %v7152, %v7256
      %v7323 = vsub.f32 %v7154, %v7256
      %v7324 = vsub.f32 %v7156, %v7259
      %v7325 = vsub.f32 %v7158, %v7259
      %v7326 = vsub.f32 %v7162, %v7262
      %v7327 = vsub.f32 %v7164, %v7262
      %v7328 = vsub.f32 %v7166, %v7265
      %v7329 = vsub.f32 %v7168, %v7265
      %v7330 = vmul.f32 %v7266, 1.442695
      %v7331 = vpow.pop %v7330
      %v7332 = vmul.f32 %v7267, 1.442695
      %v7333 = vpow.pop %v7332
      %v7334 = vmul.f32 %v7268, 1.442695
      %v7335 = vpow.pop %v7334
      %v7336 = vmul.f32 %v7269, 1.442695
      %v7337 = vpow.pop %v7336
      %v7338 = vmul.f32 %v7270, 1.442695
      %v7339 = vpow.pop %v7338
      %v7340 = vmul.f32 %v7271, 1.442695
      %v7341 = vpow.pop %v7340
      %v7342 = vmul.f32 %v7272, 1.442695
      %v7343 = vpow.pop %v7342
      %v7344 = vmul.f32 %v7273, 1.442695
      %v7345 = vpow.pop %v7344
      %v7346 = vmul.f32 %v7274, 1.442695
      %v7347 = vpow.pop %v7346
      %v7348 = vmul.f32 %v7275, 1.442695
      %v7349 = vpow.pop %v7348
      %v7350 = vmul.f32 %v7276, 1.442695
      %v7351 = vpow.pop %v7350
      %v7352 = vmul.f32 %v7277, 1.442695
      %v7353 = vpow.pop %v7352
      %v7354 = vmul.f32 %v7278, 1.442695
      %v7355 = vpow.pop %v7354
      %v7356 = vmul.f32 %v7279, 1.442695
      %v7357 = vpow.pop %v7356
      %v7358 = vmul.f32 %v7280, 1.442695
      %v7359 = vpow.pop %v7358
      %v7360 = vmul.f32 %v7281, 1.442695
      %v7361 = vpow.pop %v7360
      %v7362 = vmul.f32 %v7282, 1.442695
      %v7363 = vpow.pop %v7362
      %v7364 = vmul.f32 %v7283, 1.442695
      %v7365 = vpow.pop %v7364
      %v7366 = vmul.f32 %v7284, 1.442695
      %v7367 = vpow.pop %v7366
      %v7368 = vmul.f32 %v7285, 1.442695
      %v7369 = vpow.pop %v7368
      %v7370 = vmul.f32 %v7286, 1.442695
      %v7371 = vpow.pop %v7370
      %v7372 = vmul.f32 %v7287, 1.442695
      %v7373 = vpow.pop %v7372
      %v7374 = vmul.f32 %v7288, 1.442695
      %v7375 = vpow.pop %v7374
      %v7376 = vmul.f32 %v7289, 1.442695
      %v7377 = vpow.pop %v7376
      %v7378 = vmul.f32 %v7290, 1.442695
      %v7379 = vpow.pop %v7378
      %v7380 = vmul.f32 %v7291, 1.442695
      %v7381 = vpow.pop %v7380
      %v7382 = vmul.f32 %v7292, 1.442695
      %v7383 = vpow.pop %v7382
      %v7384 = vmul.f32 %v7293, 1.442695
      %v7385 = vpow.pop %v7384
      %v7386 = vmul.f32 %v7294, 1.442695
      %v7387 = vpow.pop %v7386
      %v7388 = vmul.f32 %v7295, 1.442695
      %v7389 = vpow.pop %v7388
      %v7390 = vmul.f32 %v7296, 1.442695
      %v7391 = vpow.pop %v7390
      %v7392 = vmul.f32 %v7297, 1.442695
      %v7393 = vpow.pop %v7392
      %v7394 = vmul.f32 %v7298, 1.442695
      %v7395 = vpow.pop %v7394
      %v7396 = vmul.f32 %v7299, 1.442695
      %v7397 = vpow.pop %v7396
      %v7398 = vmul.f32 %v7300, 1.442695
      %v7399 = vpow.pop %v7398
      %v7400 = vmul.f32 %v7301, 1.442695
      %v7401 = vpow.pop %v7400
      %v7402 = vmul.f32 %v7302, 1.442695
      %v7403 = vpow.pop %v7402
      %v7404 = vmul.f32 %v7303, 1.442695
      %v7405 = vpow.pop %v7404
      %v7406 = vmul.f32 %v7304, 1.442695
      %v7407 = vpow.pop %v7406
      %v7408 = vmul.f32 %v7305, 1.442695
      %v7409 = vpow.pop %v7408
      %v7410 = vmul.f32 %v7306, 1.442695
      %v7411 = vpow.pop %v7410
      %v7412 = vmul.f32 %v7307, 1.442695
      %v7413 = vpow.pop %v7412
      %v7414 = vmul.f32 %v7308, 1.442695
      %v7415 = vpow.pop %v7414
      %v7416 = vmul.f32 %v7309, 1.442695
      %v7417 = vpow.pop %v7416
      %v7418 = vmul.f32 %v7310, 1.442695
      %v7419 = vpow.pop %v7418
      %v7420 = vmul.f32 %v7311, 1.442695
      %v7421 = vpow.pop %v7420
      %v7422 = vmul.f32 %v7312, 1.442695
      %v7423 = vpow.pop %v7422
      %v7424 = vmul.f32 %v7313, 1.442695
      %v7425 = vpow.pop %v7424
      %v7426 = vmul.f32 %v7314, 1.442695
      %v7427 = vpow.pop %v7426
      %v7428 = vmul.f32 %v7315, 1.442695
      %v7429 = vpow.pop %v7428
      %v7430 = vmul.f32 %v7316, 1.442695
      %v7431 = vpow.pop %v7430
      %v7432 = vmul.f32 %v7317, 1.442695
      %v7433 = vpow.pop %v7432
      %v7434 = vmul.f32 %v7318, 1.442695
      %v7435 = vpow.pop %v7434
      %v7436 = vmul.f32 %v7319, 1.442695
      %v7437 = vpow.pop %v7436
      %v7438 = vmul.f32 %v7320, 1.442695
      %v7439 = vpow.pop %v7438
      %v7440 = vmul.f32 %v7321, 1.442695
      %v7441 = vpow.pop %v7440
      %v7442 = vmul.f32 %v7322, 1.442695
      %v7443 = vpow.pop %v7442
      %v7444 = vmul.f32 %v7323, 1.442695
      %v7445 = vpow.pop %v7444
      %v7446 = vmul.f32 %v7324, 1.442695
      %v7447 = vpow.pop %v7446
      %v7448 = vmul.f32 %v7325, 1.442695
      %v7449 = vpow.pop %v7448
      %v7450 = vmul.f32 %v7326, 1.442695
      %v7451 = vpow.pop %v7450
      %v7452 = vmul.f32 %v7327, 1.442695
      %v7453 = vpow.pop %v7452
      %v7454 = vmul.f32 %v7328, 1.442695
      %v7455 = vpow.pop %v7454
      %v7456 = vmul.f32 %v7329, 1.442695
      %v7457 = vpow.pop %v7456
      %v7458 = vadd.f32 %v7331, %v7333
      %7459 = vadd.xlane.f32.xlu0 %v7458
      %v7460 = vpop.xlane.xlu0 %7459
      %v7461 = vadd.f32 %v7335, %v7337
      %7462 = vadd.xlane.f32.xlu0 %v7461
      %v7463 = vpop.xlane.xlu0 %7462
      %v7464 = vadd.f32 %v7339, %v7341
      %7465 = vadd.xlane.f32.xlu0 %v7464
      %v7466 = vpop.xlane.xlu0 %7465
      %v7467 = vadd.f32 %v7343, %v7345
      %7468 = vadd.xlane.f32.xlu0 %v7467
      %v7469 = vpop.xlane.xlu0 %7468
      %v7470 = vadd.f32 %v7347, %v7349
      %7471 = vadd.xlane.f32.xlu0 %v7470
      %v7472 = vpop.xlane.xlu0 %7471
      %v7473 = vadd.f32 %v7351, %v7353
      %7474 = vadd.xlane.f32.xlu0 %v7473
      %v7475 = vpop.xlane.xlu0 %7474
      %v7476 = vadd.f32 %v7355, %v7357
      %7477 = vadd.xlane.f32.xlu0 %v7476
      %v7478 = vpop.xlane.xlu0 %7477
      %v7479 = vadd.f32 %v7359, %v7361
      %7480 = vadd.xlane.f32.xlu0 %v7479
      %v7481 = vpop.xlane.xlu0 %7480
      %v7482 = vadd.f32 %v7363, %v7365
      %7483 = vadd.xlane.f32.xlu0 %v7482
      %v7484 = vpop.xlane.xlu0 %7483
      %v7485 = vadd.f32 %v7367, %v7369
      %7486 = vadd.xlane.f32.xlu0 %v7485
      %v7487 = vpop.xlane.xlu0 %7486
      %v7488 = vadd.f32 %v7371, %v7373
      %7489 = vadd.xlane.f32.xlu0 %v7488
      %v7490 = vpop.xlane.xlu0 %7489
      %v7491 = vadd.f32 %v7375, %v7377
      %7492 = vadd.xlane.f32.xlu0 %v7491
      %v7493 = vpop.xlane.xlu0 %7492
      %v7494 = vadd.f32 %v7379, %v7381
      %7495 = vadd.xlane.f32.xlu0 %v7494
      %v7496 = vpop.xlane.xlu0 %7495
      %v7497 = vadd.f32 %v7383, %v7385
      %7498 = vadd.xlane.f32.xlu0 %v7497
      %v7499 = vpop.xlane.xlu0 %7498
      %v7500 = vadd.f32 %v7387, %v7389
      %7501 = vadd.xlane.f32.xlu0 %v7500
      %v7502 = vpop.xlane.xlu0 %7501
      %v7503 = vadd.f32 %v7391, %v7393
      %7504 = vadd.xlane.f32.xlu0 %v7503
      %v7505 = vpop.xlane.xlu0 %7504
      %v7506 = vadd.f32 %v7395, %v7397
      %7507 = vadd.xlane.f32.xlu0 %v7506
      %v7508 = vpop.xlane.xlu0 %7507
      %v7509 = vadd.f32 %v7399, %v7401
      %7510 = vadd.xlane.f32.xlu0 %v7509
      %v7511 = vpop.xlane.xlu0 %7510
      %v7512 = vadd.f32 %v7403, %v7405
      %7513 = vadd.xlane.f32.xlu0 %v7512
      %v7514 = vpop.xlane.xlu0 %7513
      %v7515 = vadd.f32 %v7407, %v7409
      %7516 = vadd.xlane.f32.xlu0 %v7515
      %v7517 = vpop.xlane.xlu0 %7516
      %v7518 = vadd.f32 %v7411, %v7413
      %7519 = vadd.xlane.f32.xlu0 %v7518
      %v7520 = vpop.xlane.xlu0 %7519
      %v7521 = vadd.f32 %v7415, %v7417
      %7522 = vadd.xlane.f32.xlu0 %v7521
      %v7523 = vpop.xlane.xlu0 %7522
      %v7524 = vadd.f32 %v7419, %v7421
      %7525 = vadd.xlane.f32.xlu0 %v7524
      %v7526 = vpop.xlane.xlu0 %7525
      %v7527 = vadd.f32 %v7423, %v7425
      %7528 = vadd.xlane.f32.xlu0 %v7527
      %v7529 = vpop.xlane.xlu0 %7528
      %v7530 = vadd.f32 %v7427, %v7429
      %7531 = vadd.xlane.f32.xlu0 %v7530
      %v7532 = vpop.xlane.xlu0 %7531
      %v7533 = vadd.f32 %v7431, %v7433
      %7534 = vadd.xlane.f32.xlu0 %v7533
      %v7535 = vpop.xlane.xlu0 %7534
      %v7536 = vadd.f32 %v7435, %v7437
      %7537 = vadd.xlane.f32.xlu0 %v7536
      %v7538 = vpop.xlane.xlu0 %7537
      %v7539 = vadd.f32 %v7439, %v7441
      %7540 = vadd.xlane.f32.xlu0 %v7539
      %v7541 = vpop.xlane.xlu0 %7540
      %v7542 = vadd.f32 %v7443, %v7445
      %7543 = vadd.xlane.f32.xlu0 %v7542
      %v7544 = vpop.xlane.xlu0 %7543
      %v7545 = vadd.f32 %v7447, %v7449
      %7546 = vadd.xlane.f32.xlu0 %v7545
      %v7547 = vpop.xlane.xlu0 %7546
      %v7548 = vadd.f32 %v7451, %v7453
      %7549 = vadd.xlane.f32.xlu0 %v7548
      %v7550 = vpop.xlane.xlu0 %7549
      %v7551 = vadd.f32 %v7455, %v7457
      %7552 = vadd.xlane.f32.xlu0 %v7551
      %v7553 = vpop.xlane.xlu0 %7552
      %v7554 = vrcp.pop %v7460
      %v7555 = vrcp.pop %v7463
      %v7556 = vrcp.pop %v7466
      %v7557 = vrcp.pop %v7469
      %v7558 = vrcp.pop %v7472
      %v7559 = vrcp.pop %v7475
      %v7560 = vrcp.pop %v7478
      %v7561 = vrcp.pop %v7481
      %v7562 = vrcp.pop %v7484
      %v7563 = vrcp.pop %v7487
      %v7564 = vrcp.pop %v7490
      %v7565 = vrcp.pop %v7493
      %v7566 = vrcp.pop %v7496
      %v7567 = vrcp.pop %v7499
      %v7568 = vrcp.pop %v7502
      %v7569 = vrcp.pop %v7505
      %v7570 = vrcp.pop %v7508
      %v7571 = vrcp.pop %v7511
      %v7572 = vrcp.pop %v7514
      %v7573 = vrcp.pop %v7517
      %v7574 = vrcp.pop %v7520
      %v7575 = vrcp.pop %v7523
      %v7576 = vrcp.pop %v7526
      %v7577 = vrcp.pop %v7529
      %v7578 = vrcp.pop %v7532
      %v7579 = vrcp.pop %v7535
      %v7580 = vrcp.pop %v7538
      %v7581 = vrcp.pop %v7541
      %v7582 = vrcp.pop %v7544
      %v7583 = vrcp.pop %v7547
      %v7584 = vrcp.pop %v7550
      %v7585 = vrcp.pop %v7553
      %v7586 = vmul.f32 %v7331, %v7554
      %v7587 = vmul.f32 %v7333, %v7554
      %v7588 = vmul.f32 %v7335, %v7555
      %v7589 = vmul.f32 %v7337, %v7555
      %v7590 = vmul.f32 %v7339, %v7556
      %v7591 = vmul.f32 %v7341, %v7556
      %v7592 = vmul.f32 %v7343, %v7557
      %v7593 = vmul.f32 %v7345, %v7557
      %v7594 = vmul.f32 %v7347, %v7558
      %v7595 = vmul.f32 %v7349, %v7558
      %v7596 = vmul.f32 %v7351, %v7559
      %v7597 = vmul.f32 %v7353, %v7559
      %v7598 = vmul.f32 %v7355, %v7560
      %v7599 = vmul.f32 %v7357, %v7560
      %v7600 = vmul.f32 %v7359, %v7561
      %v7601 = vmul.f32 %v7361, %v7561
      %v7602 = vmul.f32 %v7363, %v7562
      %v7603 = vmul.f32 %v7365, %v7562
      %v7604 = vmul.f32 %v7367, %v7563
      %v7605 = vmul.f32 %v7369, %v7563
      %v7606 = vmul.f32 %v7371, %v7564
      %v7607 = vmul.f32 %v7373, %v7564
      %v7608 = vmul.f32 %v7375, %v7565
      %v7609 = vmul.f32 %v7377, %v7565
      %v7610 = vmul.f32 %v7379, %v7566
      %v7611 = vmul.f32 %v7381, %v7566
      %v7612 = vmul.f32 %v7383, %v7567
      %v7613 = vmul.f32 %v7385, %v7567
      %v7614 = vmul.f32 %v7387, %v7568
      %v7615 = vmul.f32 %v7389, %v7568
      %v7616 = vmul.f32 %v7391, %v7569
      %v7617 = vmul.f32 %v7393, %v7569
      %v7618 = vmul.f32 %v7395, %v7570
      %v7619 = vmul.f32 %v7397, %v7570
      %v7620 = vmul.f32 %v7399, %v7571
      %v7621 = vmul.f32 %v7401, %v7571
      %v7622 = vmul.f32 %v7403, %v7572
      %v7623 = vmul.f32 %v7405, %v7572
      %v7624 = vmul.f32 %v7407, %v7573
      %v7625 = vmul.f32 %v7409, %v7573
      %v7626 = vmul.f32 %v7411, %v7574
      %v7627 = vmul.f32 %v7413, %v7574
      %v7628 = vmul.f32 %v7415, %v7575
      %v7629 = vmul.f32 %v7417, %v7575
      %v7630 = vmul.f32 %v7419, %v7576
      %v7631 = vmul.f32 %v7421, %v7576
      %v7632 = vmul.f32 %v7423, %v7577
      %v7633 = vmul.f32 %v7425, %v7577
      %v7634 = vmul.f32 %v7427, %v7578
      %v7635 = vmul.f32 %v7429, %v7578
      %v7636 = vmul.f32 %v7431, %v7579
      %v7637 = vmul.f32 %v7433, %v7579
      %v7638 = vmul.f32 %v7435, %v7580
      %v7639 = vmul.f32 %v7437, %v7580
      %v7640 = vmul.f32 %v7439, %v7581
      %v7641 = vmul.f32 %v7441, %v7581
      %v7642 = vmul.f32 %v7443, %v7582
      %v7643 = vmul.f32 %v7445, %v7582
      %v7644 = vmul.f32 %v7447, %v7583
      %v7645 = vmul.f32 %v7449, %v7583
      %v7646 = vmul.f32 %v7451, %v7584
      %v7647 = vmul.f32 %v7453, %v7584
      %v7648 = vmul.f32 %v7455, %v7585
      %v7649 = vmul.f32 %v7457, %v7585
      %v7650 = vpack.c.bf16 %v7588, %v7586
      %v7651 = vpack.c.bf16 %v7589, %v7587
      %v7652 = vpack.c.bf16 %v7592, %v7590
      %v7653 = vpack.c.bf16 %v7593, %v7591
      %v7654 = vpack.c.bf16 %v7596, %v7594
      %v7655 = vpack.c.bf16 %v7597, %v7595
      %v7656 = vpack.c.bf16 %v7600, %v7598
      %v7657 = vpack.c.bf16 %v7601, %v7599
      %v7658 = vpack.c.bf16 %v7604, %v7602
      %v7659 = vpack.c.bf16 %v7605, %v7603
      %v7660 = vpack.c.bf16 %v7608, %v7606
      %v7661 = vpack.c.bf16 %v7609, %v7607
      %v7662 = vpack.c.bf16 %v7612, %v7610
      %v7663 = vpack.c.bf16 %v7613, %v7611
      %v7664 = vpack.c.bf16 %v7616, %v7614
      %v7665 = vpack.c.bf16 %v7617, %v7615
      %v7666 = vpack.c.bf16 %v7620, %v7618
      %v7667 = vpack.c.bf16 %v7621, %v7619
      %v7668 = vpack.c.bf16 %v7624, %v7622
      %v7669 = vpack.c.bf16 %v7625, %v7623
      %v7670 = vpack.c.bf16 %v7628, %v7626
      %v7671 = vpack.c.bf16 %v7629, %v7627
      %v7672 = vpack.c.bf16 %v7632, %v7630
      %v7673 = vpack.c.bf16 %v7633, %v7631
      %v7674 = vpack.c.bf16 %v7636, %v7634
      %v7675 = vpack.c.bf16 %v7637, %v7635
      %v7676 = vpack.c.bf16 %v7640, %v7638
      %v7677 = vpack.c.bf16 %v7641, %v7639
      %v7678 = vpack.c.bf16 %v7644, %v7642
      %v7679 = vpack.c.bf16 %v7645, %v7643
      %v7680 = vpack.c.bf16 %v7648, %v7646
      %v7681 = vpack.c.bf16 %v7649, %v7647
      %7682 = vrot.lane.b32.xlu0 %v1312, 48
      %v7683 = vpop.permute.xlu0 %7682
      %7684 = vrot.lane.b32.xlu0 %v1313, 48
      %v7685 = vpop.permute.xlu0 %7684
      %7686 = vrot.lane.b32.xlu0 %v1314, 48
      %v7687 = vpop.permute.xlu0 %7686
      %7688 = vrot.lane.b32.xlu0 %v1315, 48
      %v7689 = vpop.permute.xlu0 %7688
      %7690 = vrot.lane.b32.xlu0 %v1316, 48
      %v7691 = vpop.permute.xlu0 %7690
      %7692 = vrot.lane.b32.xlu0 %v1317, 48
      %v7693 = vpop.permute.xlu0 %7692
      %7694 = vrot.lane.b32.xlu0 %v1318, 48
      %v7695 = vpop.permute.xlu0 %7694
      %7696 = vrot.lane.b32.xlu0 %v1319, 48
      %v7697 = vpop.permute.xlu0 %7696
      %7698 = vrot.lane.b32.xlu0 %v1320, 48
      %v7699 = vpop.permute.xlu0 %7698
      %7700 = vrot.lane.b32.xlu0 %v1321, 48
      %v7701 = vpop.permute.xlu0 %7700
      %7702 = vrot.lane.b32.xlu0 %v1322, 48
      %v7703 = vpop.permute.xlu0 %7702
      %7704 = vrot.lane.b32.xlu0 %v1323, 48
      %v7705 = vpop.permute.xlu0 %7704
      %7706 = vrot.lane.b32.xlu0 %v1324, 48
      %v7707 = vpop.permute.xlu0 %7706
      %7708 = vrot.lane.b32.xlu0 %v1325, 48
      %v7709 = vpop.permute.xlu0 %7708
      %7710 = vrot.lane.b32.xlu0 %v1326, 48
      %v7711 = vpop.permute.xlu0 %7710
      %7712 = vrot.lane.b32.xlu0 %v1327, 48
      %v7713 = vpop.permute.xlu0 %7712
      %7730 = vmatprep.subr.bf16.mxu0 0
      %7731 = vmatpush1.bf16.msra.mxu0 %v7697
      %7732 = vmatprep.subr.bf16.mxu0 0
      %7733 = vmatpush1.bf16.msra.mxu0 %v7695
      %7734 = vmatprep.subr.bf16.mxu0 0
      %7735 = vmatpush1.bf16.msra.mxu0 %v7693
      %7736 = vmatprep.subr.bf16.mxu0 0
      %7737 = vmatpush1.bf16.msra.mxu0 %v7691
      %7738 = vmatprep.subr.bf16.mxu0 0
      %7739 = vmatpush1.bf16.msra.mxu0 %v7689
      %7740 = vmatprep.subr.bf16.mxu0 0
      %7741 = vmatpush1.bf16.msra.mxu0 %v7687
      %7742 = vmatprep.subr.bf16.mxu0 0
      %7743 = vmatpush1.bf16.msra.mxu0 %v7685
      %7744 = vmatprep.subr.bf16.mxu0 0
      %7745 = vmatpush1.bf16.msra.mxu0 %v7683
      %7746 = vmatprep.subr.bf16.mxu0 0
      %7747 = vmatpush2.bf16.msra.mxu0 %v7713
      %7748 = vmatprep.subr.bf16.mxu0 0
      %7749 = vmatpush2.bf16.msra.mxu0 %v7711
      %7750 = vmatprep.subr.bf16.mxu0 0
      %7751 = vmatpush2.bf16.msra.mxu0 %v7709
      %7752 = vmatprep.subr.bf16.mxu0 0
      %7753 = vmatpush2.bf16.msra.mxu0 %v7707
      %7754 = vmatprep.subr.bf16.mxu0 0
      %7755 = vmatpush2.bf16.msra.mxu0 %v7705
      %7756 = vmatprep.subr.bf16.mxu0 0
      %7757 = vmatpush2.bf16.msra.mxu0 %v7703
      %7758 = vmatprep.subr.bf16.mxu0 0
      %7759 = vmatpush2.bf16.msra.mxu0 %v7701
      %7760 = vmatprep.subr.bf16.mxu0 0
      %7761 = vmatpush2.bf16.msra.mxu0 %v7699
      %7762 = vmatprep.mubr.bf16.mxu0 %v7651
      %7763 = vmatmul.mubr.bf16.gmra.mxu0 %v7650
      %v7764 = vpop.f32.mrf.mxu0
      %v7765 = vadd.f32 0.0, %v7764
      %v7766 = vpop.f32.mrf.mxu0
      %v7767 = vpop.f32.mrf.mxu0
      %v7768 = vadd.f32 0.0, %v7767
      %v7769 = vpop.f32.mrf.mxu0
      %7770 = vmatprep.mubr.bf16.mxu0 %v7653
      %7771 = vmatmul.mubr.bf16.gmra.mxu0 %v7652
      %v7772 = vpop.f32.mrf.mxu0
      %v7773 = vadd.f32 0.0, %v7772
      %v7774 = vpop.f32.mrf.mxu0
      %v7775 = vpop.f32.mrf.mxu0
      %v7776 = vadd.f32 0.0, %v7775
      %v7777 = vpop.f32.mrf.mxu0
      %7778 = vmatprep.mubr.bf16.mxu0 %v7655
      %7779 = vmatmul.mubr.bf16.gmra.mxu0 %v7654
      %v7780 = vpop.f32.mrf.mxu0
      %v7781 = vadd.f32 0.0, %v7780
      %v7782 = vpop.f32.mrf.mxu0
      %v7783 = vpop.f32.mrf.mxu0
      %v7784 = vadd.f32 0.0, %v7783
      %v7785 = vpop.f32.mrf.mxu0
      %7786 = vmatprep.mubr.bf16.mxu0 %v7657
      %7787 = vmatmul.mubr.bf16.gmra.mxu0 %v7656
      %v7788 = vpop.f32.mrf.mxu0
      %v7789 = vadd.f32 0.0, %v7788
      %v7790 = vpop.f32.mrf.mxu0
      %v7791 = vpop.f32.mrf.mxu0
      %v7792 = vadd.f32 0.0, %v7791
      %v7793 = vpop.f32.mrf.mxu0
      %7794 = vmatprep.mubr.bf16.mxu0 %v7659
      %7795 = vmatmul.mubr.bf16.gmra.mxu0 %v7658
      %v7796 = vpop.f32.mrf.mxu0
      %v7797 = vadd.f32 0.0, %v7796
      %v7798 = vpop.f32.mrf.mxu0
      %v7799 = vpop.f32.mrf.mxu0
      %v7800 = vadd.f32 0.0, %v7799
      %v7801 = vpop.f32.mrf.mxu0
      %7802 = vmatprep.mubr.bf16.mxu0 %v7661
      %7803 = vmatmul.mubr.bf16.gmra.mxu0 %v7660
      %v7804 = vpop.f32.mrf.mxu0
      %v7805 = vadd.f32 0.0, %v7804
      %v7806 = vpop.f32.mrf.mxu0
      %v7807 = vpop.f32.mrf.mxu0
      %v7808 = vadd.f32 0.0, %v7807
      %v7809 = vpop.f32.mrf.mxu0
      %7810 = vmatprep.mubr.bf16.mxu0 %v7663
      %7811 = vmatmul.mubr.bf16.gmra.mxu0 %v7662
      %v7812 = vpop.f32.mrf.mxu0
      %v7813 = vadd.f32 0.0, %v7812
      %v7814 = vpop.f32.mrf.mxu0
      %v7815 = vpop.f32.mrf.mxu0
      %v7816 = vadd.f32 0.0, %v7815
      %v7817 = vpop.f32.mrf.mxu0
      %7818 = vmatprep.mubr.bf16.mxu0 %v7665
      %7819 = vmatmul.mubr.bf16.gmra.mxu0 %v7664
      %v7820 = vpop.f32.mrf.mxu0
      %v7821 = vadd.f32 0.0, %v7820
      %v7822 = vpop.f32.mrf.mxu0
      %v7823 = vpop.f32.mrf.mxu0
      %v7824 = vadd.f32 0.0, %v7823
      %v7825 = vpop.f32.mrf.mxu0
      %7826 = vmatprep.mubr.bf16.mxu0 %v7667
      %7827 = vmatmul.mubr.bf16.gmra.mxu0 %v7666
      %v7828 = vpop.f32.mrf.mxu0
      %v7829 = vadd.f32 0.0, %v7828
      %v7830 = vpop.f32.mrf.mxu0
      %v7831 = vpop.f32.mrf.mxu0
      %v7832 = vadd.f32 0.0, %v7831
      %v7833 = vpop.f32.mrf.mxu0
      %7834 = vmatprep.mubr.bf16.mxu0 %v7669
      %7835 = vmatmul.mubr.bf16.gmra.mxu0 %v7668
      %v7836 = vpop.f32.mrf.mxu0
      %v7837 = vadd.f32 0.0, %v7836
      %v7838 = vpop.f32.mrf.mxu0
      %v7839 = vpop.f32.mrf.mxu0
      %v7840 = vadd.f32 0.0, %v7839
      %v7841 = vpop.f32.mrf.mxu0
      %7842 = vmatprep.mubr.bf16.mxu0 %v7671
      %7843 = vmatmul.mubr.bf16.gmra.mxu0 %v7670
      %v7844 = vpop.f32.mrf.mxu0
      %v7845 = vadd.f32 0.0, %v7844
      %v7846 = vpop.f32.mrf.mxu0
      %v7847 = vpop.f32.mrf.mxu0
      %v7848 = vadd.f32 0.0, %v7847
      %v7849 = vpop.f32.mrf.mxu0
      %7850 = vmatprep.mubr.bf16.mxu0 %v7673
      %7851 = vmatmul.mubr.bf16.gmra.mxu0 %v7672
      %v7852 = vpop.f32.mrf.mxu0
      %v7853 = vadd.f32 0.0, %v7852
      %v7854 = vpop.f32.mrf.mxu0
      %v7855 = vpop.f32.mrf.mxu0
      %v7856 = vadd.f32 0.0, %v7855
      %v7857 = vpop.f32.mrf.mxu0
      %7858 = vmatprep.mubr.bf16.mxu0 %v7675
      %7859 = vmatmul.mubr.bf16.gmra.mxu0 %v7674
      %v7860 = vpop.f32.mrf.mxu0
      %v7861 = vadd.f32 0.0, %v7860
      %v7862 = vpop.f32.mrf.mxu0
      %v7863 = vpop.f32.mrf.mxu0
      %v7864 = vadd.f32 0.0, %v7863
      %v7865 = vpop.f32.mrf.mxu0
      %7866 = vmatprep.mubr.bf16.mxu0 %v7677
      %7867 = vmatmul.mubr.bf16.gmra.mxu0 %v7676
      %v7868 = vpop.f32.mrf.mxu0
      %v7869 = vadd.f32 0.0, %v7868
      %v7870 = vpop.f32.mrf.mxu0
      %v7871 = vpop.f32.mrf.mxu0
      %v7872 = vadd.f32 0.0, %v7871
      %v7873 = vpop.f32.mrf.mxu0
      %7874 = vmatprep.mubr.bf16.mxu0 %v7679
      %7875 = vmatmul.mubr.bf16.gmra.mxu0 %v7678
      %v7876 = vpop.f32.mrf.mxu0
      %v7877 = vadd.f32 0.0, %v7876
      %v7878 = vpop.f32.mrf.mxu0
      %v7879 = vpop.f32.mrf.mxu0
      %v7880 = vadd.f32 0.0, %v7879
      %v7881 = vpop.f32.mrf.mxu0
      %7882 = vmatprep.mubr.bf16.mxu0 %v7681
      %7883 = vmatmul.mubr.bf16.gmra.mxu0 %v7680
      %v7884 = vpop.f32.mrf.mxu0
      %v7885 = vadd.f32 0.0, %v7884
      %v7886 = vpop.f32.mrf.mxu0
      %v7887 = vpop.f32.mrf.mxu0
      %v7888 = vadd.f32 0.0, %v7887
      %v7889 = vpop.f32.mrf.mxu0
      %7890 = vdwg.mxu0
      %v7891 = vpack.c.bf16 %v7768, %v7765
      %v7892 = vpack.c.bf16 %v7776, %v7773
      %v7893 = vpack.c.bf16 %v7784, %v7781
      %v7894 = vpack.c.bf16 %v7792, %v7789
      %v7895 = vpack.c.bf16 %v7800, %v7797
      %v7896 = vpack.c.bf16 %v7808, %v7805
      %v7897 = vpack.c.bf16 %v7816, %v7813
      %v7898 = vpack.c.bf16 %v7824, %v7821
      %v7899 = vpack.c.bf16 %v7832, %v7829
      %v7900 = vpack.c.bf16 %v7840, %v7837
      %v7901 = vpack.c.bf16 %v7848, %v7845
      %v7902 = vpack.c.bf16 %v7856, %v7853
      %v7903 = vpack.c.bf16 %v7864, %v7861
      %v7904 = vpack.c.bf16 %v7872, %v7869
      %v7905 = vpack.c.bf16 %v7880, %v7877
      %v7906 = vpack.c.bf16 %v7888, %v7885
      %s7907 = scalar_lea.vmem %s425, 8
      %v7908 = vld [vmem:[%s7907] sm:$0x3]
      %v7910 = vsel %vm1584, %v7891, 0
      %v7913 = vsel %vm1584, %v7892, 0
      %v7916 = vsel %vm1584, %v7893, 0
      %v7919 = vsel %vm1584, %v7894, 0
      %v7922 = vsel %vm1584, %v7895, 0
      %v7925 = vsel %vm1584, %v7896, 0
      %v7928 = vsel %vm1584, %v7897, 0
      %v7931 = vsel %vm1584, %v7898, 0
      %v7934 = vsel %vm1584, %v7899, 0
      %v7937 = vsel %vm1584, %v7900, 0
      %v7940 = vsel %vm1584, %v7901, 0
      %v7943 = vsel %vm1584, %v7902, 0
      %v7946 = vsel %vm1584, %v7903, 0
      %v7949 = vsel %vm1584, %v7904, 0
      %v7952 = vsel %vm1584, %v7905, 0
      %v7955 = vsel %vm1584, %v7906, 0
      %v7958 = vsel %vm3768, %v7908, 0
      %7960 = vmatprep.subr.bf16.mxu0 0
      %7961 = vmatpush1.bf16.msra.mxu0 0
      %7962 = vmatprep.subr.bf16.mxu0 0
      %7963 = vmatpush1.bf16.msra.mxu0 0
      %7964 = vmatprep.subr.bf16.mxu0 0
      %7965 = vmatpush1.bf16.msra.mxu0 0
      %7966 = vmatprep.subr.bf16.mxu0 0
      %7967 = vmatpush1.bf16.msra.mxu0 0
      %7968 = vmatprep.subr.bf16.mxu0 0
      %7969 = vmatpush1.bf16.msra.mxu0 0
      %7970 = vmatprep.subr.bf16.mxu0 0
      %7971 = vmatpush1.bf16.msra.mxu0 0
      %7972 = vmatprep.subr.bf16.mxu0 0
      %7973 = vmatpush1.bf16.msra.mxu0 0
      %7974 = vmatprep.subr.bf16.mxu0 0
      %7975 = vmatpush1.bf16.msra.mxu0 %v7958
      %7976 = vmatprep.subr.bf16.mxu0 0
      %7977 = vmatpush2.bf16.msra.mxu0 0
      %7978 = vmatprep.subr.bf16.mxu0 0
      %7979 = vmatpush2.bf16.msra.mxu0 0
      %7980 = vmatprep.subr.bf16.mxu0 0
      %7981 = vmatpush2.bf16.msra.mxu0 0
      %7982 = vmatprep.subr.bf16.mxu0 0
      %7983 = vmatpush2.bf16.msra.mxu0 0
      %7984 = vmatprep.subr.bf16.mxu0 0
      %7985 = vmatpush2.bf16.msra.mxu0 0
      %7986 = vmatprep.subr.bf16.mxu0 0
      %7987 = vmatpush2.bf16.msra.mxu0 0
      %7988 = vmatprep.subr.bf16.mxu0 0
      %7989 = vmatpush2.bf16.msra.mxu0 0
      %7990 = vmatprep.subr.bf16.mxu0 0
      %7991 = vmatpush2.bf16.msra.mxu0 0
      %7992 = vmatprep.mubr.bf16.mxu0 0
      %7993 = vmatmul.mubr.bf16.gmra.mxu0 %v7910
      %v7994 = vpop.f32.mrf.mxu0
      %v7995 = vadd.f32 0.0, %v7994
      %v7996 = vpop.f32.mrf.mxu0
      %v7997 = vpop.f32.mrf.mxu0
      %v7998 = vadd.f32 0.0, %v7997
      %v7999 = vpop.f32.mrf.mxu0
      %8000 = vmatprep.mubr.bf16.mxu0 0
      %8001 = vmatmul.mubr.bf16.gmra.mxu0 %v7913
      %v8002 = vpop.f32.mrf.mxu0
      %v8003 = vadd.f32 0.0, %v8002
      %v8004 = vpop.f32.mrf.mxu0
      %v8005 = vpop.f32.mrf.mxu0
      %v8006 = vadd.f32 0.0, %v8005
      %v8007 = vpop.f32.mrf.mxu0
      %8008 = vmatprep.mubr.bf16.mxu0 0
      %8009 = vmatmul.mubr.bf16.gmra.mxu0 %v7916
      %v8010 = vpop.f32.mrf.mxu0
      %v8011 = vadd.f32 0.0, %v8010
      %v8012 = vpop.f32.mrf.mxu0
      %v8013 = vpop.f32.mrf.mxu0
      %v8014 = vadd.f32 0.0, %v8013
      %v8015 = vpop.f32.mrf.mxu0
      %8016 = vmatprep.mubr.bf16.mxu0 0
      %8017 = vmatmul.mubr.bf16.gmra.mxu0 %v7919
      %v8018 = vpop.f32.mrf.mxu0
      %v8019 = vadd.f32 0.0, %v8018
      %v8020 = vpop.f32.mrf.mxu0
      %v8021 = vpop.f32.mrf.mxu0
      %v8022 = vadd.f32 0.0, %v8021
      %v8023 = vpop.f32.mrf.mxu0
      %8024 = vmatprep.mubr.bf16.mxu0 0
      %8025 = vmatmul.mubr.bf16.gmra.mxu0 %v7922
      %v8026 = vpop.f32.mrf.mxu0
      %v8027 = vadd.f32 0.0, %v8026
      %v8028 = vpop.f32.mrf.mxu0
      %v8029 = vpop.f32.mrf.mxu0
      %v8030 = vadd.f32 0.0, %v8029
      %v8031 = vpop.f32.mrf.mxu0
      %8032 = vmatprep.mubr.bf16.mxu0 0
      %8033 = vmatmul.mubr.bf16.gmra.mxu0 %v7925
      %v8034 = vpop.f32.mrf.mxu0
      %v8035 = vadd.f32 0.0, %v8034
      %v8036 = vpop.f32.mrf.mxu0
      %v8037 = vpop.f32.mrf.mxu0
      %v8038 = vadd.f32 0.0, %v8037
      %v8039 = vpop.f32.mrf.mxu0
      %8040 = vmatprep.mubr.bf16.mxu0 0
      %8041 = vmatmul.mubr.bf16.gmra.mxu0 %v7928
      %v8042 = vpop.f32.mrf.mxu0
      %v8043 = vadd.f32 0.0, %v8042
      %v8044 = vpop.f32.mrf.mxu0
      %v8045 = vpop.f32.mrf.mxu0
      %v8046 = vadd.f32 0.0, %v8045
      %v8047 = vpop.f32.mrf.mxu0
      %8048 = vmatprep.mubr.bf16.mxu0 0
      %8049 = vmatmul.mubr.bf16.gmra.mxu0 %v7931
      %v8050 = vpop.f32.mrf.mxu0
      %v8051 = vadd.f32 0.0, %v8050
      %v8052 = vpop.f32.mrf.mxu0
      %v8053 = vpop.f32.mrf.mxu0
      %v8054 = vadd.f32 0.0, %v8053
      %v8055 = vpop.f32.mrf.mxu0
      %8056 = vmatprep.mubr.bf16.mxu0 0
      %8057 = vmatmul.mubr.bf16.gmra.mxu0 %v7934
      %v8058 = vpop.f32.mrf.mxu0
      %v8059 = vadd.f32 0.0, %v8058
      %v8060 = vpop.f32.mrf.mxu0
      %v8061 = vpop.f32.mrf.mxu0
      %v8062 = vadd.f32 0.0, %v8061
      %v8063 = vpop.f32.mrf.mxu0
      %8064 = vmatprep.mubr.bf16.mxu0 0
      %8065 = vmatmul.mubr.bf16.gmra.mxu0 %v7937
      %v8066 = vpop.f32.mrf.mxu0
      %v8067 = vadd.f32 0.0, %v8066
      %v8068 = vpop.f32.mrf.mxu0
      %v8069 = vpop.f32.mrf.mxu0
      %v8070 = vadd.f32 0.0, %v8069
      %v8071 = vpop.f32.mrf.mxu0
      %8072 = vmatprep.mubr.bf16.mxu0 0
      %8073 = vmatmul.mubr.bf16.gmra.mxu0 %v7940
      %v8074 = vpop.f32.mrf.mxu0
      %v8075 = vadd.f32 0.0, %v8074
      %v8076 = vpop.f32.mrf.mxu0
      %v8077 = vpop.f32.mrf.mxu0
      %v8078 = vadd.f32 0.0, %v8077
      %v8079 = vpop.f32.mrf.mxu0
      %8080 = vmatprep.mubr.bf16.mxu0 0
      %8081 = vmatmul.mubr.bf16.gmra.mxu0 %v7943
      %v8082 = vpop.f32.mrf.mxu0
      %v8083 = vadd.f32 0.0, %v8082
      %v8084 = vpop.f32.mrf.mxu0
      %v8085 = vpop.f32.mrf.mxu0
      %v8086 = vadd.f32 0.0, %v8085
      %v8087 = vpop.f32.mrf.mxu0
      %8088 = vmatprep.mubr.bf16.mxu0 0
      %8089 = vmatmul.mubr.bf16.gmra.mxu0 %v7946
      %v8090 = vpop.f32.mrf.mxu0
      %v8091 = vadd.f32 0.0, %v8090
      %v8092 = vpop.f32.mrf.mxu0
      %v8093 = vpop.f32.mrf.mxu0
      %v8094 = vadd.f32 0.0, %v8093
      %v8095 = vpop.f32.mrf.mxu0
      %8096 = vmatprep.mubr.bf16.mxu0 0
      %8097 = vmatmul.mubr.bf16.gmra.mxu0 %v7949
      %v8098 = vpop.f32.mrf.mxu0
      %v8099 = vadd.f32 0.0, %v8098
      %v8100 = vpop.f32.mrf.mxu0
      %v8101 = vpop.f32.mrf.mxu0
      %v8102 = vadd.f32 0.0, %v8101
      %v8103 = vpop.f32.mrf.mxu0
      %8104 = vmatprep.mubr.bf16.mxu0 0
      %8105 = vmatmul.mubr.bf16.gmra.mxu0 %v7952
      %v8106 = vpop.f32.mrf.mxu0
      %v8107 = vadd.f32 0.0, %v8106
      %v8108 = vpop.f32.mrf.mxu0
      %v8109 = vpop.f32.mrf.mxu0
      %v8110 = vadd.f32 0.0, %v8109
      %v8111 = vpop.f32.mrf.mxu0
      %8112 = vmatprep.mubr.bf16.mxu0 0
      %8113 = vmatmul.mubr.bf16.gmra.mxu0 %v7955
      %v8114 = vpop.f32.mrf.mxu0
      %v8115 = vadd.f32 0.0, %v8114
      %v8116 = vpop.f32.mrf.mxu0
      %v8117 = vpop.f32.mrf.mxu0
      %v8118 = vadd.f32 0.0, %v8117
      %v8119 = vpop.f32.mrf.mxu0
      %8120 = vdwg.mxu0
      %v8121 = vadd.f32 %v6785, %v7995
      %v8122 = vadd.f32 %v6786, %v7998
      %v8123 = vadd.f32 %v6787, %v8003
      %v8124 = vadd.f32 %v6788, %v8006
      %v8125 = vadd.f32 %v6789, %v8011
      %v8126 = vadd.f32 %v6790, %v8014
      %v8127 = vadd.f32 %v6791, %v8019
      %v8128 = vadd.f32 %v6792, %v8022
      %v8129 = vadd.f32 %v6793, %v8027
      %v8130 = vadd.f32 %v6794, %v8030
      %v8131 = vadd.f32 %v6795, %v8035
      %v8132 = vadd.f32 %v6796, %v8038
      %v8133 = vadd.f32 %v6797, %v8043
      %v8134 = vadd.f32 %v6798, %v8046
      %v8135 = vadd.f32 %v6799, %v8051
      %v8136 = vadd.f32 %v6800, %v8054
      %v8137 = vadd.f32 %v6801, %v8059
      %v8138 = vadd.f32 %v6802, %v8062
      %v8139 = vadd.f32 %v6803, %v8067
      %v8140 = vadd.f32 %v6804, %v8070
      %v8141 = vadd.f32 %v6805, %v8075
      %v8142 = vadd.f32 %v6806, %v8078
      %v8143 = vadd.f32 %v6807, %v8083
      %v8144 = vadd.f32 %v6808, %v8086
      %v8145 = vadd.f32 %v6809, %v8091
      %v8146 = vadd.f32 %v6810, %v8094
      %v8147 = vadd.f32 %v6811, %v8099
      %v8148 = vadd.f32 %v6812, %v8102
      %v8149 = vadd.f32 %v6813, %v8107
      %v8150 = vadd.f32 %v6814, %v8110
      %v8151 = vadd.f32 %v6815, %v8115
      %v8152 = vadd.f32 %v6816, %v8118
      %8153 = vrot.lane.b32.xlu0 %v1312, 108
      %v8154 = vpop.permute.xlu0 %8153
      %8155 = vrot.lane.b32.xlu0 %v1313, 108
      %v8156 = vpop.permute.xlu0 %8155
      %8157 = vrot.lane.b32.xlu0 %v1314, 108
      %v8158 = vpop.permute.xlu0 %8157
      %8159 = vrot.lane.b32.xlu0 %v1315, 108
      %v8160 = vpop.permute.xlu0 %8159
      %8161 = vrot.lane.b32.xlu0 %v1316, 108
      %v8162 = vpop.permute.xlu0 %8161
      %8163 = vrot.lane.b32.xlu0 %v1317, 108
      %v8164 = vpop.permute.xlu0 %8163
      %8165 = vrot.lane.b32.xlu0 %v1318, 108
      %v8166 = vpop.permute.xlu0 %8165
      %8167 = vrot.lane.b32.xlu0 %v1319, 108
      %v8168 = vpop.permute.xlu0 %8167
      %8169 = vrot.lane.b32.xlu0 %v1320, 108
      %v8170 = vpop.permute.xlu0 %8169
      %8171 = vrot.lane.b32.xlu0 %v1321, 108
      %v8172 = vpop.permute.xlu0 %8171
      %8173 = vrot.lane.b32.xlu0 %v1322, 108
      %v8174 = vpop.permute.xlu0 %8173
      %8175 = vrot.lane.b32.xlu0 %v1323, 108
      %v8176 = vpop.permute.xlu0 %8175
      %8177 = vrot.lane.b32.xlu0 %v1324, 108
      %v8178 = vpop.permute.xlu0 %8177
      %8179 = vrot.lane.b32.xlu0 %v1325, 108
      %v8180 = vpop.permute.xlu0 %8179
      %8181 = vrot.lane.b32.xlu0 %v1326, 108
      %v8182 = vpop.permute.xlu0 %8181
      %8183 = vrot.lane.b32.xlu0 %v1327, 108
      %v8184 = vpop.permute.xlu0 %8183
      %8185 = vrot.lane.b32.xlu0 %v1520, 76
      %v8186 = vpop.permute.xlu0 %8185
      %8187 = vrot.lane.b32.xlu0 %v1521, 76
      %v8188 = vpop.permute.xlu0 %8187
      %8189 = vrot.lane.b32.xlu0 %v1522, 76
      %v8190 = vpop.permute.xlu0 %8189
      %8191 = vrot.lane.b32.xlu0 %v1523, 76
      %v8192 = vpop.permute.xlu0 %8191
      %8193 = vrot.lane.b32.xlu0 %v1524, 76
      %v8194 = vpop.permute.xlu0 %8193
      %8195 = vrot.lane.b32.xlu0 %v1525, 76
      %v8196 = vpop.permute.xlu0 %8195
      %8197 = vrot.lane.b32.xlu0 %v1526, 76
      %v8198 = vpop.permute.xlu0 %8197
      %8199 = vrot.lane.b32.xlu0 %v1527, 76
      %v8200 = vpop.permute.xlu0 %8199
      %8201 = vrot.lane.b32.xlu0 %v1528, 76
      %v8202 = vpop.permute.xlu0 %8201
      %8203 = vrot.lane.b32.xlu0 %v1529, 76
      %v8204 = vpop.permute.xlu0 %8203
      %8205 = vrot.lane.b32.xlu0 %v1530, 76
      %v8206 = vpop.permute.xlu0 %8205
      %8207 = vrot.lane.b32.xlu0 %v1531, 76
      %v8208 = vpop.permute.xlu0 %8207
      %8209 = vrot.lane.b32.xlu0 %v1532, 76
      %v8210 = vpop.permute.xlu0 %8209
      %8211 = vrot.lane.b32.xlu0 %v1533, 76
      %v8212 = vpop.permute.xlu0 %8211
      %8213 = vrot.lane.b32.xlu0 %v1534, 76
      %v8214 = vpop.permute.xlu0 %8213
      %8215 = vrot.lane.b32.xlu0 %v1535, 76
      %v8216 = vpop.permute.xlu0 %8215
      %v8218 = vsel %vm1584, %v8154, 0
      %v8221 = vsel %vm1584, %v8156, 0
      %v8224 = vsel %vm1584, %v8158, 0
      %v8227 = vsel %vm1584, %v8160, 0
      %v8230 = vsel %vm1584, %v8162, 0
      %v8233 = vsel %vm1584, %v8164, 0
      %v8236 = vsel %vm1584, %v8166, 0
      %v8239 = vsel %vm1584, %v8168, 0
      %v8242 = vsel %vm1584, %v8170, 0
      %v8245 = vsel %vm1584, %v8172, 0
      %v8248 = vsel %vm1584, %v8174, 0
      %v8251 = vsel %vm1584, %v8176, 0
      %v8254 = vsel %vm1584, %v8178, 0
      %v8257 = vsel %vm1584, %v8180, 0
      %v8260 = vsel %vm1584, %v8182, 0
      %v8263 = vsel %vm1584, %v8184, 0
      %v8266 = vsel %vm1584, %v8186, 0
      %v8269 = vsel %vm1584, %v8188, 0
      %v8272 = vsel %vm1584, %v8190, 0
      %v8275 = vsel %vm1584, %v8192, 0
      %v8278 = vsel %vm1584, %v8194, 0
      %v8281 = vsel %vm1584, %v8196, 0
      %v8284 = vsel %vm1584, %v8198, 0
      %v8287 = vsel %vm1584, %v8200, 0
      %v8290 = vsel %vm1584, %v8202, 0
      %v8293 = vsel %vm1584, %v8204, 0
      %v8296 = vsel %vm1584, %v8206, 0
      %v8299 = vsel %vm1584, %v8208, 0
      %v8302 = vsel %vm1584, %v8210, 0
      %v8305 = vsel %vm1584, %v8212, 0
      %v8308 = vsel %vm1584, %v8214, 0
      %v8311 = vsel %vm1584, %v8216, 0
      %8313 = vmatprep.subr.bf16.mxu0 0
      %8314 = vmatpush1.bf16.xpose.msra.mxu0 %v8287
      %8315 = vmatprep.subr.bf16.mxu0 0
      %8316 = vmatpush1.bf16.xpose.msra.mxu0 %v8284
      %8317 = vmatprep.subr.bf16.mxu0 0
      %8318 = vmatpush1.bf16.xpose.msra.mxu0 %v8281
      %8319 = vmatprep.subr.bf16.mxu0 0
      %8320 = vmatpush1.bf16.xpose.msra.mxu0 %v8278
      %8321 = vmatprep.subr.bf16.mxu0 0
      %8322 = vmatpush1.bf16.xpose.msra.mxu0 %v8275
      %8323 = vmatprep.subr.bf16.mxu0 0
      %8324 = vmatpush1.bf16.xpose.msra.mxu0 %v8272
      %8325 = vmatprep.subr.bf16.mxu0 0
      %8326 = vmatpush1.bf16.xpose.msra.mxu0 %v8269
      %8327 = vmatprep.subr.bf16.mxu0 0
      %8328 = vmatpush1.bf16.xpose.msra.mxu0 %v8266
      %8329 = vmatprep.subr.bf16.mxu0 0
      %8330 = vmatpush2.bf16.xpose.msra.mxu0 %v8311
      %8331 = vmatprep.subr.bf16.mxu0 0
      %8332 = vmatpush2.bf16.xpose.msra.mxu0 %v8308
      %8333 = vmatprep.subr.bf16.mxu0 0
      %8334 = vmatpush2.bf16.xpose.msra.mxu0 %v8305
      %8335 = vmatprep.subr.bf16.mxu0 0
      %8336 = vmatpush2.bf16.xpose.msra.mxu0 %v8302
      %8337 = vmatprep.subr.bf16.mxu0 0
      %8338 = vmatpush2.bf16.xpose.msra.mxu0 %v8299
      %8339 = vmatprep.subr.bf16.mxu0 0
      %8340 = vmatpush2.bf16.xpose.msra.mxu0 %v8296
      %8341 = vmatprep.subr.bf16.mxu0 0
      %8342 = vmatpush2.bf16.xpose.msra.mxu0 %v8293
      %8343 = vmatprep.subr.bf16.mxu0 0
      %8344 = vmatpush2.bf16.xpose.msra.mxu0 %v8290
      %8345 = vmatprep.mubr.bf16.mxu0 0
      %8346 = vmatmul.mubr.bf16.gmra.mxu0 %v8218
      %v8347 = vpop.f32.mrf.mxu0
      %v8348 = vadd.f32 0.0, %v8347
      %v8349 = vpop.f32.mrf.mxu0
      %v8350 = vadd.f32 0.0, %v8349
      %v8351 = vpop.f32.mrf.mxu0
      %v8352 = vadd.f32 0.0, %v8351
      %v8353 = vpop.f32.mrf.mxu0
      %v8354 = vadd.f32 0.0, %v8353
      %8355 = vmatprep.mubr.bf16.mxu0 0
      %8356 = vmatmul.mubr.bf16.gmra.mxu0 %v8221
      %v8357 = vpop.f32.mrf.mxu0
      %v8358 = vadd.f32 0.0, %v8357
      %v8359 = vpop.f32.mrf.mxu0
      %v8360 = vadd.f32 0.0, %v8359
      %v8361 = vpop.f32.mrf.mxu0
      %v8362 = vadd.f32 0.0, %v8361
      %v8363 = vpop.f32.mrf.mxu0
      %v8364 = vadd.f32 0.0, %v8363
      %8365 = vmatprep.mubr.bf16.mxu0 0
      %8366 = vmatmul.mubr.bf16.gmra.mxu0 %v8224
      %v8367 = vpop.f32.mrf.mxu0
      %v8368 = vadd.f32 0.0, %v8367
      %v8369 = vpop.f32.mrf.mxu0
      %v8370 = vadd.f32 0.0, %v8369
      %v8371 = vpop.f32.mrf.mxu0
      %v8372 = vadd.f32 0.0, %v8371
      %v8373 = vpop.f32.mrf.mxu0
      %v8374 = vadd.f32 0.0, %v8373
      %8375 = vmatprep.mubr.bf16.mxu0 0
      %8376 = vmatmul.mubr.bf16.gmra.mxu0 %v8227
      %v8377 = vpop.f32.mrf.mxu0
      %v8378 = vadd.f32 0.0, %v8377
      %v8379 = vpop.f32.mrf.mxu0
      %v8380 = vadd.f32 0.0, %v8379
      %v8381 = vpop.f32.mrf.mxu0
      %v8382 = vadd.f32 0.0, %v8381
      %v8383 = vpop.f32.mrf.mxu0
      %v8384 = vadd.f32 0.0, %v8383
      %8385 = vmatprep.mubr.bf16.mxu0 0
      %8386 = vmatmul.mubr.bf16.gmra.mxu0 %v8230
      %v8387 = vpop.f32.mrf.mxu0
      %v8388 = vadd.f32 0.0, %v8387
      %v8389 = vpop.f32.mrf.mxu0
      %v8390 = vadd.f32 0.0, %v8389
      %v8391 = vpop.f32.mrf.mxu0
      %v8392 = vadd.f32 0.0, %v8391
      %v8393 = vpop.f32.mrf.mxu0
      %v8394 = vadd.f32 0.0, %v8393
      %8395 = vmatprep.mubr.bf16.mxu0 0
      %8396 = vmatmul.mubr.bf16.gmra.mxu0 %v8233
      %v8397 = vpop.f32.mrf.mxu0
      %v8398 = vadd.f32 0.0, %v8397
      %v8399 = vpop.f32.mrf.mxu0
      %v8400 = vadd.f32 0.0, %v8399
      %v8401 = vpop.f32.mrf.mxu0
      %v8402 = vadd.f32 0.0, %v8401
      %v8403 = vpop.f32.mrf.mxu0
      %v8404 = vadd.f32 0.0, %v8403
      %8405 = vmatprep.mubr.bf16.mxu0 0
      %8406 = vmatmul.mubr.bf16.gmra.mxu0 %v8236
      %v8407 = vpop.f32.mrf.mxu0
      %v8408 = vadd.f32 0.0, %v8407
      %v8409 = vpop.f32.mrf.mxu0
      %v8410 = vadd.f32 0.0, %v8409
      %v8411 = vpop.f32.mrf.mxu0
      %v8412 = vadd.f32 0.0, %v8411
      %v8413 = vpop.f32.mrf.mxu0
      %v8414 = vadd.f32 0.0, %v8413
      %8415 = vmatprep.mubr.bf16.mxu0 0
      %8416 = vmatmul.mubr.bf16.gmra.mxu0 %v8239
      %v8417 = vpop.f32.mrf.mxu0
      %v8418 = vadd.f32 0.0, %v8417
      %v8419 = vpop.f32.mrf.mxu0
      %v8420 = vadd.f32 0.0, %v8419
      %v8421 = vpop.f32.mrf.mxu0
      %v8422 = vadd.f32 0.0, %v8421
      %v8423 = vpop.f32.mrf.mxu0
      %v8424 = vadd.f32 0.0, %v8423
      %8425 = vmatprep.mubr.bf16.mxu0 0
      %8426 = vmatmul.mubr.bf16.gmra.mxu0 %v8242
      %v8427 = vpop.f32.mrf.mxu0
      %v8428 = vadd.f32 0.0, %v8427
      %v8429 = vpop.f32.mrf.mxu0
      %v8430 = vadd.f32 0.0, %v8429
      %v8431 = vpop.f32.mrf.mxu0
      %v8432 = vadd.f32 0.0, %v8431
      %v8433 = vpop.f32.mrf.mxu0
      %v8434 = vadd.f32 0.0, %v8433
      %8435 = vmatprep.mubr.bf16.mxu0 0
      %8436 = vmatmul.mubr.bf16.gmra.mxu0 %v8245
      %v8437 = vpop.f32.mrf.mxu0
      %v8438 = vadd.f32 0.0, %v8437
      %v8439 = vpop.f32.mrf.mxu0
      %v8440 = vadd.f32 0.0, %v8439
      %v8441 = vpop.f32.mrf.mxu0
      %v8442 = vadd.f32 0.0, %v8441
      %v8443 = vpop.f32.mrf.mxu0
      %v8444 = vadd.f32 0.0, %v8443
      %8445 = vmatprep.mubr.bf16.mxu0 0
      %8446 = vmatmul.mubr.bf16.gmra.mxu0 %v8248
      %v8447 = vpop.f32.mrf.mxu0
      %v8448 = vadd.f32 0.0, %v8447
      %v8449 = vpop.f32.mrf.mxu0
      %v8450 = vadd.f32 0.0, %v8449
      %v8451 = vpop.f32.mrf.mxu0
      %v8452 = vadd.f32 0.0, %v8451
      %v8453 = vpop.f32.mrf.mxu0
      %v8454 = vadd.f32 0.0, %v8453
      %8455 = vmatprep.mubr.bf16.mxu0 0
      %8456 = vmatmul.mubr.bf16.gmra.mxu0 %v8251
      %v8457 = vpop.f32.mrf.mxu0
      %v8458 = vadd.f32 0.0, %v8457
      %v8459 = vpop.f32.mrf.mxu0
      %v8460 = vadd.f32 0.0, %v8459
      %v8461 = vpop.f32.mrf.mxu0
      %v8462 = vadd.f32 0.0, %v8461
      %v8463 = vpop.f32.mrf.mxu0
      %v8464 = vadd.f32 0.0, %v8463
      %8465 = vmatprep.mubr.bf16.mxu0 0
      %8466 = vmatmul.mubr.bf16.gmra.mxu0 %v8254
      %v8467 = vpop.f32.mrf.mxu0
      %v8468 = vadd.f32 0.0, %v8467
      %v8469 = vpop.f32.mrf.mxu0
      %v8470 = vadd.f32 0.0, %v8469
      %v8471 = vpop.f32.mrf.mxu0
      %v8472 = vadd.f32 0.0, %v8471
      %v8473 = vpop.f32.mrf.mxu0
      %v8474 = vadd.f32 0.0, %v8473
      %8475 = vmatprep.mubr.bf16.mxu0 0
      %8476 = vmatmul.mubr.bf16.gmra.mxu0 %v8257
      %v8477 = vpop.f32.mrf.mxu0
      %v8478 = vadd.f32 0.0, %v8477
      %v8479 = vpop.f32.mrf.mxu0
      %v8480 = vadd.f32 0.0, %v8479
      %v8481 = vpop.f32.mrf.mxu0
      %v8482 = vadd.f32 0.0, %v8481
      %v8483 = vpop.f32.mrf.mxu0
      %v8484 = vadd.f32 0.0, %v8483
      %8485 = vmatprep.mubr.bf16.mxu0 0
      %8486 = vmatmul.mubr.bf16.gmra.mxu0 %v8260
      %v8487 = vpop.f32.mrf.mxu0
      %v8488 = vadd.f32 0.0, %v8487
      %v8489 = vpop.f32.mrf.mxu0
      %v8490 = vadd.f32 0.0, %v8489
      %v8491 = vpop.f32.mrf.mxu0
      %v8492 = vadd.f32 0.0, %v8491
      %v8493 = vpop.f32.mrf.mxu0
      %v8494 = vadd.f32 0.0, %v8493
      %8495 = vmatprep.mubr.bf16.mxu0 0
      %8496 = vmatmul.mubr.bf16.gmra.mxu0 %v8263
      %v8497 = vpop.f32.mrf.mxu0
      %v8498 = vadd.f32 0.0, %v8497
      %v8499 = vpop.f32.mrf.mxu0
      %v8500 = vadd.f32 0.0, %v8499
      %v8501 = vpop.f32.mrf.mxu0
      %v8502 = vadd.f32 0.0, %v8501
      %v8503 = vpop.f32.mrf.mxu0
      %v8504 = vadd.f32 0.0, %v8503
      %8505 = vdwg.mxu0
      %v8506 = vmax.f32 %v8348, %v8350
      %8507 = vmax.xlane.f32.xlu0 %v8506
      %v8508 = vpop.xlane.xlu0 %8507
      %v8509 = vmax.f32 %v8352, %v8354
      %8510 = vmax.xlane.f32.xlu0 %v8509
      %v8511 = vpop.xlane.xlu0 %8510
      %v8512 = vmax.f32 %v8358, %v8360
      %8513 = vmax.xlane.f32.xlu0 %v8512
      %v8514 = vpop.xlane.xlu0 %8513
      %v8515 = vmax.f32 %v8362, %v8364
      %8516 = vmax.xlane.f32.xlu0 %v8515
      %v8517 = vpop.xlane.xlu0 %8516
      %v8518 = vmax.f32 %v8368, %v8370
      %8519 = vmax.xlane.f32.xlu0 %v8518
      %v8520 = vpop.xlane.xlu0 %8519
      %v8521 = vmax.f32 %v8372, %v8374
      %8522 = vmax.xlane.f32.xlu0 %v8521
      %v8523 = vpop.xlane.xlu0 %8522
      %v8524 = vmax.f32 %v8378, %v8380
      %8525 = vmax.xlane.f32.xlu0 %v8524
      %v8526 = vpop.xlane.xlu0 %8525
      %v8527 = vmax.f32 %v8382, %v8384
      %8528 = vmax.xlane.f32.xlu0 %v8527
      %v8529 = vpop.xlane.xlu0 %8528
      %v8530 = vmax.f32 %v8388, %v8390
      %8531 = vmax.xlane.f32.xlu0 %v8530
      %v8532 = vpop.xlane.xlu0 %8531
      %v8533 = vmax.f32 %v8392, %v8394
      %8534 = vmax.xlane.f32.xlu0 %v8533
      %v8535 = vpop.xlane.xlu0 %8534
      %v8536 = vmax.f32 %v8398, %v8400
      %8537 = vmax.xlane.f32.xlu0 %v8536
      %v8538 = vpop.xlane.xlu0 %8537
      %v8539 = vmax.f32 %v8402, %v8404
      %8540 = vmax.xlane.f32.xlu0 %v8539
      %v8541 = vpop.xlane.xlu0 %8540
      %v8542 = vmax.f32 %v8408, %v8410
      %8543 = vmax.xlane.f32.xlu0 %v8542
      %v8544 = vpop.xlane.xlu0 %8543
      %v8545 = vmax.f32 %v8412, %v8414
      %8546 = vmax.xlane.f32.xlu0 %v8545
      %v8547 = vpop.xlane.xlu0 %8546
      %v8548 = vmax.f32 %v8418, %v8420
      %8549 = vmax.xlane.f32.xlu0 %v8548
      %v8550 = vpop.xlane.xlu0 %8549
      %v8551 = vmax.f32 %v8422, %v8424
      %8552 = vmax.xlane.f32.xlu0 %v8551
      %v8553 = vpop.xlane.xlu0 %8552
      %v8554 = vmax.f32 %v8428, %v8430
      %8555 = vmax.xlane.f32.xlu0 %v8554
      %v8556 = vpop.xlane.xlu0 %8555
      %v8557 = vmax.f32 %v8432, %v8434
      %8558 = vmax.xlane.f32.xlu0 %v8557
      %v8559 = vpop.xlane.xlu0 %8558
      %v8560 = vmax.f32 %v8438, %v8440
      %8561 = vmax.xlane.f32.xlu0 %v8560
      %v8562 = vpop.xlane.xlu0 %8561
      %v8563 = vmax.f32 %v8442, %v8444
      %8564 = vmax.xlane.f32.xlu0 %v8563
      %v8565 = vpop.xlane.xlu0 %8564
      %v8566 = vmax.f32 %v8448, %v8450
      %8567 = vmax.xlane.f32.xlu0 %v8566
      %v8568 = vpop.xlane.xlu0 %8567
      %v8569 = vmax.f32 %v8452, %v8454
      %8570 = vmax.xlane.f32.xlu0 %v8569
      %v8571 = vpop.xlane.xlu0 %8570
      %v8572 = vmax.f32 %v8458, %v8460
      %8573 = vmax.xlane.f32.xlu0 %v8572
      %v8574 = vpop.xlane.xlu0 %8573
      %v8575 = vmax.f32 %v8462, %v8464
      %8576 = vmax.xlane.f32.xlu0 %v8575
      %v8577 = vpop.xlane.xlu0 %8576
      %v8578 = vmax.f32 %v8468, %v8470
      %8579 = vmax.xlane.f32.xlu0 %v8578
      %v8580 = vpop.xlane.xlu0 %8579
      %v8581 = vmax.f32 %v8472, %v8474
      %8582 = vmax.xlane.f32.xlu0 %v8581
      %v8583 = vpop.xlane.xlu0 %8582
      %v8584 = vmax.f32 %v8478, %v8480
      %8585 = vmax.xlane.f32.xlu0 %v8584
      %v8586 = vpop.xlane.xlu0 %8585
      %v8587 = vmax.f32 %v8482, %v8484
      %8588 = vmax.xlane.f32.xlu0 %v8587
      %v8589 = vpop.xlane.xlu0 %8588
      %v8590 = vmax.f32 %v8488, %v8490
      %8591 = vmax.xlane.f32.xlu0 %v8590
      %v8592 = vpop.xlane.xlu0 %8591
      %v8593 = vmax.f32 %v8492, %v8494
      %8594 = vmax.xlane.f32.xlu0 %v8593
      %v8595 = vpop.xlane.xlu0 %8594
      %v8596 = vmax.f32 %v8498, %v8500
      %8597 = vmax.xlane.f32.xlu0 %v8596
      %v8598 = vpop.xlane.xlu0 %8597
      %v8599 = vmax.f32 %v8502, %v8504
      %8600 = vmax.xlane.f32.xlu0 %v8599
      %v8601 = vpop.xlane.xlu0 %8600
      %v8602 = vsub.f32 %v8348, %v8508
      %v8603 = vsub.f32 %v8350, %v8508
      %v8604 = vsub.f32 %v8352, %v8511
      %v8605 = vsub.f32 %v8354, %v8511
      %v8606 = vsub.f32 %v8358, %v8514
      %v8607 = vsub.f32 %v8360, %v8514
      %v8608 = vsub.f32 %v8362, %v8517
      %v8609 = vsub.f32 %v8364, %v8517
      %v8610 = vsub.f32 %v8368, %v8520
      %v8611 = vsub.f32 %v8370, %v8520
      %v8612 = vsub.f32 %v8372, %v8523
      %v8613 = vsub.f32 %v8374, %v8523
      %v8614 = vsub.f32 %v8378, %v8526
      %v8615 = vsub.f32 %v8380, %v8526
      %v8616 = vsub.f32 %v8382, %v8529
      %v8617 = vsub.f32 %v8384, %v8529
      %v8618 = vsub.f32 %v8388, %v8532
      %v8619 = vsub.f32 %v8390, %v8532
      %v8620 = vsub.f32 %v8392, %v8535
      %v8621 = vsub.f32 %v8394, %v8535
      %v8622 = vsub.f32 %v8398, %v8538
      %v8623 = vsub.f32 %v8400, %v8538
      %v8624 = vsub.f32 %v8402, %v8541
      %v8625 = vsub.f32 %v8404, %v8541
      %v8626 = vsub.f32 %v8408, %v8544
      %v8627 = vsub.f32 %v8410, %v8544
      %v8628 = vsub.f32 %v8412, %v8547
      %v8629 = vsub.f32 %v8414, %v8547
      %v8630 = vsub.f32 %v8418, %v8550
      %v8631 = vsub.f32 %v8420, %v8550
      %v8632 = vsub.f32 %v8422, %v8553
      %v8633 = vsub.f32 %v8424, %v8553
      %v8634 = vsub.f32 %v8428, %v8556
      %v8635 = vsub.f32 %v8430, %v8556
      %v8636 = vsub.f32 %v8432, %v8559
      %v8637 = vsub.f32 %v8434, %v8559
      %v8638 = vsub.f32 %v8438, %v8562
      %v8639 = vsub.f32 %v8440, %v8562
      %v8640 = vsub.f32 %v8442, %v8565
      %v8641 = vsub.f32 %v8444, %v8565
      %v8642 = vsub.f32 %v8448, %v8568
      %v8643 = vsub.f32 %v8450, %v8568
      %v8644 = vsub.f32 %v8452, %v8571
      %v8645 = vsub.f32 %v8454, %v8571
      %v8646 = vsub.f32 %v8458, %v8574
      %v8647 = vsub.f32 %v8460, %v8574
      %v8648 = vsub.f32 %v8462, %v8577
      %v8649 = vsub.f32 %v8464, %v8577
      %v8650 = vsub.f32 %v8468, %v8580
      %v8651 = vsub.f32 %v8470, %v8580
      %v8652 = vsub.f32 %v8472, %v8583
      %v8653 = vsub.f32 %v8474, %v8583
      %v8654 = vsub.f32 %v8478, %v8586
      %v8655 = vsub.f32 %v8480, %v8586
      %v8656 = vsub.f32 %v8482, %v8589
      %v8657 = vsub.f32 %v8484, %v8589
      %v8658 = vsub.f32 %v8488, %v8592
      %v8659 = vsub.f32 %v8490, %v8592
      %v8660 = vsub.f32 %v8492, %v8595
      %v8661 = vsub.f32 %v8494, %v8595
      %v8662 = vsub.f32 %v8498, %v8598
      %v8663 = vsub.f32 %v8500, %v8598
      %v8664 = vsub.f32 %v8502, %v8601
      %v8665 = vsub.f32 %v8504, %v8601
      %v8666 = vmul.f32 %v8602, 1.442695
      %v8667 = vpow.pop %v8666
      %v8668 = vmul.f32 %v8603, 1.442695
      %v8669 = vpow.pop %v8668
      %v8670 = vmul.f32 %v8604, 1.442695
      %v8671 = vpow.pop %v8670
      %v8672 = vmul.f32 %v8605, 1.442695
      %v8673 = vpow.pop %v8672
      %v8674 = vmul.f32 %v8606, 1.442695
      %v8675 = vpow.pop %v8674
      %v8676 = vmul.f32 %v8607, 1.442695
      %v8677 = vpow.pop %v8676
      %v8678 = vmul.f32 %v8608, 1.442695
      %v8679 = vpow.pop %v8678
      %v8680 = vmul.f32 %v8609, 1.442695
      %v8681 = vpow.pop %v8680
      %v8682 = vmul.f32 %v8610, 1.442695
      %v8683 = vpow.pop %v8682
      %v8684 = vmul.f32 %v8611, 1.442695
      %v8685 = vpow.pop %v8684
      %v8686 = vmul.f32 %v8612, 1.442695
      %v8687 = vpow.pop %v8686
      %v8688 = vmul.f32 %v8613, 1.442695
      %v8689 = vpow.pop %v8688
      %v8690 = vmul.f32 %v8614, 1.442695
      %v8691 = vpow.pop %v8690
      %v8692 = vmul.f32 %v8615, 1.442695
      %v8693 = vpow.pop %v8692
      %v8694 = vmul.f32 %v8616, 1.442695
      %v8695 = vpow.pop %v8694
      %v8696 = vmul.f32 %v8617, 1.442695
      %v8697 = vpow.pop %v8696
      %v8698 = vmul.f32 %v8618, 1.442695
      %v8699 = vpow.pop %v8698
      %v8700 = vmul.f32 %v8619, 1.442695
      %v8701 = vpow.pop %v8700
      %v8702 = vmul.f32 %v8620, 1.442695
      %v8703 = vpow.pop %v8702
      %v8704 = vmul.f32 %v8621, 1.442695
      %v8705 = vpow.pop %v8704
      %v8706 = vmul.f32 %v8622, 1.442695
      %v8707 = vpow.pop %v8706
      %v8708 = vmul.f32 %v8623, 1.442695
      %v8709 = vpow.pop %v8708
      %v8710 = vmul.f32 %v8624, 1.442695
      %v8711 = vpow.pop %v8710
      %v8712 = vmul.f32 %v8625, 1.442695
      %v8713 = vpow.pop %v8712
      %v8714 = vmul.f32 %v8626, 1.442695
      %v8715 = vpow.pop %v8714
      %v8716 = vmul.f32 %v8627, 1.442695
      %v8717 = vpow.pop %v8716
      %v8718 = vmul.f32 %v8628, 1.442695
      %v8719 = vpow.pop %v8718
      %v8720 = vmul.f32 %v8629, 1.442695
      %v8721 = vpow.pop %v8720
      %v8722 = vmul.f32 %v8630, 1.442695
      %v8723 = vpow.pop %v8722
      %v8724 = vmul.f32 %v8631, 1.442695
      %v8725 = vpow.pop %v8724
      %v8726 = vmul.f32 %v8632, 1.442695
      %v8727 = vpow.pop %v8726
      %v8728 = vmul.f32 %v8633, 1.442695
      %v8729 = vpow.pop %v8728
      %v8730 = vmul.f32 %v8634, 1.442695
      %v8731 = vpow.pop %v8730
      %v8732 = vmul.f32 %v8635, 1.442695
      %v8733 = vpow.pop %v8732
      %v8734 = vmul.f32 %v8636, 1.442695
      %v8735 = vpow.pop %v8734
      %v8736 = vmul.f32 %v8637, 1.442695
      %v8737 = vpow.pop %v8736
      %v8738 = vmul.f32 %v8638, 1.442695
      %v8739 = vpow.pop %v8738
      %v8740 = vmul.f32 %v8639, 1.442695
      %v8741 = vpow.pop %v8740
      %v8742 = vmul.f32 %v8640, 1.442695
      %v8743 = vpow.pop %v8742
      %v8744 = vmul.f32 %v8641, 1.442695
      %v8745 = vpow.pop %v8744
      %v8746 = vmul.f32 %v8642, 1.442695
      %v8747 = vpow.pop %v8746
      %v8748 = vmul.f32 %v8643, 1.442695
      %v8749 = vpow.pop %v8748
      %v8750 = vmul.f32 %v8644, 1.442695
      %v8751 = vpow.pop %v8750
      %v8752 = vmul.f32 %v8645, 1.442695
      %v8753 = vpow.pop %v8752
      %v8754 = vmul.f32 %v8646, 1.442695
      %v8755 = vpow.pop %v8754
      %v8756 = vmul.f32 %v8647, 1.442695
      %v8757 = vpow.pop %v8756
      %v8758 = vmul.f32 %v8648, 1.442695
      %v8759 = vpow.pop %v8758
      %v8760 = vmul.f32 %v8649, 1.442695
      %v8761 = vpow.pop %v8760
      %v8762 = vmul.f32 %v8650, 1.442695
      %v8763 = vpow.pop %v8762
      %v8764 = vmul.f32 %v8651, 1.442695
      %v8765 = vpow.pop %v8764
      %v8766 = vmul.f32 %v8652, 1.442695
      %v8767 = vpow.pop %v8766
      %v8768 = vmul.f32 %v8653, 1.442695
      %v8769 = vpow.pop %v8768
      %v8770 = vmul.f32 %v8654, 1.442695
      %v8771 = vpow.pop %v8770
      %v8772 = vmul.f32 %v8655, 1.442695
      %v8773 = vpow.pop %v8772
      %v8774 = vmul.f32 %v8656, 1.442695
      %v8775 = vpow.pop %v8774
      %v8776 = vmul.f32 %v8657, 1.442695
      %v8777 = vpow.pop %v8776
      %v8778 = vmul.f32 %v8658, 1.442695
      %v8779 = vpow.pop %v8778
      %v8780 = vmul.f32 %v8659, 1.442695
      %v8781 = vpow.pop %v8780
      %v8782 = vmul.f32 %v8660, 1.442695
      %v8783 = vpow.pop %v8782
      %v8784 = vmul.f32 %v8661, 1.442695
      %v8785 = vpow.pop %v8784
      %v8786 = vmul.f32 %v8662, 1.442695
      %v8787 = vpow.pop %v8786
      %v8788 = vmul.f32 %v8663, 1.442695
      %v8789 = vpow.pop %v8788
      %v8790 = vmul.f32 %v8664, 1.442695
      %v8791 = vpow.pop %v8790
      %v8792 = vmul.f32 %v8665, 1.442695
      %v8793 = vpow.pop %v8792
      %v8794 = vadd.f32 %v8667, %v8669
      %8795 = vadd.xlane.f32.xlu0 %v8794
      %v8796 = vpop.xlane.xlu0 %8795
      %v8797 = vadd.f32 %v8671, %v8673
      %8798 = vadd.xlane.f32.xlu0 %v8797
      %v8799 = vpop.xlane.xlu0 %8798
      %v8800 = vadd.f32 %v8675, %v8677
      %8801 = vadd.xlane.f32.xlu0 %v8800
      %v8802 = vpop.xlane.xlu0 %8801
      %v8803 = vadd.f32 %v8679, %v8681
      %8804 = vadd.xlane.f32.xlu0 %v8803
      %v8805 = vpop.xlane.xlu0 %8804
      %v8806 = vadd.f32 %v8683, %v8685
      %8807 = vadd.xlane.f32.xlu0 %v8806
      %v8808 = vpop.xlane.xlu0 %8807
      %v8809 = vadd.f32 %v8687, %v8689
      %8810 = vadd.xlane.f32.xlu0 %v8809
      %v8811 = vpop.xlane.xlu0 %8810
      %v8812 = vadd.f32 %v8691, %v8693
      %8813 = vadd.xlane.f32.xlu0 %v8812
      %v8814 = vpop.xlane.xlu0 %8813
      %v8815 = vadd.f32 %v8695, %v8697
      %8816 = vadd.xlane.f32.xlu0 %v8815
      %v8817 = vpop.xlane.xlu0 %8816
      %v8818 = vadd.f32 %v8699, %v8701
      %8819 = vadd.xlane.f32.xlu0 %v8818
      %v8820 = vpop.xlane.xlu0 %8819
      %v8821 = vadd.f32 %v8703, %v8705
      %8822 = vadd.xlane.f32.xlu0 %v8821
      %v8823 = vpop.xlane.xlu0 %8822
      %v8824 = vadd.f32 %v8707, %v8709
      %8825 = vadd.xlane.f32.xlu0 %v8824
      %v8826 = vpop.xlane.xlu0 %8825
      %v8827 = vadd.f32 %v8711, %v8713
      %8828 = vadd.xlane.f32.xlu0 %v8827
      %v8829 = vpop.xlane.xlu0 %8828
      %v8830 = vadd.f32 %v8715, %v8717
      %8831 = vadd.xlane.f32.xlu0 %v8830
      %v8832 = vpop.xlane.xlu0 %8831
      %v8833 = vadd.f32 %v8719, %v8721
      %8834 = vadd.xlane.f32.xlu0 %v8833
      %v8835 = vpop.xlane.xlu0 %8834
      %v8836 = vadd.f32 %v8723, %v8725
      %8837 = vadd.xlane.f32.xlu0 %v8836
      %v8838 = vpop.xlane.xlu0 %8837
      %v8839 = vadd.f32 %v8727, %v8729
      %8840 = vadd.xlane.f32.xlu0 %v8839
      %v8841 = vpop.xlane.xlu0 %8840
      %v8842 = vadd.f32 %v8731, %v8733
      %8843 = vadd.xlane.f32.xlu0 %v8842
      %v8844 = vpop.xlane.xlu0 %8843
      %v8845 = vadd.f32 %v8735, %v8737
      %8846 = vadd.xlane.f32.xlu0 %v8845
      %v8847 = vpop.xlane.xlu0 %8846
      %v8848 = vadd.f32 %v8739, %v8741
      %8849 = vadd.xlane.f32.xlu0 %v8848
      %v8850 = vpop.xlane.xlu0 %8849
      %v8851 = vadd.f32 %v8743, %v8745
      %8852 = vadd.xlane.f32.xlu0 %v8851
      %v8853 = vpop.xlane.xlu0 %8852
      %v8854 = vadd.f32 %v8747, %v8749
      %8855 = vadd.xlane.f32.xlu0 %v8854
      %v8856 = vpop.xlane.xlu0 %8855
      %v8857 = vadd.f32 %v8751, %v8753
      %8858 = vadd.xlane.f32.xlu0 %v8857
      %v8859 = vpop.xlane.xlu0 %8858
      %v8860 = vadd.f32 %v8755, %v8757
      %8861 = vadd.xlane.f32.xlu0 %v8860
      %v8862 = vpop.xlane.xlu0 %8861
      %v8863 = vadd.f32 %v8759, %v8761
      %8864 = vadd.xlane.f32.xlu0 %v8863
      %v8865 = vpop.xlane.xlu0 %8864
      %v8866 = vadd.f32 %v8763, %v8765
      %8867 = vadd.xlane.f32.xlu0 %v8866
      %v8868 = vpop.xlane.xlu0 %8867
      %v8869 = vadd.f32 %v8767, %v8769
      %8870 = vadd.xlane.f32.xlu0 %v8869
      %v8871 = vpop.xlane.xlu0 %8870
      %v8872 = vadd.f32 %v8771, %v8773
      %8873 = vadd.xlane.f32.xlu0 %v8872
      %v8874 = vpop.xlane.xlu0 %8873
      %v8875 = vadd.f32 %v8775, %v8777
      %8876 = vadd.xlane.f32.xlu0 %v8875
      %v8877 = vpop.xlane.xlu0 %8876
      %v8878 = vadd.f32 %v8779, %v8781
      %8879 = vadd.xlane.f32.xlu0 %v8878
      %v8880 = vpop.xlane.xlu0 %8879
      %v8881 = vadd.f32 %v8783, %v8785
      %8882 = vadd.xlane.f32.xlu0 %v8881
      %v8883 = vpop.xlane.xlu0 %8882
      %v8884 = vadd.f32 %v8787, %v8789
      %8885 = vadd.xlane.f32.xlu0 %v8884
      %v8886 = vpop.xlane.xlu0 %8885
      %v8887 = vadd.f32 %v8791, %v8793
      %8888 = vadd.xlane.f32.xlu0 %v8887
      %v8889 = vpop.xlane.xlu0 %8888
      %v8890 = vrcp.pop %v8796
      %v8891 = vrcp.pop %v8799
      %v8892 = vrcp.pop %v8802
      %v8893 = vrcp.pop %v8805
      %v8894 = vrcp.pop %v8808
      %v8895 = vrcp.pop %v8811
      %v8896 = vrcp.pop %v8814
      %v8897 = vrcp.pop %v8817
      %v8898 = vrcp.pop %v8820
      %v8899 = vrcp.pop %v8823
      %v8900 = vrcp.pop %v8826
      %v8901 = vrcp.pop %v8829
      %v8902 = vrcp.pop %v8832
      %v8903 = vrcp.pop %v8835
      %v8904 = vrcp.pop %v8838
      %v8905 = vrcp.pop %v8841
      %v8906 = vrcp.pop %v8844
      %v8907 = vrcp.pop %v8847
      %v8908 = vrcp.pop %v8850
      %v8909 = vrcp.pop %v8853
      %v8910 = vrcp.pop %v8856
      %v8911 = vrcp.pop %v8859
      %v8912 = vrcp.pop %v8862
      %v8913 = vrcp.pop %v8865
      %v8914 = vrcp.pop %v8868
      %v8915 = vrcp.pop %v8871
      %v8916 = vrcp.pop %v8874
      %v8917 = vrcp.pop %v8877
      %v8918 = vrcp.pop %v8880
      %v8919 = vrcp.pop %v8883
      %v8920 = vrcp.pop %v8886
      %v8921 = vrcp.pop %v8889
      %v8922 = vmul.f32 %v8667, %v8890
      %v8923 = vmul.f32 %v8669, %v8890
      %v8924 = vmul.f32 %v8671, %v8891
      %v8925 = vmul.f32 %v8673, %v8891
      %v8926 = vmul.f32 %v8675, %v8892
      %v8927 = vmul.f32 %v8677, %v8892
      %v8928 = vmul.f32 %v8679, %v8893
      %v8929 = vmul.f32 %v8681, %v8893
      %v8930 = vmul.f32 %v8683, %v8894
      %v8931 = vmul.f32 %v8685, %v8894
      %v8932 = vmul.f32 %v8687, %v8895
      %v8933 = vmul.f32 %v8689, %v8895
      %v8934 = vmul.f32 %v8691, %v8896
      %v8935 = vmul.f32 %v8693, %v8896
      %v8936 = vmul.f32 %v8695, %v8897
      %v8937 = vmul.f32 %v8697, %v8897
      %v8938 = vmul.f32 %v8699, %v8898
      %v8939 = vmul.f32 %v8701, %v8898
      %v8940 = vmul.f32 %v8703, %v8899
      %v8941 = vmul.f32 %v8705, %v8899
      %v8942 = vmul.f32 %v8707, %v8900
      %v8943 = vmul.f32 %v8709, %v8900
      %v8944 = vmul.f32 %v8711, %v8901
      %v8945 = vmul.f32 %v8713, %v8901
      %v8946 = vmul.f32 %v8715, %v8902
      %v8947 = vmul.f32 %v8717, %v8902
      %v8948 = vmul.f32 %v8719, %v8903
      %v8949 = vmul.f32 %v8721, %v8903
      %v8950 = vmul.f32 %v8723, %v8904
      %v8951 = vmul.f32 %v8725, %v8904
      %v8952 = vmul.f32 %v8727, %v8905
      %v8953 = vmul.f32 %v8729, %v8905
      %v8954 = vmul.f32 %v8731, %v8906
      %v8955 = vmul.f32 %v8733, %v8906
      %v8956 = vmul.f32 %v8735, %v8907
      %v8957 = vmul.f32 %v8737, %v8907
      %v8958 = vmul.f32 %v8739, %v8908
      %v8959 = vmul.f32 %v8741, %v8908
      %v8960 = vmul.f32 %v8743, %v8909
      %v8961 = vmul.f32 %v8745, %v8909
      %v8962 = vmul.f32 %v8747, %v8910
      %v8963 = vmul.f32 %v8749, %v8910
      %v8964 = vmul.f32 %v8751, %v8911
      %v8965 = vmul.f32 %v8753, %v8911
      %v8966 = vmul.f32 %v8755, %v8912
      %v8967 = vmul.f32 %v8757, %v8912
      %v8968 = vmul.f32 %v8759, %v8913
      %v8969 = vmul.f32 %v8761, %v8913
      %v8970 = vmul.f32 %v8763, %v8914
      %v8971 = vmul.f32 %v8765, %v8914
      %v8972 = vmul.f32 %v8767, %v8915
      %v8973 = vmul.f32 %v8769, %v8915
      %v8974 = vmul.f32 %v8771, %v8916
      %v8975 = vmul.f32 %v8773, %v8916
      %v8976 = vmul.f32 %v8775, %v8917
      %v8977 = vmul.f32 %v8777, %v8917
      %v8978 = vmul.f32 %v8779, %v8918
      %v8979 = vmul.f32 %v8781, %v8918
      %v8980 = vmul.f32 %v8783, %v8919
      %v8981 = vmul.f32 %v8785, %v8919
      %v8982 = vmul.f32 %v8787, %v8920
      %v8983 = vmul.f32 %v8789, %v8920
      %v8984 = vmul.f32 %v8791, %v8921
      %v8985 = vmul.f32 %v8793, %v8921
      %v8986 = vpack.c.bf16 %v8924, %v8922
      %v8987 = vpack.c.bf16 %v8925, %v8923
      %v8988 = vpack.c.bf16 %v8928, %v8926
      %v8989 = vpack.c.bf16 %v8929, %v8927
      %v8990 = vpack.c.bf16 %v8932, %v8930
      %v8991 = vpack.c.bf16 %v8933, %v8931
      %v8992 = vpack.c.bf16 %v8936, %v8934
      %v8993 = vpack.c.bf16 %v8937, %v8935
      %v8994 = vpack.c.bf16 %v8940, %v8938
      %v8995 = vpack.c.bf16 %v8941, %v8939
      %v8996 = vpack.c.bf16 %v8944, %v8942
      %v8997 = vpack.c.bf16 %v8945, %v8943
      %v8998 = vpack.c.bf16 %v8948, %v8946
      %v8999 = vpack.c.bf16 %v8949, %v8947
      %v9000 = vpack.c.bf16 %v8952, %v8950
      %v9001 = vpack.c.bf16 %v8953, %v8951
      %v9002 = vpack.c.bf16 %v8956, %v8954
      %v9003 = vpack.c.bf16 %v8957, %v8955
      %v9004 = vpack.c.bf16 %v8960, %v8958
      %v9005 = vpack.c.bf16 %v8961, %v8959
      %v9006 = vpack.c.bf16 %v8964, %v8962
      %v9007 = vpack.c.bf16 %v8965, %v8963
      %v9008 = vpack.c.bf16 %v8968, %v8966
      %v9009 = vpack.c.bf16 %v8969, %v8967
      %v9010 = vpack.c.bf16 %v8972, %v8970
      %v9011 = vpack.c.bf16 %v8973, %v8971
      %v9012 = vpack.c.bf16 %v8976, %v8974
      %v9013 = vpack.c.bf16 %v8977, %v8975
      %v9014 = vpack.c.bf16 %v8980, %v8978
      %v9015 = vpack.c.bf16 %v8981, %v8979
      %v9016 = vpack.c.bf16 %v8984, %v8982
      %v9017 = vpack.c.bf16 %v8985, %v8983
      %9018 = vrot.lane.b32.xlu0 %v1312, 44
      %v9019 = vpop.permute.xlu0 %9018
      %9020 = vrot.lane.b32.xlu0 %v1313, 44
      %v9021 = vpop.permute.xlu0 %9020
      %9022 = vrot.lane.b32.xlu0 %v1314, 44
      %v9023 = vpop.permute.xlu0 %9022
      %9024 = vrot.lane.b32.xlu0 %v1315, 44
      %v9025 = vpop.permute.xlu0 %9024
      %9026 = vrot.lane.b32.xlu0 %v1316, 44
      %v9027 = vpop.permute.xlu0 %9026
      %9028 = vrot.lane.b32.xlu0 %v1317, 44
      %v9029 = vpop.permute.xlu0 %9028
      %9030 = vrot.lane.b32.xlu0 %v1318, 44
      %v9031 = vpop.permute.xlu0 %9030
      %9032 = vrot.lane.b32.xlu0 %v1319, 44
      %v9033 = vpop.permute.xlu0 %9032
      %9034 = vrot.lane.b32.xlu0 %v1320, 44
      %v9035 = vpop.permute.xlu0 %9034
      %9036 = vrot.lane.b32.xlu0 %v1321, 44
      %v9037 = vpop.permute.xlu0 %9036
      %9038 = vrot.lane.b32.xlu0 %v1322, 44
      %v9039 = vpop.permute.xlu0 %9038
      %9040 = vrot.lane.b32.xlu0 %v1323, 44
      %v9041 = vpop.permute.xlu0 %9040
      %9042 = vrot.lane.b32.xlu0 %v1324, 44
      %v9043 = vpop.permute.xlu0 %9042
      %9044 = vrot.lane.b32.xlu0 %v1325, 44
      %v9045 = vpop.permute.xlu0 %9044
      %9046 = vrot.lane.b32.xlu0 %v1326, 44
      %v9047 = vpop.permute.xlu0 %9046
      %9048 = vrot.lane.b32.xlu0 %v1327, 44
      %v9049 = vpop.permute.xlu0 %9048
      %9066 = vmatprep.subr.bf16.mxu0 0
      %9067 = vmatpush1.bf16.msra.mxu0 %v9033
      %9068 = vmatprep.subr.bf16.mxu0 0
      %9069 = vmatpush1.bf16.msra.mxu0 %v9031
      %9070 = vmatprep.subr.bf16.mxu0 0
      %9071 = vmatpush1.bf16.msra.mxu0 %v9029
      %9072 = vmatprep.subr.bf16.mxu0 0
      %9073 = vmatpush1.bf16.msra.mxu0 %v9027
      %9074 = vmatprep.subr.bf16.mxu0 0
      %9075 = vmatpush1.bf16.msra.mxu0 %v9025
      %9076 = vmatprep.subr.bf16.mxu0 0
      %9077 = vmatpush1.bf16.msra.mxu0 %v9023
      %9078 = vmatprep.subr.bf16.mxu0 0
      %9079 = vmatpush1.bf16.msra.mxu0 %v9021
      %9080 = vmatprep.subr.bf16.mxu0 0
      %9081 = vmatpush1.bf16.msra.mxu0 %v9019
      %9082 = vmatprep.subr.bf16.mxu0 0
      %9083 = vmatpush2.bf16.msra.mxu0 %v9049
      %9084 = vmatprep.subr.bf16.mxu0 0
      %9085 = vmatpush2.bf16.msra.mxu0 %v9047
      %9086 = vmatprep.subr.bf16.mxu0 0
      %9087 = vmatpush2.bf16.msra.mxu0 %v9045
      %9088 = vmatprep.subr.bf16.mxu0 0
      %9089 = vmatpush2.bf16.msra.mxu0 %v9043
      %9090 = vmatprep.subr.bf16.mxu0 0
      %9091 = vmatpush2.bf16.msra.mxu0 %v9041
      %9092 = vmatprep.subr.bf16.mxu0 0
      %9093 = vmatpush2.bf16.msra.mxu0 %v9039
      %9094 = vmatprep.subr.bf16.mxu0 0
      %9095 = vmatpush2.bf16.msra.mxu0 %v9037
      %9096 = vmatprep.subr.bf16.mxu0 0
      %9097 = vmatpush2.bf16.msra.mxu0 %v9035
      %9098 = vmatprep.mubr.bf16.mxu0 %v8987
      %9099 = vmatmul.mubr.bf16.gmra.mxu0 %v8986
      %v9100 = vpop.f32.mrf.mxu0
      %v9101 = vadd.f32 0.0, %v9100
      %v9102 = vpop.f32.mrf.mxu0
      %v9103 = vpop.f32.mrf.mxu0
      %v9104 = vadd.f32 0.0, %v9103
      %v9105 = vpop.f32.mrf.mxu0
      %9106 = vmatprep.mubr.bf16.mxu0 %v8989
      %9107 = vmatmul.mubr.bf16.gmra.mxu0 %v8988
      %v9108 = vpop.f32.mrf.mxu0
      %v9109 = vadd.f32 0.0, %v9108
      %v9110 = vpop.f32.mrf.mxu0
      %v9111 = vpop.f32.mrf.mxu0
      %v9112 = vadd.f32 0.0, %v9111
      %v9113 = vpop.f32.mrf.mxu0
      %9114 = vmatprep.mubr.bf16.mxu0 %v8991
      %9115 = vmatmul.mubr.bf16.gmra.mxu0 %v8990
      %v9116 = vpop.f32.mrf.mxu0
      %v9117 = vadd.f32 0.0, %v9116
      %v9118 = vpop.f32.mrf.mxu0
      %v9119 = vpop.f32.mrf.mxu0
      %v9120 = vadd.f32 0.0, %v9119
      %v9121 = vpop.f32.mrf.mxu0
      %9122 = vmatprep.mubr.bf16.mxu0 %v8993
      %9123 = vmatmul.mubr.bf16.gmra.mxu0 %v8992
      %v9124 = vpop.f32.mrf.mxu0
      %v9125 = vadd.f32 0.0, %v9124
      %v9126 = vpop.f32.mrf.mxu0
      %v9127 = vpop.f32.mrf.mxu0
      %v9128 = vadd.f32 0.0, %v9127
      %v9129 = vpop.f32.mrf.mxu0
      %9130 = vmatprep.mubr.bf16.mxu0 %v8995
      %9131 = vmatmul.mubr.bf16.gmra.mxu0 %v8994
      %v9132 = vpop.f32.mrf.mxu0
      %v9133 = vadd.f32 0.0, %v9132
      %v9134 = vpop.f32.mrf.mxu0
      %v9135 = vpop.f32.mrf.mxu0
      %v9136 = vadd.f32 0.0, %v9135
      %v9137 = vpop.f32.mrf.mxu0
      %9138 = vmatprep.mubr.bf16.mxu0 %v8997
      %9139 = vmatmul.mubr.bf16.gmra.mxu0 %v8996
      %v9140 = vpop.f32.mrf.mxu0
      %v9141 = vadd.f32 0.0, %v9140
      %v9142 = vpop.f32.mrf.mxu0
      %v9143 = vpop.f32.mrf.mxu0
      %v9144 = vadd.f32 0.0, %v9143
      %v9145 = vpop.f32.mrf.mxu0
      %9146 = vmatprep.mubr.bf16.mxu0 %v8999
      %9147 = vmatmul.mubr.bf16.gmra.mxu0 %v8998
      %v9148 = vpop.f32.mrf.mxu0
      %v9149 = vadd.f32 0.0, %v9148
      %v9150 = vpop.f32.mrf.mxu0
      %v9151 = vpop.f32.mrf.mxu0
      %v9152 = vadd.f32 0.0, %v9151
      %v9153 = vpop.f32.mrf.mxu0
      %9154 = vmatprep.mubr.bf16.mxu0 %v9001
      %9155 = vmatmul.mubr.bf16.gmra.mxu0 %v9000
      %v9156 = vpop.f32.mrf.mxu0
      %v9157 = vadd.f32 0.0, %v9156
      %v9158 = vpop.f32.mrf.mxu0
      %v9159 = vpop.f32.mrf.mxu0
      %v9160 = vadd.f32 0.0, %v9159
      %v9161 = vpop.f32.mrf.mxu0
      %9162 = vmatprep.mubr.bf16.mxu0 %v9003
      %9163 = vmatmul.mubr.bf16.gmra.mxu0 %v9002
      %v9164 = vpop.f32.mrf.mxu0
      %v9165 = vadd.f32 0.0, %v9164
      %v9166 = vpop.f32.mrf.mxu0
      %v9167 = vpop.f32.mrf.mxu0
      %v9168 = vadd.f32 0.0, %v9167
      %v9169 = vpop.f32.mrf.mxu0
      %9170 = vmatprep.mubr.bf16.mxu0 %v9005
      %9171 = vmatmul.mubr.bf16.gmra.mxu0 %v9004
      %v9172 = vpop.f32.mrf.mxu0
      %v9173 = vadd.f32 0.0, %v9172
      %v9174 = vpop.f32.mrf.mxu0
      %v9175 = vpop.f32.mrf.mxu0
      %v9176 = vadd.f32 0.0, %v9175
      %v9177 = vpop.f32.mrf.mxu0
      %9178 = vmatprep.mubr.bf16.mxu0 %v9007
      %9179 = vmatmul.mubr.bf16.gmra.mxu0 %v9006
      %v9180 = vpop.f32.mrf.mxu0
      %v9181 = vadd.f32 0.0, %v9180
      %v9182 = vpop.f32.mrf.mxu0
      %v9183 = vpop.f32.mrf.mxu0
      %v9184 = vadd.f32 0.0, %v9183
      %v9185 = vpop.f32.mrf.mxu0
      %9186 = vmatprep.mubr.bf16.mxu0 %v9009
      %9187 = vmatmul.mubr.bf16.gmra.mxu0 %v9008
      %v9188 = vpop.f32.mrf.mxu0
      %v9189 = vadd.f32 0.0, %v9188
      %v9190 = vpop.f32.mrf.mxu0
      %v9191 = vpop.f32.mrf.mxu0
      %v9192 = vadd.f32 0.0, %v9191
      %v9193 = vpop.f32.mrf.mxu0
      %9194 = vmatprep.mubr.bf16.mxu0 %v9011
      %9195 = vmatmul.mubr.bf16.gmra.mxu0 %v9010
      %v9196 = vpop.f32.mrf.mxu0
      %v9197 = vadd.f32 0.0, %v9196
      %v9198 = vpop.f32.mrf.mxu0
      %v9199 = vpop.f32.mrf.mxu0
      %v9200 = vadd.f32 0.0, %v9199
      %v9201 = vpop.f32.mrf.mxu0
      %9202 = vmatprep.mubr.bf16.mxu0 %v9013
      %9203 = vmatmul.mubr.bf16.gmra.mxu0 %v9012
      %v9204 = vpop.f32.mrf.mxu0
      %v9205 = vadd.f32 0.0, %v9204
      %v9206 = vpop.f32.mrf.mxu0
      %v9207 = vpop.f32.mrf.mxu0
      %v9208 = vadd.f32 0.0, %v9207
      %v9209 = vpop.f32.mrf.mxu0
      %9210 = vmatprep.mubr.bf16.mxu0 %v9015
      %9211 = vmatmul.mubr.bf16.gmra.mxu0 %v9014
      %v9212 = vpop.f32.mrf.mxu0
      %v9213 = vadd.f32 0.0, %v9212
      %v9214 = vpop.f32.mrf.mxu0
      %v9215 = vpop.f32.mrf.mxu0
      %v9216 = vadd.f32 0.0, %v9215
      %v9217 = vpop.f32.mrf.mxu0
      %9218 = vmatprep.mubr.bf16.mxu0 %v9017
      %9219 = vmatmul.mubr.bf16.gmra.mxu0 %v9016
      %v9220 = vpop.f32.mrf.mxu0
      %v9221 = vadd.f32 0.0, %v9220
      %v9222 = vpop.f32.mrf.mxu0
      %v9223 = vpop.f32.mrf.mxu0
      %v9224 = vadd.f32 0.0, %v9223
      %v9225 = vpop.f32.mrf.mxu0
      %9226 = vdwg.mxu0
      %v9227 = vpack.c.bf16 %v9104, %v9101
      %v9228 = vpack.c.bf16 %v9112, %v9109
      %v9229 = vpack.c.bf16 %v9120, %v9117
      %v9230 = vpack.c.bf16 %v9128, %v9125
      %v9231 = vpack.c.bf16 %v9136, %v9133
      %v9232 = vpack.c.bf16 %v9144, %v9141
      %v9233 = vpack.c.bf16 %v9152, %v9149
      %v9234 = vpack.c.bf16 %v9160, %v9157
      %v9235 = vpack.c.bf16 %v9168, %v9165
      %v9236 = vpack.c.bf16 %v9176, %v9173
      %v9237 = vpack.c.bf16 %v9184, %v9181
      %v9238 = vpack.c.bf16 %v9192, %v9189
      %v9239 = vpack.c.bf16 %v9200, %v9197
      %v9240 = vpack.c.bf16 %v9208, %v9205
      %v9241 = vpack.c.bf16 %v9216, %v9213
      %v9242 = vpack.c.bf16 %v9224, %v9221
      %s9243 = scalar_lea.vmem %s425, 10
      %v9244 = vld [vmem:[%s9243] sm:$0x3]
      %v9246 = vsel %vm1584, %v9227, 0
      %v9249 = vsel %vm1584, %v9228, 0
      %v9252 = vsel %vm1584, %v9229, 0
      %v9255 = vsel %vm1584, %v9230, 0
      %v9258 = vsel %vm1584, %v9231, 0
      %v9261 = vsel %vm1584, %v9232, 0
      %v9264 = vsel %vm1584, %v9233, 0
      %v9267 = vsel %vm1584, %v9234, 0
      %v9270 = vsel %vm1584, %v9235, 0
      %v9273 = vsel %vm1584, %v9236, 0
      %v9276 = vsel %vm1584, %v9237, 0
      %v9279 = vsel %vm1584, %v9238, 0
      %v9282 = vsel %vm1584, %v9239, 0
      %v9285 = vsel %vm1584, %v9240, 0
      %v9288 = vsel %vm1584, %v9241, 0
      %v9291 = vsel %vm1584, %v9242, 0
      %v9294 = vsel %vm3768, %v9244, 0
      %9296 = vmatprep.subr.bf16.mxu0 0
      %9297 = vmatpush1.bf16.msra.mxu0 0
      %9298 = vmatprep.subr.bf16.mxu0 0
      %9299 = vmatpush1.bf16.msra.mxu0 0
      %9300 = vmatprep.subr.bf16.mxu0 0
      %9301 = vmatpush1.bf16.msra.mxu0 0
      %9302 = vmatprep.subr.bf16.mxu0 0
      %9303 = vmatpush1.bf16.msra.mxu0 0
      %9304 = vmatprep.subr.bf16.mxu0 0
      %9305 = vmatpush1.bf16.msra.mxu0 0
      %9306 = vmatprep.subr.bf16.mxu0 0
      %9307 = vmatpush1.bf16.msra.mxu0 0
      %9308 = vmatprep.subr.bf16.mxu0 0
      %9309 = vmatpush1.bf16.msra.mxu0 0
      %9310 = vmatprep.subr.bf16.mxu0 0
      %9311 = vmatpush1.bf16.msra.mxu0 %v9294
      %9312 = vmatprep.subr.bf16.mxu0 0
      %9313 = vmatpush2.bf16.msra.mxu0 0
      %9314 = vmatprep.subr.bf16.mxu0 0
      %9315 = vmatpush2.bf16.msra.mxu0 0
      %9316 = vmatprep.subr.bf16.mxu0 0
      %9317 = vmatpush2.bf16.msra.mxu0 0
      %9318 = vmatprep.subr.bf16.mxu0 0
      %9319 = vmatpush2.bf16.msra.mxu0 0
      %9320 = vmatprep.subr.bf16.mxu0 0
      %9321 = vmatpush2.bf16.msra.mxu0 0
      %9322 = vmatprep.subr.bf16.mxu0 0
      %9323 = vmatpush2.bf16.msra.mxu0 0
      %9324 = vmatprep.subr.bf16.mxu0 0
      %9325 = vmatpush2.bf16.msra.mxu0 0
      %9326 = vmatprep.subr.bf16.mxu0 0
      %9327 = vmatpush2.bf16.msra.mxu0 0
      %9328 = vmatprep.mubr.bf16.mxu0 0
      %9329 = vmatmul.mubr.bf16.gmra.mxu0 %v9246
      %v9330 = vpop.f32.mrf.mxu0
      %v9331 = vadd.f32 0.0, %v9330
      %v9332 = vpop.f32.mrf.mxu0
      %v9333 = vpop.f32.mrf.mxu0
      %v9334 = vadd.f32 0.0, %v9333
      %v9335 = vpop.f32.mrf.mxu0
      %9336 = vmatprep.mubr.bf16.mxu0 0
      %9337 = vmatmul.mubr.bf16.gmra.mxu0 %v9249
      %v9338 = vpop.f32.mrf.mxu0
      %v9339 = vadd.f32 0.0, %v9338
      %v9340 = vpop.f32.mrf.mxu0
      %v9341 = vpop.f32.mrf.mxu0
      %v9342 = vadd.f32 0.0, %v9341
      %v9343 = vpop.f32.mrf.mxu0
      %9344 = vmatprep.mubr.bf16.mxu0 0
      %9345 = vmatmul.mubr.bf16.gmra.mxu0 %v9252
      %v9346 = vpop.f32.mrf.mxu0
      %v9347 = vadd.f32 0.0, %v9346
      %v9348 = vpop.f32.mrf.mxu0
      %v9349 = vpop.f32.mrf.mxu0
      %v9350 = vadd.f32 0.0, %v9349
      %v9351 = vpop.f32.mrf.mxu0
      %9352 = vmatprep.mubr.bf16.mxu0 0
      %9353 = vmatmul.mubr.bf16.gmra.mxu0 %v9255
      %v9354 = vpop.f32.mrf.mxu0
      %v9355 = vadd.f32 0.0, %v9354
      %v9356 = vpop.f32.mrf.mxu0
      %v9357 = vpop.f32.mrf.mxu0
      %v9358 = vadd.f32 0.0, %v9357
      %v9359 = vpop.f32.mrf.mxu0
      %9360 = vmatprep.mubr.bf16.mxu0 0
      %9361 = vmatmul.mubr.bf16.gmra.mxu0 %v9258
      %v9362 = vpop.f32.mrf.mxu0
      %v9363 = vadd.f32 0.0, %v9362
      %v9364 = vpop.f32.mrf.mxu0
      %v9365 = vpop.f32.mrf.mxu0
      %v9366 = vadd.f32 0.0, %v9365
      %v9367 = vpop.f32.mrf.mxu0
      %9368 = vmatprep.mubr.bf16.mxu0 0
      %9369 = vmatmul.mubr.bf16.gmra.mxu0 %v9261
      %v9370 = vpop.f32.mrf.mxu0
      %v9371 = vadd.f32 0.0, %v9370
      %v9372 = vpop.f32.mrf.mxu0
      %v9373 = vpop.f32.mrf.mxu0
      %v9374 = vadd.f32 0.0, %v9373
      %v9375 = vpop.f32.mrf.mxu0
      %9376 = vmatprep.mubr.bf16.mxu0 0
      %9377 = vmatmul.mubr.bf16.gmra.mxu0 %v9264
      %v9378 = vpop.f32.mrf.mxu0
      %v9379 = vadd.f32 0.0, %v9378
      %v9380 = vpop.f32.mrf.mxu0
      %v9381 = vpop.f32.mrf.mxu0
      %v9382 = vadd.f32 0.0, %v9381
      %v9383 = vpop.f32.mrf.mxu0
      %9384 = vmatprep.mubr.bf16.mxu0 0
      %9385 = vmatmul.mubr.bf16.gmra.mxu0 %v9267
      %v9386 = vpop.f32.mrf.mxu0
      %v9387 = vadd.f32 0.0, %v9386
      %v9388 = vpop.f32.mrf.mxu0
      %v9389 = vpop.f32.mrf.mxu0
      %v9390 = vadd.f32 0.0, %v9389
      %v9391 = vpop.f32.mrf.mxu0
      %9392 = vmatprep.mubr.bf16.mxu0 0
      %9393 = vmatmul.mubr.bf16.gmra.mxu0 %v9270
      %v9394 = vpop.f32.mrf.mxu0
      %v9395 = vadd.f32 0.0, %v9394
      %v9396 = vpop.f32.mrf.mxu0
      %v9397 = vpop.f32.mrf.mxu0
      %v9398 = vadd.f32 0.0, %v9397
      %v9399 = vpop.f32.mrf.mxu0
      %9400 = vmatprep.mubr.bf16.mxu0 0
      %9401 = vmatmul.mubr.bf16.gmra.mxu0 %v9273
      %v9402 = vpop.f32.mrf.mxu0
      %v9403 = vadd.f32 0.0, %v9402
      %v9404 = vpop.f32.mrf.mxu0
      %v9405 = vpop.f32.mrf.mxu0
      %v9406 = vadd.f32 0.0, %v9405
      %v9407 = vpop.f32.mrf.mxu0
      %9408 = vmatprep.mubr.bf16.mxu0 0
      %9409 = vmatmul.mubr.bf16.gmra.mxu0 %v9276
      %v9410 = vpop.f32.mrf.mxu0
      %v9411 = vadd.f32 0.0, %v9410
      %v9412 = vpop.f32.mrf.mxu0
      %v9413 = vpop.f32.mrf.mxu0
      %v9414 = vadd.f32 0.0, %v9413
      %v9415 = vpop.f32.mrf.mxu0
      %9416 = vmatprep.mubr.bf16.mxu0 0
      %9417 = vmatmul.mubr.bf16.gmra.mxu0 %v9279
      %v9418 = vpop.f32.mrf.mxu0
      %v9419 = vadd.f32 0.0, %v9418
      %v9420 = vpop.f32.mrf.mxu0
      %v9421 = vpop.f32.mrf.mxu0
      %v9422 = vadd.f32 0.0, %v9421
      %v9423 = vpop.f32.mrf.mxu0
      %9424 = vmatprep.mubr.bf16.mxu0 0
      %9425 = vmatmul.mubr.bf16.gmra.mxu0 %v9282
      %v9426 = vpop.f32.mrf.mxu0
      %v9427 = vadd.f32 0.0, %v9426
      %v9428 = vpop.f32.mrf.mxu0
      %v9429 = vpop.f32.mrf.mxu0
      %v9430 = vadd.f32 0.0, %v9429
      %v9431 = vpop.f32.mrf.mxu0
      %9432 = vmatprep.mubr.bf16.mxu0 0
      %9433 = vmatmul.mubr.bf16.gmra.mxu0 %v9285
      %v9434 = vpop.f32.mrf.mxu0
      %v9435 = vadd.f32 0.0, %v9434
      %v9436 = vpop.f32.mrf.mxu0
      %v9437 = vpop.f32.mrf.mxu0
      %v9438 = vadd.f32 0.0, %v9437
      %v9439 = vpop.f32.mrf.mxu0
      %9440 = vmatprep.mubr.bf16.mxu0 0
      %9441 = vmatmul.mubr.bf16.gmra.mxu0 %v9288
      %v9442 = vpop.f32.mrf.mxu0
      %v9443 = vadd.f32 0.0, %v9442
      %v9444 = vpop.f32.mrf.mxu0
      %v9445 = vpop.f32.mrf.mxu0
      %v9446 = vadd.f32 0.0, %v9445
      %v9447 = vpop.f32.mrf.mxu0
      %9448 = vmatprep.mubr.bf16.mxu0 0
      %9449 = vmatmul.mubr.bf16.gmra.mxu0 %v9291
      %v9450 = vpop.f32.mrf.mxu0
      %v9451 = vadd.f32 0.0, %v9450
      %v9452 = vpop.f32.mrf.mxu0
      %v9453 = vpop.f32.mrf.mxu0
      %v9454 = vadd.f32 0.0, %v9453
      %v9455 = vpop.f32.mrf.mxu0
      %9456 = vdwg.mxu0
      %v9457 = vadd.f32 %v8121, %v9331
      %v9458 = vadd.f32 %v8122, %v9334
      %v9459 = vadd.f32 %v8123, %v9339
      %v9460 = vadd.f32 %v8124, %v9342
      %v9461 = vadd.f32 %v8125, %v9347
      %v9462 = vadd.f32 %v8126, %v9350
      %v9463 = vadd.f32 %v8127, %v9355
      %v9464 = vadd.f32 %v8128, %v9358
      %v9465 = vadd.f32 %v8129, %v9363
      %v9466 = vadd.f32 %v8130, %v9366
      %v9467 = vadd.f32 %v8131, %v9371
      %v9468 = vadd.f32 %v8132, %v9374
      %v9469 = vadd.f32 %v8133, %v9379
      %v9470 = vadd.f32 %v8134, %v9382
      %v9471 = vadd.f32 %v8135, %v9387
      %v9472 = vadd.f32 %v8136, %v9390
      %v9473 = vadd.f32 %v8137, %v9395
      %v9474 = vadd.f32 %v8138, %v9398
      %v9475 = vadd.f32 %v8139, %v9403
      %v9476 = vadd.f32 %v8140, %v9406
      %v9477 = vadd.f32 %v8141, %v9411
      %v9478 = vadd.f32 %v8142, %v9414
      %v9479 = vadd.f32 %v8143, %v9419
      %v9480 = vadd.f32 %v8144, %v9422
      %v9481 = vadd.f32 %v8145, %v9427
      %v9482 = vadd.f32 %v8146, %v9430
      %v9483 = vadd.f32 %v8147, %v9435
      %v9484 = vadd.f32 %v8148, %v9438
      %v9485 = vadd.f32 %v8149, %v9443
      %v9486 = vadd.f32 %v8150, %v9446
      %v9487 = vadd.f32 %v8151, %v9451
      %v9488 = vadd.f32 %v8152, %v9454
      %9489 = vrot.lane.b32.xlu0 %v1312, 104
      %v9490 = vpop.permute.xlu0 %9489
      %9491 = vrot.lane.b32.xlu0 %v1313, 104
      %v9492 = vpop.permute.xlu0 %9491
      %9493 = vrot.lane.b32.xlu0 %v1314, 104
      %v9494 = vpop.permute.xlu0 %9493
      %9495 = vrot.lane.b32.xlu0 %v1315, 104
      %v9496 = vpop.permute.xlu0 %9495
      %9497 = vrot.lane.b32.xlu0 %v1316, 104
      %v9498 = vpop.permute.xlu0 %9497
      %9499 = vrot.lane.b32.xlu0 %v1317, 104
      %v9500 = vpop.permute.xlu0 %9499
      %9501 = vrot.lane.b32.xlu0 %v1318, 104
      %v9502 = vpop.permute.xlu0 %9501
      %9503 = vrot.lane.b32.xlu0 %v1319, 104
      %v9504 = vpop.permute.xlu0 %9503
      %9505 = vrot.lane.b32.xlu0 %v1320, 104
      %v9506 = vpop.permute.xlu0 %9505
      %9507 = vrot.lane.b32.xlu0 %v1321, 104
      %v9508 = vpop.permute.xlu0 %9507
      %9509 = vrot.lane.b32.xlu0 %v1322, 104
      %v9510 = vpop.permute.xlu0 %9509
      %9511 = vrot.lane.b32.xlu0 %v1323, 104
      %v9512 = vpop.permute.xlu0 %9511
      %9513 = vrot.lane.b32.xlu0 %v1324, 104
      %v9514 = vpop.permute.xlu0 %9513
      %9515 = vrot.lane.b32.xlu0 %v1325, 104
      %v9516 = vpop.permute.xlu0 %9515
      %9517 = vrot.lane.b32.xlu0 %v1326, 104
      %v9518 = vpop.permute.xlu0 %9517
      %9519 = vrot.lane.b32.xlu0 %v1327, 104
      %v9520 = vpop.permute.xlu0 %9519
      %9521 = vrot.lane.b32.xlu0 %v1520, 72
      %v9522 = vpop.permute.xlu0 %9521
      %9523 = vrot.lane.b32.xlu0 %v1521, 72
      %v9524 = vpop.permute.xlu0 %9523
      %9525 = vrot.lane.b32.xlu0 %v1522, 72
      %v9526 = vpop.permute.xlu0 %9525
      %9527 = vrot.lane.b32.xlu0 %v1523, 72
      %v9528 = vpop.permute.xlu0 %9527
      %9529 = vrot.lane.b32.xlu0 %v1524, 72
      %v9530 = vpop.permute.xlu0 %9529
      %9531 = vrot.lane.b32.xlu0 %v1525, 72
      %v9532 = vpop.permute.xlu0 %9531
      %9533 = vrot.lane.b32.xlu0 %v1526, 72
      %v9534 = vpop.permute.xlu0 %9533
      %9535 = vrot.lane.b32.xlu0 %v1527, 72
      %v9536 = vpop.permute.xlu0 %9535
      %9537 = vrot.lane.b32.xlu0 %v1528, 72
      %v9538 = vpop.permute.xlu0 %9537
      %9539 = vrot.lane.b32.xlu0 %v1529, 72
      %v9540 = vpop.permute.xlu0 %9539
      %9541 = vrot.lane.b32.xlu0 %v1530, 72
      %v9542 = vpop.permute.xlu0 %9541
      %9543 = vrot.lane.b32.xlu0 %v1531, 72
      %v9544 = vpop.permute.xlu0 %9543
      %9545 = vrot.lane.b32.xlu0 %v1532, 72
      %v9546 = vpop.permute.xlu0 %9545
      %9547 = vrot.lane.b32.xlu0 %v1533, 72
      %v9548 = vpop.permute.xlu0 %9547
      %9549 = vrot.lane.b32.xlu0 %v1534, 72
      %v9550 = vpop.permute.xlu0 %9549
      %9551 = vrot.lane.b32.xlu0 %v1535, 72
      %v9552 = vpop.permute.xlu0 %9551
      %v9554 = vsel %vm1584, %v9490, 0
      %v9557 = vsel %vm1584, %v9492, 0
      %v9560 = vsel %vm1584, %v9494, 0
      %v9563 = vsel %vm1584, %v9496, 0
      %v9566 = vsel %vm1584, %v9498, 0
      %v9569 = vsel %vm1584, %v9500, 0
      %v9572 = vsel %vm1584, %v9502, 0
      %v9575 = vsel %vm1584, %v9504, 0
      %v9578 = vsel %vm1584, %v9506, 0
      %v9581 = vsel %vm1584, %v9508, 0
      %v9584 = vsel %vm1584, %v9510, 0
      %v9587 = vsel %vm1584, %v9512, 0
      %v9590 = vsel %vm1584, %v9514, 0
      %v9593 = vsel %vm1584, %v9516, 0
      %v9596 = vsel %vm1584, %v9518, 0
      %v9599 = vsel %vm1584, %v9520, 0
      %v9602 = vsel %vm1584, %v9522, 0
      %v9605 = vsel %vm1584, %v9524, 0
      %v9608 = vsel %vm1584, %v9526, 0
      %v9611 = vsel %vm1584, %v9528, 0
      %v9614 = vsel %vm1584, %v9530, 0
      %v9617 = vsel %vm1584, %v9532, 0
      %v9620 = vsel %vm1584, %v9534, 0
      %v9623 = vsel %vm1584, %v9536, 0
      %v9626 = vsel %vm1584, %v9538, 0
      %v9629 = vsel %vm1584, %v9540, 0
      %v9632 = vsel %vm1584, %v9542, 0
      %v9635 = vsel %vm1584, %v9544, 0
      %v9638 = vsel %vm1584, %v9546, 0
      %v9641 = vsel %vm1584, %v9548, 0
      %v9644 = vsel %vm1584, %v9550, 0
      %v9647 = vsel %vm1584, %v9552, 0
      %9649 = vmatprep.subr.bf16.mxu0 0
      %9650 = vmatpush1.bf16.xpose.msra.mxu0 %v9623
      %9651 = vmatprep.subr.bf16.mxu0 0
      %9652 = vmatpush1.bf16.xpose.msra.mxu0 %v9620
      %9653 = vmatprep.subr.bf16.mxu0 0
      %9654 = vmatpush1.bf16.xpose.msra.mxu0 %v9617
      %9655 = vmatprep.subr.bf16.mxu0 0
      %9656 = vmatpush1.bf16.xpose.msra.mxu0 %v9614
      %9657 = vmatprep.subr.bf16.mxu0 0
      %9658 = vmatpush1.bf16.xpose.msra.mxu0 %v9611
      %9659 = vmatprep.subr.bf16.mxu0 0
      %9660 = vmatpush1.bf16.xpose.msra.mxu0 %v9608
      %9661 = vmatprep.subr.bf16.mxu0 0
      %9662 = vmatpush1.bf16.xpose.msra.mxu0 %v9605
      %9663 = vmatprep.subr.bf16.mxu0 0
      %9664 = vmatpush1.bf16.xpose.msra.mxu0 %v9602
      %9665 = vmatprep.subr.bf16.mxu0 0
      %9666 = vmatpush2.bf16.xpose.msra.mxu0 %v9647
      %9667 = vmatprep.subr.bf16.mxu0 0
      %9668 = vmatpush2.bf16.xpose.msra.mxu0 %v9644
      %9669 = vmatprep.subr.bf16.mxu0 0
      %9670 = vmatpush2.bf16.xpose.msra.mxu0 %v9641
      %9671 = vmatprep.subr.bf16.mxu0 0
      %9672 = vmatpush2.bf16.xpose.msra.mxu0 %v9638
      %9673 = vmatprep.subr.bf16.mxu0 0
      %9674 = vmatpush2.bf16.xpose.msra.mxu0 %v9635
      %9675 = vmatprep.subr.bf16.mxu0 0
      %9676 = vmatpush2.bf16.xpose.msra.mxu0 %v9632
      %9677 = vmatprep.subr.bf16.mxu0 0
      %9678 = vmatpush2.bf16.xpose.msra.mxu0 %v9629
      %9679 = vmatprep.subr.bf16.mxu0 0
      %9680 = vmatpush2.bf16.xpose.msra.mxu0 %v9626
      %9681 = vmatprep.mubr.bf16.mxu0 0
      %9682 = vmatmul.mubr.bf16.gmra.mxu0 %v9554
      %v9683 = vpop.f32.mrf.mxu0
      %v9684 = vadd.f32 0.0, %v9683
      %v9685 = vpop.f32.mrf.mxu0
      %v9686 = vadd.f32 0.0, %v9685
      %v9687 = vpop.f32.mrf.mxu0
      %v9688 = vadd.f32 0.0, %v9687
      %v9689 = vpop.f32.mrf.mxu0
      %v9690 = vadd.f32 0.0, %v9689
      %9691 = vmatprep.mubr.bf16.mxu0 0
      %9692 = vmatmul.mubr.bf16.gmra.mxu0 %v9557
      %v9693 = vpop.f32.mrf.mxu0
      %v9694 = vadd.f32 0.0, %v9693
      %v9695 = vpop.f32.mrf.mxu0
      %v9696 = vadd.f32 0.0, %v9695
      %v9697 = vpop.f32.mrf.mxu0
      %v9698 = vadd.f32 0.0, %v9697
      %v9699 = vpop.f32.mrf.mxu0
      %v9700 = vadd.f32 0.0, %v9699
      %9701 = vmatprep.mubr.bf16.mxu0 0
      %9702 = vmatmul.mubr.bf16.gmra.mxu0 %v9560
      %v9703 = vpop.f32.mrf.mxu0
      %v9704 = vadd.f32 0.0, %v9703
      %v9705 = vpop.f32.mrf.mxu0
      %v9706 = vadd.f32 0.0, %v9705
      %v9707 = vpop.f32.mrf.mxu0
      %v9708 = vadd.f32 0.0, %v9707
      %v9709 = vpop.f32.mrf.mxu0
      %v9710 = vadd.f32 0.0, %v9709
      %9711 = vmatprep.mubr.bf16.mxu0 0
      %9712 = vmatmul.mubr.bf16.gmra.mxu0 %v9563
      %v9713 = vpop.f32.mrf.mxu0
      %v9714 = vadd.f32 0.0, %v9713
      %v9715 = vpop.f32.mrf.mxu0
      %v9716 = vadd.f32 0.0, %v9715
      %v9717 = vpop.f32.mrf.mxu0
      %v9718 = vadd.f32 0.0, %v9717
      %v9719 = vpop.f32.mrf.mxu0
      %v9720 = vadd.f32 0.0, %v9719
      %9721 = vmatprep.mubr.bf16.mxu0 0
      %9722 = vmatmul.mubr.bf16.gmra.mxu0 %v9566
      %v9723 = vpop.f32.mrf.mxu0
      %v9724 = vadd.f32 0.0, %v9723
      %v9725 = vpop.f32.mrf.mxu0
      %v9726 = vadd.f32 0.0, %v9725
      %v9727 = vpop.f32.mrf.mxu0
      %v9728 = vadd.f32 0.0, %v9727
      %v9729 = vpop.f32.mrf.mxu0
      %v9730 = vadd.f32 0.0, %v9729
      %9731 = vmatprep.mubr.bf16.mxu0 0
      %9732 = vmatmul.mubr.bf16.gmra.mxu0 %v9569
      %v9733 = vpop.f32.mrf.mxu0
      %v9734 = vadd.f32 0.0, %v9733
      %v9735 = vpop.f32.mrf.mxu0
      %v9736 = vadd.f32 0.0, %v9735
      %v9737 = vpop.f32.mrf.mxu0
      %v9738 = vadd.f32 0.0, %v9737
      %v9739 = vpop.f32.mrf.mxu0
      %v9740 = vadd.f32 0.0, %v9739
      %9741 = vmatprep.mubr.bf16.mxu0 0
      %9742 = vmatmul.mubr.bf16.gmra.mxu0 %v9572
      %v9743 = vpop.f32.mrf.mxu0
      %v9744 = vadd.f32 0.0, %v9743
      %v9745 = vpop.f32.mrf.mxu0
      %v9746 = vadd.f32 0.0, %v9745
      %v9747 = vpop.f32.mrf.mxu0
      %v9748 = vadd.f32 0.0, %v9747
      %v9749 = vpop.f32.mrf.mxu0
      %v9750 = vadd.f32 0.0, %v9749
      %9751 = vmatprep.mubr.bf16.mxu0 0
      %9752 = vmatmul.mubr.bf16.gmra.mxu0 %v9575
      %v9753 = vpop.f32.mrf.mxu0
      %v9754 = vadd.f32 0.0, %v9753
      %v9755 = vpop.f32.mrf.mxu0
      %v9756 = vadd.f32 0.0, %v9755
      %v9757 = vpop.f32.mrf.mxu0
      %v9758 = vadd.f32 0.0, %v9757
      %v9759 = vpop.f32.mrf.mxu0
      %v9760 = vadd.f32 0.0, %v9759
      %9761 = vmatprep.mubr.bf16.mxu0 0
      %9762 = vmatmul.mubr.bf16.gmra.mxu0 %v9578
      %v9763 = vpop.f32.mrf.mxu0
      %v9764 = vadd.f32 0.0, %v9763
      %v9765 = vpop.f32.mrf.mxu0
      %v9766 = vadd.f32 0.0, %v9765
      %v9767 = vpop.f32.mrf.mxu0
      %v9768 = vadd.f32 0.0, %v9767
      %v9769 = vpop.f32.mrf.mxu0
      %v9770 = vadd.f32 0.0, %v9769
      %9771 = vmatprep.mubr.bf16.mxu0 0
      %9772 = vmatmul.mubr.bf16.gmra.mxu0 %v9581
      %v9773 = vpop.f32.mrf.mxu0
      %v9774 = vadd.f32 0.0, %v9773
      %v9775 = vpop.f32.mrf.mxu0
      %v9776 = vadd.f32 0.0, %v9775
      %v9777 = vpop.f32.mrf.mxu0
      %v9778 = vadd.f32 0.0, %v9777
      %v9779 = vpop.f32.mrf.mxu0
      %v9780 = vadd.f32 0.0, %v9779
      %9781 = vmatprep.mubr.bf16.mxu0 0
      %9782 = vmatmul.mubr.bf16.gmra.mxu0 %v9584
      %v9783 = vpop.f32.mrf.mxu0
      %v9784 = vadd.f32 0.0, %v9783
      %v9785 = vpop.f32.mrf.mxu0
      %v9786 = vadd.f32 0.0, %v9785
      %v9787 = vpop.f32.mrf.mxu0
      %v9788 = vadd.f32 0.0, %v9787
      %v9789 = vpop.f32.mrf.mxu0
      %v9790 = vadd.f32 0.0, %v9789
      %9791 = vmatprep.mubr.bf16.mxu0 0
      %9792 = vmatmul.mubr.bf16.gmra.mxu0 %v9587
      %v9793 = vpop.f32.mrf.mxu0
      %v9794 = vadd.f32 0.0, %v9793
      %v9795 = vpop.f32.mrf.mxu0
      %v9796 = vadd.f32 0.0, %v9795
      %v9797 = vpop.f32.mrf.mxu0
      %v9798 = vadd.f32 0.0, %v9797
      %v9799 = vpop.f32.mrf.mxu0
      %v9800 = vadd.f32 0.0, %v9799
      %9801 = vmatprep.mubr.bf16.mxu0 0
      %9802 = vmatmul.mubr.bf16.gmra.mxu0 %v9590
      %v9803 = vpop.f32.mrf.mxu0
      %v9804 = vadd.f32 0.0, %v9803
      %v9805 = vpop.f32.mrf.mxu0
      %v9806 = vadd.f32 0.0, %v9805
      %v9807 = vpop.f32.mrf.mxu0
      %v9808 = vadd.f32 0.0, %v9807
      %v9809 = vpop.f32.mrf.mxu0
      %v9810 = vadd.f32 0.0, %v9809
      %9811 = vmatprep.mubr.bf16.mxu0 0
      %9812 = vmatmul.mubr.bf16.gmra.mxu0 %v9593
      %v9813 = vpop.f32.mrf.mxu0
      %v9814 = vadd.f32 0.0, %v9813
      %v9815 = vpop.f32.mrf.mxu0
      %v9816 = vadd.f32 0.0, %v9815
      %v9817 = vpop.f32.mrf.mxu0
      %v9818 = vadd.f32 0.0, %v9817
      %v9819 = vpop.f32.mrf.mxu0
      %v9820 = vadd.f32 0.0, %v9819
      %9821 = vmatprep.mubr.bf16.mxu0 0
      %9822 = vmatmul.mubr.bf16.gmra.mxu0 %v9596
      %v9823 = vpop.f32.mrf.mxu0
      %v9824 = vadd.f32 0.0, %v9823
      %v9825 = vpop.f32.mrf.mxu0
      %v9826 = vadd.f32 0.0, %v9825
      %v9827 = vpop.f32.mrf.mxu0
      %v9828 = vadd.f32 0.0, %v9827
      %v9829 = vpop.f32.mrf.mxu0
      %v9830 = vadd.f32 0.0, %v9829
      %9831 = vmatprep.mubr.bf16.mxu0 0
      %9832 = vmatmul.mubr.bf16.gmra.mxu0 %v9599
      %v9833 = vpop.f32.mrf.mxu0
      %v9834 = vadd.f32 0.0, %v9833
      %v9835 = vpop.f32.mrf.mxu0
      %v9836 = vadd.f32 0.0, %v9835
      %v9837 = vpop.f32.mrf.mxu0
      %v9838 = vadd.f32 0.0, %v9837
      %v9839 = vpop.f32.mrf.mxu0
      %v9840 = vadd.f32 0.0, %v9839
      %9841 = vdwg.mxu0
      %v9842 = vmax.f32 %v9684, %v9686
      %9843 = vmax.xlane.f32.xlu0 %v9842
      %v9844 = vpop.xlane.xlu0 %9843
      %v9845 = vmax.f32 %v9688, %v9690
      %9846 = vmax.xlane.f32.xlu0 %v9845
      %v9847 = vpop.xlane.xlu0 %9846
      %v9848 = vmax.f32 %v9694, %v9696
      %9849 = vmax.xlane.f32.xlu0 %v9848
      %v9850 = vpop.xlane.xlu0 %9849
      %v9851 = vmax.f32 %v9698, %v9700
      %9852 = vmax.xlane.f32.xlu0 %v9851
      %v9853 = vpop.xlane.xlu0 %9852
      %v9854 = vmax.f32 %v9704, %v9706
      %9855 = vmax.xlane.f32.xlu0 %v9854
      %v9856 = vpop.xlane.xlu0 %9855
      %v9857 = vmax.f32 %v9708, %v9710
      %9858 = vmax.xlane.f32.xlu0 %v9857
      %v9859 = vpop.xlane.xlu0 %9858
      %v9860 = vmax.f32 %v9714, %v9716
      %9861 = vmax.xlane.f32.xlu0 %v9860
      %v9862 = vpop.xlane.xlu0 %9861
      %v9863 = vmax.f32 %v9718, %v9720
      %9864 = vmax.xlane.f32.xlu0 %v9863
      %v9865 = vpop.xlane.xlu0 %9864
      %v9866 = vmax.f32 %v9724, %v9726
      %9867 = vmax.xlane.f32.xlu0 %v9866
      %v9868 = vpop.xlane.xlu0 %9867
      %v9869 = vmax.f32 %v9728, %v9730
      %9870 = vmax.xlane.f32.xlu0 %v9869
      %v9871 = vpop.xlane.xlu0 %9870
      %v9872 = vmax.f32 %v9734, %v9736
      %9873 = vmax.xlane.f32.xlu0 %v9872
      %v9874 = vpop.xlane.xlu0 %9873
      %v9875 = vmax.f32 %v9738, %v9740
      %9876 = vmax.xlane.f32.xlu0 %v9875
      %v9877 = vpop.xlane.xlu0 %9876
      %v9878 = vmax.f32 %v9744, %v9746
      %9879 = vmax.xlane.f32.xlu0 %v9878
      %v9880 = vpop.xlane.xlu0 %9879
      %v9881 = vmax.f32 %v9748, %v9750
      %9882 = vmax.xlane.f32.xlu0 %v9881
      %v9883 = vpop.xlane.xlu0 %9882
      %v9884 = vmax.f32 %v9754, %v9756
      %9885 = vmax.xlane.f32.xlu0 %v9884
      %v9886 = vpop.xlane.xlu0 %9885
      %v9887 = vmax.f32 %v9758, %v9760
      %9888 = vmax.xlane.f32.xlu0 %v9887
      %v9889 = vpop.xlane.xlu0 %9888
      %v9890 = vmax.f32 %v9764, %v9766
      %9891 = vmax.xlane.f32.xlu0 %v9890
      %v9892 = vpop.xlane.xlu0 %9891
      %v9893 = vmax.f32 %v9768, %v9770
      %9894 = vmax.xlane.f32.xlu0 %v9893
      %v9895 = vpop.xlane.xlu0 %9894
      %v9896 = vmax.f32 %v9774, %v9776
      %9897 = vmax.xlane.f32.xlu0 %v9896
      %v9898 = vpop.xlane.xlu0 %9897
      %v9899 = vmax.f32 %v9778, %v9780
      %9900 = vmax.xlane.f32.xlu0 %v9899
      %v9901 = vpop.xlane.xlu0 %9900
      %v9902 = vmax.f32 %v9784, %v9786
      %9903 = vmax.xlane.f32.xlu0 %v9902
      %v9904 = vpop.xlane.xlu0 %9903
      %v9905 = vmax.f32 %v9788, %v9790
      %9906 = vmax.xlane.f32.xlu0 %v9905
      %v9907 = vpop.xlane.xlu0 %9906
      %v9908 = vmax.f32 %v9794, %v9796
      %9909 = vmax.xlane.f32.xlu0 %v9908
      %v9910 = vpop.xlane.xlu0 %9909
      %v9911 = vmax.f32 %v9798, %v9800
      %9912 = vmax.xlane.f32.xlu0 %v9911
      %v9913 = vpop.xlane.xlu0 %9912
      %v9914 = vmax.f32 %v9804, %v9806
      %9915 = vmax.xlane.f32.xlu0 %v9914
      %v9916 = vpop.xlane.xlu0 %9915
      %v9917 = vmax.f32 %v9808, %v9810
      %9918 = vmax.xlane.f32.xlu0 %v9917
      %v9919 = vpop.xlane.xlu0 %9918
      %v9920 = vmax.f32 %v9814, %v9816
      %9921 = vmax.xlane.f32.xlu0 %v9920
      %v9922 = vpop.xlane.xlu0 %9921
      %v9923 = vmax.f32 %v9818, %v9820
      %9924 = vmax.xlane.f32.xlu0 %v9923
      %v9925 = vpop.xlane.xlu0 %9924
      %v9926 = vmax.f32 %v9824, %v9826
      %9927 = vmax.xlane.f32.xlu0 %v9926
      %v9928 = vpop.xlane.xlu0 %9927
      %v9929 = vmax.f32 %v9828, %v9830
      %9930 = vmax.xlane.f32.xlu0 %v9929
      %v9931 = vpop.xlane.xlu0 %9930
      %v9932 = vmax.f32 %v9834, %v9836
      %9933 = vmax.xlane.f32.xlu0 %v9932
      %v9934 = vpop.xlane.xlu0 %9933
      %v9935 = vmax.f32 %v9838, %v9840
      %9936 = vmax.xlane.f32.xlu0 %v9935
      %v9937 = vpop.xlane.xlu0 %9936
      %v9938 = vsub.f32 %v9684, %v9844
      %v9939 = vsub.f32 %v9686, %v9844
      %v9940 = vsub.f32 %v9688, %v9847
      %v9941 = vsub.f32 %v9690, %v9847
      %v9942 = vsub.f32 %v9694, %v9850
      %v9943 = vsub.f32 %v9696, %v9850
      %v9944 = vsub.f32 %v9698, %v9853
      %v9945 = vsub.f32 %v9700, %v9853
      %v9946 = vsub.f32 %v9704, %v9856
      %v9947 = vsub.f32 %v9706, %v9856
      %v9948 = vsub.f32 %v9708, %v9859
      %v9949 = vsub.f32 %v9710, %v9859
      %v9950 = vsub.f32 %v9714, %v9862
      %v9951 = vsub.f32 %v9716, %v9862
      %v9952 = vsub.f32 %v9718, %v9865
      %v9953 = vsub.f32 %v9720, %v9865
      %v9954 = vsub.f32 %v9724, %v9868
      %v9955 = vsub.f32 %v9726, %v9868
      %v9956 = vsub.f32 %v9728, %v9871
      %v9957 = vsub.f32 %v9730, %v9871
      %v9958 = vsub.f32 %v9734, %v9874
      %v9959 = vsub.f32 %v9736, %v9874
      %v9960 = vsub.f32 %v9738, %v9877
      %v9961 = vsub.f32 %v9740, %v9877
      %v9962 = vsub.f32 %v9744, %v9880
      %v9963 = vsub.f32 %v9746, %v9880
      %v9964 = vsub.f32 %v9748, %v9883
      %v9965 = vsub.f32 %v9750, %v9883
      %v9966 = vsub.f32 %v9754, %v9886
      %v9967 = vsub.f32 %v9756, %v9886
      %v9968 = vsub.f32 %v9758, %v9889
      %v9969 = vsub.f32 %v9760, %v9889
      %v9970 = vsub.f32 %v9764, %v9892
      %v9971 = vsub.f32 %v9766, %v9892
      %v9972 = vsub.f32 %v9768, %v9895
      %v9973 = vsub.f32 %v9770, %v9895
      %v9974 = vsub.f32 %v9774, %v9898
      %v9975 = vsub.f32 %v9776, %v9898
      %v9976 = vsub.f32 %v9778, %v9901
      %v9977 = vsub.f32 %v9780, %v9901
      %v9978 = vsub.f32 %v9784, %v9904
      %v9979 = vsub.f32 %v9786, %v9904
      %v9980 = vsub.f32 %v9788, %v9907
      %v9981 = vsub.f32 %v9790, %v9907
      %v9982 = vsub.f32 %v9794, %v9910
      %v9983 = vsub.f32 %v9796, %v9910
      %v9984 = vsub.f32 %v9798, %v9913
      %v9985 = vsub.f32 %v9800, %v9913
      %v9986 = vsub.f32 %v9804, %v9916
      %v9987 = vsub.f32 %v9806, %v9916
      %v9988 = vsub.f32 %v9808, %v9919
      %v9989 = vsub.f32 %v9810, %v9919
      %v9990 = vsub.f32 %v9814, %v9922
      %v9991 = vsub.f32 %v9816, %v9922
      %v9992 = vsub.f32 %v9818, %v9925
      %v9993 = vsub.f32 %v9820, %v9925
      %v9994 = vsub.f32 %v9824, %v9928
      %v9995 = vsub.f32 %v9826, %v9928
      %v9996 = vsub.f32 %v9828, %v9931
      %v9997 = vsub.f32 %v9830, %v9931
      %v9998 = vsub.f32 %v9834, %v9934
      %v9999 = vsub.f32 %v9836, %v9934
      %v10000 = vsub.f32 %v9838, %v9937
      %v10001 = vsub.f32 %v9840, %v9937
      %v10002 = vmul.f32 %v9938, 1.442695
      %v10003 = vpow.pop %v10002
      %v10004 = vmul.f32 %v9939, 1.442695
      %v10005 = vpow.pop %v10004
      %v10006 = vmul.f32 %v9940, 1.442695
      %v10007 = vpow.pop %v10006
      %v10008 = vmul.f32 %v9941, 1.442695
      %v10009 = vpow.pop %v10008
      %v10010 = vmul.f32 %v9942, 1.442695
      %v10011 = vpow.pop %v10010
      %v10012 = vmul.f32 %v9943, 1.442695
      %v10013 = vpow.pop %v10012
      %v10014 = vmul.f32 %v9944, 1.442695
      %v10015 = vpow.pop %v10014
      %v10016 = vmul.f32 %v9945, 1.442695
      %v10017 = vpow.pop %v10016
      %v10018 = vmul.f32 %v9946, 1.442695
      %v10019 = vpow.pop %v10018
      %v10020 = vmul.f32 %v9947, 1.442695
      %v10021 = vpow.pop %v10020
      %v10022 = vmul.f32 %v9948, 1.442695
      %v10023 = vpow.pop %v10022
      %v10024 = vmul.f32 %v9949, 1.442695
      %v10025 = vpow.pop %v10024
      %v10026 = vmul.f32 %v9950, 1.442695
      %v10027 = vpow.pop %v10026
      %v10028 = vmul.f32 %v9951, 1.442695
      %v10029 = vpow.pop %v10028
      %v10030 = vmul.f32 %v9952, 1.442695
      %v10031 = vpow.pop %v10030
      %v10032 = vmul.f32 %v9953, 1.442695
      %v10033 = vpow.pop %v10032
      %v10034 = vmul.f32 %v9954, 1.442695
      %v10035 = vpow.pop %v10034
      %v10036 = vmul.f32 %v9955, 1.442695
      %v10037 = vpow.pop %v10036
      %v10038 = vmul.f32 %v9956, 1.442695
      %v10039 = vpow.pop %v10038
      %v10040 = vmul.f32 %v9957, 1.442695
      %v10041 = vpow.pop %v10040
      %v10042 = vmul.f32 %v9958, 1.442695
      %v10043 = vpow.pop %v10042
      %v10044 = vmul.f32 %v9959, 1.442695
      %v10045 = vpow.pop %v10044
      %v10046 = vmul.f32 %v9960, 1.442695
      %v10047 = vpow.pop %v10046
      %v10048 = vmul.f32 %v9961, 1.442695
      %v10049 = vpow.pop %v10048
      %v10050 = vmul.f32 %v9962, 1.442695
      %v10051 = vpow.pop %v10050
      %v10052 = vmul.f32 %v9963, 1.442695
      %v10053 = vpow.pop %v10052
      %v10054 = vmul.f32 %v9964, 1.442695
      %v10055 = vpow.pop %v10054
      %v10056 = vmul.f32 %v9965, 1.442695
      %v10057 = vpow.pop %v10056
      %v10058 = vmul.f32 %v9966, 1.442695
      %v10059 = vpow.pop %v10058
      %v10060 = vmul.f32 %v9967, 1.442695
      %v10061 = vpow.pop %v10060
      %v10062 = vmul.f32 %v9968, 1.442695
      %v10063 = vpow.pop %v10062
      %v10064 = vmul.f32 %v9969, 1.442695
      %v10065 = vpow.pop %v10064
      %v10066 = vmul.f32 %v9970, 1.442695
      %v10067 = vpow.pop %v10066
      %v10068 = vmul.f32 %v9971, 1.442695
      %v10069 = vpow.pop %v10068
      %v10070 = vmul.f32 %v9972, 1.442695
      %v10071 = vpow.pop %v10070
      %v10072 = vmul.f32 %v9973, 1.442695
      %v10073 = vpow.pop %v10072
      %v10074 = vmul.f32 %v9974, 1.442695
      %v10075 = vpow.pop %v10074
      %v10076 = vmul.f32 %v9975, 1.442695
      %v10077 = vpow.pop %v10076
      %v10078 = vmul.f32 %v9976, 1.442695
      %v10079 = vpow.pop %v10078
      %v10080 = vmul.f32 %v9977, 1.442695
      %v10081 = vpow.pop %v10080
      %v10082 = vmul.f32 %v9978, 1.442695
      %v10083 = vpow.pop %v10082
      %v10084 = vmul.f32 %v9979, 1.442695
      %v10085 = vpow.pop %v10084
      %v10086 = vmul.f32 %v9980, 1.442695
      %v10087 = vpow.pop %v10086
      %v10088 = vmul.f32 %v9981, 1.442695
      %v10089 = vpow.pop %v10088
      %v10090 = vmul.f32 %v9982, 1.442695
      %v10091 = vpow.pop %v10090
      %v10092 = vmul.f32 %v9983, 1.442695
      %v10093 = vpow.pop %v10092
      %v10094 = vmul.f32 %v9984, 1.442695
      %v10095 = vpow.pop %v10094
      %v10096 = vmul.f32 %v9985, 1.442695
      %v10097 = vpow.pop %v10096
      %v10098 = vmul.f32 %v9986, 1.442695
      %v10099 = vpow.pop %v10098
      %v10100 = vmul.f32 %v9987, 1.442695
      %v10101 = vpow.pop %v10100
      %v10102 = vmul.f32 %v9988, 1.442695
      %v10103 = vpow.pop %v10102
      %v10104 = vmul.f32 %v9989, 1.442695
      %v10105 = vpow.pop %v10104
      %v10106 = vmul.f32 %v9990, 1.442695
      %v10107 = vpow.pop %v10106
      %v10108 = vmul.f32 %v9991, 1.442695
      %v10109 = vpow.pop %v10108
      %v10110 = vmul.f32 %v9992, 1.442695
      %v10111 = vpow.pop %v10110
      %v10112 = vmul.f32 %v9993, 1.442695
      %v10113 = vpow.pop %v10112
      %v10114 = vmul.f32 %v9994, 1.442695
      %v10115 = vpow.pop %v10114
      %v10116 = vmul.f32 %v9995, 1.442695
      %v10117 = vpow.pop %v10116
      %v10118 = vmul.f32 %v9996, 1.442695
      %v10119 = vpow.pop %v10118
      %v10120 = vmul.f32 %v9997, 1.442695
      %v10121 = vpow.pop %v10120
      %v10122 = vmul.f32 %v9998, 1.442695
      %v10123 = vpow.pop %v10122
      %v10124 = vmul.f32 %v9999, 1.442695
      %v10125 = vpow.pop %v10124
      %v10126 = vmul.f32 %v10000, 1.442695
      %v10127 = vpow.pop %v10126
      %v10128 = vmul.f32 %v10001, 1.442695
      %v10129 = vpow.pop %v10128
      %v10130 = vadd.f32 %v10003, %v10005
      %10131 = vadd.xlane.f32.xlu0 %v10130
      %v10132 = vpop.xlane.xlu0 %10131
      %v10133 = vadd.f32 %v10007, %v10009
      %10134 = vadd.xlane.f32.xlu0 %v10133
      %v10135 = vpop.xlane.xlu0 %10134
      %v10136 = vadd.f32 %v10011, %v10013
      %10137 = vadd.xlane.f32.xlu0 %v10136
      %v10138 = vpop.xlane.xlu0 %10137
      %v10139 = vadd.f32 %v10015, %v10017
      %10140 = vadd.xlane.f32.xlu0 %v10139
      %v10141 = vpop.xlane.xlu0 %10140
      %v10142 = vadd.f32 %v10019, %v10021
      %10143 = vadd.xlane.f32.xlu0 %v10142
      %v10144 = vpop.xlane.xlu0 %10143
      %v10145 = vadd.f32 %v10023, %v10025
      %10146 = vadd.xlane.f32.xlu0 %v10145
      %v10147 = vpop.xlane.xlu0 %10146
      %v10148 = vadd.f32 %v10027, %v10029
      %10149 = vadd.xlane.f32.xlu0 %v10148
      %v10150 = vpop.xlane.xlu0 %10149
      %v10151 = vadd.f32 %v10031, %v10033
      %10152 = vadd.xlane.f32.xlu0 %v10151
      %v10153 = vpop.xlane.xlu0 %10152
      %v10154 = vadd.f32 %v10035, %v10037
      %10155 = vadd.xlane.f32.xlu0 %v10154
      %v10156 = vpop.xlane.xlu0 %10155
      %v10157 = vadd.f32 %v10039, %v10041
      %10158 = vadd.xlane.f32.xlu0 %v10157
      %v10159 = vpop.xlane.xlu0 %10158
      %v10160 = vadd.f32 %v10043, %v10045
      %10161 = vadd.xlane.f32.xlu0 %v10160
      %v10162 = vpop.xlane.xlu0 %10161
      %v10163 = vadd.f32 %v10047, %v10049
      %10164 = vadd.xlane.f32.xlu0 %v10163
      %v10165 = vpop.xlane.xlu0 %10164
      %v10166 = vadd.f32 %v10051, %v10053
      %10167 = vadd.xlane.f32.xlu0 %v10166
      %v10168 = vpop.xlane.xlu0 %10167
      %v10169 = vadd.f32 %v10055, %v10057
      %10170 = vadd.xlane.f32.xlu0 %v10169
      %v10171 = vpop.xlane.xlu0 %10170
      %v10172 = vadd.f32 %v10059, %v10061
      %10173 = vadd.xlane.f32.xlu0 %v10172
      %v10174 = vpop.xlane.xlu0 %10173
      %v10175 = vadd.f32 %v10063, %v10065
      %10176 = vadd.xlane.f32.xlu0 %v10175
      %v10177 = vpop.xlane.xlu0 %10176
      %v10178 = vadd.f32 %v10067, %v10069
      %10179 = vadd.xlane.f32.xlu0 %v10178
      %v10180 = vpop.xlane.xlu0 %10179
      %v10181 = vadd.f32 %v10071, %v10073
      %10182 = vadd.xlane.f32.xlu0 %v10181
      %v10183 = vpop.xlane.xlu0 %10182
      %v10184 = vadd.f32 %v10075, %v10077
      %10185 = vadd.xlane.f32.xlu0 %v10184
      %v10186 = vpop.xlane.xlu0 %10185
      %v10187 = vadd.f32 %v10079, %v10081
      %10188 = vadd.xlane.f32.xlu0 %v10187
      %v10189 = vpop.xlane.xlu0 %10188
      %v10190 = vadd.f32 %v10083, %v10085
      %10191 = vadd.xlane.f32.xlu0 %v10190
      %v10192 = vpop.xlane.xlu0 %10191
      %v10193 = vadd.f32 %v10087, %v10089
      %10194 = vadd.xlane.f32.xlu0 %v10193
      %v10195 = vpop.xlane.xlu0 %10194
      %v10196 = vadd.f32 %v10091, %v10093
      %10197 = vadd.xlane.f32.xlu0 %v10196
      %v10198 = vpop.xlane.xlu0 %10197
      %v10199 = vadd.f32 %v10095, %v10097
      %10200 = vadd.xlane.f32.xlu0 %v10199
      %v10201 = vpop.xlane.xlu0 %10200
      %v10202 = vadd.f32 %v10099, %v10101
      %10203 = vadd.xlane.f32.xlu0 %v10202
      %v10204 = vpop.xlane.xlu0 %10203
      %v10205 = vadd.f32 %v10103, %v10105
      %10206 = vadd.xlane.f32.xlu0 %v10205
      %v10207 = vpop.xlane.xlu0 %10206
      %v10208 = vadd.f32 %v10107, %v10109
      %10209 = vadd.xlane.f32.xlu0 %v10208
      %v10210 = vpop.xlane.xlu0 %10209
      %v10211 = vadd.f32 %v10111, %v10113
      %10212 = vadd.xlane.f32.xlu0 %v10211
      %v10213 = vpop.xlane.xlu0 %10212
      %v10214 = vadd.f32 %v10115, %v10117
      %10215 = vadd.xlane.f32.xlu0 %v10214
      %v10216 = vpop.xlane.xlu0 %10215
      %v10217 = vadd.f32 %v10119, %v10121
      %10218 = vadd.xlane.f32.xlu0 %v10217
      %v10219 = vpop.xlane.xlu0 %10218
      %v10220 = vadd.f32 %v10123, %v10125
      %10221 = vadd.xlane.f32.xlu0 %v10220
      %v10222 = vpop.xlane.xlu0 %10221
      %v10223 = vadd.f32 %v10127, %v10129
      %10224 = vadd.xlane.f32.xlu0 %v10223
      %v10225 = vpop.xlane.xlu0 %10224
      %v10226 = vrcp.pop %v10132
      %v10227 = vrcp.pop %v10135
      %v10228 = vrcp.pop %v10138
      %v10229 = vrcp.pop %v10141
      %v10230 = vrcp.pop %v10144
      %v10231 = vrcp.pop %v10147
      %v10232 = vrcp.pop %v10150
      %v10233 = vrcp.pop %v10153
      %v10234 = vrcp.pop %v10156
      %v10235 = vrcp.pop %v10159
      %v10236 = vrcp.pop %v10162
      %v10237 = vrcp.pop %v10165
      %v10238 = vrcp.pop %v10168
      %v10239 = vrcp.pop %v10171
      %v10240 = vrcp.pop %v10174
      %v10241 = vrcp.pop %v10177
      %v10242 = vrcp.pop %v10180
      %v10243 = vrcp.pop %v10183
      %v10244 = vrcp.pop %v10186
      %v10245 = vrcp.pop %v10189
      %v10246 = vrcp.pop %v10192
      %v10247 = vrcp.pop %v10195
      %v10248 = vrcp.pop %v10198
      %v10249 = vrcp.pop %v10201
      %v10250 = vrcp.pop %v10204
      %v10251 = vrcp.pop %v10207
      %v10252 = vrcp.pop %v10210
      %v10253 = vrcp.pop %v10213
      %v10254 = vrcp.pop %v10216
      %v10255 = vrcp.pop %v10219
      %v10256 = vrcp.pop %v10222
      %v10257 = vrcp.pop %v10225
      %v10258 = vmul.f32 %v10003, %v10226
      %v10259 = vmul.f32 %v10005, %v10226
      %v10260 = vmul.f32 %v10007, %v10227
      %v10261 = vmul.f32 %v10009, %v10227
      %v10262 = vmul.f32 %v10011, %v10228
      %v10263 = vmul.f32 %v10013, %v10228
      %v10264 = vmul.f32 %v10015, %v10229
      %v10265 = vmul.f32 %v10017, %v10229
      %v10266 = vmul.f32 %v10019, %v10230
      %v10267 = vmul.f32 %v10021, %v10230
      %v10268 = vmul.f32 %v10023, %v10231
      %v10269 = vmul.f32 %v10025, %v10231
      %v10270 = vmul.f32 %v10027, %v10232
      %v10271 = vmul.f32 %v10029, %v10232
      %v10272 = vmul.f32 %v10031, %v10233
      %v10273 = vmul.f32 %v10033, %v10233
      %v10274 = vmul.f32 %v10035, %v10234
      %v10275 = vmul.f32 %v10037, %v10234
      %v10276 = vmul.f32 %v10039, %v10235
      %v10277 = vmul.f32 %v10041, %v10235
      %v10278 = vmul.f32 %v10043, %v10236
      %v10279 = vmul.f32 %v10045, %v10236
      %v10280 = vmul.f32 %v10047, %v10237
      %v10281 = vmul.f32 %v10049, %v10237
      %v10282 = vmul.f32 %v10051, %v10238
      %v10283 = vmul.f32 %v10053, %v10238
      %v10284 = vmul.f32 %v10055, %v10239
      %v10285 = vmul.f32 %v10057, %v10239
      %v10286 = vmul.f32 %v10059, %v10240
      %v10287 = vmul.f32 %v10061, %v10240
      %v10288 = vmul.f32 %v10063, %v10241
      %v10289 = vmul.f32 %v10065, %v10241
      %v10290 = vmul.f32 %v10067, %v10242
      %v10291 = vmul.f32 %v10069, %v10242
      %v10292 = vmul.f32 %v10071, %v10243
      %v10293 = vmul.f32 %v10073, %v10243
      %v10294 = vmul.f32 %v10075, %v10244
      %v10295 = vmul.f32 %v10077, %v10244
      %v10296 = vmul.f32 %v10079, %v10245
      %v10297 = vmul.f32 %v10081, %v10245
      %v10298 = vmul.f32 %v10083, %v10246
      %v10299 = vmul.f32 %v10085, %v10246
      %v10300 = vmul.f32 %v10087, %v10247
      %v10301 = vmul.f32 %v10089, %v10247
      %v10302 = vmul.f32 %v10091, %v10248
      %v10303 = vmul.f32 %v10093, %v10248
      %v10304 = vmul.f32 %v10095, %v10249
      %v10305 = vmul.f32 %v10097, %v10249
      %v10306 = vmul.f32 %v10099, %v10250
      %v10307 = vmul.f32 %v10101, %v10250
      %v10308 = vmul.f32 %v10103, %v10251
      %v10309 = vmul.f32 %v10105, %v10251
      %v10310 = vmul.f32 %v10107, %v10252
      %v10311 = vmul.f32 %v10109, %v10252
      %v10312 = vmul.f32 %v10111, %v10253
      %v10313 = vmul.f32 %v10113, %v10253
      %v10314 = vmul.f32 %v10115, %v10254
      %v10315 = vmul.f32 %v10117, %v10254
      %v10316 = vmul.f32 %v10119, %v10255
      %v10317 = vmul.f32 %v10121, %v10255
      %v10318 = vmul.f32 %v10123, %v10256
      %v10319 = vmul.f32 %v10125, %v10256
      %v10320 = vmul.f32 %v10127, %v10257
      %v10321 = vmul.f32 %v10129, %v10257
      %v10322 = vpack.c.bf16 %v10260, %v10258
      %v10323 = vpack.c.bf16 %v10261, %v10259
      %v10324 = vpack.c.bf16 %v10264, %v10262
      %v10325 = vpack.c.bf16 %v10265, %v10263
      %v10326 = vpack.c.bf16 %v10268, %v10266
      %v10327 = vpack.c.bf16 %v10269, %v10267
      %v10328 = vpack.c.bf16 %v10272, %v10270
      %v10329 = vpack.c.bf16 %v10273, %v10271
      %v10330 = vpack.c.bf16 %v10276, %v10274
      %v10331 = vpack.c.bf16 %v10277, %v10275
      %v10332 = vpack.c.bf16 %v10280, %v10278
      %v10333 = vpack.c.bf16 %v10281, %v10279
      %v10334 = vpack.c.bf16 %v10284, %v10282
      %v10335 = vpack.c.bf16 %v10285, %v10283
      %v10336 = vpack.c.bf16 %v10288, %v10286
      %v10337 = vpack.c.bf16 %v10289, %v10287
      %v10338 = vpack.c.bf16 %v10292, %v10290
      %v10339 = vpack.c.bf16 %v10293, %v10291
      %v10340 = vpack.c.bf16 %v10296, %v10294
      %v10341 = vpack.c.bf16 %v10297, %v10295
      %v10342 = vpack.c.bf16 %v10300, %v10298
      %v10343 = vpack.c.bf16 %v10301, %v10299
      %v10344 = vpack.c.bf16 %v10304, %v10302
      %v10345 = vpack.c.bf16 %v10305, %v10303
      %v10346 = vpack.c.bf16 %v10308, %v10306
      %v10347 = vpack.c.bf16 %v10309, %v10307
      %v10348 = vpack.c.bf16 %v10312, %v10310
      %v10349 = vpack.c.bf16 %v10313, %v10311
      %v10350 = vpack.c.bf16 %v10316, %v10314
      %v10351 = vpack.c.bf16 %v10317, %v10315
      %v10352 = vpack.c.bf16 %v10320, %v10318
      %v10353 = vpack.c.bf16 %v10321, %v10319
      %10354 = vrot.lane.b32.xlu0 %v1312, 40
      %v10355 = vpop.permute.xlu0 %10354
      %10356 = vrot.lane.b32.xlu0 %v1313, 40
      %v10357 = vpop.permute.xlu0 %10356
      %10358 = vrot.lane.b32.xlu0 %v1314, 40
      %v10359 = vpop.permute.xlu0 %10358
      %10360 = vrot.lane.b32.xlu0 %v1315, 40
      %v10361 = vpop.permute.xlu0 %10360
      %10362 = vrot.lane.b32.xlu0 %v1316, 40
      %v10363 = vpop.permute.xlu0 %10362
      %10364 = vrot.lane.b32.xlu0 %v1317, 40
      %v10365 = vpop.permute.xlu0 %10364
      %10366 = vrot.lane.b32.xlu0 %v1318, 40
      %v10367 = vpop.permute.xlu0 %10366
      %10368 = vrot.lane.b32.xlu0 %v1319, 40
      %v10369 = vpop.permute.xlu0 %10368
      %10370 = vrot.lane.b32.xlu0 %v1320, 40
      %v10371 = vpop.permute.xlu0 %10370
      %10372 = vrot.lane.b32.xlu0 %v1321, 40
      %v10373 = vpop.permute.xlu0 %10372
      %10374 = vrot.lane.b32.xlu0 %v1322, 40
      %v10375 = vpop.permute.xlu0 %10374
      %10376 = vrot.lane.b32.xlu0 %v1323, 40
      %v10377 = vpop.permute.xlu0 %10376
      %10378 = vrot.lane.b32.xlu0 %v1324, 40
      %v10379 = vpop.permute.xlu0 %10378
      %10380 = vrot.lane.b32.xlu0 %v1325, 40
      %v10381 = vpop.permute.xlu0 %10380
      %10382 = vrot.lane.b32.xlu0 %v1326, 40
      %v10383 = vpop.permute.xlu0 %10382
      %10384 = vrot.lane.b32.xlu0 %v1327, 40
      %v10385 = vpop.permute.xlu0 %10384
      %10402 = vmatprep.subr.bf16.mxu0 0
      %10403 = vmatpush1.bf16.msra.mxu0 %v10369
      %10404 = vmatprep.subr.bf16.mxu0 0
      %10405 = vmatpush1.bf16.msra.mxu0 %v10367
      %10406 = vmatprep.subr.bf16.mxu0 0
      %10407 = vmatpush1.bf16.msra.mxu0 %v10365
      %10408 = vmatprep.subr.bf16.mxu0 0
      %10409 = vmatpush1.bf16.msra.mxu0 %v10363
      %10410 = vmatprep.subr.bf16.mxu0 0
      %10411 = vmatpush1.bf16.msra.mxu0 %v10361
      %10412 = vmatprep.subr.bf16.mxu0 0
      %10413 = vmatpush1.bf16.msra.mxu0 %v10359
      %10414 = vmatprep.subr.bf16.mxu0 0
      %10415 = vmatpush1.bf16.msra.mxu0 %v10357
      %10416 = vmatprep.subr.bf16.mxu0 0
      %10417 = vmatpush1.bf16.msra.mxu0 %v10355
      %10418 = vmatprep.subr.bf16.mxu0 0
      %10419 = vmatpush2.bf16.msra.mxu0 %v10385
      %10420 = vmatprep.subr.bf16.mxu0 0
      %10421 = vmatpush2.bf16.msra.mxu0 %v10383
      %10422 = vmatprep.subr.bf16.mxu0 0
      %10423 = vmatpush2.bf16.msra.mxu0 %v10381
      %10424 = vmatprep.subr.bf16.mxu0 0
      %10425 = vmatpush2.bf16.msra.mxu0 %v10379
      %10426 = vmatprep.subr.bf16.mxu0 0
      %10427 = vmatpush2.bf16.msra.mxu0 %v10377
      %10428 = vmatprep.subr.bf16.mxu0 0
      %10429 = vmatpush2.bf16.msra.mxu0 %v10375
      %10430 = vmatprep.subr.bf16.mxu0 0
      %10431 = vmatpush2.bf16.msra.mxu0 %v10373
      %10432 = vmatprep.subr.bf16.mxu0 0
      %10433 = vmatpush2.bf16.msra.mxu0 %v10371
      %10434 = vmatprep.mubr.bf16.mxu0 %v10323
      %10435 = vmatmul.mubr.bf16.gmra.mxu0 %v10322
      %v10436 = vpop.f32.mrf.mxu0
      %v10437 = vadd.f32 0.0, %v10436
      %v10438 = vpop.f32.mrf.mxu0
      %v10439 = vpop.f32.mrf.mxu0
      %v10440 = vadd.f32 0.0, %v10439
      %v10441 = vpop.f32.mrf.mxu0
      %10442 = vmatprep.mubr.bf16.mxu0 %v10325
      %10443 = vmatmul.mubr.bf16.gmra.mxu0 %v10324
      %v10444 = vpop.f32.mrf.mxu0
      %v10445 = vadd.f32 0.0, %v10444
      %v10446 = vpop.f32.mrf.mxu0
      %v10447 = vpop.f32.mrf.mxu0
      %v10448 = vadd.f32 0.0, %v10447
      %v10449 = vpop.f32.mrf.mxu0
      %10450 = vmatprep.mubr.bf16.mxu0 %v10327
      %10451 = vmatmul.mubr.bf16.gmra.mxu0 %v10326
      %v10452 = vpop.f32.mrf.mxu0
      %v10453 = vadd.f32 0.0, %v10452
      %v10454 = vpop.f32.mrf.mxu0
      %v10455 = vpop.f32.mrf.mxu0
      %v10456 = vadd.f32 0.0, %v10455
      %v10457 = vpop.f32.mrf.mxu0
      %10458 = vmatprep.mubr.bf16.mxu0 %v10329
      %10459 = vmatmul.mubr.bf16.gmra.mxu0 %v10328
      %v10460 = vpop.f32.mrf.mxu0
      %v10461 = vadd.f32 0.0, %v10460
      %v10462 = vpop.f32.mrf.mxu0
      %v10463 = vpop.f32.mrf.mxu0
      %v10464 = vadd.f32 0.0, %v10463
      %v10465 = vpop.f32.mrf.mxu0
      %10466 = vmatprep.mubr.bf16.mxu0 %v10331
      %10467 = vmatmul.mubr.bf16.gmra.mxu0 %v10330
      %v10468 = vpop.f32.mrf.mxu0
      %v10469 = vadd.f32 0.0, %v10468
      %v10470 = vpop.f32.mrf.mxu0
      %v10471 = vpop.f32.mrf.mxu0
      %v10472 = vadd.f32 0.0, %v10471
      %v10473 = vpop.f32.mrf.mxu0
      %10474 = vmatprep.mubr.bf16.mxu0 %v10333
      %10475 = vmatmul.mubr.bf16.gmra.mxu0 %v10332
      %v10476 = vpop.f32.mrf.mxu0
      %v10477 = vadd.f32 0.0, %v10476
      %v10478 = vpop.f32.mrf.mxu0
      %v10479 = vpop.f32.mrf.mxu0
      %v10480 = vadd.f32 0.0, %v10479
      %v10481 = vpop.f32.mrf.mxu0
      %10482 = vmatprep.mubr.bf16.mxu0 %v10335
      %10483 = vmatmul.mubr.bf16.gmra.mxu0 %v10334
      %v10484 = vpop.f32.mrf.mxu0
      %v10485 = vadd.f32 0.0, %v10484
      %v10486 = vpop.f32.mrf.mxu0
      %v10487 = vpop.f32.mrf.mxu0
      %v10488 = vadd.f32 0.0, %v10487
      %v10489 = vpop.f32.mrf.mxu0
      %10490 = vmatprep.mubr.bf16.mxu0 %v10337
      %10491 = vmatmul.mubr.bf16.gmra.mxu0 %v10336
      %v10492 = vpop.f32.mrf.mxu0
      %v10493 = vadd.f32 0.0, %v10492
      %v10494 = vpop.f32.mrf.mxu0
      %v10495 = vpop.f32.mrf.mxu0
      %v10496 = vadd.f32 0.0, %v10495
      %v10497 = vpop.f32.mrf.mxu0
      %10498 = vmatprep.mubr.bf16.mxu0 %v10339
      %10499 = vmatmul.mubr.bf16.gmra.mxu0 %v10338
      %v10500 = vpop.f32.mrf.mxu0
      %v10501 = vadd.f32 0.0, %v10500
      %v10502 = vpop.f32.mrf.mxu0
      %v10503 = vpop.f32.mrf.mxu0
      %v10504 = vadd.f32 0.0, %v10503
      %v10505 = vpop.f32.mrf.mxu0
      %10506 = vmatprep.mubr.bf16.mxu0 %v10341
      %10507 = vmatmul.mubr.bf16.gmra.mxu0 %v10340
      %v10508 = vpop.f32.mrf.mxu0
      %v10509 = vadd.f32 0.0, %v10508
      %v10510 = vpop.f32.mrf.mxu0
      %v10511 = vpop.f32.mrf.mxu0
      %v10512 = vadd.f32 0.0, %v10511
      %v10513 = vpop.f32.mrf.mxu0
      %10514 = vmatprep.mubr.bf16.mxu0 %v10343
      %10515 = vmatmul.mubr.bf16.gmra.mxu0 %v10342
      %v10516 = vpop.f32.mrf.mxu0
      %v10517 = vadd.f32 0.0, %v10516
      %v10518 = vpop.f32.mrf.mxu0
      %v10519 = vpop.f32.mrf.mxu0
      %v10520 = vadd.f32 0.0, %v10519
      %v10521 = vpop.f32.mrf.mxu0
      %10522 = vmatprep.mubr.bf16.mxu0 %v10345
      %10523 = vmatmul.mubr.bf16.gmra.mxu0 %v10344
      %v10524 = vpop.f32.mrf.mxu0
      %v10525 = vadd.f32 0.0, %v10524
      %v10526 = vpop.f32.mrf.mxu0
      %v10527 = vpop.f32.mrf.mxu0
      %v10528 = vadd.f32 0.0, %v10527
      %v10529 = vpop.f32.mrf.mxu0
      %10530 = vmatprep.mubr.bf16.mxu0 %v10347
      %10531 = vmatmul.mubr.bf16.gmra.mxu0 %v10346
      %v10532 = vpop.f32.mrf.mxu0
      %v10533 = vadd.f32 0.0, %v10532
      %v10534 = vpop.f32.mrf.mxu0
      %v10535 = vpop.f32.mrf.mxu0
      %v10536 = vadd.f32 0.0, %v10535
      %v10537 = vpop.f32.mrf.mxu0
      %10538 = vmatprep.mubr.bf16.mxu0 %v10349
      %10539 = vmatmul.mubr.bf16.gmra.mxu0 %v10348
      %v10540 = vpop.f32.mrf.mxu0
      %v10541 = vadd.f32 0.0, %v10540
      %v10542 = vpop.f32.mrf.mxu0
      %v10543 = vpop.f32.mrf.mxu0
      %v10544 = vadd.f32 0.0, %v10543
      %v10545 = vpop.f32.mrf.mxu0
      %10546 = vmatprep.mubr.bf16.mxu0 %v10351
      %10547 = vmatmul.mubr.bf16.gmra.mxu0 %v10350
      %v10548 = vpop.f32.mrf.mxu0
      %v10549 = vadd.f32 0.0, %v10548
      %v10550 = vpop.f32.mrf.mxu0
      %v10551 = vpop.f32.mrf.mxu0
      %v10552 = vadd.f32 0.0, %v10551
      %v10553 = vpop.f32.mrf.mxu0
      %10554 = vmatprep.mubr.bf16.mxu0 %v10353
      %10555 = vmatmul.mubr.bf16.gmra.mxu0 %v10352
      %v10556 = vpop.f32.mrf.mxu0
      %v10557 = vadd.f32 0.0, %v10556
      %v10558 = vpop.f32.mrf.mxu0
      %v10559 = vpop.f32.mrf.mxu0
      %v10560 = vadd.f32 0.0, %v10559
      %v10561 = vpop.f32.mrf.mxu0
      %10562 = vdwg.mxu0
      %v10563 = vpack.c.bf16 %v10440, %v10437
      %v10564 = vpack.c.bf16 %v10448, %v10445
      %v10565 = vpack.c.bf16 %v10456, %v10453
      %v10566 = vpack.c.bf16 %v10464, %v10461
      %v10567 = vpack.c.bf16 %v10472, %v10469
      %v10568 = vpack.c.bf16 %v10480, %v10477
      %v10569 = vpack.c.bf16 %v10488, %v10485
      %v10570 = vpack.c.bf16 %v10496, %v10493
      %v10571 = vpack.c.bf16 %v10504, %v10501
      %v10572 = vpack.c.bf16 %v10512, %v10509
      %v10573 = vpack.c.bf16 %v10520, %v10517
      %v10574 = vpack.c.bf16 %v10528, %v10525
      %v10575 = vpack.c.bf16 %v10536, %v10533
      %v10576 = vpack.c.bf16 %v10544, %v10541
      %v10577 = vpack.c.bf16 %v10552, %v10549
      %v10578 = vpack.c.bf16 %v10560, %v10557
      %s10579 = scalar_lea.vmem %s425, 12
      %v10580 = vld [vmem:[%s10579] sm:$0x3]
      %v10582 = vsel %vm1584, %v10563, 0
      %v10585 = vsel %vm1584, %v10564, 0
      %v10588 = vsel %vm1584, %v10565, 0
      %v10591 = vsel %vm1584, %v10566, 0
      %v10594 = vsel %vm1584, %v10567, 0
      %v10597 = vsel %vm1584, %v10568, 0
      %v10600 = vsel %vm1584, %v10569, 0
      %v10603 = vsel %vm1584, %v10570, 0
      %v10606 = vsel %vm1584, %v10571, 0
      %v10609 = vsel %vm1584, %v10572, 0
      %v10612 = vsel %vm1584, %v10573, 0
      %v10615 = vsel %vm1584, %v10574, 0
      %v10618 = vsel %vm1584, %v10575, 0
      %v10621 = vsel %vm1584, %v10576, 0
      %v10624 = vsel %vm1584, %v10577, 0
      %v10627 = vsel %vm1584, %v10578, 0
      %v10630 = vsel %vm3768, %v10580, 0
      %10632 = vmatprep.subr.bf16.mxu0 0
      %10633 = vmatpush1.bf16.msra.mxu0 0
      %10634 = vmatprep.subr.bf16.mxu0 0
      %10635 = vmatpush1.bf16.msra.mxu0 0
      %10636 = vmatprep.subr.bf16.mxu0 0
      %10637 = vmatpush1.bf16.msra.mxu0 0
      %10638 = vmatprep.subr.bf16.mxu0 0
      %10639 = vmatpush1.bf16.msra.mxu0 0
      %10640 = vmatprep.subr.bf16.mxu0 0
      %10641 = vmatpush1.bf16.msra.mxu0 0
      %10642 = vmatprep.subr.bf16.mxu0 0
      %10643 = vmatpush1.bf16.msra.mxu0 0
      %10644 = vmatprep.subr.bf16.mxu0 0
      %10645 = vmatpush1.bf16.msra.mxu0 0
      %10646 = vmatprep.subr.bf16.mxu0 0
      %10647 = vmatpush1.bf16.msra.mxu0 %v10630
      %10648 = vmatprep.subr.bf16.mxu0 0
      %10649 = vmatpush2.bf16.msra.mxu0 0
      %10650 = vmatprep.subr.bf16.mxu0 0
      %10651 = vmatpush2.bf16.msra.mxu0 0
      %10652 = vmatprep.subr.bf16.mxu0 0
      %10653 = vmatpush2.bf16.msra.mxu0 0
      %10654 = vmatprep.subr.bf16.mxu0 0
      %10655 = vmatpush2.bf16.msra.mxu0 0
      %10656 = vmatprep.subr.bf16.mxu0 0
      %10657 = vmatpush2.bf16.msra.mxu0 0
      %10658 = vmatprep.subr.bf16.mxu0 0
      %10659 = vmatpush2.bf16.msra.mxu0 0
      %10660 = vmatprep.subr.bf16.mxu0 0
      %10661 = vmatpush2.bf16.msra.mxu0 0
      %10662 = vmatprep.subr.bf16.mxu0 0
      %10663 = vmatpush2.bf16.msra.mxu0 0
      %10664 = vmatprep.mubr.bf16.mxu0 0
      %10665 = vmatmul.mubr.bf16.gmra.mxu0 %v10582
      %v10666 = vpop.f32.mrf.mxu0
      %v10667 = vadd.f32 0.0, %v10666
      %v10668 = vpop.f32.mrf.mxu0
      %v10669 = vpop.f32.mrf.mxu0
      %v10670 = vadd.f32 0.0, %v10669
      %v10671 = vpop.f32.mrf.mxu0
      %10672 = vmatprep.mubr.bf16.mxu0 0
      %10673 = vmatmul.mubr.bf16.gmra.mxu0 %v10585
      %v10674 = vpop.f32.mrf.mxu0
      %v10675 = vadd.f32 0.0, %v10674
      %v10676 = vpop.f32.mrf.mxu0
      %v10677 = vpop.f32.mrf.mxu0
      %v10678 = vadd.f32 0.0, %v10677
      %v10679 = vpop.f32.mrf.mxu0
      %10680 = vmatprep.mubr.bf16.mxu0 0
      %10681 = vmatmul.mubr.bf16.gmra.mxu0 %v10588
      %v10682 = vpop.f32.mrf.mxu0
      %v10683 = vadd.f32 0.0, %v10682
      %v10684 = vpop.f32.mrf.mxu0
      %v10685 = vpop.f32.mrf.mxu0
      %v10686 = vadd.f32 0.0, %v10685
      %v10687 = vpop.f32.mrf.mxu0
      %10688 = vmatprep.mubr.bf16.mxu0 0
      %10689 = vmatmul.mubr.bf16.gmra.mxu0 %v10591
      %v10690 = vpop.f32.mrf.mxu0
      %v10691 = vadd.f32 0.0, %v10690
      %v10692 = vpop.f32.mrf.mxu0
      %v10693 = vpop.f32.mrf.mxu0
      %v10694 = vadd.f32 0.0, %v10693
      %v10695 = vpop.f32.mrf.mxu0
      %10696 = vmatprep.mubr.bf16.mxu0 0
      %10697 = vmatmul.mubr.bf16.gmra.mxu0 %v10594
      %v10698 = vpop.f32.mrf.mxu0
      %v10699 = vadd.f32 0.0, %v10698
      %v10700 = vpop.f32.mrf.mxu0
      %v10701 = vpop.f32.mrf.mxu0
      %v10702 = vadd.f32 0.0, %v10701
      %v10703 = vpop.f32.mrf.mxu0
      %10704 = vmatprep.mubr.bf16.mxu0 0
      %10705 = vmatmul.mubr.bf16.gmra.mxu0 %v10597
      %v10706 = vpop.f32.mrf.mxu0
      %v10707 = vadd.f32 0.0, %v10706
      %v10708 = vpop.f32.mrf.mxu0
      %v10709 = vpop.f32.mrf.mxu0
      %v10710 = vadd.f32 0.0, %v10709
      %v10711 = vpop.f32.mrf.mxu0
      %10712 = vmatprep.mubr.bf16.mxu0 0
      %10713 = vmatmul.mubr.bf16.gmra.mxu0 %v10600
      %v10714 = vpop.f32.mrf.mxu0
      %v10715 = vadd.f32 0.0, %v10714
      %v10716 = vpop.f32.mrf.mxu0
      %v10717 = vpop.f32.mrf.mxu0
      %v10718 = vadd.f32 0.0, %v10717
      %v10719 = vpop.f32.mrf.mxu0
      %10720 = vmatprep.mubr.bf16.mxu0 0
      %10721 = vmatmul.mubr.bf16.gmra.mxu0 %v10603
      %v10722 = vpop.f32.mrf.mxu0
      %v10723 = vadd.f32 0.0, %v10722
      %v10724 = vpop.f32.mrf.mxu0
      %v10725 = vpop.f32.mrf.mxu0
      %v10726 = vadd.f32 0.0, %v10725
      %v10727 = vpop.f32.mrf.mxu0
      %10728 = vmatprep.mubr.bf16.mxu0 0
      %10729 = vmatmul.mubr.bf16.gmra.mxu0 %v10606
      %v10730 = vpop.f32.mrf.mxu0
      %v10731 = vadd.f32 0.0, %v10730
      %v10732 = vpop.f32.mrf.mxu0
      %v10733 = vpop.f32.mrf.mxu0
      %v10734 = vadd.f32 0.0, %v10733
      %v10735 = vpop.f32.mrf.mxu0
      %10736 = vmatprep.mubr.bf16.mxu0 0
      %10737 = vmatmul.mubr.bf16.gmra.mxu0 %v10609
      %v10738 = vpop.f32.mrf.mxu0
      %v10739 = vadd.f32 0.0, %v10738
      %v10740 = vpop.f32.mrf.mxu0
      %v10741 = vpop.f32.mrf.mxu0
      %v10742 = vadd.f32 0.0, %v10741
      %v10743 = vpop.f32.mrf.mxu0
      %10744 = vmatprep.mubr.bf16.mxu0 0
      %10745 = vmatmul.mubr.bf16.gmra.mxu0 %v10612
      %v10746 = vpop.f32.mrf.mxu0
      %v10747 = vadd.f32 0.0, %v10746
      %v10748 = vpop.f32.mrf.mxu0
      %v10749 = vpop.f32.mrf.mxu0
      %v10750 = vadd.f32 0.0, %v10749
      %v10751 = vpop.f32.mrf.mxu0
      %10752 = vmatprep.mubr.bf16.mxu0 0
      %10753 = vmatmul.mubr.bf16.gmra.mxu0 %v10615
      %v10754 = vpop.f32.mrf.mxu0
      %v10755 = vadd.f32 0.0, %v10754
      %v10756 = vpop.f32.mrf.mxu0
      %v10757 = vpop.f32.mrf.mxu0
      %v10758 = vadd.f32 0.0, %v10757
      %v10759 = vpop.f32.mrf.mxu0
      %10760 = vmatprep.mubr.bf16.mxu0 0
      %10761 = vmatmul.mubr.bf16.gmra.mxu0 %v10618
      %v10762 = vpop.f32.mrf.mxu0
      %v10763 = vadd.f32 0.0, %v10762
      %v10764 = vpop.f32.mrf.mxu0
      %v10765 = vpop.f32.mrf.mxu0
      %v10766 = vadd.f32 0.0, %v10765
      %v10767 = vpop.f32.mrf.mxu0
      %10768 = vmatprep.mubr.bf16.mxu0 0
      %10769 = vmatmul.mubr.bf16.gmra.mxu0 %v10621
      %v10770 = vpop.f32.mrf.mxu0
      %v10771 = vadd.f32 0.0, %v10770
      %v10772 = vpop.f32.mrf.mxu0
      %v10773 = vpop.f32.mrf.mxu0
      %v10774 = vadd.f32 0.0, %v10773
      %v10775 = vpop.f32.mrf.mxu0
      %10776 = vmatprep.mubr.bf16.mxu0 0
      %10777 = vmatmul.mubr.bf16.gmra.mxu0 %v10624
      %v10778 = vpop.f32.mrf.mxu0
      %v10779 = vadd.f32 0.0, %v10778
      %v10780 = vpop.f32.mrf.mxu0
      %v10781 = vpop.f32.mrf.mxu0
      %v10782 = vadd.f32 0.0, %v10781
      %v10783 = vpop.f32.mrf.mxu0
      %10784 = vmatprep.mubr.bf16.mxu0 0
      %10785 = vmatmul.mubr.bf16.gmra.mxu0 %v10627
      %v10786 = vpop.f32.mrf.mxu0
      %v10787 = vadd.f32 0.0, %v10786
      %v10788 = vpop.f32.mrf.mxu0
      %v10789 = vpop.f32.mrf.mxu0
      %v10790 = vadd.f32 0.0, %v10789
      %v10791 = vpop.f32.mrf.mxu0
      %10792 = vdwg.mxu0
      %v10793 = vadd.f32 %v9457, %v10667
      %v10794 = vadd.f32 %v9458, %v10670
      %v10795 = vadd.f32 %v9459, %v10675
      %v10796 = vadd.f32 %v9460, %v10678
      %v10797 = vadd.f32 %v9461, %v10683
      %v10798 = vadd.f32 %v9462, %v10686
      %v10799 = vadd.f32 %v9463, %v10691
      %v10800 = vadd.f32 %v9464, %v10694
      %v10801 = vadd.f32 %v9465, %v10699
      %v10802 = vadd.f32 %v9466, %v10702
      %v10803 = vadd.f32 %v9467, %v10707
      %v10804 = vadd.f32 %v9468, %v10710
      %v10805 = vadd.f32 %v9469, %v10715
      %v10806 = vadd.f32 %v9470, %v10718
      %v10807 = vadd.f32 %v9471, %v10723
      %v10808 = vadd.f32 %v9472, %v10726
      %v10809 = vadd.f32 %v9473, %v10731
      %v10810 = vadd.f32 %v9474, %v10734
      %v10811 = vadd.f32 %v9475, %v10739
      %v10812 = vadd.f32 %v9476, %v10742
      %v10813 = vadd.f32 %v9477, %v10747
      %v10814 = vadd.f32 %v9478, %v10750
      %v10815 = vadd.f32 %v9479, %v10755
      %v10816 = vadd.f32 %v9480, %v10758
      %v10817 = vadd.f32 %v9481, %v10763
      %v10818 = vadd.f32 %v9482, %v10766
      %v10819 = vadd.f32 %v9483, %v10771
      %v10820 = vadd.f32 %v9484, %v10774
      %v10821 = vadd.f32 %v9485, %v10779
      %v10822 = vadd.f32 %v9486, %v10782
      %v10823 = vadd.f32 %v9487, %v10787
      %v10824 = vadd.f32 %v9488, %v10790
      %10825 = vrot.lane.b32.xlu0 %v1312, 100
      %v10826 = vpop.permute.xlu0 %10825
      %10827 = vrot.lane.b32.xlu0 %v1313, 100
      %v10828 = vpop.permute.xlu0 %10827
      %10829 = vrot.lane.b32.xlu0 %v1314, 100
      %v10830 = vpop.permute.xlu0 %10829
      %10831 = vrot.lane.b32.xlu0 %v1315, 100
      %v10832 = vpop.permute.xlu0 %10831
      %10833 = vrot.lane.b32.xlu0 %v1316, 100
      %v10834 = vpop.permute.xlu0 %10833
      %10835 = vrot.lane.b32.xlu0 %v1317, 100
      %v10836 = vpop.permute.xlu0 %10835
      %10837 = vrot.lane.b32.xlu0 %v1318, 100
      %v10838 = vpop.permute.xlu0 %10837
      %10839 = vrot.lane.b32.xlu0 %v1319, 100
      %v10840 = vpop.permute.xlu0 %10839
      %10841 = vrot.lane.b32.xlu0 %v1320, 100
      %v10842 = vpop.permute.xlu0 %10841
      %10843 = vrot.lane.b32.xlu0 %v1321, 100
      %v10844 = vpop.permute.xlu0 %10843
      %10845 = vrot.lane.b32.xlu0 %v1322, 100
      %v10846 = vpop.permute.xlu0 %10845
      %10847 = vrot.lane.b32.xlu0 %v1323, 100
      %v10848 = vpop.permute.xlu0 %10847
      %10849 = vrot.lane.b32.xlu0 %v1324, 100
      %v10850 = vpop.permute.xlu0 %10849
      %10851 = vrot.lane.b32.xlu0 %v1325, 100
      %v10852 = vpop.permute.xlu0 %10851
      %10853 = vrot.lane.b32.xlu0 %v1326, 100
      %v10854 = vpop.permute.xlu0 %10853
      %10855 = vrot.lane.b32.xlu0 %v1327, 100
      %v10856 = vpop.permute.xlu0 %10855
      %10857 = vrot.lane.b32.xlu0 %v1520, 68
      %v10858 = vpop.permute.xlu0 %10857
      %10859 = vrot.lane.b32.xlu0 %v1521, 68
      %v10860 = vpop.permute.xlu0 %10859
      %10861 = vrot.lane.b32.xlu0 %v1522, 68
      %v10862 = vpop.permute.xlu0 %10861
      %10863 = vrot.lane.b32.xlu0 %v1523, 68
      %v10864 = vpop.permute.xlu0 %10863
      %10865 = vrot.lane.b32.xlu0 %v1524, 68
      %v10866 = vpop.permute.xlu0 %10865
      %10867 = vrot.lane.b32.xlu0 %v1525, 68
      %v10868 = vpop.permute.xlu0 %10867
      %10869 = vrot.lane.b32.xlu0 %v1526, 68
      %v10870 = vpop.permute.xlu0 %10869
      %10871 = vrot.lane.b32.xlu0 %v1527, 68
      %v10872 = vpop.permute.xlu0 %10871
      %10873 = vrot.lane.b32.xlu0 %v1528, 68
      %v10874 = vpop.permute.xlu0 %10873
      %10875 = vrot.lane.b32.xlu0 %v1529, 68
      %v10876 = vpop.permute.xlu0 %10875
      %10877 = vrot.lane.b32.xlu0 %v1530, 68
      %v10878 = vpop.permute.xlu0 %10877
      %10879 = vrot.lane.b32.xlu0 %v1531, 68
      %v10880 = vpop.permute.xlu0 %10879
      %10881 = vrot.lane.b32.xlu0 %v1532, 68
      %v10882 = vpop.permute.xlu0 %10881
      %10883 = vrot.lane.b32.xlu0 %v1533, 68
      %v10884 = vpop.permute.xlu0 %10883
      %10885 = vrot.lane.b32.xlu0 %v1534, 68
      %v10886 = vpop.permute.xlu0 %10885
      %10887 = vrot.lane.b32.xlu0 %v1535, 68
      %v10888 = vpop.permute.xlu0 %10887
      %v10890 = vsel %vm1584, %v10826, 0
      %v10893 = vsel %vm1584, %v10828, 0
      %v10896 = vsel %vm1584, %v10830, 0
      %v10899 = vsel %vm1584, %v10832, 0
      %v10902 = vsel %vm1584, %v10834, 0
      %v10905 = vsel %vm1584, %v10836, 0
      %v10908 = vsel %vm1584, %v10838, 0
      %v10911 = vsel %vm1584, %v10840, 0
      %v10914 = vsel %vm1584, %v10842, 0
      %v10917 = vsel %vm1584, %v10844, 0
      %v10920 = vsel %vm1584, %v10846, 0
      %v10923 = vsel %vm1584, %v10848, 0
      %v10926 = vsel %vm1584, %v10850, 0
      %v10929 = vsel %vm1584, %v10852, 0
      %v10932 = vsel %vm1584, %v10854, 0
      %v10935 = vsel %vm1584, %v10856, 0
      %v10938 = vsel %vm1584, %v10858, 0
      %v10941 = vsel %vm1584, %v10860, 0
      %v10944 = vsel %vm1584, %v10862, 0
      %v10947 = vsel %vm1584, %v10864, 0
      %v10950 = vsel %vm1584, %v10866, 0
      %v10953 = vsel %vm1584, %v10868, 0
      %v10956 = vsel %vm1584, %v10870, 0
      %v10959 = vsel %vm1584, %v10872, 0
      %v10962 = vsel %vm1584, %v10874, 0
      %v10965 = vsel %vm1584, %v10876, 0
      %v10968 = vsel %vm1584, %v10878, 0
      %v10971 = vsel %vm1584, %v10880, 0
      %v10974 = vsel %vm1584, %v10882, 0
      %v10977 = vsel %vm1584, %v10884, 0
      %v10980 = vsel %vm1584, %v10886, 0
      %v10983 = vsel %vm1584, %v10888, 0
      %10985 = vmatprep.subr.bf16.mxu0 0
      %10986 = vmatpush1.bf16.xpose.msra.mxu0 %v10959
      %10987 = vmatprep.subr.bf16.mxu0 0
      %10988 = vmatpush1.bf16.xpose.msra.mxu0 %v10956
      %10989 = vmatprep.subr.bf16.mxu0 0
      %10990 = vmatpush1.bf16.xpose.msra.mxu0 %v10953
      %10991 = vmatprep.subr.bf16.mxu0 0
      %10992 = vmatpush1.bf16.xpose.msra.mxu0 %v10950
      %10993 = vmatprep.subr.bf16.mxu0 0
      %10994 = vmatpush1.bf16.xpose.msra.mxu0 %v10947
      %10995 = vmatprep.subr.bf16.mxu0 0
      %10996 = vmatpush1.bf16.xpose.msra.mxu0 %v10944
      %10997 = vmatprep.subr.bf16.mxu0 0
      %10998 = vmatpush1.bf16.xpose.msra.mxu0 %v10941
      %10999 = vmatprep.subr.bf16.mxu0 0
      %11000 = vmatpush1.bf16.xpose.msra.mxu0 %v10938
      %11001 = vmatprep.subr.bf16.mxu0 0
      %11002 = vmatpush2.bf16.xpose.msra.mxu0 %v10983
      %11003 = vmatprep.subr.bf16.mxu0 0
      %11004 = vmatpush2.bf16.xpose.msra.mxu0 %v10980
      %11005 = vmatprep.subr.bf16.mxu0 0
      %11006 = vmatpush2.bf16.xpose.msra.mxu0 %v10977
      %11007 = vmatprep.subr.bf16.mxu0 0
      %11008 = vmatpush2.bf16.xpose.msra.mxu0 %v10974
      %11009 = vmatprep.subr.bf16.mxu0 0
      %11010 = vmatpush2.bf16.xpose.msra.mxu0 %v10971
      %11011 = vmatprep.subr.bf16.mxu0 0
      %11012 = vmatpush2.bf16.xpose.msra.mxu0 %v10968
      %11013 = vmatprep.subr.bf16.mxu0 0
      %11014 = vmatpush2.bf16.xpose.msra.mxu0 %v10965
      %11015 = vmatprep.subr.bf16.mxu0 0
      %11016 = vmatpush2.bf16.xpose.msra.mxu0 %v10962
      %11017 = vmatprep.mubr.bf16.mxu0 0
      %11018 = vmatmul.mubr.bf16.gmra.mxu0 %v10890
      %v11019 = vpop.f32.mrf.mxu0
      %v11020 = vadd.f32 0.0, %v11019
      %v11021 = vpop.f32.mrf.mxu0
      %v11022 = vadd.f32 0.0, %v11021
      %v11023 = vpop.f32.mrf.mxu0
      %v11024 = vadd.f32 0.0, %v11023
      %v11025 = vpop.f32.mrf.mxu0
      %v11026 = vadd.f32 0.0, %v11025
      %11027 = vmatprep.mubr.bf16.mxu0 0
      %11028 = vmatmul.mubr.bf16.gmra.mxu0 %v10893
      %v11029 = vpop.f32.mrf.mxu0
      %v11030 = vadd.f32 0.0, %v11029
      %v11031 = vpop.f32.mrf.mxu0
      %v11032 = vadd.f32 0.0, %v11031
      %v11033 = vpop.f32.mrf.mxu0
      %v11034 = vadd.f32 0.0, %v11033
      %v11035 = vpop.f32.mrf.mxu0
      %v11036 = vadd.f32 0.0, %v11035
      %11037 = vmatprep.mubr.bf16.mxu0 0
      %11038 = vmatmul.mubr.bf16.gmra.mxu0 %v10896
      %v11039 = vpop.f32.mrf.mxu0
      %v11040 = vadd.f32 0.0, %v11039
      %v11041 = vpop.f32.mrf.mxu0
      %v11042 = vadd.f32 0.0, %v11041
      %v11043 = vpop.f32.mrf.mxu0
      %v11044 = vadd.f32 0.0, %v11043
      %v11045 = vpop.f32.mrf.mxu0
      %v11046 = vadd.f32 0.0, %v11045
      %11047 = vmatprep.mubr.bf16.mxu0 0
      %11048 = vmatmul.mubr.bf16.gmra.mxu0 %v10899
      %v11049 = vpop.f32.mrf.mxu0
      %v11050 = vadd.f32 0.0, %v11049
      %v11051 = vpop.f32.mrf.mxu0
      %v11052 = vadd.f32 0.0, %v11051
      %v11053 = vpop.f32.mrf.mxu0
      %v11054 = vadd.f32 0.0, %v11053
      %v11055 = vpop.f32.mrf.mxu0
      %v11056 = vadd.f32 0.0, %v11055
      %11057 = vmatprep.mubr.bf16.mxu0 0
      %11058 = vmatmul.mubr.bf16.gmra.mxu0 %v10902
      %v11059 = vpop.f32.mrf.mxu0
      %v11060 = vadd.f32 0.0, %v11059
      %v11061 = vpop.f32.mrf.mxu0
      %v11062 = vadd.f32 0.0, %v11061
      %v11063 = vpop.f32.mrf.mxu0
      %v11064 = vadd.f32 0.0, %v11063
      %v11065 = vpop.f32.mrf.mxu0
      %v11066 = vadd.f32 0.0, %v11065
      %11067 = vmatprep.mubr.bf16.mxu0 0
      %11068 = vmatmul.mubr.bf16.gmra.mxu0 %v10905
      %v11069 = vpop.f32.mrf.mxu0
      %v11070 = vadd.f32 0.0, %v11069
      %v11071 = vpop.f32.mrf.mxu0
      %v11072 = vadd.f32 0.0, %v11071
      %v11073 = vpop.f32.mrf.mxu0
      %v11074 = vadd.f32 0.0, %v11073
      %v11075 = vpop.f32.mrf.mxu0
      %v11076 = vadd.f32 0.0, %v11075
      %11077 = vmatprep.mubr.bf16.mxu0 0
      %11078 = vmatmul.mubr.bf16.gmra.mxu0 %v10908
      %v11079 = vpop.f32.mrf.mxu0
      %v11080 = vadd.f32 0.0, %v11079
      %v11081 = vpop.f32.mrf.mxu0
      %v11082 = vadd.f32 0.0, %v11081
      %v11083 = vpop.f32.mrf.mxu0
      %v11084 = vadd.f32 0.0, %v11083
      %v11085 = vpop.f32.mrf.mxu0
      %v11086 = vadd.f32 0.0, %v11085
      %11087 = vmatprep.mubr.bf16.mxu0 0
      %11088 = vmatmul.mubr.bf16.gmra.mxu0 %v10911
      %v11089 = vpop.f32.mrf.mxu0
      %v11090 = vadd.f32 0.0, %v11089
      %v11091 = vpop.f32.mrf.mxu0
      %v11092 = vadd.f32 0.0, %v11091
      %v11093 = vpop.f32.mrf.mxu0
      %v11094 = vadd.f32 0.0, %v11093
      %v11095 = vpop.f32.mrf.mxu0
      %v11096 = vadd.f32 0.0, %v11095
      %11097 = vmatprep.mubr.bf16.mxu0 0
      %11098 = vmatmul.mubr.bf16.gmra.mxu0 %v10914
      %v11099 = vpop.f32.mrf.mxu0
      %v11100 = vadd.f32 0.0, %v11099
      %v11101 = vpop.f32.mrf.mxu0
      %v11102 = vadd.f32 0.0, %v11101
      %v11103 = vpop.f32.mrf.mxu0
      %v11104 = vadd.f32 0.0, %v11103
      %v11105 = vpop.f32.mrf.mxu0
      %v11106 = vadd.f32 0.0, %v11105
      %11107 = vmatprep.mubr.bf16.mxu0 0
      %11108 = vmatmul.mubr.bf16.gmra.mxu0 %v10917
      %v11109 = vpop.f32.mrf.mxu0
      %v11110 = vadd.f32 0.0, %v11109
      %v11111 = vpop.f32.mrf.mxu0
      %v11112 = vadd.f32 0.0, %v11111
      %v11113 = vpop.f32.mrf.mxu0
      %v11114 = vadd.f32 0.0, %v11113
      %v11115 = vpop.f32.mrf.mxu0
      %v11116 = vadd.f32 0.0, %v11115
      %11117 = vmatprep.mubr.bf16.mxu0 0
      %11118 = vmatmul.mubr.bf16.gmra.mxu0 %v10920
      %v11119 = vpop.f32.mrf.mxu0
      %v11120 = vadd.f32 0.0, %v11119
      %v11121 = vpop.f32.mrf.mxu0
      %v11122 = vadd.f32 0.0, %v11121
      %v11123 = vpop.f32.mrf.mxu0
      %v11124 = vadd.f32 0.0, %v11123
      %v11125 = vpop.f32.mrf.mxu0
      %v11126 = vadd.f32 0.0, %v11125
      %11127 = vmatprep.mubr.bf16.mxu0 0
      %11128 = vmatmul.mubr.bf16.gmra.mxu0 %v10923
      %v11129 = vpop.f32.mrf.mxu0
      %v11130 = vadd.f32 0.0, %v11129
      %v11131 = vpop.f32.mrf.mxu0
      %v11132 = vadd.f32 0.0, %v11131
      %v11133 = vpop.f32.mrf.mxu0
      %v11134 = vadd.f32 0.0, %v11133
      %v11135 = vpop.f32.mrf.mxu0
      %v11136 = vadd.f32 0.0, %v11135
      %11137 = vmatprep.mubr.bf16.mxu0 0
      %11138 = vmatmul.mubr.bf16.gmra.mxu0 %v10926
      %v11139 = vpop.f32.mrf.mxu0
      %v11140 = vadd.f32 0.0, %v11139
      %v11141 = vpop.f32.mrf.mxu0
      %v11142 = vadd.f32 0.0, %v11141
      %v11143 = vpop.f32.mrf.mxu0
      %v11144 = vadd.f32 0.0, %v11143
      %v11145 = vpop.f32.mrf.mxu0
      %v11146 = vadd.f32 0.0, %v11145
      %11147 = vmatprep.mubr.bf16.mxu0 0
      %11148 = vmatmul.mubr.bf16.gmra.mxu0 %v10929
      %v11149 = vpop.f32.mrf.mxu0
      %v11150 = vadd.f32 0.0, %v11149
      %v11151 = vpop.f32.mrf.mxu0
      %v11152 = vadd.f32 0.0, %v11151
      %v11153 = vpop.f32.mrf.mxu0
      %v11154 = vadd.f32 0.0, %v11153
      %v11155 = vpop.f32.mrf.mxu0
      %v11156 = vadd.f32 0.0, %v11155
      %11157 = vmatprep.mubr.bf16.mxu0 0
      %11158 = vmatmul.mubr.bf16.gmra.mxu0 %v10932
      %v11159 = vpop.f32.mrf.mxu0
      %v11160 = vadd.f32 0.0, %v11159
      %v11161 = vpop.f32.mrf.mxu0
      %v11162 = vadd.f32 0.0, %v11161
      %v11163 = vpop.f32.mrf.mxu0
      %v11164 = vadd.f32 0.0, %v11163
      %v11165 = vpop.f32.mrf.mxu0
      %v11166 = vadd.f32 0.0, %v11165
      %11167 = vmatprep.mubr.bf16.mxu0 0
      %11168 = vmatmul.mubr.bf16.gmra.mxu0 %v10935
      %v11169 = vpop.f32.mrf.mxu0
      %v11170 = vadd.f32 0.0, %v11169
      %v11171 = vpop.f32.mrf.mxu0
      %v11172 = vadd.f32 0.0, %v11171
      %v11173 = vpop.f32.mrf.mxu0
      %v11174 = vadd.f32 0.0, %v11173
      %v11175 = vpop.f32.mrf.mxu0
      %v11176 = vadd.f32 0.0, %v11175
      %11177 = vdwg.mxu0
      %v11178 = vmax.f32 %v11020, %v11022
      %11179 = vmax.xlane.f32.xlu0 %v11178
      %v11180 = vpop.xlane.xlu0 %11179
      %v11181 = vmax.f32 %v11024, %v11026
      %11182 = vmax.xlane.f32.xlu0 %v11181
      %v11183 = vpop.xlane.xlu0 %11182
      %v11184 = vmax.f32 %v11030, %v11032
      %11185 = vmax.xlane.f32.xlu0 %v11184
      %v11186 = vpop.xlane.xlu0 %11185
      %v11187 = vmax.f32 %v11034, %v11036
      %11188 = vmax.xlane.f32.xlu0 %v11187
      %v11189 = vpop.xlane.xlu0 %11188
      %v11190 = vmax.f32 %v11040, %v11042
      %11191 = vmax.xlane.f32.xlu0 %v11190
      %v11192 = vpop.xlane.xlu0 %11191
      %v11193 = vmax.f32 %v11044, %v11046
      %11194 = vmax.xlane.f32.xlu0 %v11193
      %v11195 = vpop.xlane.xlu0 %11194
      %v11196 = vmax.f32 %v11050, %v11052
      %11197 = vmax.xlane.f32.xlu0 %v11196
      %v11198 = vpop.xlane.xlu0 %11197
      %v11199 = vmax.f32 %v11054, %v11056
      %11200 = vmax.xlane.f32.xlu0 %v11199
      %v11201 = vpop.xlane.xlu0 %11200
      %v11202 = vmax.f32 %v11060, %v11062
      %11203 = vmax.xlane.f32.xlu0 %v11202
      %v11204 = vpop.xlane.xlu0 %11203
      %v11205 = vmax.f32 %v11064, %v11066
      %11206 = vmax.xlane.f32.xlu0 %v11205
      %v11207 = vpop.xlane.xlu0 %11206
      %v11208 = vmax.f32 %v11070, %v11072
      %11209 = vmax.xlane.f32.xlu0 %v11208
      %v11210 = vpop.xlane.xlu0 %11209
      %v11211 = vmax.f32 %v11074, %v11076
      %11212 = vmax.xlane.f32.xlu0 %v11211
      %v11213 = vpop.xlane.xlu0 %11212
      %v11214 = vmax.f32 %v11080, %v11082
      %11215 = vmax.xlane.f32.xlu0 %v11214
      %v11216 = vpop.xlane.xlu0 %11215
      %v11217 = vmax.f32 %v11084, %v11086
      %11218 = vmax.xlane.f32.xlu0 %v11217
      %v11219 = vpop.xlane.xlu0 %11218
      %v11220 = vmax.f32 %v11090, %v11092
      %11221 = vmax.xlane.f32.xlu0 %v11220
      %v11222 = vpop.xlane.xlu0 %11221
      %v11223 = vmax.f32 %v11094, %v11096
      %11224 = vmax.xlane.f32.xlu0 %v11223
      %v11225 = vpop.xlane.xlu0 %11224
      %v11226 = vmax.f32 %v11100, %v11102
      %11227 = vmax.xlane.f32.xlu0 %v11226
      %v11228 = vpop.xlane.xlu0 %11227
      %v11229 = vmax.f32 %v11104, %v11106
      %11230 = vmax.xlane.f32.xlu0 %v11229
      %v11231 = vpop.xlane.xlu0 %11230
      %v11232 = vmax.f32 %v11110, %v11112
      %11233 = vmax.xlane.f32.xlu0 %v11232
      %v11234 = vpop.xlane.xlu0 %11233
      %v11235 = vmax.f32 %v11114, %v11116
      %11236 = vmax.xlane.f32.xlu0 %v11235
      %v11237 = vpop.xlane.xlu0 %11236
      %v11238 = vmax.f32 %v11120, %v11122
      %11239 = vmax.xlane.f32.xlu0 %v11238
      %v11240 = vpop.xlane.xlu0 %11239
      %v11241 = vmax.f32 %v11124, %v11126
      %11242 = vmax.xlane.f32.xlu0 %v11241
      %v11243 = vpop.xlane.xlu0 %11242
      %v11244 = vmax.f32 %v11130, %v11132
      %11245 = vmax.xlane.f32.xlu0 %v11244
      %v11246 = vpop.xlane.xlu0 %11245
      %v11247 = vmax.f32 %v11134, %v11136
      %11248 = vmax.xlane.f32.xlu0 %v11247
      %v11249 = vpop.xlane.xlu0 %11248
      %v11250 = vmax.f32 %v11140, %v11142
      %11251 = vmax.xlane.f32.xlu0 %v11250
      %v11252 = vpop.xlane.xlu0 %11251
      %v11253 = vmax.f32 %v11144, %v11146
      %11254 = vmax.xlane.f32.xlu0 %v11253
      %v11255 = vpop.xlane.xlu0 %11254
      %v11256 = vmax.f32 %v11150, %v11152
      %11257 = vmax.xlane.f32.xlu0 %v11256
      %v11258 = vpop.xlane.xlu0 %11257
      %v11259 = vmax.f32 %v11154, %v11156
      %11260 = vmax.xlane.f32.xlu0 %v11259
      %v11261 = vpop.xlane.xlu0 %11260
      %v11262 = vmax.f32 %v11160, %v11162
      %11263 = vmax.xlane.f32.xlu0 %v11262
      %v11264 = vpop.xlane.xlu0 %11263
      %v11265 = vmax.f32 %v11164, %v11166
      %11266 = vmax.xlane.f32.xlu0 %v11265
      %v11267 = vpop.xlane.xlu0 %11266
      %v11268 = vmax.f32 %v11170, %v11172
      %11269 = vmax.xlane.f32.xlu0 %v11268
      %v11270 = vpop.xlane.xlu0 %11269
      %v11271 = vmax.f32 %v11174, %v11176
      %11272 = vmax.xlane.f32.xlu0 %v11271
      %v11273 = vpop.xlane.xlu0 %11272
      %v11274 = vsub.f32 %v11020, %v11180
      %v11275 = vsub.f32 %v11022, %v11180
      %v11276 = vsub.f32 %v11024, %v11183
      %v11277 = vsub.f32 %v11026, %v11183
      %v11278 = vsub.f32 %v11030, %v11186
      %v11279 = vsub.f32 %v11032, %v11186
      %v11280 = vsub.f32 %v11034, %v11189
      %v11281 = vsub.f32 %v11036, %v11189
      %v11282 = vsub.f32 %v11040, %v11192
      %v11283 = vsub.f32 %v11042, %v11192
      %v11284 = vsub.f32 %v11044, %v11195
      %v11285 = vsub.f32 %v11046, %v11195
      %v11286 = vsub.f32 %v11050, %v11198
      %v11287 = vsub.f32 %v11052, %v11198
      %v11288 = vsub.f32 %v11054, %v11201
      %v11289 = vsub.f32 %v11056, %v11201
      %v11290 = vsub.f32 %v11060, %v11204
      %v11291 = vsub.f32 %v11062, %v11204
      %v11292 = vsub.f32 %v11064, %v11207
      %v11293 = vsub.f32 %v11066, %v11207
      %v11294 = vsub.f32 %v11070, %v11210
      %v11295 = vsub.f32 %v11072, %v11210
      %v11296 = vsub.f32 %v11074, %v11213
      %v11297 = vsub.f32 %v11076, %v11213
      %v11298 = vsub.f32 %v11080, %v11216
      %v11299 = vsub.f32 %v11082, %v11216
      %v11300 = vsub.f32 %v11084, %v11219
      %v11301 = vsub.f32 %v11086, %v11219
      %v11302 = vsub.f32 %v11090, %v11222
      %v11303 = vsub.f32 %v11092, %v11222
      %v11304 = vsub.f32 %v11094, %v11225
      %v11305 = vsub.f32 %v11096, %v11225
      %v11306 = vsub.f32 %v11100, %v11228
      %v11307 = vsub.f32 %v11102, %v11228
      %v11308 = vsub.f32 %v11104, %v11231
      %v11309 = vsub.f32 %v11106, %v11231
      %v11310 = vsub.f32 %v11110, %v11234
      %v11311 = vsub.f32 %v11112, %v11234
      %v11312 = vsub.f32 %v11114, %v11237
      %v11313 = vsub.f32 %v11116, %v11237
      %v11314 = vsub.f32 %v11120, %v11240
      %v11315 = vsub.f32 %v11122, %v11240
      %v11316 = vsub.f32 %v11124, %v11243
      %v11317 = vsub.f32 %v11126, %v11243
      %v11318 = vsub.f32 %v11130, %v11246
      %v11319 = vsub.f32 %v11132, %v11246
      %v11320 = vsub.f32 %v11134, %v11249
      %v11321 = vsub.f32 %v11136, %v11249
      %v11322 = vsub.f32 %v11140, %v11252
      %v11323 = vsub.f32 %v11142, %v11252
      %v11324 = vsub.f32 %v11144, %v11255
      %v11325 = vsub.f32 %v11146, %v11255
      %v11326 = vsub.f32 %v11150, %v11258
      %v11327 = vsub.f32 %v11152, %v11258
      %v11328 = vsub.f32 %v11154, %v11261
      %v11329 = vsub.f32 %v11156, %v11261
      %v11330 = vsub.f32 %v11160, %v11264
      %v11331 = vsub.f32 %v11162, %v11264
      %v11332 = vsub.f32 %v11164, %v11267
      %v11333 = vsub.f32 %v11166, %v11267
      %v11334 = vsub.f32 %v11170, %v11270
      %v11335 = vsub.f32 %v11172, %v11270
      %v11336 = vsub.f32 %v11174, %v11273
      %v11337 = vsub.f32 %v11176, %v11273
      %v11338 = vmul.f32 %v11274, 1.442695
      %v11339 = vpow.pop %v11338
      %v11340 = vmul.f32 %v11275, 1.442695
      %v11341 = vpow.pop %v11340
      %v11342 = vmul.f32 %v11276, 1.442695
      %v11343 = vpow.pop %v11342
      %v11344 = vmul.f32 %v11277, 1.442695
      %v11345 = vpow.pop %v11344
      %v11346 = vmul.f32 %v11278, 1.442695
      %v11347 = vpow.pop %v11346
      %v11348 = vmul.f32 %v11279, 1.442695
      %v11349 = vpow.pop %v11348
      %v11350 = vmul.f32 %v11280, 1.442695
      %v11351 = vpow.pop %v11350
      %v11352 = vmul.f32 %v11281, 1.442695
      %v11353 = vpow.pop %v11352
      %v11354 = vmul.f32 %v11282, 1.442695
      %v11355 = vpow.pop %v11354
      %v11356 = vmul.f32 %v11283, 1.442695
      %v11357 = vpow.pop %v11356
      %v11358 = vmul.f32 %v11284, 1.442695
      %v11359 = vpow.pop %v11358
      %v11360 = vmul.f32 %v11285, 1.442695
      %v11361 = vpow.pop %v11360
      %v11362 = vmul.f32 %v11286, 1.442695
      %v11363 = vpow.pop %v11362
      %v11364 = vmul.f32 %v11287, 1.442695
      %v11365 = vpow.pop %v11364
      %v11366 = vmul.f32 %v11288, 1.442695
      %v11367 = vpow.pop %v11366
      %v11368 = vmul.f32 %v11289, 1.442695
      %v11369 = vpow.pop %v11368
      %v11370 = vmul.f32 %v11290, 1.442695
      %v11371 = vpow.pop %v11370
      %v11372 = vmul.f32 %v11291, 1.442695
      %v11373 = vpow.pop %v11372
      %v11374 = vmul.f32 %v11292, 1.442695
      %v11375 = vpow.pop %v11374
      %v11376 = vmul.f32 %v11293, 1.442695
      %v11377 = vpow.pop %v11376
      %v11378 = vmul.f32 %v11294, 1.442695
      %v11379 = vpow.pop %v11378
      %v11380 = vmul.f32 %v11295, 1.442695
      %v11381 = vpow.pop %v11380
      %v11382 = vmul.f32 %v11296, 1.442695
      %v11383 = vpow.pop %v11382
      %v11384 = vmul.f32 %v11297, 1.442695
      %v11385 = vpow.pop %v11384
      %v11386 = vmul.f32 %v11298, 1.442695
      %v11387 = vpow.pop %v11386
      %v11388 = vmul.f32 %v11299, 1.442695
      %v11389 = vpow.pop %v11388
      %v11390 = vmul.f32 %v11300, 1.442695
      %v11391 = vpow.pop %v11390
      %v11392 = vmul.f32 %v11301, 1.442695
      %v11393 = vpow.pop %v11392
      %v11394 = vmul.f32 %v11302, 1.442695
      %v11395 = vpow.pop %v11394
      %v11396 = vmul.f32 %v11303, 1.442695
      %v11397 = vpow.pop %v11396
      %v11398 = vmul.f32 %v11304, 1.442695
      %v11399 = vpow.pop %v11398
      %v11400 = vmul.f32 %v11305, 1.442695
      %v11401 = vpow.pop %v11400
      %v11402 = vmul.f32 %v11306, 1.442695
      %v11403 = vpow.pop %v11402
      %v11404 = vmul.f32 %v11307, 1.442695
      %v11405 = vpow.pop %v11404
      %v11406 = vmul.f32 %v11308, 1.442695
      %v11407 = vpow.pop %v11406
      %v11408 = vmul.f32 %v11309, 1.442695
      %v11409 = vpow.pop %v11408
      %v11410 = vmul.f32 %v11310, 1.442695
      %v11411 = vpow.pop %v11410
      %v11412 = vmul.f32 %v11311, 1.442695
      %v11413 = vpow.pop %v11412
      %v11414 = vmul.f32 %v11312, 1.442695
      %v11415 = vpow.pop %v11414
      %v11416 = vmul.f32 %v11313, 1.442695
      %v11417 = vpow.pop %v11416
      %v11418 = vmul.f32 %v11314, 1.442695
      %v11419 = vpow.pop %v11418
      %v11420 = vmul.f32 %v11315, 1.442695
      %v11421 = vpow.pop %v11420
      %v11422 = vmul.f32 %v11316, 1.442695
      %v11423 = vpow.pop %v11422
      %v11424 = vmul.f32 %v11317, 1.442695
      %v11425 = vpow.pop %v11424
      %v11426 = vmul.f32 %v11318, 1.442695
      %v11427 = vpow.pop %v11426
      %v11428 = vmul.f32 %v11319, 1.442695
      %v11429 = vpow.pop %v11428
      %v11430 = vmul.f32 %v11320, 1.442695
      %v11431 = vpow.pop %v11430
      %v11432 = vmul.f32 %v11321, 1.442695
      %v11433 = vpow.pop %v11432
      %v11434 = vmul.f32 %v11322, 1.442695
      %v11435 = vpow.pop %v11434
      %v11436 = vmul.f32 %v11323, 1.442695
      %v11437 = vpow.pop %v11436
      %v11438 = vmul.f32 %v11324, 1.442695
      %v11439 = vpow.pop %v11438
      %v11440 = vmul.f32 %v11325, 1.442695
      %v11441 = vpow.pop %v11440
      %v11442 = vmul.f32 %v11326, 1.442695
      %v11443 = vpow.pop %v11442
      %v11444 = vmul.f32 %v11327, 1.442695
      %v11445 = vpow.pop %v11444
      %v11446 = vmul.f32 %v11328, 1.442695
      %v11447 = vpow.pop %v11446
      %v11448 = vmul.f32 %v11329, 1.442695
      %v11449 = vpow.pop %v11448
      %v11450 = vmul.f32 %v11330, 1.442695
      %v11451 = vpow.pop %v11450
      %v11452 = vmul.f32 %v11331, 1.442695
      %v11453 = vpow.pop %v11452
      %v11454 = vmul.f32 %v11332, 1.442695
      %v11455 = vpow.pop %v11454
      %v11456 = vmul.f32 %v11333, 1.442695
      %v11457 = vpow.pop %v11456
      %v11458 = vmul.f32 %v11334, 1.442695
      %v11459 = vpow.pop %v11458
      %v11460 = vmul.f32 %v11335, 1.442695
      %v11461 = vpow.pop %v11460
      %v11462 = vmul.f32 %v11336, 1.442695
      %v11463 = vpow.pop %v11462
      %v11464 = vmul.f32 %v11337, 1.442695
      %v11465 = vpow.pop %v11464
      %v11466 = vadd.f32 %v11339, %v11341
      %11467 = vadd.xlane.f32.xlu0 %v11466
      %v11468 = vpop.xlane.xlu0 %11467
      %v11469 = vadd.f32 %v11343, %v11345
      %11470 = vadd.xlane.f32.xlu0 %v11469
      %v11471 = vpop.xlane.xlu0 %11470
      %v11472 = vadd.f32 %v11347, %v11349
      %11473 = vadd.xlane.f32.xlu0 %v11472
      %v11474 = vpop.xlane.xlu0 %11473
      %v11475 = vadd.f32 %v11351, %v11353
      %11476 = vadd.xlane.f32.xlu0 %v11475
      %v11477 = vpop.xlane.xlu0 %11476
      %v11478 = vadd.f32 %v11355, %v11357
      %11479 = vadd.xlane.f32.xlu0 %v11478
      %v11480 = vpop.xlane.xlu0 %11479
      %v11481 = vadd.f32 %v11359, %v11361
      %11482 = vadd.xlane.f32.xlu0 %v11481
      %v11483 = vpop.xlane.xlu0 %11482
      %v11484 = vadd.f32 %v11363, %v11365
      %11485 = vadd.xlane.f32.xlu0 %v11484
      %v11486 = vpop.xlane.xlu0 %11485
      %v11487 = vadd.f32 %v11367, %v11369
      %11488 = vadd.xlane.f32.xlu0 %v11487
      %v11489 = vpop.xlane.xlu0 %11488
      %v11490 = vadd.f32 %v11371, %v11373
      %11491 = vadd.xlane.f32.xlu0 %v11490
      %v11492 = vpop.xlane.xlu0 %11491
      %v11493 = vadd.f32 %v11375, %v11377
      %11494 = vadd.xlane.f32.xlu0 %v11493
      %v11495 = vpop.xlane.xlu0 %11494
      %v11496 = vadd.f32 %v11379, %v11381
      %11497 = vadd.xlane.f32.xlu0 %v11496
      %v11498 = vpop.xlane.xlu0 %11497
      %v11499 = vadd.f32 %v11383, %v11385
      %11500 = vadd.xlane.f32.xlu0 %v11499
      %v11501 = vpop.xlane.xlu0 %11500
      %v11502 = vadd.f32 %v11387, %v11389
      %11503 = vadd.xlane.f32.xlu0 %v11502
      %v11504 = vpop.xlane.xlu0 %11503
      %v11505 = vadd.f32 %v11391, %v11393
      %11506 = vadd.xlane.f32.xlu0 %v11505
      %v11507 = vpop.xlane.xlu0 %11506
      %v11508 = vadd.f32 %v11395, %v11397
      %11509 = vadd.xlane.f32.xlu0 %v11508
      %v11510 = vpop.xlane.xlu0 %11509
      %v11511 = vadd.f32 %v11399, %v11401
      %11512 = vadd.xlane.f32.xlu0 %v11511
      %v11513 = vpop.xlane.xlu0 %11512
      %v11514 = vadd.f32 %v11403, %v11405
      %11515 = vadd.xlane.f32.xlu0 %v11514
      %v11516 = vpop.xlane.xlu0 %11515
      %v11517 = vadd.f32 %v11407, %v11409
      %11518 = vadd.xlane.f32.xlu0 %v11517
      %v11519 = vpop.xlane.xlu0 %11518
      %v11520 = vadd.f32 %v11411, %v11413
      %11521 = vadd.xlane.f32.xlu0 %v11520
      %v11522 = vpop.xlane.xlu0 %11521
      %v11523 = vadd.f32 %v11415, %v11417
      %11524 = vadd.xlane.f32.xlu0 %v11523
      %v11525 = vpop.xlane.xlu0 %11524
      %v11526 = vadd.f32 %v11419, %v11421
      %11527 = vadd.xlane.f32.xlu0 %v11526
      %v11528 = vpop.xlane.xlu0 %11527
      %v11529 = vadd.f32 %v11423, %v11425
      %11530 = vadd.xlane.f32.xlu0 %v11529
      %v11531 = vpop.xlane.xlu0 %11530
      %v11532 = vadd.f32 %v11427, %v11429
      %11533 = vadd.xlane.f32.xlu0 %v11532
      %v11534 = vpop.xlane.xlu0 %11533
      %v11535 = vadd.f32 %v11431, %v11433
      %11536 = vadd.xlane.f32.xlu0 %v11535
      %v11537 = vpop.xlane.xlu0 %11536
      %v11538 = vadd.f32 %v11435, %v11437
      %11539 = vadd.xlane.f32.xlu0 %v11538
      %v11540 = vpop.xlane.xlu0 %11539
      %v11541 = vadd.f32 %v11439, %v11441
      %11542 = vadd.xlane.f32.xlu0 %v11541
      %v11543 = vpop.xlane.xlu0 %11542
      %v11544 = vadd.f32 %v11443, %v11445
      %11545 = vadd.xlane.f32.xlu0 %v11544
      %v11546 = vpop.xlane.xlu0 %11545
      %v11547 = vadd.f32 %v11447, %v11449
      %11548 = vadd.xlane.f32.xlu0 %v11547
      %v11549 = vpop.xlane.xlu0 %11548
      %v11550 = vadd.f32 %v11451, %v11453
      %11551 = vadd.xlane.f32.xlu0 %v11550
      %v11552 = vpop.xlane.xlu0 %11551
      %v11553 = vadd.f32 %v11455, %v11457
      %11554 = vadd.xlane.f32.xlu0 %v11553
      %v11555 = vpop.xlane.xlu0 %11554
      %v11556 = vadd.f32 %v11459, %v11461
      %11557 = vadd.xlane.f32.xlu0 %v11556
      %v11558 = vpop.xlane.xlu0 %11557
      %v11559 = vadd.f32 %v11463, %v11465
      %11560 = vadd.xlane.f32.xlu0 %v11559
      %v11561 = vpop.xlane.xlu0 %11560
      %v11562 = vrcp.pop %v11468
      %v11563 = vrcp.pop %v11471
      %v11564 = vrcp.pop %v11474
      %v11565 = vrcp.pop %v11477
      %v11566 = vrcp.pop %v11480
      %v11567 = vrcp.pop %v11483
      %v11568 = vrcp.pop %v11486
      %v11569 = vrcp.pop %v11489
      %v11570 = vrcp.pop %v11492
      %v11571 = vrcp.pop %v11495
      %v11572 = vrcp.pop %v11498
      %v11573 = vrcp.pop %v11501
      %v11574 = vrcp.pop %v11504
      %v11575 = vrcp.pop %v11507
      %v11576 = vrcp.pop %v11510
      %v11577 = vrcp.pop %v11513
      %v11578 = vrcp.pop %v11516
      %v11579 = vrcp.pop %v11519
      %v11580 = vrcp.pop %v11522
      %v11581 = vrcp.pop %v11525
      %v11582 = vrcp.pop %v11528
      %v11583 = vrcp.pop %v11531
      %v11584 = vrcp.pop %v11534
      %v11585 = vrcp.pop %v11537
      %v11586 = vrcp.pop %v11540
      %v11587 = vrcp.pop %v11543
      %v11588 = vrcp.pop %v11546
      %v11589 = vrcp.pop %v11549
      %v11590 = vrcp.pop %v11552
      %v11591 = vrcp.pop %v11555
      %v11592 = vrcp.pop %v11558
      %v11593 = vrcp.pop %v11561
      %v11594 = vmul.f32 %v11339, %v11562
      %v11595 = vmul.f32 %v11341, %v11562
      %v11596 = vmul.f32 %v11343, %v11563
      %v11597 = vmul.f32 %v11345, %v11563
      %v11598 = vmul.f32 %v11347, %v11564
      %v11599 = vmul.f32 %v11349, %v11564
      %v11600 = vmul.f32 %v11351, %v11565
      %v11601 = vmul.f32 %v11353, %v11565
      %v11602 = vmul.f32 %v11355, %v11566
      %v11603 = vmul.f32 %v11357, %v11566
      %v11604 = vmul.f32 %v11359, %v11567
      %v11605 = vmul.f32 %v11361, %v11567
      %v11606 = vmul.f32 %v11363, %v11568
      %v11607 = vmul.f32 %v11365, %v11568
      %v11608 = vmul.f32 %v11367, %v11569
      %v11609 = vmul.f32 %v11369, %v11569
      %v11610 = vmul.f32 %v11371, %v11570
      %v11611 = vmul.f32 %v11373, %v11570
      %v11612 = vmul.f32 %v11375, %v11571
      %v11613 = vmul.f32 %v11377, %v11571
      %v11614 = vmul.f32 %v11379, %v11572
      %v11615 = vmul.f32 %v11381, %v11572
      %v11616 = vmul.f32 %v11383, %v11573
      %v11617 = vmul.f32 %v11385, %v11573
      %v11618 = vmul.f32 %v11387, %v11574
      %v11619 = vmul.f32 %v11389, %v11574
      %v11620 = vmul.f32 %v11391, %v11575
      %v11621 = vmul.f32 %v11393, %v11575
      %v11622 = vmul.f32 %v11395, %v11576
      %v11623 = vmul.f32 %v11397, %v11576
      %v11624 = vmul.f32 %v11399, %v11577
      %v11625 = vmul.f32 %v11401, %v11577
      %v11626 = vmul.f32 %v11403, %v11578
      %v11627 = vmul.f32 %v11405, %v11578
      %v11628 = vmul.f32 %v11407, %v11579
      %v11629 = vmul.f32 %v11409, %v11579
      %v11630 = vmul.f32 %v11411, %v11580
      %v11631 = vmul.f32 %v11413, %v11580
      %v11632 = vmul.f32 %v11415, %v11581
      %v11633 = vmul.f32 %v11417, %v11581
      %v11634 = vmul.f32 %v11419, %v11582
      %v11635 = vmul.f32 %v11421, %v11582
      %v11636 = vmul.f32 %v11423, %v11583
      %v11637 = vmul.f32 %v11425, %v11583
      %v11638 = vmul.f32 %v11427, %v11584
      %v11639 = vmul.f32 %v11429, %v11584
      %v11640 = vmul.f32 %v11431, %v11585
      %v11641 = vmul.f32 %v11433, %v11585
      %v11642 = vmul.f32 %v11435, %v11586
      %v11643 = vmul.f32 %v11437, %v11586
      %v11644 = vmul.f32 %v11439, %v11587
      %v11645 = vmul.f32 %v11441, %v11587
      %v11646 = vmul.f32 %v11443, %v11588
      %v11647 = vmul.f32 %v11445, %v11588
      %v11648 = vmul.f32 %v11447, %v11589
      %v11649 = vmul.f32 %v11449, %v11589
      %v11650 = vmul.f32 %v11451, %v11590
      %v11651 = vmul.f32 %v11453, %v11590
      %v11652 = vmul.f32 %v11455, %v11591
      %v11653 = vmul.f32 %v11457, %v11591
      %v11654 = vmul.f32 %v11459, %v11592
      %v11655 = vmul.f32 %v11461, %v11592
      %v11656 = vmul.f32 %v11463, %v11593
      %v11657 = vmul.f32 %v11465, %v11593
      %v11658 = vpack.c.bf16 %v11596, %v11594
      %v11659 = vpack.c.bf16 %v11597, %v11595
      %v11660 = vpack.c.bf16 %v11600, %v11598
      %v11661 = vpack.c.bf16 %v11601, %v11599
      %v11662 = vpack.c.bf16 %v11604, %v11602
      %v11663 = vpack.c.bf16 %v11605, %v11603
      %v11664 = vpack.c.bf16 %v11608, %v11606
      %v11665 = vpack.c.bf16 %v11609, %v11607
      %v11666 = vpack.c.bf16 %v11612, %v11610
      %v11667 = vpack.c.bf16 %v11613, %v11611
      %v11668 = vpack.c.bf16 %v11616, %v11614
      %v11669 = vpack.c.bf16 %v11617, %v11615
      %v11670 = vpack.c.bf16 %v11620, %v11618
      %v11671 = vpack.c.bf16 %v11621, %v11619
      %v11672 = vpack.c.bf16 %v11624, %v11622
      %v11673 = vpack.c.bf16 %v11625, %v11623
      %v11674 = vpack.c.bf16 %v11628, %v11626
      %v11675 = vpack.c.bf16 %v11629, %v11627
      %v11676 = vpack.c.bf16 %v11632, %v11630
      %v11677 = vpack.c.bf16 %v11633, %v11631
      %v11678 = vpack.c.bf16 %v11636, %v11634
      %v11679 = vpack.c.bf16 %v11637, %v11635
      %v11680 = vpack.c.bf16 %v11640, %v11638
      %v11681 = vpack.c.bf16 %v11641, %v11639
      %v11682 = vpack.c.bf16 %v11644, %v11642
      %v11683 = vpack.c.bf16 %v11645, %v11643
      %v11684 = vpack.c.bf16 %v11648, %v11646
      %v11685 = vpack.c.bf16 %v11649, %v11647
      %v11686 = vpack.c.bf16 %v11652, %v11650
      %v11687 = vpack.c.bf16 %v11653, %v11651
      %v11688 = vpack.c.bf16 %v11656, %v11654
      %v11689 = vpack.c.bf16 %v11657, %v11655
      %11690 = vrot.lane.b32.xlu0 %v1312, 36
      %v11691 = vpop.permute.xlu0 %11690
      %11692 = vrot.lane.b32.xlu0 %v1313, 36
      %v11693 = vpop.permute.xlu0 %11692
      %11694 = vrot.lane.b32.xlu0 %v1314, 36
      %v11695 = vpop.permute.xlu0 %11694
      %11696 = vrot.lane.b32.xlu0 %v1315, 36
      %v11697 = vpop.permute.xlu0 %11696
      %11698 = vrot.lane.b32.xlu0 %v1316, 36
      %v11699 = vpop.permute.xlu0 %11698
      %11700 = vrot.lane.b32.xlu0 %v1317, 36
      %v11701 = vpop.permute.xlu0 %11700
      %11702 = vrot.lane.b32.xlu0 %v1318, 36
      %v11703 = vpop.permute.xlu0 %11702
      %11704 = vrot.lane.b32.xlu0 %v1319, 36
      %v11705 = vpop.permute.xlu0 %11704
      %11706 = vrot.lane.b32.xlu0 %v1320, 36
      %v11707 = vpop.permute.xlu0 %11706
      %11708 = vrot.lane.b32.xlu0 %v1321, 36
      %v11709 = vpop.permute.xlu0 %11708
      %11710 = vrot.lane.b32.xlu0 %v1322, 36
      %v11711 = vpop.permute.xlu0 %11710
      %11712 = vrot.lane.b32.xlu0 %v1323, 36
      %v11713 = vpop.permute.xlu0 %11712
      %11714 = vrot.lane.b32.xlu0 %v1324, 36
      %v11715 = vpop.permute.xlu0 %11714
      %11716 = vrot.lane.b32.xlu0 %v1325, 36
      %v11717 = vpop.permute.xlu0 %11716
      %11718 = vrot.lane.b32.xlu0 %v1326, 36
      %v11719 = vpop.permute.xlu0 %11718
      %11720 = vrot.lane.b32.xlu0 %v1327, 36
      %v11721 = vpop.permute.xlu0 %11720
      %11738 = vmatprep.subr.bf16.mxu0 0
      %11739 = vmatpush1.bf16.msra.mxu0 %v11705
      %11740 = vmatprep.subr.bf16.mxu0 0
      %11741 = vmatpush1.bf16.msra.mxu0 %v11703
      %11742 = vmatprep.subr.bf16.mxu0 0
      %11743 = vmatpush1.bf16.msra.mxu0 %v11701
      %11744 = vmatprep.subr.bf16.mxu0 0
      %11745 = vmatpush1.bf16.msra.mxu0 %v11699
      %11746 = vmatprep.subr.bf16.mxu0 0
      %11747 = vmatpush1.bf16.msra.mxu0 %v11697
      %11748 = vmatprep.subr.bf16.mxu0 0
      %11749 = vmatpush1.bf16.msra.mxu0 %v11695
      %11750 = vmatprep.subr.bf16.mxu0 0
      %11751 = vmatpush1.bf16.msra.mxu0 %v11693
      %11752 = vmatprep.subr.bf16.mxu0 0
      %11753 = vmatpush1.bf16.msra.mxu0 %v11691
      %11754 = vmatprep.subr.bf16.mxu0 0
      %11755 = vmatpush2.bf16.msra.mxu0 %v11721
      %11756 = vmatprep.subr.bf16.mxu0 0
      %11757 = vmatpush2.bf16.msra.mxu0 %v11719
      %11758 = vmatprep.subr.bf16.mxu0 0
      %11759 = vmatpush2.bf16.msra.mxu0 %v11717
      %11760 = vmatprep.subr.bf16.mxu0 0
      %11761 = vmatpush2.bf16.msra.mxu0 %v11715
      %11762 = vmatprep.subr.bf16.mxu0 0
      %11763 = vmatpush2.bf16.msra.mxu0 %v11713
      %11764 = vmatprep.subr.bf16.mxu0 0
      %11765 = vmatpush2.bf16.msra.mxu0 %v11711
      %11766 = vmatprep.subr.bf16.mxu0 0
      %11767 = vmatpush2.bf16.msra.mxu0 %v11709
      %11768 = vmatprep.subr.bf16.mxu0 0
      %11769 = vmatpush2.bf16.msra.mxu0 %v11707
      %11770 = vmatprep.mubr.bf16.mxu0 %v11659
      %11771 = vmatmul.mubr.bf16.gmra.mxu0 %v11658
      %v11772 = vpop.f32.mrf.mxu0
      %v11773 = vadd.f32 0.0, %v11772
      %v11774 = vpop.f32.mrf.mxu0
      %v11775 = vpop.f32.mrf.mxu0
      %v11776 = vadd.f32 0.0, %v11775
      %v11777 = vpop.f32.mrf.mxu0
      %11778 = vmatprep.mubr.bf16.mxu0 %v11661
      %11779 = vmatmul.mubr.bf16.gmra.mxu0 %v11660
      %v11780 = vpop.f32.mrf.mxu0
      %v11781 = vadd.f32 0.0, %v11780
      %v11782 = vpop.f32.mrf.mxu0
      %v11783 = vpop.f32.mrf.mxu0
      %v11784 = vadd.f32 0.0, %v11783
      %v11785 = vpop.f32.mrf.mxu0
      %11786 = vmatprep.mubr.bf16.mxu0 %v11663
      %11787 = vmatmul.mubr.bf16.gmra.mxu0 %v11662
      %v11788 = vpop.f32.mrf.mxu0
      %v11789 = vadd.f32 0.0, %v11788
      %v11790 = vpop.f32.mrf.mxu0
      %v11791 = vpop.f32.mrf.mxu0
      %v11792 = vadd.f32 0.0, %v11791
      %v11793 = vpop.f32.mrf.mxu0
      %11794 = vmatprep.mubr.bf16.mxu0 %v11665
      %11795 = vmatmul.mubr.bf16.gmra.mxu0 %v11664
      %v11796 = vpop.f32.mrf.mxu0
      %v11797 = vadd.f32 0.0, %v11796
      %v11798 = vpop.f32.mrf.mxu0
      %v11799 = vpop.f32.mrf.mxu0
      %v11800 = vadd.f32 0.0, %v11799
      %v11801 = vpop.f32.mrf.mxu0
      %11802 = vmatprep.mubr.bf16.mxu0 %v11667
      %11803 = vmatmul.mubr.bf16.gmra.mxu0 %v11666
      %v11804 = vpop.f32.mrf.mxu0
      %v11805 = vadd.f32 0.0, %v11804
      %v11806 = vpop.f32.mrf.mxu0
      %v11807 = vpop.f32.mrf.mxu0
      %v11808 = vadd.f32 0.0, %v11807
      %v11809 = vpop.f32.mrf.mxu0
      %11810 = vmatprep.mubr.bf16.mxu0 %v11669
      %11811 = vmatmul.mubr.bf16.gmra.mxu0 %v11668
      %v11812 = vpop.f32.mrf.mxu0
      %v11813 = vadd.f32 0.0, %v11812
      %v11814 = vpop.f32.mrf.mxu0
      %v11815 = vpop.f32.mrf.mxu0
      %v11816 = vadd.f32 0.0, %v11815
      %v11817 = vpop.f32.mrf.mxu0
      %11818 = vmatprep.mubr.bf16.mxu0 %v11671
      %11819 = vmatmul.mubr.bf16.gmra.mxu0 %v11670
      %v11820 = vpop.f32.mrf.mxu0
      %v11821 = vadd.f32 0.0, %v11820
      %v11822 = vpop.f32.mrf.mxu0
      %v11823 = vpop.f32.mrf.mxu0
      %v11824 = vadd.f32 0.0, %v11823
      %v11825 = vpop.f32.mrf.mxu0
      %11826 = vmatprep.mubr.bf16.mxu0 %v11673
      %11827 = vmatmul.mubr.bf16.gmra.mxu0 %v11672
      %v11828 = vpop.f32.mrf.mxu0
      %v11829 = vadd.f32 0.0, %v11828
      %v11830 = vpop.f32.mrf.mxu0
      %v11831 = vpop.f32.mrf.mxu0
      %v11832 = vadd.f32 0.0, %v11831
      %v11833 = vpop.f32.mrf.mxu0
      %11834 = vmatprep.mubr.bf16.mxu0 %v11675
      %11835 = vmatmul.mubr.bf16.gmra.mxu0 %v11674
      %v11836 = vpop.f32.mrf.mxu0
      %v11837 = vadd.f32 0.0, %v11836
      %v11838 = vpop.f32.mrf.mxu0
      %v11839 = vpop.f32.mrf.mxu0
      %v11840 = vadd.f32 0.0, %v11839
      %v11841 = vpop.f32.mrf.mxu0
      %11842 = vmatprep.mubr.bf16.mxu0 %v11677
      %11843 = vmatmul.mubr.bf16.gmra.mxu0 %v11676
      %v11844 = vpop.f32.mrf.mxu0
      %v11845 = vadd.f32 0.0, %v11844
      %v11846 = vpop.f32.mrf.mxu0
      %v11847 = vpop.f32.mrf.mxu0
      %v11848 = vadd.f32 0.0, %v11847
      %v11849 = vpop.f32.mrf.mxu0
      %11850 = vmatprep.mubr.bf16.mxu0 %v11679
      %11851 = vmatmul.mubr.bf16.gmra.mxu0 %v11678
      %v11852 = vpop.f32.mrf.mxu0
      %v11853 = vadd.f32 0.0, %v11852
      %v11854 = vpop.f32.mrf.mxu0
      %v11855 = vpop.f32.mrf.mxu0
      %v11856 = vadd.f32 0.0, %v11855
      %v11857 = vpop.f32.mrf.mxu0
      %11858 = vmatprep.mubr.bf16.mxu0 %v11681
      %11859 = vmatmul.mubr.bf16.gmra.mxu0 %v11680
      %v11860 = vpop.f32.mrf.mxu0
      %v11861 = vadd.f32 0.0, %v11860
      %v11862 = vpop.f32.mrf.mxu0
      %v11863 = vpop.f32.mrf.mxu0
      %v11864 = vadd.f32 0.0, %v11863
      %v11865 = vpop.f32.mrf.mxu0
      %11866 = vmatprep.mubr.bf16.mxu0 %v11683
      %11867 = vmatmul.mubr.bf16.gmra.mxu0 %v11682
      %v11868 = vpop.f32.mrf.mxu0
      %v11869 = vadd.f32 0.0, %v11868
      %v11870 = vpop.f32.mrf.mxu0
      %v11871 = vpop.f32.mrf.mxu0
      %v11872 = vadd.f32 0.0, %v11871
      %v11873 = vpop.f32.mrf.mxu0
      %11874 = vmatprep.mubr.bf16.mxu0 %v11685
      %11875 = vmatmul.mubr.bf16.gmra.mxu0 %v11684
      %v11876 = vpop.f32.mrf.mxu0
      %v11877 = vadd.f32 0.0, %v11876
      %v11878 = vpop.f32.mrf.mxu0
      %v11879 = vpop.f32.mrf.mxu0
      %v11880 = vadd.f32 0.0, %v11879
      %v11881 = vpop.f32.mrf.mxu0
      %11882 = vmatprep.mubr.bf16.mxu0 %v11687
      %11883 = vmatmul.mubr.bf16.gmra.mxu0 %v11686
      %v11884 = vpop.f32.mrf.mxu0
      %v11885 = vadd.f32 0.0, %v11884
      %v11886 = vpop.f32.mrf.mxu0
      %v11887 = vpop.f32.mrf.mxu0
      %v11888 = vadd.f32 0.0, %v11887
      %v11889 = vpop.f32.mrf.mxu0
      %11890 = vmatprep.mubr.bf16.mxu0 %v11689
      %11891 = vmatmul.mubr.bf16.gmra.mxu0 %v11688
      %v11892 = vpop.f32.mrf.mxu0
      %v11893 = vadd.f32 0.0, %v11892
      %v11894 = vpop.f32.mrf.mxu0
      %v11895 = vpop.f32.mrf.mxu0
      %v11896 = vadd.f32 0.0, %v11895
      %v11897 = vpop.f32.mrf.mxu0
      %11898 = vdwg.mxu0
      %v11899 = vpack.c.bf16 %v11776, %v11773
      %v11900 = vpack.c.bf16 %v11784, %v11781
      %v11901 = vpack.c.bf16 %v11792, %v11789
      %v11902 = vpack.c.bf16 %v11800, %v11797
      %v11903 = vpack.c.bf16 %v11808, %v11805
      %v11904 = vpack.c.bf16 %v11816, %v11813
      %v11905 = vpack.c.bf16 %v11824, %v11821
      %v11906 = vpack.c.bf16 %v11832, %v11829
      %v11907 = vpack.c.bf16 %v11840, %v11837
      %v11908 = vpack.c.bf16 %v11848, %v11845
      %v11909 = vpack.c.bf16 %v11856, %v11853
      %v11910 = vpack.c.bf16 %v11864, %v11861
      %v11911 = vpack.c.bf16 %v11872, %v11869
      %v11912 = vpack.c.bf16 %v11880, %v11877
      %v11913 = vpack.c.bf16 %v11888, %v11885
      %v11914 = vpack.c.bf16 %v11896, %v11893
      %s11915 = scalar_lea.vmem %s425, 14
      %v11916 = vld [vmem:[%s11915] sm:$0x3]
      %v11918 = vsel %vm1584, %v11899, 0
      %v11921 = vsel %vm1584, %v11900, 0
      %v11924 = vsel %vm1584, %v11901, 0
      %v11927 = vsel %vm1584, %v11902, 0
      %v11930 = vsel %vm1584, %v11903, 0
      %v11933 = vsel %vm1584, %v11904, 0
      %v11936 = vsel %vm1584, %v11905, 0
      %v11939 = vsel %vm1584, %v11906, 0
      %v11942 = vsel %vm1584, %v11907, 0
      %v11945 = vsel %vm1584, %v11908, 0
      %v11948 = vsel %vm1584, %v11909, 0
      %v11951 = vsel %vm1584, %v11910, 0
      %v11954 = vsel %vm1584, %v11911, 0
      %v11957 = vsel %vm1584, %v11912, 0
      %v11960 = vsel %vm1584, %v11913, 0
      %v11963 = vsel %vm1584, %v11914, 0
      %v11966 = vsel %vm3768, %v11916, 0
      %11968 = vmatprep.subr.bf16.mxu0 0
      %11969 = vmatpush1.bf16.msra.mxu0 0
      %11970 = vmatprep.subr.bf16.mxu0 0
      %11971 = vmatpush1.bf16.msra.mxu0 0
      %11972 = vmatprep.subr.bf16.mxu0 0
      %11973 = vmatpush1.bf16.msra.mxu0 0
      %11974 = vmatprep.subr.bf16.mxu0 0
      %11975 = vmatpush1.bf16.msra.mxu0 0
      %11976 = vmatprep.subr.bf16.mxu0 0
      %11977 = vmatpush1.bf16.msra.mxu0 0
      %11978 = vmatprep.subr.bf16.mxu0 0
      %11979 = vmatpush1.bf16.msra.mxu0 0
      %11980 = vmatprep.subr.bf16.mxu0 0
      %11981 = vmatpush1.bf16.msra.mxu0 0
      %11982 = vmatprep.subr.bf16.mxu0 0
      %11983 = vmatpush1.bf16.msra.mxu0 %v11966
      %11984 = vmatprep.subr.bf16.mxu0 0
      %11985 = vmatpush2.bf16.msra.mxu0 0
      %11986 = vmatprep.subr.bf16.mxu0 0
      %11987 = vmatpush2.bf16.msra.mxu0 0
      %11988 = vmatprep.subr.bf16.mxu0 0
      %11989 = vmatpush2.bf16.msra.mxu0 0
      %11990 = vmatprep.subr.bf16.mxu0 0
      %11991 = vmatpush2.bf16.msra.mxu0 0
      %11992 = vmatprep.subr.bf16.mxu0 0
      %11993 = vmatpush2.bf16.msra.mxu0 0
      %11994 = vmatprep.subr.bf16.mxu0 0
      %11995 = vmatpush2.bf16.msra.mxu0 0
      %11996 = vmatprep.subr.bf16.mxu0 0
      %11997 = vmatpush2.bf16.msra.mxu0 0
      %11998 = vmatprep.subr.bf16.mxu0 0
      %11999 = vmatpush2.bf16.msra.mxu0 0
      %12000 = vmatprep.mubr.bf16.mxu0 0
      %12001 = vmatmul.mubr.bf16.gmra.mxu0 %v11918
      %v12002 = vpop.f32.mrf.mxu0
      %v12003 = vadd.f32 0.0, %v12002
      %v12004 = vpop.f32.mrf.mxu0
      %v12005 = vpop.f32.mrf.mxu0
      %v12006 = vadd.f32 0.0, %v12005
      %v12007 = vpop.f32.mrf.mxu0
      %12008 = vmatprep.mubr.bf16.mxu0 0
      %12009 = vmatmul.mubr.bf16.gmra.mxu0 %v11921
      %v12010 = vpop.f32.mrf.mxu0
      %v12011 = vadd.f32 0.0, %v12010
      %v12012 = vpop.f32.mrf.mxu0
      %v12013 = vpop.f32.mrf.mxu0
      %v12014 = vadd.f32 0.0, %v12013
      %v12015 = vpop.f32.mrf.mxu0
      %12016 = vmatprep.mubr.bf16.mxu0 0
      %12017 = vmatmul.mubr.bf16.gmra.mxu0 %v11924
      %v12018 = vpop.f32.mrf.mxu0
      %v12019 = vadd.f32 0.0, %v12018
      %v12020 = vpop.f32.mrf.mxu0
      %v12021 = vpop.f32.mrf.mxu0
      %v12022 = vadd.f32 0.0, %v12021
      %v12023 = vpop.f32.mrf.mxu0
      %12024 = vmatprep.mubr.bf16.mxu0 0
      %12025 = vmatmul.mubr.bf16.gmra.mxu0 %v11927
      %v12026 = vpop.f32.mrf.mxu0
      %v12027 = vadd.f32 0.0, %v12026
      %v12028 = vpop.f32.mrf.mxu0
      %v12029 = vpop.f32.mrf.mxu0
      %v12030 = vadd.f32 0.0, %v12029
      %v12031 = vpop.f32.mrf.mxu0
      %12032 = vmatprep.mubr.bf16.mxu0 0
      %12033 = vmatmul.mubr.bf16.gmra.mxu0 %v11930
      %v12034 = vpop.f32.mrf.mxu0
      %v12035 = vadd.f32 0.0, %v12034
      %v12036 = vpop.f32.mrf.mxu0
      %v12037 = vpop.f32.mrf.mxu0
      %v12038 = vadd.f32 0.0, %v12037
      %v12039 = vpop.f32.mrf.mxu0
      %12040 = vmatprep.mubr.bf16.mxu0 0
      %12041 = vmatmul.mubr.bf16.gmra.mxu0 %v11933
      %v12042 = vpop.f32.mrf.mxu0
      %v12043 = vadd.f32 0.0, %v12042
      %v12044 = vpop.f32.mrf.mxu0
      %v12045 = vpop.f32.mrf.mxu0
      %v12046 = vadd.f32 0.0, %v12045
      %v12047 = vpop.f32.mrf.mxu0
      %12048 = vmatprep.mubr.bf16.mxu0 0
      %12049 = vmatmul.mubr.bf16.gmra.mxu0 %v11936
      %v12050 = vpop.f32.mrf.mxu0
      %v12051 = vadd.f32 0.0, %v12050
      %v12052 = vpop.f32.mrf.mxu0
      %v12053 = vpop.f32.mrf.mxu0
      %v12054 = vadd.f32 0.0, %v12053
      %v12055 = vpop.f32.mrf.mxu0
      %12056 = vmatprep.mubr.bf16.mxu0 0
      %12057 = vmatmul.mubr.bf16.gmra.mxu0 %v11939
      %v12058 = vpop.f32.mrf.mxu0
      %v12059 = vadd.f32 0.0, %v12058
      %v12060 = vpop.f32.mrf.mxu0
      %v12061 = vpop.f32.mrf.mxu0
      %v12062 = vadd.f32 0.0, %v12061
      %v12063 = vpop.f32.mrf.mxu0
      %12064 = vmatprep.mubr.bf16.mxu0 0
      %12065 = vmatmul.mubr.bf16.gmra.mxu0 %v11942
      %v12066 = vpop.f32.mrf.mxu0
      %v12067 = vadd.f32 0.0, %v12066
      %v12068 = vpop.f32.mrf.mxu0
      %v12069 = vpop.f32.mrf.mxu0
      %v12070 = vadd.f32 0.0, %v12069
      %v12071 = vpop.f32.mrf.mxu0
      %12072 = vmatprep.mubr.bf16.mxu0 0
      %12073 = vmatmul.mubr.bf16.gmra.mxu0 %v11945
      %v12074 = vpop.f32.mrf.mxu0
      %v12075 = vadd.f32 0.0, %v12074
      %v12076 = vpop.f32.mrf.mxu0
      %v12077 = vpop.f32.mrf.mxu0
      %v12078 = vadd.f32 0.0, %v12077
      %v12079 = vpop.f32.mrf.mxu0
      %12080 = vmatprep.mubr.bf16.mxu0 0
      %12081 = vmatmul.mubr.bf16.gmra.mxu0 %v11948
      %v12082 = vpop.f32.mrf.mxu0
      %v12083 = vadd.f32 0.0, %v12082
      %v12084 = vpop.f32.mrf.mxu0
      %v12085 = vpop.f32.mrf.mxu0
      %v12086 = vadd.f32 0.0, %v12085
      %v12087 = vpop.f32.mrf.mxu0
      %12088 = vmatprep.mubr.bf16.mxu0 0
      %12089 = vmatmul.mubr.bf16.gmra.mxu0 %v11951
      %v12090 = vpop.f32.mrf.mxu0
      %v12091 = vadd.f32 0.0, %v12090
      %v12092 = vpop.f32.mrf.mxu0
      %v12093 = vpop.f32.mrf.mxu0
      %v12094 = vadd.f32 0.0, %v12093
      %v12095 = vpop.f32.mrf.mxu0
      %12096 = vmatprep.mubr.bf16.mxu0 0
      %12097 = vmatmul.mubr.bf16.gmra.mxu0 %v11954
      %v12098 = vpop.f32.mrf.mxu0
      %v12099 = vadd.f32 0.0, %v12098
      %v12100 = vpop.f32.mrf.mxu0
      %v12101 = vpop.f32.mrf.mxu0
      %v12102 = vadd.f32 0.0, %v12101
      %v12103 = vpop.f32.mrf.mxu0
      %12104 = vmatprep.mubr.bf16.mxu0 0
      %12105 = vmatmul.mubr.bf16.gmra.mxu0 %v11957
      %v12106 = vpop.f32.mrf.mxu0
      %v12107 = vadd.f32 0.0, %v12106
      %v12108 = vpop.f32.mrf.mxu0
      %v12109 = vpop.f32.mrf.mxu0
      %v12110 = vadd.f32 0.0, %v12109
      %v12111 = vpop.f32.mrf.mxu0
      %12112 = vmatprep.mubr.bf16.mxu0 0
      %12113 = vmatmul.mubr.bf16.gmra.mxu0 %v11960
      %v12114 = vpop.f32.mrf.mxu0
      %v12115 = vadd.f32 0.0, %v12114
      %v12116 = vpop.f32.mrf.mxu0
      %v12117 = vpop.f32.mrf.mxu0
      %v12118 = vadd.f32 0.0, %v12117
      %v12119 = vpop.f32.mrf.mxu0
      %12120 = vmatprep.mubr.bf16.mxu0 0
      %12121 = vmatmul.mubr.bf16.gmra.mxu0 %v11963
      %v12122 = vpop.f32.mrf.mxu0
      %v12123 = vadd.f32 0.0, %v12122
      %v12124 = vpop.f32.mrf.mxu0
      %v12125 = vpop.f32.mrf.mxu0
      %v12126 = vadd.f32 0.0, %v12125
      %v12127 = vpop.f32.mrf.mxu0
      %12128 = vdwg.mxu0
      %v12129 = vadd.f32 %v10793, %v12003
      %v12130 = vadd.f32 %v10794, %v12006
      %v12131 = vadd.f32 %v10795, %v12011
      %v12132 = vadd.f32 %v10796, %v12014
      %v12133 = vadd.f32 %v10797, %v12019
      %v12134 = vadd.f32 %v10798, %v12022
      %v12135 = vadd.f32 %v10799, %v12027
      %v12136 = vadd.f32 %v10800, %v12030
      %v12137 = vadd.f32 %v10801, %v12035
      %v12138 = vadd.f32 %v10802, %v12038
      %v12139 = vadd.f32 %v10803, %v12043
      %v12140 = vadd.f32 %v10804, %v12046
      %v12141 = vadd.f32 %v10805, %v12051
      %v12142 = vadd.f32 %v10806, %v12054
      %v12143 = vadd.f32 %v10807, %v12059
      %v12144 = vadd.f32 %v10808, %v12062
      %v12145 = vadd.f32 %v10809, %v12067
      %v12146 = vadd.f32 %v10810, %v12070
      %v12147 = vadd.f32 %v10811, %v12075
      %v12148 = vadd.f32 %v10812, %v12078
      %v12149 = vadd.f32 %v10813, %v12083
      %v12150 = vadd.f32 %v10814, %v12086
      %v12151 = vadd.f32 %v10815, %v12091
      %v12152 = vadd.f32 %v10816, %v12094
      %v12153 = vadd.f32 %v10817, %v12099
      %v12154 = vadd.f32 %v10818, %v12102
      %v12155 = vadd.f32 %v10819, %v12107
      %v12156 = vadd.f32 %v10820, %v12110
      %v12157 = vadd.f32 %v10821, %v12115
      %v12158 = vadd.f32 %v10822, %v12118
      %v12159 = vadd.f32 %v10823, %v12123
      %v12160 = vadd.f32 %v10824, %v12126
      %v12161 = vld [vmem:[%s428] sm:$0x1]
      %v12163 = vlaneseq
      %v12164 = vshrl.u32 %v12163, 7
      %v12165 = vsub.s32 0, %v12164
      %v12166 = vrot.slane %v12161, %v12165
      %v12168 = vadd.f32 %v12129, %v12166
      %v12169 = vadd.f32 %v12130, %v12166
      %v12170 = vadd.f32 %v12131, %v12166
      %v12171 = vadd.f32 %v12132, %v12166
      %v12172 = vadd.f32 %v12133, %v12166
      %v12173 = vadd.f32 %v12134, %v12166
      %v12174 = vadd.f32 %v12135, %v12166
      %v12175 = vadd.f32 %v12136, %v12166
      %v12176 = vadd.f32 %v12137, %v12166
      %v12177 = vadd.f32 %v12138, %v12166
      %v12178 = vadd.f32 %v12139, %v12166
      %v12179 = vadd.f32 %v12140, %v12166
      %v12180 = vadd.f32 %v12141, %v12166
      %v12181 = vadd.f32 %v12142, %v12166
      %v12182 = vadd.f32 %v12143, %v12166
      %v12183 = vadd.f32 %v12144, %v12166
      %v12184 = vadd.f32 %v12145, %v12166
      %v12185 = vadd.f32 %v12146, %v12166
      %v12186 = vadd.f32 %v12147, %v12166
      %v12187 = vadd.f32 %v12148, %v12166
      %v12188 = vadd.f32 %v12149, %v12166
      %v12189 = vadd.f32 %v12150, %v12166
      %v12190 = vadd.f32 %v12151, %v12166
      %v12191 = vadd.f32 %v12152, %v12166
      %v12192 = vadd.f32 %v12153, %v12166
      %v12193 = vadd.f32 %v12154, %v12166
      %v12194 = vadd.f32 %v12155, %v12166
      %v12195 = vadd.f32 %v12156, %v12166
      %v12196 = vadd.f32 %v12157, %v12166
      %v12197 = vadd.f32 %v12158, %v12166
      %v12198 = vadd.f32 %v12159, %v12166
      %v12199 = vadd.f32 %v12160, %v12166
      %12200 = vst.msk [vmem:[#allocation2] sm:$0xff] %vm536, %v12168
      %12201 = vst.msk [vmem:[#allocation2 + $0x8] sm:$0xff] %vm536, %v12169
      %12202 = vst.msk [vmem:[#allocation2 + $0x10] sm:$0xff] %vm536, %v12170
      %12203 = vst.msk [vmem:[#allocation2 + $0x18] sm:$0xff] %vm536, %v12171
      %12204 = vst.msk [vmem:[#allocation2 + $0x20] sm:$0xff] %vm536, %v12172
      %12205 = vst.msk [vmem:[#allocation2 + $0x28] sm:$0xff] %vm536, %v12173
      %12206 = vst.msk [vmem:[#allocation2 + $0x30] sm:$0xff] %vm536, %v12174
      %12207 = vst.msk [vmem:[#allocation2 + $0x38] sm:$0xff] %vm536, %v12175
      %12208 = vst.msk [vmem:[#allocation2 + $0x40] sm:$0xff] %vm536, %v12176
      %12209 = vst.msk [vmem:[#allocation2 + $0x48] sm:$0xff] %vm536, %v12177
      %12210 = vst.msk [vmem:[#allocation2 + $0x50] sm:$0xff] %vm536, %v12178
      %12211 = vst.msk [vmem:[#allocation2 + $0x58] sm:$0xff] %vm536, %v12179
      %12212 = vst.msk [vmem:[#allocation2 + $0x60] sm:$0xff] %vm536, %v12180
      %12213 = vst.msk [vmem:[#allocation2 + $0x68] sm:$0xff] %vm536, %v12181
      %12214 = vst.msk [vmem:[#allocation2 + $0x70] sm:$0xff] %vm536, %v12182
      %12215 = vst.msk [vmem:[#allocation2 + $0x78] sm:$0xff] %vm536, %v12183
      %12216 = vst.msk [vmem:[#allocation2 + $0x80] sm:$0xff] %vm536, %v12184
      %12217 = vst.msk [vmem:[#allocation2 + $0x88] sm:$0xff] %vm536, %v12185
      %12218 = vst.msk [vmem:[#allocation2 + $0x90] sm:$0xff] %vm536, %v12186
      %12219 = vst.msk [vmem:[#allocation2 + $0x98] sm:$0xff] %vm536, %v12187
      %12220 = vst.msk [vmem:[#allocation2 + $0xa0] sm:$0xff] %vm536, %v12188
      %12221 = vst.msk [vmem:[#allocation2 + $0xa8] sm:$0xff] %vm536, %v12189
      %12222 = vst.msk [vmem:[#allocation2 + $0xb0] sm:$0xff] %vm536, %v12190
      %12223 = vst.msk [vmem:[#allocation2 + $0xb8] sm:$0xff] %vm536, %v12191
      %12224 = vst.msk [vmem:[#allocation2 + $0xc0] sm:$0xff] %vm536, %v12192
      %12225 = vst.msk [vmem:[#allocation2 + $0xc8] sm:$0xff] %vm536, %v12193
      %12226 = vst.msk [vmem:[#allocation2 + $0xd0] sm:$0xff] %vm536, %v12194
      %12227 = vst.msk [vmem:[#allocation2 + $0xd8] sm:$0xff] %vm536, %v12195
      %12228 = vst.msk [vmem:[#allocation2 + $0xe0] sm:$0xff] %vm536, %v12196
      %12229 = vst.msk [vmem:[#allocation2 + $0xe8] sm:$0xff] %vm536, %v12197
      %12230 = vst.msk [vmem:[#allocation2 + $0xf0] sm:$0xff] %vm536, %v12198
      %12231 = vst.msk [vmem:[#allocation2 + $0xf8] sm:$0xff] %vm536, %v12199
      %p12232 = scmp.eq.s32.totalorder %s24, 1
      // Predicated region
      $region57: #{s2b_stage_pallas.1} parent=51 // pred_check
        %p12233 = pneg %p12232
      $region58: #{s2b_stage_pallas.1} parent=51 // pred_check_branch
        %12235 = sbr.rel (%p12233) target = $region60
      $region59: #{s2b_stage_pallas.1} parent=51 // pred_region
        %12236 = vst.msk [vmem:[%s433] sm:$0xff] %vm536, %v12168
        %12237 = vst.msk [vmem:[%s433 + $0x8] sm:$0xff] %vm536, %v12169
        %12238 = vst.msk [vmem:[%s433 + $0x10] sm:$0xff] %vm536, %v12170
        %12239 = vst.msk [vmem:[%s433 + $0x18] sm:$0xff] %vm536, %v12171
        %12240 = vst.msk [vmem:[%s433 + $0x20] sm:$0xff] %vm536, %v12172
        %12241 = vst.msk [vmem:[%s433 + $0x28] sm:$0xff] %vm536, %v12173
        %12242 = vst.msk [vmem:[%s433 + $0x30] sm:$0xff] %vm536, %v12174
        %12243 = vst.msk [vmem:[%s433 + $0x38] sm:$0xff] %vm536, %v12175
        %12244 = vst.msk [vmem:[%s433 + $0x40] sm:$0xff] %vm536, %v12176
        %12245 = vst.msk [vmem:[%s433 + $0x48] sm:$0xff] %vm536, %v12177
        %12246 = vst.msk [vmem:[%s433 + $0x50] sm:$0xff] %vm536, %v12178
        %12247 = vst.msk [vmem:[%s433 + $0x58] sm:$0xff] %vm536, %v12179
        %12248 = vst.msk [vmem:[%s433 + $0x60] sm:$0xff] %vm536, %v12180
        %12249 = vst.msk [vmem:[%s433 + $0x68] sm:$0xff] %vm536, %v12181
        %12250 = vst.msk [vmem:[%s433 + $0x70] sm:$0xff] %vm536, %v12182
        %12251 = vst.msk [vmem:[%s433 + $0x78] sm:$0xff] %vm536, %v12183
        %12252 = vst.msk [vmem:[%s433 + $0x80] sm:$0xff] %vm536, %v12184
        %12253 = vst.msk [vmem:[%s433 + $0x88] sm:$0xff] %vm536, %v12185
        %12254 = vst.msk [vmem:[%s433 + $0x90] sm:$0xff] %vm536, %v12186
        %12255 = vst.msk [vmem:[%s433 + $0x98] sm:$0xff] %vm536, %v12187
        %12256 = vst.msk [vmem:[%s433 + $0xa0] sm:$0xff] %vm536, %v12188
        %12257 = vst.msk [vmem:[%s433 + $0xa8] sm:$0xff] %vm536, %v12189
        %12258 = vst.msk [vmem:[%s433 + $0xb0] sm:$0xff] %vm536, %v12190
        %12259 = vst.msk [vmem:[%s433 + $0xb8] sm:$0xff] %vm536, %v12191
        %12260 = vst.msk [vmem:[%s433 + $0xc0] sm:$0xff] %vm536, %v12192
        %12261 = vst.msk [vmem:[%s433 + $0xc8] sm:$0xff] %vm536, %v12193
        %12262 = vst.msk [vmem:[%s433 + $0xd0] sm:$0xff] %vm536, %v12194
        %12263 = vst.msk [vmem:[%s433 + $0xd8] sm:$0xff] %vm536, %v12195
        %12264 = vst.msk [vmem:[%s433 + $0xe0] sm:$0xff] %vm536, %v12196
        %12265 = vst.msk [vmem:[%s433 + $0xe8] sm:$0xff] %vm536, %v12197
        %12266 = vst.msk [vmem:[%s433 + $0xf0] sm:$0xff] %vm536, %v12198
        %12267 = vst.msk [vmem:[%s433 + $0xf8] sm:$0xff] %vm536, %v12199
      $region60: #{s2b_stage_pallas.1} parent=51 // pred_fallthru
        _
      %p12268 = scmp.lt.s32.totalorder %s23, 1
      %s12269 = scalar_select %p12268, %s23, 1
      %s12270 = smul.addr %s12269, 32
      %s12271 = smul.addr %s12270, 8
      %s12272 = scalar_lea.vmem %s8, %s12271
      // Predicated region
      $region61: #{s2b_stage_pallas.1} parent=51 // pred_check
        %p12273 = pneg %p257
      $region62: #{s2b_stage_pallas.1} parent=51 // pred_check_branch
        %12275 = sbr.rel (%p12273) target = $region64
      $region63: #{s2b_stage_pallas.1} parent=51 // pred_region
        _
      $region64: #{s2b_stage_pallas.1} parent=51 // pred_fallthru
        _
    $region52: #{s2b_stage_pallas.1} parent=5 // pred_fallthru
      _
    %p12276 = scmp.le.s32.totalorder 2, %s14
    // Predicated region
    $region65: #{s2b_stage_pallas.1} parent=5 // pred_check
      %p12277 = pneg %p12276
    $region66: #{s2b_stage_pallas.1} parent=5 // pred_check_branch
      %12279 = sbr.rel (%p12277) target = $region68
    $region67: #{s2b_stage_pallas.1} parent=5 // pred_region
      %s12280 = ssub.s32 %s14, 2
      // Predicated region
      $region69: #{s2b_stage_pallas.1} parent=67 // pred_check
        %p12281 = pneg %p263
      $region70: #{s2b_stage_pallas.1} parent=67 // pred_check_branch
        %12283 = sbr.rel (%p12281) target = $region72
      $region71: #{s2b_stage_pallas.1} parent=67 // pred_region
        %p12284 = scmp.lt.s32.totalorder %s25, 1
        %s12285 = scalar_select %p12284, %s25, 1
        %s12286 = smul.addr %s12285, 32
        %s12287 = smul.addr %s12286, 8
        %s12288 = scalar_lea.vmem %s8, %s12287
      $region72: #{s2b_stage_pallas.1} parent=67 // pred_fallthru
        _
    $region68: #{s2b_stage_pallas.1} parent=5 // pred_fallthru
      _
  $region6: #{s2b_stage_pallas.1} parent=0 // loop_footer
    %s18 = sadd.s32 1, %s14
  $region7: #{s2b_stage_pallas.1} parent=0 // loop_footer_branch
    %13 = sbr.rel target = $region3
  $region8: #{s2b_stage_pallas.1} parent=0 // loop_exit
    _

</llo_original>
